<compile_context>
chip_gen: v6e
topology: v6e:2x2x1
jax: 0.10.0
libtpu: 0.0.40
codegen_flags: <defaults>
</compile_context>

<pallas_src>
import jax
import jax.numpy as jnp
from jax.experimental import pallas as pl
from jax.experimental.pallas import tpu as pltpu

STATE_SIZE = 16
ACTION_SIZE = 16
HIDDEN = 512
BATCH = 2048       # rows per pallas_call (weight DMA amortized ~16x vs B=128)
MAX_TILE = 1024    # rows per grid step (keeps live f32 intermediates ~8 MiB)
LANE_PAD = 128     # fc3 output padded to a full 128-lane width


# --------------------------------------------------------------------------- #
# Kernel
# --------------------------------------------------------------------------- #
def dynamics_mlp_kernel(x_ref,            # (TB, S+A) f32  raw concat([s, a])
                        w1_ref, b1_ref,   # (S+A, H) bf16, (1, H) f32  (norm folded in)
                        w2_ref, b2_ref,   # (H, H)  bf16, (1, H) f32
                        w3_ref, b3_ref,   # (H, NP) bf16, (1, NP) f32  (zero-padded)
                        out_ref):         # (TB, NP) f32
    x = x_ref[...].astype(jnp.bfloat16)

    # fc1 (single K=32 dot; normalization is pre-folded into w1/b1)
    h = jnp.dot(x, w1_ref[...], preferred_element_type=jnp.float32) + b1_ref[...]
    h = jnp.maximum(h, 0.0).astype(jnp.bfloat16)

    # fc2 (dominant 512x512 matmul)
    h = jnp.dot(h, w2_ref[...], preferred_element_type=jnp.float32) + b2_ref[...]
    h = jnp.maximum(h, 0.0).astype(jnp.bfloat16)

    # fc3 (N padded to 128 lanes -> unmasked full-width stores)
    out_ref[...] = (jnp.dot(h, w3_ref[...], preferred_element_type=jnp.float32)
                    + b3_ref[...])


# --------------------------------------------------------------------------- #
# Parameter preparation (host-side, done once per set of weights)
# --------------------------------------------------------------------------- #
def prepare_params(params, state_size, action_size, lane_pad=LANE_PAD):
    """Fold the scalar normalization into fc1 and pad fc3 to a lane-dense width.

    (x - mean)/std @ W1 + b1  ==  x @ (W1 * 1/std per-row) + (b1 - (mean/std) @ W1)
    Division by std is unguarded, matching the torch module.
    """
    S, A = state_size, action_size
    w1 = params["w1"].astype(jnp.float32)
    b1 = params["b1"].astype(jnp.float32)
    H = w1.shape[1]

    s_scale = 1.0 / params["state_std"]
    a_scale = 1.0 / params["action_std"]
    scale = jnp.concatenate([jnp.full((S,), s_scale, jnp.float32),
                             jnp.full((A,), a_scale, jnp.float32)])
    shift = jnp.concatenate([jnp.full((S,), params["state_mean"] * s_scale, jnp.float32),
                             jnp.full((A,), params["action_mean"] * a_scale, jnp.float32)])
    w1_fold = w1 * scale[:, None]
    b1_fold = b1 - shift @ w1

    n_pad = max(lane_pad, ((S + lane_pad - 1) // lane_pad) * lane_pad)
    w3 = params["w3"].astype(jnp.float32)
    b3 = params["b3"].astype(jnp.float32)
    w3_pad = jnp.zeros((H, n_pad), jnp.float32).at[:, :S].set(w3)
    b3_pad = jnp.zeros((n_pad,), jnp.float32).at[:S].set(b3)

    return {
        "w1": w1_fold.astype(jnp.bfloat16),
        "b1": b1_fold.reshape(1, H),
        "w2": params["w2"].astype(jnp.bfloat16),
        "b2": params["b2"].reshape(1, H).astype(jnp.float32),
        "w3": w3_pad.astype(jnp.bfloat16),
        "b3": b3_pad.reshape(1, n_pad),
    }


# --------------------------------------------------------------------------- #
# Wrapper
# --------------------------------------------------------------------------- #
def _tensorcores_per_device():
    """Best-effort count of TensorCores behind one JAX device."""
    try:
        dev = jax.devices()[0]
        n = getattr(dev, "num_cores", None)
        if isinstance(n, int) and n > 0:
            return n
        kind = str(getattr(dev, "device_kind", "")).lower()
        if any(tag in kind for tag in ("v4", "v5p", "v7")):
            return 2
    except Exception:
        pass
    return 1


def _pick_steps(batch, n_cores, max_tile):
    """Fewest grid steps s.t. tile <= max_tile, >=1 step per core, 8-row aligned."""
    steps = max(n_cores, pl.cdiv(batch, max_tile))
    while steps <= batch and (batch % steps != 0 or (batch // steps) % 8 != 0):
        steps += 1
    if steps > batch:
        steps = 1
    return steps


def dynamics_model_forward(s, a, prepared, *, max_tile=MAX_TILE):
    """prepared: output of prepare_params. Returns mu of shape (B, state_size)."""
    B, S = s.shape
    _, A = a.shape
    H = prepared["w2"].shape[0]
    NP = prepared["w3"].shape[1]
    assert B % 8 == 0, "batch must be a multiple of 8 (sublane alignment)"

    # Raw concat; normalization was folded into w1/b1 by prepare_params.
    x = jnp.concatenate([s.astype(jnp.float32), a.astype(jnp.float32)], axis=-1)

    n_cores = _tensorcores_per_device()
    steps = _pick_steps(B, n_cores, max_tile)
    tile = B // steps

    # Weights/biases: constant block index -> DMA'd once, resident across steps.
    # Activations/outputs: tiled along batch -> auto double-buffered pipeline.
    in_specs = [
        pl.BlockSpec((tile, S + A), lambda i: (i, 0)),   # x
        pl.BlockSpec((S + A, H), lambda i: (0, 0)),      # w1 (folded)
        pl.BlockSpec((1, H), lambda i: (0, 0)),          # b1 (folded)
        pl.BlockSpec((H, H), lambda i: (0, 0)),          # w2
        pl.BlockSpec((1, H), lambda i: (0, 0)),          # b2
        pl.BlockSpec((H, NP), lambda i: (0, 0)),         # w3 (padded)
        pl.BlockSpec((1, NP), lambda i: (0, 0)),         # b3 (padded)
    ]
    out_spec = pl.BlockSpec((tile, NP), lambda i: (i, 0))

    # Batch axis genuinely shards across TensorCores only with CORE_PARALLEL.
    core_parallel = getattr(pltpu, "CORE_PARALLEL", "parallel")
    semantics = (core_parallel,) if (n_cores >= 2 and steps >= 2) else ("arbitrary",)

    weight_bytes = 2 * ((S + A) * H + H * H + H * NP) + 4 * (H + H + NP)
    cost = pl.CostEstimate(
        flops=2 * B * ((S + A) * H + H * H + H * NP),
        transcendentals=0,
        bytes_accessed=B * (S + A) * 4 + weight_bytes + B * NP * 4,
    )

    out = pl.pallas_call(
        dynamics_mlp_kernel,
        out_shape=jax.ShapeDtypeStruct((B, NP), jnp.float32),
        grid=(steps,),
        in_specs=in_specs,
        out_specs=out_spec,
        compiler_params=pltpu.CompilerParams(
            dimension_semantics=semantics,
            vmem_limit_bytes=32 * 1024 * 1024,
        ),
        cost_estimate=cost,
    )(x, prepared["w1"], prepared["b1"], prepared["w2"], prepared["b2"],
      prepared["w3"], prepared["b3"])

    # TODO(synk): if this runs every rollout step, the ~0.6 MiB weight fetch can
    # be hidden behind the previous JAX op with a cross-call prefetch (P10).
    return out[:, :S]


# --------------------------------------------------------------------------- #
# Synthetic params + reference
# --------------------------------------------------------------------------- #
def init_params(key, state_size, action_size, hidden):
    """Deterministic synthetic parameters (shapes match the nn.Linear layers)."""
    ks = jax.random.split(key, 6)
    in_dim = state_size + action_size
    scale1 = 1.0 / jnp.sqrt(in_dim)
    scale2 = 1.0 / jnp.sqrt(hidden)
    return {
        "w1": jax.random.uniform(ks[0], (in_dim, hidden), jnp.float32, -scale1, scale1),
        "b1": jax.random.uniform(ks[1], (hidden,), jnp.float32, -scale1, scale1),
        "w2": jax.random.uniform(ks[2], (hidden, hidden), jnp.float32, -scale2, scale2),
        "b2": jax.random.uniform(ks[3], (hidden,), jnp.float32, -scale2, scale2),
        "w3": jax.random.uniform(ks[4], (hidden, state_size), jnp.float32, -scale2, scale2),
        "b3": jax.random.uniform(ks[5], (state_size,), jnp.float32, -scale2, scale2),
        # scalar statistics (Parameters set by _init_statistics in the torch module)
        "state_mean": jnp.float32(0.1),
        "state_std": jnp.float32(1.5),
        "action_mean": jnp.float32(-0.05),
        "action_std": jnp.float32(0.8),
    }


def reference_forward(s, a, prepared, state_size):
    """Pure-JAX reference on the same prepared (folded bf16) parameters, so only
    matmul summation order differs from the kernel."""
    x = jnp.concatenate([s, a], axis=-1).astype(jnp.bfloat16)
    h = jnp.dot(x, prepared["w1"], preferred_element_type=jnp.float32) + prepared["b1"]
    h = jnp.maximum(h, 0.0).astype(jnp.bfloat16)
    h = jnp.dot(h, prepared["w2"], preferred_element_type=jnp.float32) + prepared["b2"]
    h = jnp.maximum(h, 0.0).astype(jnp.bfloat16)
    out = jnp.dot(h, prepared["w3"], preferred_element_type=jnp.float32) + prepared["b3"]
    return out[:, :state_size]


if __name__ == "__main__":
    key = jax.random.PRNGKey(0)
    k_param, k_s, k_a = jax.random.split(key, 3)

    params = init_params(k_param, STATE_SIZE, ACTION_SIZE, HIDDEN)
    prepared = prepare_params(params, STATE_SIZE, ACTION_SIZE)

    s = jax.random.normal(k_s, (BATCH, STATE_SIZE), jnp.float32)
    a = jax.random.normal(k_a, (BATCH, ACTION_SIZE), jnp.float32)

    mu = dynamics_model_forward(s, a, prepared)
    jax.block_until_ready(mu)

    ref = reference_forward(s, a, prepared, STATE_SIZE)
    assert mu.shape == (BATCH, STATE_SIZE)
    assert jnp.allclose(mu, ref, atol=2e-2, rtol=2e-2), "mismatch vs JAX reference"

    # TODO(synk): predict() adds torch.normal noise with std=self.std and s + mu;
    # sampling and the residual add are host-side, not part of this forward kernel.
    # NOTE: weights run in bf16 (f32 accumulation); keep w2 in f32 if the MOReL
    # accuracy budget requires bit-closer parity with the all-f32 torch module.
    print("KERNEL_OK")
</pallas_src>

<mosaic_0001>
module attributes {stable_mosaic.version = 11 : i64} {
  func.func @dynamics_mlp_kernel(%arg0: i32, %arg1: memref<1024x32xf32, #tpu.memory_space<vmem>>, %arg2: memref<32x512xbf16, #tpu.memory_space<vmem>>, %arg3: memref<1x512xf32, #tpu.memory_space<vmem>>, %arg4: memref<512x512xbf16, #tpu.memory_space<vmem>>, %arg5: memref<1x512xf32, #tpu.memory_space<vmem>>, %arg6: memref<512x128xbf16, #tpu.memory_space<vmem>>, %arg7: memref<1x128xf32, #tpu.memory_space<vmem>>, %arg8: memref<1024x128xf32, #tpu.memory_space<vmem>>) attributes {dimension_semantics = [#tpu.dimension_semantics<arbitrary>], iteration_bounds = array<i64: 2>, scalar_prefetch = 0 : i64, scratch_operands = 0 : i64, tpu.core_type = #tpu.core_type<tc>, window_params = [{transform_indices = @transform_0, window_bounds = array<i64: 1024, 32>}, {pipeline_mode = #tpu.pipeline_mode<synchronous>, transform_indices = @transform_1, window_bounds = array<i64: 32, 512>}, {pipeline_mode = #tpu.pipeline_mode<synchronous>, transform_indices = @transform_2, window_bounds = array<i64: 1, 512>}, {pipeline_mode = #tpu.pipeline_mode<synchronous>, transform_indices = @transform_3, window_bounds = array<i64: 512, 512>}, {pipeline_mode = #tpu.pipeline_mode<synchronous>, transform_indices = @transform_4, window_bounds = array<i64: 1, 512>}, {pipeline_mode = #tpu.pipeline_mode<synchronous>, transform_indices = @transform_5, window_bounds = array<i64: 512, 128>}, {pipeline_mode = #tpu.pipeline_mode<synchronous>, transform_indices = @transform_6, window_bounds = array<i64: 1, 128>}, {transform_indices = @transform_7, window_bounds = array<i64: 1024, 128>}]} {
    %c0 = arith.constant 0 : index
    %c0_0 = arith.constant 0 : index
    %0 = vector.load %arg1[%c0, %c0_0] : memref<1024x32xf32, #tpu.memory_space<vmem>>, vector<1024x32xf32>
    %1 = arith.truncf %0 : vector<1024x32xf32> to vector<1024x32xbf16>
    %c0_1 = arith.constant 0 : index
    %c0_2 = arith.constant 0 : index
    %2 = vector.load %arg2[%c0_1, %c0_2] : memref<32x512xbf16, #tpu.memory_space<vmem>>, vector<32x512xbf16>
    %cst = arith.constant dense<0.000000e+00> : vector<1024x512xf32>
    %3 = tpu.matmul %1, %2, %cst {dimension_numbers = #tpu.dot_dimension_numbers<[1], [0], [0], [1], [0, 0, 1, 1], [], []>} : vector<1024x32xbf16>, vector<32x512xbf16>, vector<1024x512xf32> -> vector<1024x512xf32>
    %c0_3 = arith.constant 0 : index
    %c0_4 = arith.constant 0 : index
    %4 = vector.load %arg3[%c0_3, %c0_4] : memref<1x512xf32, #tpu.memory_space<vmem>>, vector<1x512xf32>
    %5 = vector.broadcast %4 : vector<1x512xf32> to vector<1024x512xf32>
    %6 = arith.addf %3, %5 : vector<1024x512xf32>
    %cst_5 = arith.constant 0.000000e+00 : f32
    %7 = vector.broadcast %cst_5 : f32 to vector<1024x512xf32>
    %8 = arith.maximumf %6, %7 : vector<1024x512xf32>
    %9 = arith.truncf %8 : vector<1024x512xf32> to vector<1024x512xbf16>
    %c0_6 = arith.constant 0 : index
    %c0_7 = arith.constant 0 : index
    %10 = vector.load %arg4[%c0_6, %c0_7] : memref<512x512xbf16, #tpu.memory_space<vmem>>, vector<512x512xbf16>
    %cst_8 = arith.constant dense<0.000000e+00> : vector<1024x512xf32>
    %11 = tpu.matmul %9, %10, %cst_8 {dimension_numbers = #tpu.dot_dimension_numbers<[1], [0], [0], [1], [0, 0, 1, 1], [], []>} : vector<1024x512xbf16>, vector<512x512xbf16>, vector<1024x512xf32> -> vector<1024x512xf32>
    %c0_9 = arith.constant 0 : index
    %c0_10 = arith.constant 0 : index
    %12 = vector.load %arg5[%c0_9, %c0_10] : memref<1x512xf32, #tpu.memory_space<vmem>>, vector<1x512xf32>
    %13 = vector.broadcast %12 : vector<1x512xf32> to vector<1024x512xf32>
    %14 = arith.addf %11, %13 : vector<1024x512xf32>
    %cst_11 = arith.constant 0.000000e+00 : f32
    %15 = vector.broadcast %cst_11 : f32 to vector<1024x512xf32>
    %16 = arith.maximumf %14, %15 : vector<1024x512xf32>
    %17 = arith.truncf %16 : vector<1024x512xf32> to vector<1024x512xbf16>
    %c0_12 = arith.constant 0 : index
    %c0_13 = arith.constant 0 : index
    %18 = vector.load %arg6[%c0_12, %c0_13] : memref<512x128xbf16, #tpu.memory_space<vmem>>, vector<512x128xbf16>
    %cst_14 = arith.constant dense<0.000000e+00> : vector<1024x128xf32>
    %19 = tpu.matmul %17, %18, %cst_14 {dimension_numbers = #tpu.dot_dimension_numbers<[1], [0], [0], [1], [0, 0, 1, 1], [], []>} : vector<1024x512xbf16>, vector<512x128xbf16>, vector<1024x128xf32> -> vector<1024x128xf32>
    %c0_15 = arith.constant 0 : index
    %c0_16 = arith.constant 0 : index
    %20 = vector.load %arg7[%c0_15, %c0_16] : memref<1x128xf32, #tpu.memory_space<vmem>>, vector<1x128xf32>
    %21 = vector.broadcast %20 : vector<1x128xf32> to vector<1024x128xf32>
    %22 = arith.addf %19, %21 : vector<1024x128xf32>
    %c0_17 = arith.constant 0 : index
    %c0_18 = arith.constant 0 : index
    %23 = vector.load %arg8[%c0_17, %c0_18] : memref<1024x128xf32, #tpu.memory_space<vmem>>, vector<1024x128xf32>
    tpu.vector_store %arg8[%c0_17, %c0_18], %22 {strides = array<i32>} : memref<1024x128xf32, #tpu.memory_space<vmem>>, vector<1024x128xf32>,
    return
  }
  func.func @transform_0(%arg0: i32) -> (i32, i32) {
    %c0_i32 = arith.constant 0 : i32
    %c0_i32_0 = arith.constant 0 : i32
    return %arg0, %c0_i32 : i32, i32
  }
  func.func @transform_1(%arg0: i32) -> (i32, i32) {
    %c0_i32 = arith.constant 0 : i32
    %c0_i32_0 = arith.constant 0 : i32
    %c0_i32_1 = arith.constant 0 : i32
    return %c0_i32, %c0_i32_0 : i32, i32
  }
  func.func @transform_2(%arg0: i32) -> (i32, i32) {
    %c0_i32 = arith.constant 0 : i32
    %c0_i32_0 = arith.constant 0 : i32
    %c0_i32_1 = arith.constant 0 : i32
    return %c0_i32, %c0_i32_0 : i32, i32
  }
  func.func @transform_3(%arg0: i32) -> (i32, i32) {
    %c0_i32 = arith.constant 0 : i32
    %c0_i32_0 = arith.constant 0 : i32
    %c0_i32_1 = arith.constant 0 : i32
    return %c0_i32, %c0_i32_0 : i32, i32
  }
  func.func @transform_4(%arg0: i32) -> (i32, i32) {
    %c0_i32 = arith.constant 0 : i32
    %c0_i32_0 = arith.constant 0 : i32
    %c0_i32_1 = arith.constant 0 : i32
    return %c0_i32, %c0_i32_0 : i32, i32
  }
  func.func @transform_5(%arg0: i32) -> (i32, i32) {
    %c0_i32 = arith.constant 0 : i32
    %c0_i32_0 = arith.constant 0 : i32
    %c0_i32_1 = arith.constant 0 : i32
    return %c0_i32, %c0_i32_0 : i32, i32
  }
  func.func @transform_6(%arg0: i32) -> (i32, i32) {
    %c0_i32 = arith.constant 0 : i32
    %c0_i32_0 = arith.constant 0 : i32
    %c0_i32_1 = arith.constant 0 : i32
    return %c0_i32, %c0_i32_0 : i32, i32
  }
  func.func @transform_7(%arg0: i32) -> (i32, i32) {
    %c0_i32 = arith.constant 0 : i32
    %c0_i32_0 = arith.constant 0 : i32
    return %arg0, %c0_i32 : i32, i32
  }
}

</mosaic_0001>

<llo_original>
// kernel: tpu_custom_call.1
$region0: #{tpu_custom_call.1}
  #allocation0 [shape = 'u32[]', space=smem, size = 0x4, offset = 0x4, fixed_abs, tag = 'smem constant byte address 0x4 - core index']
  #allocation1 [shape = 'u32[144,128]{1,0:T(1,128)}', space=vmem, size = 0x12000, scoped, tag = 'internal scratch']
  %s0 = inlined_call_operand.vmem [shape: f32[2048,32], index: 0, kind: input, shape index: {}]
  %s1 = inlined_call_operand.vmem [shape: bf16[32,512], index: 1, kind: input, shape index: {}]
  %s2 = inlined_call_operand.vmem [shape: f32[1,512], index: 2, kind: input, shape index: {}]
  %s3 = inlined_call_operand.vmem [shape: bf16[512,512], index: 3, kind: input, shape index: {}]
  %s4 = inlined_call_operand.vmem [shape: f32[1,512], index: 4, kind: input, shape index: {}]
  %s5 = inlined_call_operand.vmem [shape: bf16[512,128], index: 5, kind: input, shape index: {}]
  %s6 = inlined_call_operand.vmem [shape: f32[1,128], index: 6, kind: input, shape index: {}]
  %s7 = inlined_call_operand.hbm [shape: f32[2048,128], index: 7, kind: output, shape index: {}]
  %s8 = sld [smem:[#allocation0]]
  $region61: #{tpu_custom_call.1} parent=0
    _
  %s10 = ssub.s32 1, %s8
  %s11 = scalar_select 0, %s10, %s8
  $region1: #{tpu_custom_call.1} parent=0
    #allocation2 [shape = 'u8[1048576]{0}', space=vmem, size = 0x100000, scoped, tag = 'output window, operand 0']
    #allocation3 [shape = 's32[2]{0}', space=sflag, size = 0x8, scoped, tag = 'scoped memory for tpu_custom_call.1']
    %12 = vsyncpa [#allocation3], 0
    %s13 = scalar_lea.sflag [#allocation3], 1
    %14 = vsyncpa %s13, 0
    loop: start=0, step=1, limit=4
    $region2: #{tpu_custom_call.1} parent=1 // loop_pre_header
      _
    $region3: #{tpu_custom_call.1} parent=1 // loop_header
      %s16 = sphi 0, %s20
      %p17 = scmp.ge.s32.totalorder %s16, 4
      %s26 = sphi 0, %s28
      %s29 = sphi 0, %s26
      %s30 = sphi 0, %s29
      %s46 = sphi 0, %s30
      %s50 = sphi 0, %s50
      %s52 = sphi 0, %s50
      %s53 = sphi 0, %s52
      %s67 = sphi 0, %s53
      %s71 = sphi 0, %s71
      %s73 = sphi 0, %s71
      %s74 = sphi 0, %s73
      %s88 = sphi 0, %s74
      %s92 = sphi 0, %s92
      %s94 = sphi 0, %s92
      %s95 = sphi 0, %s94
      %s109 = sphi 0, %s95
      %s113 = sphi 0, %s113
      %s115 = sphi 0, %s113
      %s116 = sphi 0, %s115
      %s130 = sphi 0, %s116
      %s134 = sphi 0, %s134
      %s136 = sphi 0, %s134
      %s137 = sphi 0, %s136
      %s151 = sphi 0, %s137
      %s155 = sphi 0, %s155
      %s157 = sphi 0, %s155
      %s158 = sphi 0, %s157
      %s172 = sphi 0, %s158
      %s178 = sphi 0, %s180
      %s181 = sphi 0, %s178
      %s182 = sphi 0, %s181
      %s198 = sphi 0, %s182
    $region4: #{tpu_custom_call.1} parent=1 // loop_header_branch
      %19 = sbr.rel (%p17) target = $region8
    $region5: #{tpu_custom_call.1} parent=1 // loop_body
      %s21 = ssub.s32 %s16, 1
      %s22 = ssub.s32 %s16, 2
      %s23 = sadd.s32 %s16, 1
      %s24 = ssub.s32 %s16, %s23
      %p25 = scmp.eq.s32.totalorder %s24, 0
      %s27 = sadd.s32 %s26, 1
      %s28 = scalar_select %p25, %s26, %s27
      %p31 = pneg %p25
      %p32 = scmp.eq.s32.totalorder %s16, 1
      %p33 = por %p31, %p32
      %p34 = scmp.ne.s32.totalorder %s26, %s29
      %p35 = scmp.eq.s32.totalorder %s16, 0
      %p36 = por %p34, %p35
      %p37 = scmp.ne.s32.totalorder %s26, %s29
      %p38 = scmp.eq.s32.totalorder %s21, 1
      %p39 = por %p37, %p38
      %p40 = scmp.ne.s32.totalorder %s29, %s30
      %p41 = scmp.eq.s32.totalorder %s21, 0
      %p42 = por %p40, %p41
      %p43 = scmp.ne.s32.totalorder %s29, %s30
      %p44 = scmp.eq.s32.totalorder %s22, 1
      %p45 = por %p43, %p44
      %p47 = scmp.ne.s32.totalorder %s30, %s46
      %p48 = scmp.eq.s32.totalorder %s22, 0
      %p49 = por %p47, %p48
      %s51 = sadd.s32 %s50, 1
      %p54 = scmp.eq.s32.totalorder %s16, 1
      %p55 = scmp.ne.s32.totalorder %s50, %s52
      %p56 = scmp.eq.s32.totalorder %s16, 0
      %p57 = por %p55, %p56
      %p58 = scmp.ne.s32.totalorder %s50, %s52
      %p59 = scmp.eq.s32.totalorder %s21, 1
      %p60 = por %p58, %p59
      %p61 = scmp.ne.s32.totalorder %s52, %s53
      %p62 = scmp.eq.s32.totalorder %s21, 0
      %p63 = por %p61, %p62
      %p64 = scmp.ne.s32.totalorder %s52, %s53
      %p65 = scmp.eq.s32.totalorder %s22, 1
      %p66 = por %p64, %p65
      %p68 = scmp.ne.s32.totalorder %s53, %s67
      %p69 = scmp.eq.s32.totalorder %s22, 0
      %p70 = por %p68, %p69
      %s72 = sadd.s32 %s71, 1
      %p75 = scmp.eq.s32.totalorder %s16, 1
      %p76 = scmp.ne.s32.totalorder %s71, %s73
      %p77 = scmp.eq.s32.totalorder %s16, 0
      %p78 = por %p76, %p77
      %p79 = scmp.ne.s32.totalorder %s71, %s73
      %p80 = scmp.eq.s32.totalorder %s21, 1
      %p81 = por %p79, %p80
      %p82 = scmp.ne.s32.totalorder %s73, %s74
      %p83 = scmp.eq.s32.totalorder %s21, 0
      %p84 = por %p82, %p83
      %p85 = scmp.ne.s32.totalorder %s73, %s74
      %p86 = scmp.eq.s32.totalorder %s22, 1
      %p87 = por %p85, %p86
      %p89 = scmp.ne.s32.totalorder %s74, %s88
      %p90 = scmp.eq.s32.totalorder %s22, 0
      %p91 = por %p89, %p90
      %s93 = sadd.s32 %s92, 1
      %p96 = scmp.eq.s32.totalorder %s16, 1
      %p97 = scmp.ne.s32.totalorder %s92, %s94
      %p98 = scmp.eq.s32.totalorder %s16, 0
      %p99 = por %p97, %p98
      %p100 = scmp.ne.s32.totalorder %s92, %s94
      %p101 = scmp.eq.s32.totalorder %s21, 1
      %p102 = por %p100, %p101
      %p103 = scmp.ne.s32.totalorder %s94, %s95
      %p104 = scmp.eq.s32.totalorder %s21, 0
      %p105 = por %p103, %p104
      %p106 = scmp.ne.s32.totalorder %s94, %s95
      %p107 = scmp.eq.s32.totalorder %s22, 1
      %p108 = por %p106, %p107
      %p110 = scmp.ne.s32.totalorder %s95, %s109
      %p111 = scmp.eq.s32.totalorder %s22, 0
      %p112 = por %p110, %p111
      %s114 = sadd.s32 %s113, 1
      %p117 = scmp.eq.s32.totalorder %s16, 1
      %p118 = scmp.ne.s32.totalorder %s113, %s115
      %p119 = scmp.eq.s32.totalorder %s16, 0
      %p120 = por %p118, %p119
      %p121 = scmp.ne.s32.totalorder %s113, %s115
      %p122 = scmp.eq.s32.totalorder %s21, 1
      %p123 = por %p121, %p122
      %p124 = scmp.ne.s32.totalorder %s115, %s116
      %p125 = scmp.eq.s32.totalorder %s21, 0
      %p126 = por %p124, %p125
      %p127 = scmp.ne.s32.totalorder %s115, %s116
      %p128 = scmp.eq.s32.totalorder %s22, 1
      %p129 = por %p127, %p128
      %p131 = scmp.ne.s32.totalorder %s116, %s130
      %p132 = scmp.eq.s32.totalorder %s22, 0
      %p133 = por %p131, %p132
      %s135 = sadd.s32 %s134, 1
      %p138 = scmp.eq.s32.totalorder %s16, 1
      %p139 = scmp.ne.s32.totalorder %s134, %s136
      %p140 = scmp.eq.s32.totalorder %s16, 0
      %p141 = por %p139, %p140
      %p142 = scmp.ne.s32.totalorder %s134, %s136
      %p143 = scmp.eq.s32.totalorder %s21, 1
      %p144 = por %p142, %p143
      %p145 = scmp.ne.s32.totalorder %s136, %s137
      %p146 = scmp.eq.s32.totalorder %s21, 0
      %p147 = por %p145, %p146
      %p148 = scmp.ne.s32.totalorder %s136, %s137
      %p149 = scmp.eq.s32.totalorder %s22, 1
      %p150 = por %p148, %p149
      %p152 = scmp.ne.s32.totalorder %s137, %s151
      %p153 = scmp.eq.s32.totalorder %s22, 0
      %p154 = por %p152, %p153
      %s156 = sadd.s32 %s155, 1
      %p159 = scmp.eq.s32.totalorder %s16, 1
      %p160 = scmp.ne.s32.totalorder %s155, %s157
      %p161 = scmp.eq.s32.totalorder %s16, 0
      %p162 = por %p160, %p161
      %p163 = scmp.ne.s32.totalorder %s155, %s157
      %p164 = scmp.eq.s32.totalorder %s21, 1
      %p165 = por %p163, %p164
      %p166 = scmp.ne.s32.totalorder %s157, %s158
      %p167 = scmp.eq.s32.totalorder %s21, 0
      %p168 = por %p166, %p167
      %p169 = scmp.ne.s32.totalorder %s157, %s158
      %p170 = scmp.eq.s32.totalorder %s22, 1
      %p171 = por %p169, %p170
      %p173 = scmp.ne.s32.totalorder %s158, %s172
      %p174 = scmp.eq.s32.totalorder %s22, 0
      %p175 = por %p173, %p174
      %s176 = ssub.s32 %s16, %s23
      %p177 = scmp.eq.s32.totalorder %s176, 0
      %s179 = sadd.s32 %s178, 1
      %s180 = scalar_select %p177, %s178, %s179
      %p183 = pneg %p177
      %p184 = scmp.eq.s32.totalorder %s16, 1
      %p185 = por %p183, %p184
      %p186 = scmp.ne.s32.totalorder %s178, %s181
      %p187 = scmp.eq.s32.totalorder %s16, 0
      %p188 = por %p186, %p187
      %p189 = scmp.ne.s32.totalorder %s178, %s181
      %p190 = scmp.eq.s32.totalorder %s21, 1
      %p191 = por %p189, %p190
      %p192 = scmp.ne.s32.totalorder %s181, %s182
      %p193 = scmp.eq.s32.totalorder %s21, 0
      %p194 = por %p192, %p193
      %p195 = scmp.ne.s32.totalorder %s181, %s182
      %p196 = scmp.eq.s32.totalorder %s22, 1
      %p197 = por %p195, %p196
      %p199 = scmp.ne.s32.totalorder %s182, %s198
      %p200 = scmp.eq.s32.totalorder %s22, 0
      %p201 = por %p199, %p200
      %p202 = scmp.le.s32.totalorder 1, %s16
      %p203 = scmp.lt.s32.totalorder %s16, 3
      %p204 = pnand %p202, %p203
      %p205 = pneg %p204
      // Predicated region
      $region9: #{tpu_custom_call.1} parent=5 // pred_check
        _
      $region10: #{tpu_custom_call.1} parent=5 // pred_check_branch
        %207 = sbr.rel (%p204) target = $region12
      $region11: #{tpu_custom_call.1} parent=5 // pred_region
        %s208 = ssub.s32 %s16, 1
        // Predicated region
        $region13: #{tpu_custom_call.1} parent=11 // pred_check
          %p209 = pneg %p63
        $region14: #{tpu_custom_call.1} parent=11 // pred_check_branch
          %211 = sbr.rel (%p209) target = $region16
        $region15: #{tpu_custom_call.1} parent=11 // pred_region
          _
        $region16: #{tpu_custom_call.1} parent=11 // pred_fallthru
          _
        // Predicated region
        $region17: #{tpu_custom_call.1} parent=11 // pred_check
          %p212 = pneg %p84
        $region18: #{tpu_custom_call.1} parent=11 // pred_check_branch
          %214 = sbr.rel (%p212) target = $region20
        $region19: #{tpu_custom_call.1} parent=11 // pred_region
          _
        $region20: #{tpu_custom_call.1} parent=11 // pred_fallthru
          _
        // Predicated region
        $region21: #{tpu_custom_call.1} parent=11 // pred_check
          %p215 = pneg %p105
        $region22: #{tpu_custom_call.1} parent=11 // pred_check_branch
          %217 = sbr.rel (%p215) target = $region24
        $region23: #{tpu_custom_call.1} parent=11 // pred_region
          _
        $region24: #{tpu_custom_call.1} parent=11 // pred_fallthru
          _
        // Predicated region
        $region25: #{tpu_custom_call.1} parent=11 // pred_check
          %p218 = pneg %p126
        $region26: #{tpu_custom_call.1} parent=11 // pred_check_branch
          %220 = sbr.rel (%p218) target = $region28
        $region27: #{tpu_custom_call.1} parent=11 // pred_region
          _
        $region28: #{tpu_custom_call.1} parent=11 // pred_fallthru
          _
        // Predicated region
        $region29: #{tpu_custom_call.1} parent=11 // pred_check
          %p221 = pneg %p147
        $region30: #{tpu_custom_call.1} parent=11 // pred_check_branch
          %223 = sbr.rel (%p221) target = $region32
        $region31: #{tpu_custom_call.1} parent=11 // pred_region
          _
        $region32: #{tpu_custom_call.1} parent=11 // pred_fallthru
          _
        // Predicated region
        $region33: #{tpu_custom_call.1} parent=11 // pred_check
          %p224 = pneg %p168
        $region34: #{tpu_custom_call.1} parent=11 // pred_check_branch
          %226 = sbr.rel (%p224) target = $region36
        $region35: #{tpu_custom_call.1} parent=11 // pred_region
          _
        $region36: #{tpu_custom_call.1} parent=11 // pred_fallthru
          _
      $region12: #{tpu_custom_call.1} parent=5 // pred_fallthru
        _
      %p227 = scmp.lt.s32.totalorder %s16, 2
      // Predicated region
      $region37: #{tpu_custom_call.1} parent=5 // pred_check
        %p228 = pneg %p227
      $region38: #{tpu_custom_call.1} parent=5 // pred_check_branch
        %230 = sbr.rel (%p228) target = $region40
      $region39: #{tpu_custom_call.1} parent=5 // pred_region
        // Predicated region
        $region41: #{tpu_custom_call.1} parent=39 // pred_check
          %p231 = pneg %p36
        $region42: #{tpu_custom_call.1} parent=39 // pred_check_branch
          %233 = sbr.rel (%p231) target = $region44
        $region43: #{tpu_custom_call.1} parent=39 // pred_region
          %s234 = smul.u32 128, %s16
          %p235 = scmp.lt.s32.totalorder %s234, 255
          %s236 = scalar_select %p235, %s234, 255
          %s237 = smul.addr %s236, 8
          %s238 = scalar_lea.vmem %s0, %s237
          %s239 = smul.u32 128, %s16
        $region44: #{tpu_custom_call.1} parent=39 // pred_fallthru
          _
      $region40: #{tpu_custom_call.1} parent=5 // pred_fallthru
        _
      %p240 = scmp.le.s32.totalorder 1, %s16
      %p241 = scmp.lt.s32.totalorder %s16, 3
      %p242 = pnand %p240, %p241
      %p243 = pneg %p242
      // Predicated region
      $region45: #{tpu_custom_call.1} parent=5 // pred_check
        _
      $region46: #{tpu_custom_call.1} parent=5 // pred_check_branch
        %245 = sbr.rel (%p242) target = $region48
      $region47: #{tpu_custom_call.1} parent=5 // pred_region
        %s246 = ssub.s32 %s16, 1
        %s247 = smul.u32 128, %s21
        %p248 = scmp.lt.s32.totalorder %s247, 255
        %s249 = scalar_select %p248, %s247, 255
        %s250 = smul.addr %s249, 8
        %s251 = scalar_lea.vmem %s0, %s250
        %p252 = pneg %p42
        %p253 = pneg %p39
        %p254 = pneg %p63
        %p255 = pneg %p60
        %p256 = pneg %p84
        %p257 = pneg %p81
        %p258 = pneg %p105
        %p259 = pneg %p102
        %p260 = pneg %p126
        %p261 = pneg %p123
        %p262 = pneg %p147
        %p263 = pneg %p144
        %p264 = pneg %p168
        %p265 = pneg %p165
        %p266 = pneg %p194
        %p267 = pneg %p191
        %s268 = sand.u32 %s181, 1
        %s269 = scalar_lea.sflag [#allocation3], %s268
        %s270 = sand.u32 %s181, 1
        %s271 = smul.addr %s270, 1024
        %s272 = scalar_lea.vmem [#allocation2], %s271
        %s273 = smul.u32 128, %s21
        %p274 = scmp.lt.s32.totalorder %s273, 255
        %s275 = scalar_select %p274, %s273, 255
        %s276 = smul.addr %s275, 8
        %s277 = scalar_lea.vmem %s0, %s276
        %s278 = smul.u32 128, %s21
        %s279 = smul.u32 128, %s21
        %v281 = vld [vmem:[%s277] sm:$0xff]
        %v282 = vld [vmem:[%s277 + $0x8] sm:$0xff]
        %v283 = vld [vmem:[%s277 + $0x10] sm:$0xff]
        %v284 = vld [vmem:[%s277 + $0x18] sm:$0xff]
        %v285 = vld [vmem:[%s277 + $0x20] sm:$0xff]
        %v286 = vld [vmem:[%s277 + $0x28] sm:$0xff]
        %v287 = vld [vmem:[%s277 + $0x30] sm:$0xff]
        %v288 = vld [vmem:[%s277 + $0x38] sm:$0xff]
        %v289 = vld [vmem:[%s277 + $0x40] sm:$0xff]
        %v290 = vld [vmem:[%s277 + $0x48] sm:$0xff]
        %v291 = vld [vmem:[%s277 + $0x50] sm:$0xff]
        %v292 = vld [vmem:[%s277 + $0x58] sm:$0xff]
        %v293 = vld [vmem:[%s277 + $0x60] sm:$0xff]
        %v294 = vld [vmem:[%s277 + $0x68] sm:$0xff]
        %v295 = vld [vmem:[%s277 + $0x70] sm:$0xff]
        %v296 = vld [vmem:[%s277 + $0x78] sm:$0xff]
        %v297 = vld [vmem:[%s277 + $0x80] sm:$0xff]
        %v298 = vld [vmem:[%s277 + $0x88] sm:$0xff]
        %v299 = vld [vmem:[%s277 + $0x90] sm:$0xff]
        %v300 = vld [vmem:[%s277 + $0x98] sm:$0xff]
        %v301 = vld [vmem:[%s277 + $0xa0] sm:$0xff]
        %v302 = vld [vmem:[%s277 + $0xa8] sm:$0xff]
        %v303 = vld [vmem:[%s277 + $0xb0] sm:$0xff]
        %v304 = vld [vmem:[%s277 + $0xb8] sm:$0xff]
        %v305 = vld [vmem:[%s277 + $0xc0] sm:$0xff]
        %v306 = vld [vmem:[%s277 + $0xc8] sm:$0xff]
        %v307 = vld [vmem:[%s277 + $0xd0] sm:$0xff]
        %v308 = vld [vmem:[%s277 + $0xd8] sm:$0xff]
        %v309 = vld [vmem:[%s277 + $0xe0] sm:$0xff]
        %v310 = vld [vmem:[%s277 + $0xe8] sm:$0xff]
        %v311 = vld [vmem:[%s277 + $0xf0] sm:$0xff]
        %v312 = vld [vmem:[%s277 + $0xf8] sm:$0xff]
        %v313 = vld [vmem:[%s277 + $0x100] sm:$0xff]
        %v314 = vld [vmem:[%s277 + $0x108] sm:$0xff]
        %v315 = vld [vmem:[%s277 + $0x110] sm:$0xff]
        %v316 = vld [vmem:[%s277 + $0x118] sm:$0xff]
        %v317 = vld [vmem:[%s277 + $0x120] sm:$0xff]
        %v318 = vld [vmem:[%s277 + $0x128] sm:$0xff]
        %v319 = vld [vmem:[%s277 + $0x130] sm:$0xff]
        %v320 = vld [vmem:[%s277 + $0x138] sm:$0xff]
        %v321 = vld [vmem:[%s277 + $0x140] sm:$0xff]
        %v322 = vld [vmem:[%s277 + $0x148] sm:$0xff]
        %v323 = vld [vmem:[%s277 + $0x150] sm:$0xff]
        %v324 = vld [vmem:[%s277 + $0x158] sm:$0xff]
        %v325 = vld [vmem:[%s277 + $0x160] sm:$0xff]
        %v326 = vld [vmem:[%s277 + $0x168] sm:$0xff]
        %v327 = vld [vmem:[%s277 + $0x170] sm:$0xff]
        %v328 = vld [vmem:[%s277 + $0x178] sm:$0xff]
        %v329 = vld [vmem:[%s277 + $0x180] sm:$0xff]
        %v330 = vld [vmem:[%s277 + $0x188] sm:$0xff]
        %v331 = vld [vmem:[%s277 + $0x190] sm:$0xff]
        %v332 = vld [vmem:[%s277 + $0x198] sm:$0xff]
        %v333 = vld [vmem:[%s277 + $0x1a0] sm:$0xff]
        %v334 = vld [vmem:[%s277 + $0x1a8] sm:$0xff]
        %v335 = vld [vmem:[%s277 + $0x1b0] sm:$0xff]
        %v336 = vld [vmem:[%s277 + $0x1b8] sm:$0xff]
        %v337 = vld [vmem:[%s277 + $0x1c0] sm:$0xff]
        %v338 = vld [vmem:[%s277 + $0x1c8] sm:$0xff]
        %v339 = vld [vmem:[%s277 + $0x1d0] sm:$0xff]
        %v340 = vld [vmem:[%s277 + $0x1d8] sm:$0xff]
        %v341 = vld [vmem:[%s277 + $0x1e0] sm:$0xff]
        %v342 = vld [vmem:[%s277 + $0x1e8] sm:$0xff]
        %v343 = vld [vmem:[%s277 + $0x1f0] sm:$0xff]
        %v344 = vld [vmem:[%s277 + $0x1f8] sm:$0xff]
        %v345 = vld [vmem:[%s277 + $0x200] sm:$0xff]
        %v346 = vld [vmem:[%s277 + $0x208] sm:$0xff]
        %v347 = vld [vmem:[%s277 + $0x210] sm:$0xff]
        %v348 = vld [vmem:[%s277 + $0x218] sm:$0xff]
        %v349 = vld [vmem:[%s277 + $0x220] sm:$0xff]
        %v350 = vld [vmem:[%s277 + $0x228] sm:$0xff]
        %v351 = vld [vmem:[%s277 + $0x230] sm:$0xff]
        %v352 = vld [vmem:[%s277 + $0x238] sm:$0xff]
        %v353 = vld [vmem:[%s277 + $0x240] sm:$0xff]
        %v354 = vld [vmem:[%s277 + $0x248] sm:$0xff]
        %v355 = vld [vmem:[%s277 + $0x250] sm:$0xff]
        %v356 = vld [vmem:[%s277 + $0x258] sm:$0xff]
        %v357 = vld [vmem:[%s277 + $0x260] sm:$0xff]
        %v358 = vld [vmem:[%s277 + $0x268] sm:$0xff]
        %v359 = vld [vmem:[%s277 + $0x270] sm:$0xff]
        %v360 = vld [vmem:[%s277 + $0x278] sm:$0xff]
        %v361 = vld [vmem:[%s277 + $0x280] sm:$0xff]
        %v362 = vld [vmem:[%s277 + $0x288] sm:$0xff]
        %v363 = vld [vmem:[%s277 + $0x290] sm:$0xff]
        %v364 = vld [vmem:[%s277 + $0x298] sm:$0xff]
        %v365 = vld [vmem:[%s277 + $0x2a0] sm:$0xff]
        %v366 = vld [vmem:[%s277 + $0x2a8] sm:$0xff]
        %v367 = vld [vmem:[%s277 + $0x2b0] sm:$0xff]
        %v368 = vld [vmem:[%s277 + $0x2b8] sm:$0xff]
        %v369 = vld [vmem:[%s277 + $0x2c0] sm:$0xff]
        %v370 = vld [vmem:[%s277 + $0x2c8] sm:$0xff]
        %v371 = vld [vmem:[%s277 + $0x2d0] sm:$0xff]
        %v372 = vld [vmem:[%s277 + $0x2d8] sm:$0xff]
        %v373 = vld [vmem:[%s277 + $0x2e0] sm:$0xff]
        %v374 = vld [vmem:[%s277 + $0x2e8] sm:$0xff]
        %v375 = vld [vmem:[%s277 + $0x2f0] sm:$0xff]
        %v376 = vld [vmem:[%s277 + $0x2f8] sm:$0xff]
        %v377 = vld [vmem:[%s277 + $0x300] sm:$0xff]
        %v378 = vld [vmem:[%s277 + $0x308] sm:$0xff]
        %v379 = vld [vmem:[%s277 + $0x310] sm:$0xff]
        %v380 = vld [vmem:[%s277 + $0x318] sm:$0xff]
        %v381 = vld [vmem:[%s277 + $0x320] sm:$0xff]
        %v382 = vld [vmem:[%s277 + $0x328] sm:$0xff]
        %v383 = vld [vmem:[%s277 + $0x330] sm:$0xff]
        %v384 = vld [vmem:[%s277 + $0x338] sm:$0xff]
        %v385 = vld [vmem:[%s277 + $0x340] sm:$0xff]
        %v386 = vld [vmem:[%s277 + $0x348] sm:$0xff]
        %v387 = vld [vmem:[%s277 + $0x350] sm:$0xff]
        %v388 = vld [vmem:[%s277 + $0x358] sm:$0xff]
        %v389 = vld [vmem:[%s277 + $0x360] sm:$0xff]
        %v390 = vld [vmem:[%s277 + $0x368] sm:$0xff]
        %v391 = vld [vmem:[%s277 + $0x370] sm:$0xff]
        %v392 = vld [vmem:[%s277 + $0x378] sm:$0xff]
        %v393 = vld [vmem:[%s277 + $0x380] sm:$0xff]
        %v394 = vld [vmem:[%s277 + $0x388] sm:$0xff]
        %v395 = vld [vmem:[%s277 + $0x390] sm:$0xff]
        %v396 = vld [vmem:[%s277 + $0x398] sm:$0xff]
        %v397 = vld [vmem:[%s277 + $0x3a0] sm:$0xff]
        %v398 = vld [vmem:[%s277 + $0x3a8] sm:$0xff]
        %v399 = vld [vmem:[%s277 + $0x3b0] sm:$0xff]
        %v400 = vld [vmem:[%s277 + $0x3b8] sm:$0xff]
        %v401 = vld [vmem:[%s277 + $0x3c0] sm:$0xff]
        %v402 = vld [vmem:[%s277 + $0x3c8] sm:$0xff]
        %v403 = vld [vmem:[%s277 + $0x3d0] sm:$0xff]
        %v404 = vld [vmem:[%s277 + $0x3d8] sm:$0xff]
        %v405 = vld [vmem:[%s277 + $0x3e0] sm:$0xff]
        %v406 = vld [vmem:[%s277 + $0x3e8] sm:$0xff]
        %v407 = vld [vmem:[%s277 + $0x3f0] sm:$0xff]
        %v408 = vld [vmem:[%s277 + $0x3f8] sm:$0xff]
        %v409 = vpack.c.bf16 %v282, %v281
        %v410 = vpack.c.bf16 %v284, %v283
        %v411 = vpack.c.bf16 %v286, %v285
        %v412 = vpack.c.bf16 %v288, %v287
        %v413 = vpack.c.bf16 %v290, %v289
        %v414 = vpack.c.bf16 %v292, %v291
        %v415 = vpack.c.bf16 %v294, %v293
        %v416 = vpack.c.bf16 %v296, %v295
        %v417 = vpack.c.bf16 %v298, %v297
        %v418 = vpack.c.bf16 %v300, %v299
        %v419 = vpack.c.bf16 %v302, %v301
        %v420 = vpack.c.bf16 %v304, %v303
        %v421 = vpack.c.bf16 %v306, %v305
        %v422 = vpack.c.bf16 %v308, %v307
        %v423 = vpack.c.bf16 %v310, %v309
        %v424 = vpack.c.bf16 %v312, %v311
        %v425 = vpack.c.bf16 %v314, %v313
        %v426 = vpack.c.bf16 %v316, %v315
        %v427 = vpack.c.bf16 %v318, %v317
        %v428 = vpack.c.bf16 %v320, %v319
        %v429 = vpack.c.bf16 %v322, %v321
        %v430 = vpack.c.bf16 %v324, %v323
        %v431 = vpack.c.bf16 %v326, %v325
        %v432 = vpack.c.bf16 %v328, %v327
        %v433 = vpack.c.bf16 %v330, %v329
        %v434 = vpack.c.bf16 %v332, %v331
        %v435 = vpack.c.bf16 %v334, %v333
        %v436 = vpack.c.bf16 %v336, %v335
        %v437 = vpack.c.bf16 %v338, %v337
        %v438 = vpack.c.bf16 %v340, %v339
        %v439 = vpack.c.bf16 %v342, %v341
        %v440 = vpack.c.bf16 %v344, %v343
        %v441 = vpack.c.bf16 %v346, %v345
        %v442 = vpack.c.bf16 %v348, %v347
        %v443 = vpack.c.bf16 %v350, %v349
        %v444 = vpack.c.bf16 %v352, %v351
        %v445 = vpack.c.bf16 %v354, %v353
        %v446 = vpack.c.bf16 %v356, %v355
        %v447 = vpack.c.bf16 %v358, %v357
        %v448 = vpack.c.bf16 %v360, %v359
        %v449 = vpack.c.bf16 %v362, %v361
        %v450 = vpack.c.bf16 %v364, %v363
        %v451 = vpack.c.bf16 %v366, %v365
        %v452 = vpack.c.bf16 %v368, %v367
        %v453 = vpack.c.bf16 %v370, %v369
        %v454 = vpack.c.bf16 %v372, %v371
        %v455 = vpack.c.bf16 %v374, %v373
        %v456 = vpack.c.bf16 %v376, %v375
        %v457 = vpack.c.bf16 %v378, %v377
        %v458 = vpack.c.bf16 %v380, %v379
        %v459 = vpack.c.bf16 %v382, %v381
        %v460 = vpack.c.bf16 %v384, %v383
        %v461 = vpack.c.bf16 %v386, %v385
        %v462 = vpack.c.bf16 %v388, %v387
        %v463 = vpack.c.bf16 %v390, %v389
        %v464 = vpack.c.bf16 %v392, %v391
        %v465 = vpack.c.bf16 %v394, %v393
        %v466 = vpack.c.bf16 %v396, %v395
        %v467 = vpack.c.bf16 %v398, %v397
        %v468 = vpack.c.bf16 %v400, %v399
        %v469 = vpack.c.bf16 %v402, %v401
        %v470 = vpack.c.bf16 %v404, %v403
        %v471 = vpack.c.bf16 %v406, %v405
        %v472 = vpack.c.bf16 %v408, %v407
        %v473 = vld [vmem:[%s1] sm:$0xff]
        %v474 = vld [vmem:[%s1 + $0x8] sm:$0xff]
        %v475 = vld [vmem:[%s1 + $0x10] sm:$0xff]
        %v476 = vld [vmem:[%s1 + $0x18] sm:$0xff]
        %v477 = vld [vmem:[%s1 + $0x20] sm:$0xff]
        %v478 = vld [vmem:[%s1 + $0x28] sm:$0xff]
        %v479 = vld [vmem:[%s1 + $0x30] sm:$0xff]
        %v480 = vld [vmem:[%s1 + $0x38] sm:$0xff]
        %v481 = vld [vmem:[%s2] sm:$0xf]
        %v483 = vlaneseq
        %v484 = vshrl.u32 %v483, 7
        %v485 = vsub.s32 0, %v484
        %v486 = vrot.slane %v481, %v485
        %v487 = vlaneseq
        %v488 = vshrl.u32 %v487, 7
        %v489 = vsub.s32 1, %v488
        %v490 = vrot.slane %v481, %v489
        %v491 = vlaneseq
        %v492 = vshrl.u32 %v491, 7
        %v493 = vsub.s32 2, %v492
        %v494 = vrot.slane %v481, %v493
        %v495 = vlaneseq
        %v496 = vshrl.u32 %v495, 7
        %v497 = vsub.s32 3, %v496
        %v498 = vrot.slane %v481, %v497
        %v511 = vunpack.c.l.b16 %v473
        %v512 = vunpack.c.h.b16 %v473
        %v513 = vunpack.c.l.b16 %v474
        %v514 = vunpack.c.h.b16 %v474
        %v515 = vunpack.c.l.b16 %v475
        %v516 = vunpack.c.h.b16 %v475
        %v517 = vunpack.c.l.b16 %v476
        %v518 = vunpack.c.h.b16 %v476
        %v519 = vunpack.c.l.b16 %v477
        %v520 = vunpack.c.h.b16 %v477
        %v521 = vunpack.c.l.b16 %v478
        %v522 = vunpack.c.h.b16 %v478
        %v523 = vunpack.c.l.b16 %v479
        %v524 = vunpack.c.h.b16 %v479
        %v525 = vunpack.c.l.b16 %v480
        %v526 = vunpack.c.h.b16 %v480
        %v527 = vpack.c.b16 %v515, %v511
        %v528 = vpack.c.b16 %v516, %v512
        %v529 = vpack.c.b16 %v517, %v513
        %v530 = vpack.c.b16 %v518, %v514
        %v531 = vpack.c.b16 %v523, %v519
        %v532 = vpack.c.b16 %v524, %v520
        %v533 = vpack.c.b16 %v525, %v521
        %v534 = vpack.c.b16 %v526, %v522
        %vm543 = vcmask 261120
        %v545 = vsel %vm543, %v409, 0
        %v548 = vsel %vm543, %v410, 0
        %v551 = vsel %vm543, %v411, 0
        %v554 = vsel %vm543, %v412, 0
        %v557 = vsel %vm543, %v413, 0
        %v560 = vsel %vm543, %v414, 0
        %v563 = vsel %vm543, %v415, 0
        %v566 = vsel %vm543, %v416, 0
        %v569 = vsel %vm543, %v417, 0
        %v572 = vsel %vm543, %v418, 0
        %v575 = vsel %vm543, %v419, 0
        %v578 = vsel %vm543, %v420, 0
        %v581 = vsel %vm543, %v421, 0
        %v584 = vsel %vm543, %v422, 0
        %v587 = vsel %vm543, %v423, 0
        %v590 = vsel %vm543, %v424, 0
        %v593 = vsel %vm543, %v425, 0
        %v596 = vsel %vm543, %v426, 0
        %v599 = vsel %vm543, %v427, 0
        %v602 = vsel %vm543, %v428, 0
        %v605 = vsel %vm543, %v429, 0
        %v608 = vsel %vm543, %v430, 0
        %v611 = vsel %vm543, %v431, 0
        %v614 = vsel %vm543, %v432, 0
        %v617 = vsel %vm543, %v433, 0
        %v620 = vsel %vm543, %v434, 0
        %v623 = vsel %vm543, %v435, 0
        %v626 = vsel %vm543, %v436, 0
        %v629 = vsel %vm543, %v437, 0
        %v632 = vsel %vm543, %v438, 0
        %v635 = vsel %vm543, %v439, 0
        %v638 = vsel %vm543, %v440, 0
        %v641 = vsel %vm543, %v441, 0
        %v644 = vsel %vm543, %v442, 0
        %v647 = vsel %vm543, %v443, 0
        %v650 = vsel %vm543, %v444, 0
        %v653 = vsel %vm543, %v445, 0
        %v656 = vsel %vm543, %v446, 0
        %v659 = vsel %vm543, %v447, 0
        %v662 = vsel %vm543, %v448, 0
        %v665 = vsel %vm543, %v449, 0
        %v668 = vsel %vm543, %v450, 0
        %v671 = vsel %vm543, %v451, 0
        %v674 = vsel %vm543, %v452, 0
        %v677 = vsel %vm543, %v453, 0
        %v680 = vsel %vm543, %v454, 0
        %v683 = vsel %vm543, %v455, 0
        %v686 = vsel %vm543, %v456, 0
        %v689 = vsel %vm543, %v457, 0
        %v692 = vsel %vm543, %v458, 0
        %v695 = vsel %vm543, %v459, 0
        %v698 = vsel %vm543, %v460, 0
        %v701 = vsel %vm543, %v461, 0
        %v704 = vsel %vm543, %v462, 0
        %v707 = vsel %vm543, %v463, 0
        %v710 = vsel %vm543, %v464, 0
        %v713 = vsel %vm543, %v465, 0
        %v716 = vsel %vm543, %v466, 0
        %v719 = vsel %vm543, %v467, 0
        %v722 = vsel %vm543, %v468, 0
        %v725 = vsel %vm543, %v469, 0
        %v728 = vsel %vm543, %v470, 0
        %v731 = vsel %vm543, %v471, 0
        %v734 = vsel %vm543, %v472, 0
        %736 = vmatprep.subr.bf16.mxu0 0
        %737 = vmatpush1.bf16.msra.mxu0 0
        %738 = vmatprep.subr.bf16.mxu0 0
        %739 = vmatpush1.bf16.msra.mxu0 0
        %740 = vmatprep.subr.bf16.mxu0 0
        %741 = vmatpush1.bf16.msra.mxu0 0
        %742 = vmatprep.subr.bf16.mxu0 0
        %743 = vmatpush1.bf16.msra.mxu0 0
        %744 = vmatprep.subr.bf16.mxu0 0
        %745 = vmatpush1.bf16.msra.mxu0 0
        %746 = vmatprep.subr.bf16.mxu0 0
        %747 = vmatpush1.bf16.msra.mxu0 0
        %748 = vmatprep.subr.bf16.mxu0 %v532
        %749 = vmatpush1.bf16.msra.mxu0 %v531
        %750 = vmatprep.subr.bf16.mxu0 %v528
        %751 = vmatpush1.bf16.msra.mxu0 %v527
        %752 = vmatprep.subr.bf16.mxu0 0
        %753 = vmatpush2.bf16.msra.mxu0 0
        %754 = vmatprep.subr.bf16.mxu0 0
        %755 = vmatpush2.bf16.msra.mxu0 0
        %756 = vmatprep.subr.bf16.mxu0 0
        %757 = vmatpush2.bf16.msra.mxu0 0
        %758 = vmatprep.subr.bf16.mxu0 0
        %759 = vmatpush2.bf16.msra.mxu0 0
        %760 = vmatprep.subr.bf16.mxu0 0
        %761 = vmatpush2.bf16.msra.mxu0 0
        %762 = vmatprep.subr.bf16.mxu0 0
        %763 = vmatpush2.bf16.msra.mxu0 0
        %764 = vmatprep.subr.bf16.mxu0 0
        %765 = vmatpush2.bf16.msra.mxu0 0
        %766 = vmatprep.subr.bf16.mxu0 0
        %767 = vmatpush2.bf16.msra.mxu0 0
        %768 = vmatprep.mubr.bf16.mxu0 0
        %769 = vmatmul.mubr.bf16.gmra.mxu0 %v545
        %v770 = vpop.f32.mrf.mxu0
        %v771 = vadd.f32 %v486, %v770
        %v772 = vpop.f32.mrf.mxu0
        %v773 = vadd.f32 %v490, %v772
        %v774 = vpop.f32.mrf.mxu0
        %v775 = vadd.f32 %v486, %v774
        %v776 = vpop.f32.mrf.mxu0
        %v777 = vadd.f32 %v490, %v776
        %778 = vmatprep.mubr.bf16.mxu0 0
        %779 = vmatmul.mubr.bf16.gmra.mxu0 %v548
        %v780 = vpop.f32.mrf.mxu0
        %v781 = vadd.f32 %v486, %v780
        %v782 = vpop.f32.mrf.mxu0
        %v783 = vadd.f32 %v490, %v782
        %v784 = vpop.f32.mrf.mxu0
        %v785 = vadd.f32 %v486, %v784
        %v786 = vpop.f32.mrf.mxu0
        %v787 = vadd.f32 %v490, %v786
        %788 = vmatprep.mubr.bf16.mxu0 0
        %789 = vmatmul.mubr.bf16.gmra.mxu0 %v551
        %v790 = vpop.f32.mrf.mxu0
        %v791 = vadd.f32 %v486, %v790
        %v792 = vpop.f32.mrf.mxu0
        %v793 = vadd.f32 %v490, %v792
        %v794 = vpop.f32.mrf.mxu0
        %v795 = vadd.f32 %v486, %v794
        %v796 = vpop.f32.mrf.mxu0
        %v797 = vadd.f32 %v490, %v796
        %798 = vmatprep.mubr.bf16.mxu0 0
        %799 = vmatmul.mubr.bf16.gmra.mxu0 %v554
        %v800 = vpop.f32.mrf.mxu0
        %v801 = vadd.f32 %v486, %v800
        %v802 = vpop.f32.mrf.mxu0
        %v803 = vadd.f32 %v490, %v802
        %v804 = vpop.f32.mrf.mxu0
        %v805 = vadd.f32 %v486, %v804
        %v806 = vpop.f32.mrf.mxu0
        %v807 = vadd.f32 %v490, %v806
        %808 = vmatprep.mubr.bf16.mxu0 0
        %809 = vmatmul.mubr.bf16.gmra.mxu0 %v557
        %v810 = vpop.f32.mrf.mxu0
        %v811 = vadd.f32 %v486, %v810
        %v812 = vpop.f32.mrf.mxu0
        %v813 = vadd.f32 %v490, %v812
        %v814 = vpop.f32.mrf.mxu0
        %v815 = vadd.f32 %v486, %v814
        %v816 = vpop.f32.mrf.mxu0
        %v817 = vadd.f32 %v490, %v816
        %818 = vmatprep.mubr.bf16.mxu0 0
        %819 = vmatmul.mubr.bf16.gmra.mxu0 %v560
        %v820 = vpop.f32.mrf.mxu0
        %v821 = vadd.f32 %v486, %v820
        %v822 = vpop.f32.mrf.mxu0
        %v823 = vadd.f32 %v490, %v822
        %v824 = vpop.f32.mrf.mxu0
        %v825 = vadd.f32 %v486, %v824
        %v826 = vpop.f32.mrf.mxu0
        %v827 = vadd.f32 %v490, %v826
        %828 = vmatprep.mubr.bf16.mxu0 0
        %829 = vmatmul.mubr.bf16.gmra.mxu0 %v563
        %v830 = vpop.f32.mrf.mxu0
        %v831 = vadd.f32 %v486, %v830
        %v832 = vpop.f32.mrf.mxu0
        %v833 = vadd.f32 %v490, %v832
        %v834 = vpop.f32.mrf.mxu0
        %v835 = vadd.f32 %v486, %v834
        %v836 = vpop.f32.mrf.mxu0
        %v837 = vadd.f32 %v490, %v836
        %838 = vmatprep.mubr.bf16.mxu0 0
        %839 = vmatmul.mubr.bf16.gmra.mxu0 %v566
        %v840 = vpop.f32.mrf.mxu0
        %v841 = vadd.f32 %v486, %v840
        %v842 = vpop.f32.mrf.mxu0
        %v843 = vadd.f32 %v490, %v842
        %v844 = vpop.f32.mrf.mxu0
        %v845 = vadd.f32 %v486, %v844
        %v846 = vpop.f32.mrf.mxu0
        %v847 = vadd.f32 %v490, %v846
        %848 = vmatprep.mubr.bf16.mxu0 0
        %849 = vmatmul.mubr.bf16.gmra.mxu0 %v569
        %v850 = vpop.f32.mrf.mxu0
        %v851 = vadd.f32 %v486, %v850
        %v852 = vpop.f32.mrf.mxu0
        %v853 = vadd.f32 %v490, %v852
        %v854 = vpop.f32.mrf.mxu0
        %v855 = vadd.f32 %v486, %v854
        %v856 = vpop.f32.mrf.mxu0
        %v857 = vadd.f32 %v490, %v856
        %858 = vmatprep.mubr.bf16.mxu0 0
        %859 = vmatmul.mubr.bf16.gmra.mxu0 %v572
        %v860 = vpop.f32.mrf.mxu0
        %v861 = vadd.f32 %v486, %v860
        %v862 = vpop.f32.mrf.mxu0
        %v863 = vadd.f32 %v490, %v862
        %v864 = vpop.f32.mrf.mxu0
        %v865 = vadd.f32 %v486, %v864
        %v866 = vpop.f32.mrf.mxu0
        %v867 = vadd.f32 %v490, %v866
        %868 = vmatprep.mubr.bf16.mxu0 0
        %869 = vmatmul.mubr.bf16.gmra.mxu0 %v575
        %v870 = vpop.f32.mrf.mxu0
        %v871 = vadd.f32 %v486, %v870
        %v872 = vpop.f32.mrf.mxu0
        %v873 = vadd.f32 %v490, %v872
        %v874 = vpop.f32.mrf.mxu0
        %v875 = vadd.f32 %v486, %v874
        %v876 = vpop.f32.mrf.mxu0
        %v877 = vadd.f32 %v490, %v876
        %878 = vmatprep.mubr.bf16.mxu0 0
        %879 = vmatmul.mubr.bf16.gmra.mxu0 %v578
        %v880 = vpop.f32.mrf.mxu0
        %v881 = vadd.f32 %v486, %v880
        %v882 = vpop.f32.mrf.mxu0
        %v883 = vadd.f32 %v490, %v882
        %v884 = vpop.f32.mrf.mxu0
        %v885 = vadd.f32 %v486, %v884
        %v886 = vpop.f32.mrf.mxu0
        %v887 = vadd.f32 %v490, %v886
        %888 = vmatprep.mubr.bf16.mxu0 0
        %889 = vmatmul.mubr.bf16.gmra.mxu0 %v581
        %v890 = vpop.f32.mrf.mxu0
        %v891 = vadd.f32 %v486, %v890
        %v892 = vpop.f32.mrf.mxu0
        %v893 = vadd.f32 %v490, %v892
        %v894 = vpop.f32.mrf.mxu0
        %v895 = vadd.f32 %v486, %v894
        %v896 = vpop.f32.mrf.mxu0
        %v897 = vadd.f32 %v490, %v896
        %898 = vmatprep.mubr.bf16.mxu0 0
        %899 = vmatmul.mubr.bf16.gmra.mxu0 %v584
        %v900 = vpop.f32.mrf.mxu0
        %v901 = vadd.f32 %v486, %v900
        %v902 = vpop.f32.mrf.mxu0
        %v903 = vadd.f32 %v490, %v902
        %v904 = vpop.f32.mrf.mxu0
        %v905 = vadd.f32 %v486, %v904
        %v906 = vpop.f32.mrf.mxu0
        %v907 = vadd.f32 %v490, %v906
        %908 = vmatprep.mubr.bf16.mxu0 0
        %909 = vmatmul.mubr.bf16.gmra.mxu0 %v587
        %v910 = vpop.f32.mrf.mxu0
        %v911 = vadd.f32 %v486, %v910
        %v912 = vpop.f32.mrf.mxu0
        %v913 = vadd.f32 %v490, %v912
        %v914 = vpop.f32.mrf.mxu0
        %v915 = vadd.f32 %v486, %v914
        %v916 = vpop.f32.mrf.mxu0
        %v917 = vadd.f32 %v490, %v916
        %918 = vmatprep.mubr.bf16.mxu0 0
        %919 = vmatmul.mubr.bf16.gmra.mxu0 %v590
        %v920 = vpop.f32.mrf.mxu0
        %v921 = vadd.f32 %v486, %v920
        %v922 = vpop.f32.mrf.mxu0
        %v923 = vadd.f32 %v490, %v922
        %v924 = vpop.f32.mrf.mxu0
        %v925 = vadd.f32 %v486, %v924
        %v926 = vpop.f32.mrf.mxu0
        %v927 = vadd.f32 %v490, %v926
        %928 = vmatprep.mubr.bf16.mxu0 0
        %929 = vmatmul.mubr.bf16.gmra.mxu0 %v593
        %v930 = vpop.f32.mrf.mxu0
        %v931 = vadd.f32 %v486, %v930
        %v932 = vpop.f32.mrf.mxu0
        %v933 = vadd.f32 %v490, %v932
        %v934 = vpop.f32.mrf.mxu0
        %v935 = vadd.f32 %v486, %v934
        %v936 = vpop.f32.mrf.mxu0
        %v937 = vadd.f32 %v490, %v936
        %938 = vmatprep.mubr.bf16.mxu0 0
        %939 = vmatmul.mubr.bf16.gmra.mxu0 %v596
        %v940 = vpop.f32.mrf.mxu0
        %v941 = vadd.f32 %v486, %v940
        %v942 = vpop.f32.mrf.mxu0
        %v943 = vadd.f32 %v490, %v942
        %v944 = vpop.f32.mrf.mxu0
        %v945 = vadd.f32 %v486, %v944
        %v946 = vpop.f32.mrf.mxu0
        %v947 = vadd.f32 %v490, %v946
        %948 = vmatprep.mubr.bf16.mxu0 0
        %949 = vmatmul.mubr.bf16.gmra.mxu0 %v599
        %v950 = vpop.f32.mrf.mxu0
        %v951 = vadd.f32 %v486, %v950
        %v952 = vpop.f32.mrf.mxu0
        %v953 = vadd.f32 %v490, %v952
        %v954 = vpop.f32.mrf.mxu0
        %v955 = vadd.f32 %v486, %v954
        %v956 = vpop.f32.mrf.mxu0
        %v957 = vadd.f32 %v490, %v956
        %958 = vmatprep.mubr.bf16.mxu0 0
        %959 = vmatmul.mubr.bf16.gmra.mxu0 %v602
        %v960 = vpop.f32.mrf.mxu0
        %v961 = vadd.f32 %v486, %v960
        %v962 = vpop.f32.mrf.mxu0
        %v963 = vadd.f32 %v490, %v962
        %v964 = vpop.f32.mrf.mxu0
        %v965 = vadd.f32 %v486, %v964
        %v966 = vpop.f32.mrf.mxu0
        %v967 = vadd.f32 %v490, %v966
        %968 = vmatprep.mubr.bf16.mxu0 0
        %969 = vmatmul.mubr.bf16.gmra.mxu0 %v605
        %v970 = vpop.f32.mrf.mxu0
        %v971 = vadd.f32 %v486, %v970
        %v972 = vpop.f32.mrf.mxu0
        %v973 = vadd.f32 %v490, %v972
        %v974 = vpop.f32.mrf.mxu0
        %v975 = vadd.f32 %v486, %v974
        %v976 = vpop.f32.mrf.mxu0
        %v977 = vadd.f32 %v490, %v976
        %978 = vmatprep.mubr.bf16.mxu0 0
        %979 = vmatmul.mubr.bf16.gmra.mxu0 %v608
        %v980 = vpop.f32.mrf.mxu0
        %v981 = vadd.f32 %v486, %v980
        %v982 = vpop.f32.mrf.mxu0
        %v983 = vadd.f32 %v490, %v982
        %v984 = vpop.f32.mrf.mxu0
        %v985 = vadd.f32 %v486, %v984
        %v986 = vpop.f32.mrf.mxu0
        %v987 = vadd.f32 %v490, %v986
        %988 = vmatprep.mubr.bf16.mxu0 0
        %989 = vmatmul.mubr.bf16.gmra.mxu0 %v611
        %v990 = vpop.f32.mrf.mxu0
        %v991 = vadd.f32 %v486, %v990
        %v992 = vpop.f32.mrf.mxu0
        %v993 = vadd.f32 %v490, %v992
        %v994 = vpop.f32.mrf.mxu0
        %v995 = vadd.f32 %v486, %v994
        %v996 = vpop.f32.mrf.mxu0
        %v997 = vadd.f32 %v490, %v996
        %998 = vmatprep.mubr.bf16.mxu0 0
        %999 = vmatmul.mubr.bf16.gmra.mxu0 %v614
        %v1000 = vpop.f32.mrf.mxu0
        %v1001 = vadd.f32 %v486, %v1000
        %v1002 = vpop.f32.mrf.mxu0
        %v1003 = vadd.f32 %v490, %v1002
        %v1004 = vpop.f32.mrf.mxu0
        %v1005 = vadd.f32 %v486, %v1004
        %v1006 = vpop.f32.mrf.mxu0
        %v1007 = vadd.f32 %v490, %v1006
        %1008 = vmatprep.mubr.bf16.mxu0 0
        %1009 = vmatmul.mubr.bf16.gmra.mxu0 %v617
        %v1010 = vpop.f32.mrf.mxu0
        %v1011 = vadd.f32 %v486, %v1010
        %v1012 = vpop.f32.mrf.mxu0
        %v1013 = vadd.f32 %v490, %v1012
        %v1014 = vpop.f32.mrf.mxu0
        %v1015 = vadd.f32 %v486, %v1014
        %v1016 = vpop.f32.mrf.mxu0
        %v1017 = vadd.f32 %v490, %v1016
        %1018 = vmatprep.mubr.bf16.mxu0 0
        %1019 = vmatmul.mubr.bf16.gmra.mxu0 %v620
        %v1020 = vpop.f32.mrf.mxu0
        %v1021 = vadd.f32 %v486, %v1020
        %v1022 = vpop.f32.mrf.mxu0
        %v1023 = vadd.f32 %v490, %v1022
        %v1024 = vpop.f32.mrf.mxu0
        %v1025 = vadd.f32 %v486, %v1024
        %v1026 = vpop.f32.mrf.mxu0
        %v1027 = vadd.f32 %v490, %v1026
        %1028 = vmatprep.mubr.bf16.mxu0 0
        %1029 = vmatmul.mubr.bf16.gmra.mxu0 %v623
        %v1030 = vpop.f32.mrf.mxu0
        %v1031 = vadd.f32 %v486, %v1030
        %v1032 = vpop.f32.mrf.mxu0
        %v1033 = vadd.f32 %v490, %v1032
        %v1034 = vpop.f32.mrf.mxu0
        %v1035 = vadd.f32 %v486, %v1034
        %v1036 = vpop.f32.mrf.mxu0
        %v1037 = vadd.f32 %v490, %v1036
        %1038 = vmatprep.mubr.bf16.mxu0 0
        %1039 = vmatmul.mubr.bf16.gmra.mxu0 %v626
        %v1040 = vpop.f32.mrf.mxu0
        %v1041 = vadd.f32 %v486, %v1040
        %v1042 = vpop.f32.mrf.mxu0
        %v1043 = vadd.f32 %v490, %v1042
        %v1044 = vpop.f32.mrf.mxu0
        %v1045 = vadd.f32 %v486, %v1044
        %v1046 = vpop.f32.mrf.mxu0
        %v1047 = vadd.f32 %v490, %v1046
        %1048 = vmatprep.mubr.bf16.mxu0 0
        %1049 = vmatmul.mubr.bf16.gmra.mxu0 %v629
        %v1050 = vpop.f32.mrf.mxu0
        %v1051 = vadd.f32 %v486, %v1050
        %v1052 = vpop.f32.mrf.mxu0
        %v1053 = vadd.f32 %v490, %v1052
        %v1054 = vpop.f32.mrf.mxu0
        %v1055 = vadd.f32 %v486, %v1054
        %v1056 = vpop.f32.mrf.mxu0
        %v1057 = vadd.f32 %v490, %v1056
        %1058 = vmatprep.mubr.bf16.mxu0 0
        %1059 = vmatmul.mubr.bf16.gmra.mxu0 %v632
        %v1060 = vpop.f32.mrf.mxu0
        %v1061 = vadd.f32 %v486, %v1060
        %v1062 = vpop.f32.mrf.mxu0
        %v1063 = vadd.f32 %v490, %v1062
        %v1064 = vpop.f32.mrf.mxu0
        %v1065 = vadd.f32 %v486, %v1064
        %v1066 = vpop.f32.mrf.mxu0
        %v1067 = vadd.f32 %v490, %v1066
        %1068 = vmatprep.mubr.bf16.mxu0 0
        %1069 = vmatmul.mubr.bf16.gmra.mxu0 %v635
        %v1070 = vpop.f32.mrf.mxu0
        %v1071 = vadd.f32 %v486, %v1070
        %v1072 = vpop.f32.mrf.mxu0
        %v1073 = vadd.f32 %v490, %v1072
        %v1074 = vpop.f32.mrf.mxu0
        %v1075 = vadd.f32 %v486, %v1074
        %v1076 = vpop.f32.mrf.mxu0
        %v1077 = vadd.f32 %v490, %v1076
        %1078 = vmatprep.mubr.bf16.mxu0 0
        %1079 = vmatmul.mubr.bf16.gmra.mxu0 %v638
        %v1080 = vpop.f32.mrf.mxu0
        %v1081 = vadd.f32 %v486, %v1080
        %v1082 = vpop.f32.mrf.mxu0
        %v1083 = vadd.f32 %v490, %v1082
        %v1084 = vpop.f32.mrf.mxu0
        %v1085 = vadd.f32 %v486, %v1084
        %v1086 = vpop.f32.mrf.mxu0
        %v1087 = vadd.f32 %v490, %v1086
        %1088 = vmatprep.mubr.bf16.mxu0 0
        %1089 = vmatmul.mubr.bf16.gmra.mxu0 %v641
        %v1090 = vpop.f32.mrf.mxu0
        %v1091 = vadd.f32 %v486, %v1090
        %v1092 = vpop.f32.mrf.mxu0
        %v1093 = vadd.f32 %v490, %v1092
        %v1094 = vpop.f32.mrf.mxu0
        %v1095 = vadd.f32 %v486, %v1094
        %v1096 = vpop.f32.mrf.mxu0
        %v1097 = vadd.f32 %v490, %v1096
        %1098 = vmatprep.mubr.bf16.mxu0 0
        %1099 = vmatmul.mubr.bf16.gmra.mxu0 %v644
        %v1100 = vpop.f32.mrf.mxu0
        %v1101 = vadd.f32 %v486, %v1100
        %v1102 = vpop.f32.mrf.mxu0
        %v1103 = vadd.f32 %v490, %v1102
        %v1104 = vpop.f32.mrf.mxu0
        %v1105 = vadd.f32 %v486, %v1104
        %v1106 = vpop.f32.mrf.mxu0
        %v1107 = vadd.f32 %v490, %v1106
        %1108 = vmatprep.mubr.bf16.mxu0 0
        %1109 = vmatmul.mubr.bf16.gmra.mxu0 %v647
        %v1110 = vpop.f32.mrf.mxu0
        %v1111 = vadd.f32 %v486, %v1110
        %v1112 = vpop.f32.mrf.mxu0
        %v1113 = vadd.f32 %v490, %v1112
        %v1114 = vpop.f32.mrf.mxu0
        %v1115 = vadd.f32 %v486, %v1114
        %v1116 = vpop.f32.mrf.mxu0
        %v1117 = vadd.f32 %v490, %v1116
        %1118 = vmatprep.mubr.bf16.mxu0 0
        %1119 = vmatmul.mubr.bf16.gmra.mxu0 %v650
        %v1120 = vpop.f32.mrf.mxu0
        %v1121 = vadd.f32 %v486, %v1120
        %v1122 = vpop.f32.mrf.mxu0
        %v1123 = vadd.f32 %v490, %v1122
        %v1124 = vpop.f32.mrf.mxu0
        %v1125 = vadd.f32 %v486, %v1124
        %v1126 = vpop.f32.mrf.mxu0
        %v1127 = vadd.f32 %v490, %v1126
        %1128 = vmatprep.mubr.bf16.mxu0 0
        %1129 = vmatmul.mubr.bf16.gmra.mxu0 %v653
        %v1130 = vpop.f32.mrf.mxu0
        %v1131 = vadd.f32 %v486, %v1130
        %v1132 = vpop.f32.mrf.mxu0
        %v1133 = vadd.f32 %v490, %v1132
        %v1134 = vpop.f32.mrf.mxu0
        %v1135 = vadd.f32 %v486, %v1134
        %v1136 = vpop.f32.mrf.mxu0
        %v1137 = vadd.f32 %v490, %v1136
        %1138 = vmatprep.mubr.bf16.mxu0 0
        %1139 = vmatmul.mubr.bf16.gmra.mxu0 %v656
        %v1140 = vpop.f32.mrf.mxu0
        %v1141 = vadd.f32 %v486, %v1140
        %v1142 = vpop.f32.mrf.mxu0
        %v1143 = vadd.f32 %v490, %v1142
        %v1144 = vpop.f32.mrf.mxu0
        %v1145 = vadd.f32 %v486, %v1144
        %v1146 = vpop.f32.mrf.mxu0
        %v1147 = vadd.f32 %v490, %v1146
        %1148 = vmatprep.mubr.bf16.mxu0 0
        %1149 = vmatmul.mubr.bf16.gmra.mxu0 %v659
        %v1150 = vpop.f32.mrf.mxu0
        %v1151 = vadd.f32 %v486, %v1150
        %v1152 = vpop.f32.mrf.mxu0
        %v1153 = vadd.f32 %v490, %v1152
        %v1154 = vpop.f32.mrf.mxu0
        %v1155 = vadd.f32 %v486, %v1154
        %v1156 = vpop.f32.mrf.mxu0
        %v1157 = vadd.f32 %v490, %v1156
        %1158 = vmatprep.mubr.bf16.mxu0 0
        %1159 = vmatmul.mubr.bf16.gmra.mxu0 %v662
        %v1160 = vpop.f32.mrf.mxu0
        %v1161 = vadd.f32 %v486, %v1160
        %v1162 = vpop.f32.mrf.mxu0
        %v1163 = vadd.f32 %v490, %v1162
        %v1164 = vpop.f32.mrf.mxu0
        %v1165 = vadd.f32 %v486, %v1164
        %v1166 = vpop.f32.mrf.mxu0
        %v1167 = vadd.f32 %v490, %v1166
        %1168 = vmatprep.mubr.bf16.mxu0 0
        %1169 = vmatmul.mubr.bf16.gmra.mxu0 %v665
        %v1170 = vpop.f32.mrf.mxu0
        %v1171 = vadd.f32 %v486, %v1170
        %v1172 = vpop.f32.mrf.mxu0
        %v1173 = vadd.f32 %v490, %v1172
        %v1174 = vpop.f32.mrf.mxu0
        %v1175 = vadd.f32 %v486, %v1174
        %v1176 = vpop.f32.mrf.mxu0
        %v1177 = vadd.f32 %v490, %v1176
        %1178 = vmatprep.mubr.bf16.mxu0 0
        %1179 = vmatmul.mubr.bf16.gmra.mxu0 %v668
        %v1180 = vpop.f32.mrf.mxu0
        %v1181 = vadd.f32 %v486, %v1180
        %v1182 = vpop.f32.mrf.mxu0
        %v1183 = vadd.f32 %v490, %v1182
        %v1184 = vpop.f32.mrf.mxu0
        %v1185 = vadd.f32 %v486, %v1184
        %v1186 = vpop.f32.mrf.mxu0
        %v1187 = vadd.f32 %v490, %v1186
        %1188 = vmatprep.mubr.bf16.mxu0 0
        %1189 = vmatmul.mubr.bf16.gmra.mxu0 %v671
        %v1190 = vpop.f32.mrf.mxu0
        %v1191 = vadd.f32 %v486, %v1190
        %v1192 = vpop.f32.mrf.mxu0
        %v1193 = vadd.f32 %v490, %v1192
        %v1194 = vpop.f32.mrf.mxu0
        %v1195 = vadd.f32 %v486, %v1194
        %v1196 = vpop.f32.mrf.mxu0
        %v1197 = vadd.f32 %v490, %v1196
        %1198 = vmatprep.mubr.bf16.mxu0 0
        %1199 = vmatmul.mubr.bf16.gmra.mxu0 %v674
        %v1200 = vpop.f32.mrf.mxu0
        %v1201 = vadd.f32 %v486, %v1200
        %v1202 = vpop.f32.mrf.mxu0
        %v1203 = vadd.f32 %v490, %v1202
        %v1204 = vpop.f32.mrf.mxu0
        %v1205 = vadd.f32 %v486, %v1204
        %v1206 = vpop.f32.mrf.mxu0
        %v1207 = vadd.f32 %v490, %v1206
        %1208 = vmatprep.mubr.bf16.mxu0 0
        %1209 = vmatmul.mubr.bf16.gmra.mxu0 %v677
        %v1210 = vpop.f32.mrf.mxu0
        %v1211 = vadd.f32 %v486, %v1210
        %v1212 = vpop.f32.mrf.mxu0
        %v1213 = vadd.f32 %v490, %v1212
        %v1214 = vpop.f32.mrf.mxu0
        %v1215 = vadd.f32 %v486, %v1214
        %v1216 = vpop.f32.mrf.mxu0
        %v1217 = vadd.f32 %v490, %v1216
        %1218 = vmatprep.mubr.bf16.mxu0 0
        %1219 = vmatmul.mubr.bf16.gmra.mxu0 %v680
        %v1220 = vpop.f32.mrf.mxu0
        %v1221 = vadd.f32 %v486, %v1220
        %v1222 = vpop.f32.mrf.mxu0
        %v1223 = vadd.f32 %v490, %v1222
        %v1224 = vpop.f32.mrf.mxu0
        %v1225 = vadd.f32 %v486, %v1224
        %v1226 = vpop.f32.mrf.mxu0
        %v1227 = vadd.f32 %v490, %v1226
        %1228 = vmatprep.mubr.bf16.mxu0 0
        %1229 = vmatmul.mubr.bf16.gmra.mxu0 %v683
        %v1230 = vpop.f32.mrf.mxu0
        %v1231 = vadd.f32 %v486, %v1230
        %v1232 = vpop.f32.mrf.mxu0
        %v1233 = vadd.f32 %v490, %v1232
        %v1234 = vpop.f32.mrf.mxu0
        %v1235 = vadd.f32 %v486, %v1234
        %v1236 = vpop.f32.mrf.mxu0
        %v1237 = vadd.f32 %v490, %v1236
        %1238 = vmatprep.mubr.bf16.mxu0 0
        %1239 = vmatmul.mubr.bf16.gmra.mxu0 %v686
        %v1240 = vpop.f32.mrf.mxu0
        %v1241 = vadd.f32 %v486, %v1240
        %v1242 = vpop.f32.mrf.mxu0
        %v1243 = vadd.f32 %v490, %v1242
        %v1244 = vpop.f32.mrf.mxu0
        %v1245 = vadd.f32 %v486, %v1244
        %v1246 = vpop.f32.mrf.mxu0
        %v1247 = vadd.f32 %v490, %v1246
        %1248 = vmatprep.mubr.bf16.mxu0 0
        %1249 = vmatmul.mubr.bf16.gmra.mxu0 %v689
        %v1250 = vpop.f32.mrf.mxu0
        %v1251 = vadd.f32 %v486, %v1250
        %v1252 = vpop.f32.mrf.mxu0
        %v1253 = vadd.f32 %v490, %v1252
        %v1254 = vpop.f32.mrf.mxu0
        %v1255 = vadd.f32 %v486, %v1254
        %v1256 = vpop.f32.mrf.mxu0
        %v1257 = vadd.f32 %v490, %v1256
        %1258 = vmatprep.mubr.bf16.mxu0 0
        %1259 = vmatmul.mubr.bf16.gmra.mxu0 %v692
        %v1260 = vpop.f32.mrf.mxu0
        %v1261 = vadd.f32 %v486, %v1260
        %v1262 = vpop.f32.mrf.mxu0
        %v1263 = vadd.f32 %v490, %v1262
        %v1264 = vpop.f32.mrf.mxu0
        %v1265 = vadd.f32 %v486, %v1264
        %v1266 = vpop.f32.mrf.mxu0
        %v1267 = vadd.f32 %v490, %v1266
        %1268 = vmatprep.mubr.bf16.mxu0 0
        %1269 = vmatmul.mubr.bf16.gmra.mxu0 %v695
        %v1270 = vpop.f32.mrf.mxu0
        %v1271 = vadd.f32 %v486, %v1270
        %v1272 = vpop.f32.mrf.mxu0
        %v1273 = vadd.f32 %v490, %v1272
        %v1274 = vpop.f32.mrf.mxu0
        %v1275 = vadd.f32 %v486, %v1274
        %v1276 = vpop.f32.mrf.mxu0
        %v1277 = vadd.f32 %v490, %v1276
        %1278 = vmatprep.mubr.bf16.mxu0 0
        %1279 = vmatmul.mubr.bf16.gmra.mxu0 %v698
        %v1280 = vpop.f32.mrf.mxu0
        %v1281 = vadd.f32 %v486, %v1280
        %v1282 = vpop.f32.mrf.mxu0
        %v1283 = vadd.f32 %v490, %v1282
        %v1284 = vpop.f32.mrf.mxu0
        %v1285 = vadd.f32 %v486, %v1284
        %v1286 = vpop.f32.mrf.mxu0
        %v1287 = vadd.f32 %v490, %v1286
        %1288 = vmatprep.mubr.bf16.mxu0 0
        %1289 = vmatmul.mubr.bf16.gmra.mxu0 %v701
        %v1290 = vpop.f32.mrf.mxu0
        %v1291 = vadd.f32 %v486, %v1290
        %v1292 = vpop.f32.mrf.mxu0
        %v1293 = vadd.f32 %v490, %v1292
        %v1294 = vpop.f32.mrf.mxu0
        %v1295 = vadd.f32 %v486, %v1294
        %v1296 = vpop.f32.mrf.mxu0
        %v1297 = vadd.f32 %v490, %v1296
        %1298 = vmatprep.mubr.bf16.mxu0 0
        %1299 = vmatmul.mubr.bf16.gmra.mxu0 %v704
        %v1300 = vpop.f32.mrf.mxu0
        %v1301 = vadd.f32 %v486, %v1300
        %v1302 = vpop.f32.mrf.mxu0
        %v1303 = vadd.f32 %v490, %v1302
        %v1304 = vpop.f32.mrf.mxu0
        %v1305 = vadd.f32 %v486, %v1304
        %v1306 = vpop.f32.mrf.mxu0
        %v1307 = vadd.f32 %v490, %v1306
        %1308 = vmatprep.mubr.bf16.mxu0 0
        %1309 = vmatmul.mubr.bf16.gmra.mxu0 %v707
        %v1310 = vpop.f32.mrf.mxu0
        %v1311 = vadd.f32 %v486, %v1310
        %v1312 = vpop.f32.mrf.mxu0
        %v1313 = vadd.f32 %v490, %v1312
        %v1314 = vpop.f32.mrf.mxu0
        %v1315 = vadd.f32 %v486, %v1314
        %v1316 = vpop.f32.mrf.mxu0
        %v1317 = vadd.f32 %v490, %v1316
        %1318 = vmatprep.mubr.bf16.mxu0 0
        %1319 = vmatmul.mubr.bf16.gmra.mxu0 %v710
        %v1320 = vpop.f32.mrf.mxu0
        %v1321 = vadd.f32 %v486, %v1320
        %v1322 = vpop.f32.mrf.mxu0
        %v1323 = vadd.f32 %v490, %v1322
        %v1324 = vpop.f32.mrf.mxu0
        %v1325 = vadd.f32 %v486, %v1324
        %v1326 = vpop.f32.mrf.mxu0
        %v1327 = vadd.f32 %v490, %v1326
        %1328 = vmatprep.mubr.bf16.mxu0 0
        %1329 = vmatmul.mubr.bf16.gmra.mxu0 %v713
        %v1330 = vpop.f32.mrf.mxu0
        %v1331 = vadd.f32 %v486, %v1330
        %v1332 = vpop.f32.mrf.mxu0
        %v1333 = vadd.f32 %v490, %v1332
        %v1334 = vpop.f32.mrf.mxu0
        %v1335 = vadd.f32 %v486, %v1334
        %v1336 = vpop.f32.mrf.mxu0
        %v1337 = vadd.f32 %v490, %v1336
        %1338 = vmatprep.mubr.bf16.mxu0 0
        %1339 = vmatmul.mubr.bf16.gmra.mxu0 %v716
        %v1340 = vpop.f32.mrf.mxu0
        %v1341 = vadd.f32 %v486, %v1340
        %v1342 = vpop.f32.mrf.mxu0
        %v1343 = vadd.f32 %v490, %v1342
        %v1344 = vpop.f32.mrf.mxu0
        %v1345 = vadd.f32 %v486, %v1344
        %v1346 = vpop.f32.mrf.mxu0
        %v1347 = vadd.f32 %v490, %v1346
        %1348 = vmatprep.mubr.bf16.mxu0 0
        %1349 = vmatmul.mubr.bf16.gmra.mxu0 %v719
        %v1350 = vpop.f32.mrf.mxu0
        %v1351 = vadd.f32 %v486, %v1350
        %v1352 = vpop.f32.mrf.mxu0
        %v1353 = vadd.f32 %v490, %v1352
        %v1354 = vpop.f32.mrf.mxu0
        %v1355 = vadd.f32 %v486, %v1354
        %v1356 = vpop.f32.mrf.mxu0
        %v1357 = vadd.f32 %v490, %v1356
        %1358 = vmatprep.mubr.bf16.mxu0 0
        %1359 = vmatmul.mubr.bf16.gmra.mxu0 %v722
        %v1360 = vpop.f32.mrf.mxu0
        %v1361 = vadd.f32 %v486, %v1360
        %v1362 = vpop.f32.mrf.mxu0
        %v1363 = vadd.f32 %v490, %v1362
        %v1364 = vpop.f32.mrf.mxu0
        %v1365 = vadd.f32 %v486, %v1364
        %v1366 = vpop.f32.mrf.mxu0
        %v1367 = vadd.f32 %v490, %v1366
        %1368 = vmatprep.mubr.bf16.mxu0 0
        %1369 = vmatmul.mubr.bf16.gmra.mxu0 %v725
        %v1370 = vpop.f32.mrf.mxu0
        %v1371 = vadd.f32 %v486, %v1370
        %v1372 = vpop.f32.mrf.mxu0
        %v1373 = vadd.f32 %v490, %v1372
        %v1374 = vpop.f32.mrf.mxu0
        %v1375 = vadd.f32 %v486, %v1374
        %v1376 = vpop.f32.mrf.mxu0
        %v1377 = vadd.f32 %v490, %v1376
        %1378 = vmatprep.mubr.bf16.mxu0 0
        %1379 = vmatmul.mubr.bf16.gmra.mxu0 %v728
        %v1380 = vpop.f32.mrf.mxu0
        %v1381 = vadd.f32 %v486, %v1380
        %v1382 = vpop.f32.mrf.mxu0
        %v1383 = vadd.f32 %v490, %v1382
        %v1384 = vpop.f32.mrf.mxu0
        %v1385 = vadd.f32 %v486, %v1384
        %v1386 = vpop.f32.mrf.mxu0
        %v1387 = vadd.f32 %v490, %v1386
        %1388 = vmatprep.mubr.bf16.mxu0 0
        %1389 = vmatmul.mubr.bf16.gmra.mxu0 %v731
        %v1390 = vpop.f32.mrf.mxu0
        %v1391 = vadd.f32 %v486, %v1390
        %v1392 = vpop.f32.mrf.mxu0
        %v1393 = vadd.f32 %v490, %v1392
        %v1394 = vpop.f32.mrf.mxu0
        %v1395 = vadd.f32 %v486, %v1394
        %v1396 = vpop.f32.mrf.mxu0
        %v1397 = vadd.f32 %v490, %v1396
        %1398 = vmatprep.mubr.bf16.mxu0 0
        %1399 = vmatmul.mubr.bf16.gmra.mxu0 %v734
        %v1400 = vpop.f32.mrf.mxu0
        %v1401 = vadd.f32 %v486, %v1400
        %v1402 = vpop.f32.mrf.mxu0
        %v1403 = vadd.f32 %v490, %v1402
        %v1404 = vpop.f32.mrf.mxu0
        %v1405 = vadd.f32 %v486, %v1404
        %v1406 = vpop.f32.mrf.mxu0
        %v1407 = vadd.f32 %v490, %v1406
        %1408 = vdwg.mxu0
        %1409 = vmatprep.subr.bf16.mxu0 0
        %1410 = vmatpush1.bf16.msra.mxu0 0
        %1411 = vmatprep.subr.bf16.mxu0 0
        %1412 = vmatpush1.bf16.msra.mxu0 0
        %1413 = vmatprep.subr.bf16.mxu0 0
        %1414 = vmatpush1.bf16.msra.mxu0 0
        %1415 = vmatprep.subr.bf16.mxu0 0
        %1416 = vmatpush1.bf16.msra.mxu0 0
        %1417 = vmatprep.subr.bf16.mxu0 0
        %1418 = vmatpush1.bf16.msra.mxu0 0
        %1419 = vmatprep.subr.bf16.mxu0 0
        %1420 = vmatpush1.bf16.msra.mxu0 0
        %1421 = vmatprep.subr.bf16.mxu0 %v534
        %1422 = vmatpush1.bf16.msra.mxu0 %v533
        %1423 = vmatprep.subr.bf16.mxu0 %v530
        %1424 = vmatpush1.bf16.msra.mxu0 %v529
        %1425 = vmatprep.subr.bf16.mxu0 0
        %1426 = vmatpush2.bf16.msra.mxu0 0
        %1427 = vmatprep.subr.bf16.mxu0 0
        %1428 = vmatpush2.bf16.msra.mxu0 0
        %1429 = vmatprep.subr.bf16.mxu0 0
        %1430 = vmatpush2.bf16.msra.mxu0 0
        %1431 = vmatprep.subr.bf16.mxu0 0
        %1432 = vmatpush2.bf16.msra.mxu0 0
        %1433 = vmatprep.subr.bf16.mxu0 0
        %1434 = vmatpush2.bf16.msra.mxu0 0
        %1435 = vmatprep.subr.bf16.mxu0 0
        %1436 = vmatpush2.bf16.msra.mxu0 0
        %1437 = vmatprep.subr.bf16.mxu0 0
        %1438 = vmatpush2.bf16.msra.mxu0 0
        %1439 = vmatprep.subr.bf16.mxu0 0
        %1440 = vmatpush2.bf16.msra.mxu0 0
        %1441 = vmatprep.mubr.bf16.mxu0 0
        %1442 = vmatmul.mubr.bf16.gmra.mxu0 %v545
        %v1443 = vpop.f32.mrf.mxu0
        %v1444 = vadd.f32 %v494, %v1443
        %v1445 = vpop.f32.mrf.mxu0
        %v1446 = vadd.f32 %v498, %v1445
        %v1447 = vpop.f32.mrf.mxu0
        %v1448 = vadd.f32 %v494, %v1447
        %v1449 = vpop.f32.mrf.mxu0
        %v1450 = vadd.f32 %v498, %v1449
        %1451 = vmatprep.mubr.bf16.mxu0 0
        %1452 = vmatmul.mubr.bf16.gmra.mxu0 %v548
        %v1453 = vpop.f32.mrf.mxu0
        %v1454 = vadd.f32 %v494, %v1453
        %v1455 = vpop.f32.mrf.mxu0
        %v1456 = vadd.f32 %v498, %v1455
        %v1457 = vpop.f32.mrf.mxu0
        %v1458 = vadd.f32 %v494, %v1457
        %v1459 = vpop.f32.mrf.mxu0
        %v1460 = vadd.f32 %v498, %v1459
        %1461 = vmatprep.mubr.bf16.mxu0 0
        %1462 = vmatmul.mubr.bf16.gmra.mxu0 %v551
        %v1463 = vpop.f32.mrf.mxu0
        %v1464 = vadd.f32 %v494, %v1463
        %v1465 = vpop.f32.mrf.mxu0
        %v1466 = vadd.f32 %v498, %v1465
        %v1467 = vpop.f32.mrf.mxu0
        %v1468 = vadd.f32 %v494, %v1467
        %v1469 = vpop.f32.mrf.mxu0
        %v1470 = vadd.f32 %v498, %v1469
        %1471 = vmatprep.mubr.bf16.mxu0 0
        %1472 = vmatmul.mubr.bf16.gmra.mxu0 %v554
        %v1473 = vpop.f32.mrf.mxu0
        %v1474 = vadd.f32 %v494, %v1473
        %v1475 = vpop.f32.mrf.mxu0
        %v1476 = vadd.f32 %v498, %v1475
        %v1477 = vpop.f32.mrf.mxu0
        %v1478 = vadd.f32 %v494, %v1477
        %v1479 = vpop.f32.mrf.mxu0
        %v1480 = vadd.f32 %v498, %v1479
        %1481 = vmatprep.mubr.bf16.mxu0 0
        %1482 = vmatmul.mubr.bf16.gmra.mxu0 %v557
        %v1483 = vpop.f32.mrf.mxu0
        %v1484 = vadd.f32 %v494, %v1483
        %v1485 = vpop.f32.mrf.mxu0
        %v1486 = vadd.f32 %v498, %v1485
        %v1487 = vpop.f32.mrf.mxu0
        %v1488 = vadd.f32 %v494, %v1487
        %v1489 = vpop.f32.mrf.mxu0
        %v1490 = vadd.f32 %v498, %v1489
        %1491 = vmatprep.mubr.bf16.mxu0 0
        %1492 = vmatmul.mubr.bf16.gmra.mxu0 %v560
        %v1493 = vpop.f32.mrf.mxu0
        %v1494 = vadd.f32 %v494, %v1493
        %v1495 = vpop.f32.mrf.mxu0
        %v1496 = vadd.f32 %v498, %v1495
        %v1497 = vpop.f32.mrf.mxu0
        %v1498 = vadd.f32 %v494, %v1497
        %v1499 = vpop.f32.mrf.mxu0
        %v1500 = vadd.f32 %v498, %v1499
        %1501 = vmatprep.mubr.bf16.mxu0 0
        %1502 = vmatmul.mubr.bf16.gmra.mxu0 %v563
        %v1503 = vpop.f32.mrf.mxu0
        %v1504 = vadd.f32 %v494, %v1503
        %v1505 = vpop.f32.mrf.mxu0
        %v1506 = vadd.f32 %v498, %v1505
        %v1507 = vpop.f32.mrf.mxu0
        %v1508 = vadd.f32 %v494, %v1507
        %v1509 = vpop.f32.mrf.mxu0
        %v1510 = vadd.f32 %v498, %v1509
        %1511 = vmatprep.mubr.bf16.mxu0 0
        %1512 = vmatmul.mubr.bf16.gmra.mxu0 %v566
        %v1513 = vpop.f32.mrf.mxu0
        %v1514 = vadd.f32 %v494, %v1513
        %v1515 = vpop.f32.mrf.mxu0
        %v1516 = vadd.f32 %v498, %v1515
        %v1517 = vpop.f32.mrf.mxu0
        %v1518 = vadd.f32 %v494, %v1517
        %v1519 = vpop.f32.mrf.mxu0
        %v1520 = vadd.f32 %v498, %v1519
        %1521 = vmatprep.mubr.bf16.mxu0 0
        %1522 = vmatmul.mubr.bf16.gmra.mxu0 %v569
        %v1523 = vpop.f32.mrf.mxu0
        %v1524 = vadd.f32 %v494, %v1523
        %v1525 = vpop.f32.mrf.mxu0
        %v1526 = vadd.f32 %v498, %v1525
        %v1527 = vpop.f32.mrf.mxu0
        %v1528 = vadd.f32 %v494, %v1527
        %v1529 = vpop.f32.mrf.mxu0
        %v1530 = vadd.f32 %v498, %v1529
        %1531 = vmatprep.mubr.bf16.mxu0 0
        %1532 = vmatmul.mubr.bf16.gmra.mxu0 %v572
        %v1533 = vpop.f32.mrf.mxu0
        %v1534 = vadd.f32 %v494, %v1533
        %v1535 = vpop.f32.mrf.mxu0
        %v1536 = vadd.f32 %v498, %v1535
        %v1537 = vpop.f32.mrf.mxu0
        %v1538 = vadd.f32 %v494, %v1537
        %v1539 = vpop.f32.mrf.mxu0
        %v1540 = vadd.f32 %v498, %v1539
        %1541 = vmatprep.mubr.bf16.mxu0 0
        %1542 = vmatmul.mubr.bf16.gmra.mxu0 %v575
        %v1543 = vpop.f32.mrf.mxu0
        %v1544 = vadd.f32 %v494, %v1543
        %v1545 = vpop.f32.mrf.mxu0
        %v1546 = vadd.f32 %v498, %v1545
        %v1547 = vpop.f32.mrf.mxu0
        %v1548 = vadd.f32 %v494, %v1547
        %v1549 = vpop.f32.mrf.mxu0
        %v1550 = vadd.f32 %v498, %v1549
        %1551 = vmatprep.mubr.bf16.mxu0 0
        %1552 = vmatmul.mubr.bf16.gmra.mxu0 %v578
        %v1553 = vpop.f32.mrf.mxu0
        %v1554 = vadd.f32 %v494, %v1553
        %v1555 = vpop.f32.mrf.mxu0
        %v1556 = vadd.f32 %v498, %v1555
        %v1557 = vpop.f32.mrf.mxu0
        %v1558 = vadd.f32 %v494, %v1557
        %v1559 = vpop.f32.mrf.mxu0
        %v1560 = vadd.f32 %v498, %v1559
        %1561 = vmatprep.mubr.bf16.mxu0 0
        %1562 = vmatmul.mubr.bf16.gmra.mxu0 %v581
        %v1563 = vpop.f32.mrf.mxu0
        %v1564 = vadd.f32 %v494, %v1563
        %v1565 = vpop.f32.mrf.mxu0
        %v1566 = vadd.f32 %v498, %v1565
        %v1567 = vpop.f32.mrf.mxu0
        %v1568 = vadd.f32 %v494, %v1567
        %v1569 = vpop.f32.mrf.mxu0
        %v1570 = vadd.f32 %v498, %v1569
        %1571 = vmatprep.mubr.bf16.mxu0 0
        %1572 = vmatmul.mubr.bf16.gmra.mxu0 %v584
        %v1573 = vpop.f32.mrf.mxu0
        %v1574 = vadd.f32 %v494, %v1573
        %v1575 = vpop.f32.mrf.mxu0
        %v1576 = vadd.f32 %v498, %v1575
        %v1577 = vpop.f32.mrf.mxu0
        %v1578 = vadd.f32 %v494, %v1577
        %v1579 = vpop.f32.mrf.mxu0
        %v1580 = vadd.f32 %v498, %v1579
        %1581 = vmatprep.mubr.bf16.mxu0 0
        %1582 = vmatmul.mubr.bf16.gmra.mxu0 %v587
        %v1583 = vpop.f32.mrf.mxu0
        %v1584 = vadd.f32 %v494, %v1583
        %v1585 = vpop.f32.mrf.mxu0
        %v1586 = vadd.f32 %v498, %v1585
        %v1587 = vpop.f32.mrf.mxu0
        %v1588 = vadd.f32 %v494, %v1587
        %v1589 = vpop.f32.mrf.mxu0
        %v1590 = vadd.f32 %v498, %v1589
        %1591 = vmatprep.mubr.bf16.mxu0 0
        %1592 = vmatmul.mubr.bf16.gmra.mxu0 %v590
        %v1593 = vpop.f32.mrf.mxu0
        %v1594 = vadd.f32 %v494, %v1593
        %v1595 = vpop.f32.mrf.mxu0
        %v1596 = vadd.f32 %v498, %v1595
        %v1597 = vpop.f32.mrf.mxu0
        %v1598 = vadd.f32 %v494, %v1597
        %v1599 = vpop.f32.mrf.mxu0
        %v1600 = vadd.f32 %v498, %v1599
        %1601 = vmatprep.mubr.bf16.mxu0 0
        %1602 = vmatmul.mubr.bf16.gmra.mxu0 %v593
        %v1603 = vpop.f32.mrf.mxu0
        %v1604 = vadd.f32 %v494, %v1603
        %v1605 = vpop.f32.mrf.mxu0
        %v1606 = vadd.f32 %v498, %v1605
        %v1607 = vpop.f32.mrf.mxu0
        %v1608 = vadd.f32 %v494, %v1607
        %v1609 = vpop.f32.mrf.mxu0
        %v1610 = vadd.f32 %v498, %v1609
        %1611 = vmatprep.mubr.bf16.mxu0 0
        %1612 = vmatmul.mubr.bf16.gmra.mxu0 %v596
        %v1613 = vpop.f32.mrf.mxu0
        %v1614 = vadd.f32 %v494, %v1613
        %v1615 = vpop.f32.mrf.mxu0
        %v1616 = vadd.f32 %v498, %v1615
        %v1617 = vpop.f32.mrf.mxu0
        %v1618 = vadd.f32 %v494, %v1617
        %v1619 = vpop.f32.mrf.mxu0
        %v1620 = vadd.f32 %v498, %v1619
        %1621 = vmatprep.mubr.bf16.mxu0 0
        %1622 = vmatmul.mubr.bf16.gmra.mxu0 %v599
        %v1623 = vpop.f32.mrf.mxu0
        %v1624 = vadd.f32 %v494, %v1623
        %v1625 = vpop.f32.mrf.mxu0
        %v1626 = vadd.f32 %v498, %v1625
        %v1627 = vpop.f32.mrf.mxu0
        %v1628 = vadd.f32 %v494, %v1627
        %v1629 = vpop.f32.mrf.mxu0
        %v1630 = vadd.f32 %v498, %v1629
        %1631 = vmatprep.mubr.bf16.mxu0 0
        %1632 = vmatmul.mubr.bf16.gmra.mxu0 %v602
        %v1633 = vpop.f32.mrf.mxu0
        %v1634 = vadd.f32 %v494, %v1633
        %v1635 = vpop.f32.mrf.mxu0
        %v1636 = vadd.f32 %v498, %v1635
        %v1637 = vpop.f32.mrf.mxu0
        %v1638 = vadd.f32 %v494, %v1637
        %v1639 = vpop.f32.mrf.mxu0
        %v1640 = vadd.f32 %v498, %v1639
        %1641 = vmatprep.mubr.bf16.mxu0 0
        %1642 = vmatmul.mubr.bf16.gmra.mxu0 %v605
        %v1643 = vpop.f32.mrf.mxu0
        %v1644 = vadd.f32 %v494, %v1643
        %v1645 = vpop.f32.mrf.mxu0
        %v1646 = vadd.f32 %v498, %v1645
        %v1647 = vpop.f32.mrf.mxu0
        %v1648 = vadd.f32 %v494, %v1647
        %v1649 = vpop.f32.mrf.mxu0
        %v1650 = vadd.f32 %v498, %v1649
        %1651 = vmatprep.mubr.bf16.mxu0 0
        %1652 = vmatmul.mubr.bf16.gmra.mxu0 %v608
        %v1653 = vpop.f32.mrf.mxu0
        %v1654 = vadd.f32 %v494, %v1653
        %v1655 = vpop.f32.mrf.mxu0
        %v1656 = vadd.f32 %v498, %v1655
        %v1657 = vpop.f32.mrf.mxu0
        %v1658 = vadd.f32 %v494, %v1657
        %v1659 = vpop.f32.mrf.mxu0
        %v1660 = vadd.f32 %v498, %v1659
        %1661 = vmatprep.mubr.bf16.mxu0 0
        %1662 = vmatmul.mubr.bf16.gmra.mxu0 %v611
        %v1663 = vpop.f32.mrf.mxu0
        %v1664 = vadd.f32 %v494, %v1663
        %v1665 = vpop.f32.mrf.mxu0
        %v1666 = vadd.f32 %v498, %v1665
        %v1667 = vpop.f32.mrf.mxu0
        %v1668 = vadd.f32 %v494, %v1667
        %v1669 = vpop.f32.mrf.mxu0
        %v1670 = vadd.f32 %v498, %v1669
        %1671 = vmatprep.mubr.bf16.mxu0 0
        %1672 = vmatmul.mubr.bf16.gmra.mxu0 %v614
        %v1673 = vpop.f32.mrf.mxu0
        %v1674 = vadd.f32 %v494, %v1673
        %v1675 = vpop.f32.mrf.mxu0
        %v1676 = vadd.f32 %v498, %v1675
        %v1677 = vpop.f32.mrf.mxu0
        %v1678 = vadd.f32 %v494, %v1677
        %v1679 = vpop.f32.mrf.mxu0
        %v1680 = vadd.f32 %v498, %v1679
        %1681 = vmatprep.mubr.bf16.mxu0 0
        %1682 = vmatmul.mubr.bf16.gmra.mxu0 %v617
        %v1683 = vpop.f32.mrf.mxu0
        %v1684 = vadd.f32 %v494, %v1683
        %v1685 = vpop.f32.mrf.mxu0
        %v1686 = vadd.f32 %v498, %v1685
        %v1687 = vpop.f32.mrf.mxu0
        %v1688 = vadd.f32 %v494, %v1687
        %v1689 = vpop.f32.mrf.mxu0
        %v1690 = vadd.f32 %v498, %v1689
        %1691 = vmatprep.mubr.bf16.mxu0 0
        %1692 = vmatmul.mubr.bf16.gmra.mxu0 %v620
        %v1693 = vpop.f32.mrf.mxu0
        %v1694 = vadd.f32 %v494, %v1693
        %v1695 = vpop.f32.mrf.mxu0
        %v1696 = vadd.f32 %v498, %v1695
        %v1697 = vpop.f32.mrf.mxu0
        %v1698 = vadd.f32 %v494, %v1697
        %v1699 = vpop.f32.mrf.mxu0
        %v1700 = vadd.f32 %v498, %v1699
        %1701 = vmatprep.mubr.bf16.mxu0 0
        %1702 = vmatmul.mubr.bf16.gmra.mxu0 %v623
        %v1703 = vpop.f32.mrf.mxu0
        %v1704 = vadd.f32 %v494, %v1703
        %v1705 = vpop.f32.mrf.mxu0
        %v1706 = vadd.f32 %v498, %v1705
        %v1707 = vpop.f32.mrf.mxu0
        %v1708 = vadd.f32 %v494, %v1707
        %v1709 = vpop.f32.mrf.mxu0
        %v1710 = vadd.f32 %v498, %v1709
        %1711 = vmatprep.mubr.bf16.mxu0 0
        %1712 = vmatmul.mubr.bf16.gmra.mxu0 %v626
        %v1713 = vpop.f32.mrf.mxu0
        %v1714 = vadd.f32 %v494, %v1713
        %v1715 = vpop.f32.mrf.mxu0
        %v1716 = vadd.f32 %v498, %v1715
        %v1717 = vpop.f32.mrf.mxu0
        %v1718 = vadd.f32 %v494, %v1717
        %v1719 = vpop.f32.mrf.mxu0
        %v1720 = vadd.f32 %v498, %v1719
        %1721 = vmatprep.mubr.bf16.mxu0 0
        %1722 = vmatmul.mubr.bf16.gmra.mxu0 %v629
        %v1723 = vpop.f32.mrf.mxu0
        %v1724 = vadd.f32 %v494, %v1723
        %v1725 = vpop.f32.mrf.mxu0
        %v1726 = vadd.f32 %v498, %v1725
        %v1727 = vpop.f32.mrf.mxu0
        %v1728 = vadd.f32 %v494, %v1727
        %v1729 = vpop.f32.mrf.mxu0
        %v1730 = vadd.f32 %v498, %v1729
        %1731 = vmatprep.mubr.bf16.mxu0 0
        %1732 = vmatmul.mubr.bf16.gmra.mxu0 %v632
        %v1733 = vpop.f32.mrf.mxu0
        %v1734 = vadd.f32 %v494, %v1733
        %v1735 = vpop.f32.mrf.mxu0
        %v1736 = vadd.f32 %v498, %v1735
        %v1737 = vpop.f32.mrf.mxu0
        %v1738 = vadd.f32 %v494, %v1737
        %v1739 = vpop.f32.mrf.mxu0
        %v1740 = vadd.f32 %v498, %v1739
        %1741 = vmatprep.mubr.bf16.mxu0 0
        %1742 = vmatmul.mubr.bf16.gmra.mxu0 %v635
        %v1743 = vpop.f32.mrf.mxu0
        %v1744 = vadd.f32 %v494, %v1743
        %v1745 = vpop.f32.mrf.mxu0
        %v1746 = vadd.f32 %v498, %v1745
        %v1747 = vpop.f32.mrf.mxu0
        %v1748 = vadd.f32 %v494, %v1747
        %v1749 = vpop.f32.mrf.mxu0
        %v1750 = vadd.f32 %v498, %v1749
        %1751 = vmatprep.mubr.bf16.mxu0 0
        %1752 = vmatmul.mubr.bf16.gmra.mxu0 %v638
        %v1753 = vpop.f32.mrf.mxu0
        %v1754 = vadd.f32 %v494, %v1753
        %v1755 = vpop.f32.mrf.mxu0
        %v1756 = vadd.f32 %v498, %v1755
        %v1757 = vpop.f32.mrf.mxu0
        %v1758 = vadd.f32 %v494, %v1757
        %v1759 = vpop.f32.mrf.mxu0
        %v1760 = vadd.f32 %v498, %v1759
        %1761 = vmatprep.mubr.bf16.mxu0 0
        %1762 = vmatmul.mubr.bf16.gmra.mxu0 %v641
        %v1763 = vpop.f32.mrf.mxu0
        %v1764 = vadd.f32 %v494, %v1763
        %v1765 = vpop.f32.mrf.mxu0
        %v1766 = vadd.f32 %v498, %v1765
        %v1767 = vpop.f32.mrf.mxu0
        %v1768 = vadd.f32 %v494, %v1767
        %v1769 = vpop.f32.mrf.mxu0
        %v1770 = vadd.f32 %v498, %v1769
        %1771 = vmatprep.mubr.bf16.mxu0 0
        %1772 = vmatmul.mubr.bf16.gmra.mxu0 %v644
        %v1773 = vpop.f32.mrf.mxu0
        %v1774 = vadd.f32 %v494, %v1773
        %v1775 = vpop.f32.mrf.mxu0
        %v1776 = vadd.f32 %v498, %v1775
        %v1777 = vpop.f32.mrf.mxu0
        %v1778 = vadd.f32 %v494, %v1777
        %v1779 = vpop.f32.mrf.mxu0
        %v1780 = vadd.f32 %v498, %v1779
        %1781 = vmatprep.mubr.bf16.mxu0 0
        %1782 = vmatmul.mubr.bf16.gmra.mxu0 %v647
        %v1783 = vpop.f32.mrf.mxu0
        %v1784 = vadd.f32 %v494, %v1783
        %v1785 = vpop.f32.mrf.mxu0
        %v1786 = vadd.f32 %v498, %v1785
        %v1787 = vpop.f32.mrf.mxu0
        %v1788 = vadd.f32 %v494, %v1787
        %v1789 = vpop.f32.mrf.mxu0
        %v1790 = vadd.f32 %v498, %v1789
        %1791 = vmatprep.mubr.bf16.mxu0 0
        %1792 = vmatmul.mubr.bf16.gmra.mxu0 %v650
        %v1793 = vpop.f32.mrf.mxu0
        %v1794 = vadd.f32 %v494, %v1793
        %v1795 = vpop.f32.mrf.mxu0
        %v1796 = vadd.f32 %v498, %v1795
        %v1797 = vpop.f32.mrf.mxu0
        %v1798 = vadd.f32 %v494, %v1797
        %v1799 = vpop.f32.mrf.mxu0
        %v1800 = vadd.f32 %v498, %v1799
        %1801 = vmatprep.mubr.bf16.mxu0 0
        %1802 = vmatmul.mubr.bf16.gmra.mxu0 %v653
        %v1803 = vpop.f32.mrf.mxu0
        %v1804 = vadd.f32 %v494, %v1803
        %v1805 = vpop.f32.mrf.mxu0
        %v1806 = vadd.f32 %v498, %v1805
        %v1807 = vpop.f32.mrf.mxu0
        %v1808 = vadd.f32 %v494, %v1807
        %v1809 = vpop.f32.mrf.mxu0
        %v1810 = vadd.f32 %v498, %v1809
        %1811 = vmatprep.mubr.bf16.mxu0 0
        %1812 = vmatmul.mubr.bf16.gmra.mxu0 %v656
        %v1813 = vpop.f32.mrf.mxu0
        %v1814 = vadd.f32 %v494, %v1813
        %v1815 = vpop.f32.mrf.mxu0
        %v1816 = vadd.f32 %v498, %v1815
        %v1817 = vpop.f32.mrf.mxu0
        %v1818 = vadd.f32 %v494, %v1817
        %v1819 = vpop.f32.mrf.mxu0
        %v1820 = vadd.f32 %v498, %v1819
        %1821 = vmatprep.mubr.bf16.mxu0 0
        %1822 = vmatmul.mubr.bf16.gmra.mxu0 %v659
        %v1823 = vpop.f32.mrf.mxu0
        %v1824 = vadd.f32 %v494, %v1823
        %v1825 = vpop.f32.mrf.mxu0
        %v1826 = vadd.f32 %v498, %v1825
        %v1827 = vpop.f32.mrf.mxu0
        %v1828 = vadd.f32 %v494, %v1827
        %v1829 = vpop.f32.mrf.mxu0
        %v1830 = vadd.f32 %v498, %v1829
        %1831 = vmatprep.mubr.bf16.mxu0 0
        %1832 = vmatmul.mubr.bf16.gmra.mxu0 %v662
        %v1833 = vpop.f32.mrf.mxu0
        %v1834 = vadd.f32 %v494, %v1833
        %v1835 = vpop.f32.mrf.mxu0
        %v1836 = vadd.f32 %v498, %v1835
        %v1837 = vpop.f32.mrf.mxu0
        %v1838 = vadd.f32 %v494, %v1837
        %v1839 = vpop.f32.mrf.mxu0
        %v1840 = vadd.f32 %v498, %v1839
        %1841 = vmatprep.mubr.bf16.mxu0 0
        %1842 = vmatmul.mubr.bf16.gmra.mxu0 %v665
        %v1843 = vpop.f32.mrf.mxu0
        %v1844 = vadd.f32 %v494, %v1843
        %v1845 = vpop.f32.mrf.mxu0
        %v1846 = vadd.f32 %v498, %v1845
        %v1847 = vpop.f32.mrf.mxu0
        %v1848 = vadd.f32 %v494, %v1847
        %v1849 = vpop.f32.mrf.mxu0
        %v1850 = vadd.f32 %v498, %v1849
        %1851 = vmatprep.mubr.bf16.mxu0 0
        %1852 = vmatmul.mubr.bf16.gmra.mxu0 %v668
        %v1853 = vpop.f32.mrf.mxu0
        %v1854 = vadd.f32 %v494, %v1853
        %v1855 = vpop.f32.mrf.mxu0
        %v1856 = vadd.f32 %v498, %v1855
        %v1857 = vpop.f32.mrf.mxu0
        %v1858 = vadd.f32 %v494, %v1857
        %v1859 = vpop.f32.mrf.mxu0
        %v1860 = vadd.f32 %v498, %v1859
        %1861 = vmatprep.mubr.bf16.mxu0 0
        %1862 = vmatmul.mubr.bf16.gmra.mxu0 %v671
        %v1863 = vpop.f32.mrf.mxu0
        %v1864 = vadd.f32 %v494, %v1863
        %v1865 = vpop.f32.mrf.mxu0
        %v1866 = vadd.f32 %v498, %v1865
        %v1867 = vpop.f32.mrf.mxu0
        %v1868 = vadd.f32 %v494, %v1867
        %v1869 = vpop.f32.mrf.mxu0
        %v1870 = vadd.f32 %v498, %v1869
        %1871 = vmatprep.mubr.bf16.mxu0 0
        %1872 = vmatmul.mubr.bf16.gmra.mxu0 %v674
        %v1873 = vpop.f32.mrf.mxu0
        %v1874 = vadd.f32 %v494, %v1873
        %v1875 = vpop.f32.mrf.mxu0
        %v1876 = vadd.f32 %v498, %v1875
        %v1877 = vpop.f32.mrf.mxu0
        %v1878 = vadd.f32 %v494, %v1877
        %v1879 = vpop.f32.mrf.mxu0
        %v1880 = vadd.f32 %v498, %v1879
        %1881 = vmatprep.mubr.bf16.mxu0 0
        %1882 = vmatmul.mubr.bf16.gmra.mxu0 %v677
        %v1883 = vpop.f32.mrf.mxu0
        %v1884 = vadd.f32 %v494, %v1883
        %v1885 = vpop.f32.mrf.mxu0
        %v1886 = vadd.f32 %v498, %v1885
        %v1887 = vpop.f32.mrf.mxu0
        %v1888 = vadd.f32 %v494, %v1887
        %v1889 = vpop.f32.mrf.mxu0
        %v1890 = vadd.f32 %v498, %v1889
        %1891 = vmatprep.mubr.bf16.mxu0 0
        %1892 = vmatmul.mubr.bf16.gmra.mxu0 %v680
        %v1893 = vpop.f32.mrf.mxu0
        %v1894 = vadd.f32 %v494, %v1893
        %v1895 = vpop.f32.mrf.mxu0
        %v1896 = vadd.f32 %v498, %v1895
        %v1897 = vpop.f32.mrf.mxu0
        %v1898 = vadd.f32 %v494, %v1897
        %v1899 = vpop.f32.mrf.mxu0
        %v1900 = vadd.f32 %v498, %v1899
        %1901 = vmatprep.mubr.bf16.mxu0 0
        %1902 = vmatmul.mubr.bf16.gmra.mxu0 %v683
        %v1903 = vpop.f32.mrf.mxu0
        %v1904 = vadd.f32 %v494, %v1903
        %v1905 = vpop.f32.mrf.mxu0
        %v1906 = vadd.f32 %v498, %v1905
        %v1907 = vpop.f32.mrf.mxu0
        %v1908 = vadd.f32 %v494, %v1907
        %v1909 = vpop.f32.mrf.mxu0
        %v1910 = vadd.f32 %v498, %v1909
        %1911 = vmatprep.mubr.bf16.mxu0 0
        %1912 = vmatmul.mubr.bf16.gmra.mxu0 %v686
        %v1913 = vpop.f32.mrf.mxu0
        %v1914 = vadd.f32 %v494, %v1913
        %v1915 = vpop.f32.mrf.mxu0
        %v1916 = vadd.f32 %v498, %v1915
        %v1917 = vpop.f32.mrf.mxu0
        %v1918 = vadd.f32 %v494, %v1917
        %v1919 = vpop.f32.mrf.mxu0
        %v1920 = vadd.f32 %v498, %v1919
        %1921 = vmatprep.mubr.bf16.mxu0 0
        %1922 = vmatmul.mubr.bf16.gmra.mxu0 %v689
        %v1923 = vpop.f32.mrf.mxu0
        %v1924 = vadd.f32 %v494, %v1923
        %v1925 = vpop.f32.mrf.mxu0
        %v1926 = vadd.f32 %v498, %v1925
        %v1927 = vpop.f32.mrf.mxu0
        %v1928 = vadd.f32 %v494, %v1927
        %v1929 = vpop.f32.mrf.mxu0
        %v1930 = vadd.f32 %v498, %v1929
        %1931 = vmatprep.mubr.bf16.mxu0 0
        %1932 = vmatmul.mubr.bf16.gmra.mxu0 %v692
        %v1933 = vpop.f32.mrf.mxu0
        %v1934 = vadd.f32 %v494, %v1933
        %v1935 = vpop.f32.mrf.mxu0
        %v1936 = vadd.f32 %v498, %v1935
        %v1937 = vpop.f32.mrf.mxu0
        %v1938 = vadd.f32 %v494, %v1937
        %v1939 = vpop.f32.mrf.mxu0
        %v1940 = vadd.f32 %v498, %v1939
        %1941 = vmatprep.mubr.bf16.mxu0 0
        %1942 = vmatmul.mubr.bf16.gmra.mxu0 %v695
        %v1943 = vpop.f32.mrf.mxu0
        %v1944 = vadd.f32 %v494, %v1943
        %v1945 = vpop.f32.mrf.mxu0
        %v1946 = vadd.f32 %v498, %v1945
        %v1947 = vpop.f32.mrf.mxu0
        %v1948 = vadd.f32 %v494, %v1947
        %v1949 = vpop.f32.mrf.mxu0
        %v1950 = vadd.f32 %v498, %v1949
        %1951 = vmatprep.mubr.bf16.mxu0 0
        %1952 = vmatmul.mubr.bf16.gmra.mxu0 %v698
        %v1953 = vpop.f32.mrf.mxu0
        %v1954 = vadd.f32 %v494, %v1953
        %v1955 = vpop.f32.mrf.mxu0
        %v1956 = vadd.f32 %v498, %v1955
        %v1957 = vpop.f32.mrf.mxu0
        %v1958 = vadd.f32 %v494, %v1957
        %v1959 = vpop.f32.mrf.mxu0
        %v1960 = vadd.f32 %v498, %v1959
        %1961 = vmatprep.mubr.bf16.mxu0 0
        %1962 = vmatmul.mubr.bf16.gmra.mxu0 %v701
        %v1963 = vpop.f32.mrf.mxu0
        %v1964 = vadd.f32 %v494, %v1963
        %v1965 = vpop.f32.mrf.mxu0
        %v1966 = vadd.f32 %v498, %v1965
        %v1967 = vpop.f32.mrf.mxu0
        %v1968 = vadd.f32 %v494, %v1967
        %v1969 = vpop.f32.mrf.mxu0
        %v1970 = vadd.f32 %v498, %v1969
        %1971 = vmatprep.mubr.bf16.mxu0 0
        %1972 = vmatmul.mubr.bf16.gmra.mxu0 %v704
        %v1973 = vpop.f32.mrf.mxu0
        %v1974 = vadd.f32 %v494, %v1973
        %v1975 = vpop.f32.mrf.mxu0
        %v1976 = vadd.f32 %v498, %v1975
        %v1977 = vpop.f32.mrf.mxu0
        %v1978 = vadd.f32 %v494, %v1977
        %v1979 = vpop.f32.mrf.mxu0
        %v1980 = vadd.f32 %v498, %v1979
        %1981 = vmatprep.mubr.bf16.mxu0 0
        %1982 = vmatmul.mubr.bf16.gmra.mxu0 %v707
        %v1983 = vpop.f32.mrf.mxu0
        %v1984 = vadd.f32 %v494, %v1983
        %v1985 = vpop.f32.mrf.mxu0
        %v1986 = vadd.f32 %v498, %v1985
        %v1987 = vpop.f32.mrf.mxu0
        %v1988 = vadd.f32 %v494, %v1987
        %v1989 = vpop.f32.mrf.mxu0
        %v1990 = vadd.f32 %v498, %v1989
        %1991 = vmatprep.mubr.bf16.mxu0 0
        %1992 = vmatmul.mubr.bf16.gmra.mxu0 %v710
        %v1993 = vpop.f32.mrf.mxu0
        %v1994 = vadd.f32 %v494, %v1993
        %v1995 = vpop.f32.mrf.mxu0
        %v1996 = vadd.f32 %v498, %v1995
        %v1997 = vpop.f32.mrf.mxu0
        %v1998 = vadd.f32 %v494, %v1997
        %v1999 = vpop.f32.mrf.mxu0
        %v2000 = vadd.f32 %v498, %v1999
        %2001 = vmatprep.mubr.bf16.mxu0 0
        %2002 = vmatmul.mubr.bf16.gmra.mxu0 %v713
        %v2003 = vpop.f32.mrf.mxu0
        %v2004 = vadd.f32 %v494, %v2003
        %v2005 = vpop.f32.mrf.mxu0
        %v2006 = vadd.f32 %v498, %v2005
        %v2007 = vpop.f32.mrf.mxu0
        %v2008 = vadd.f32 %v494, %v2007
        %v2009 = vpop.f32.mrf.mxu0
        %v2010 = vadd.f32 %v498, %v2009
        %2011 = vmatprep.mubr.bf16.mxu0 0
        %2012 = vmatmul.mubr.bf16.gmra.mxu0 %v716
        %v2013 = vpop.f32.mrf.mxu0
        %v2014 = vadd.f32 %v494, %v2013
        %v2015 = vpop.f32.mrf.mxu0
        %v2016 = vadd.f32 %v498, %v2015
        %v2017 = vpop.f32.mrf.mxu0
        %v2018 = vadd.f32 %v494, %v2017
        %v2019 = vpop.f32.mrf.mxu0
        %v2020 = vadd.f32 %v498, %v2019
        %2021 = vmatprep.mubr.bf16.mxu0 0
        %2022 = vmatmul.mubr.bf16.gmra.mxu0 %v719
        %v2023 = vpop.f32.mrf.mxu0
        %v2024 = vadd.f32 %v494, %v2023
        %v2025 = vpop.f32.mrf.mxu0
        %v2026 = vadd.f32 %v498, %v2025
        %v2027 = vpop.f32.mrf.mxu0
        %v2028 = vadd.f32 %v494, %v2027
        %v2029 = vpop.f32.mrf.mxu0
        %v2030 = vadd.f32 %v498, %v2029
        %2031 = vmatprep.mubr.bf16.mxu0 0
        %2032 = vmatmul.mubr.bf16.gmra.mxu0 %v722
        %v2033 = vpop.f32.mrf.mxu0
        %v2034 = vadd.f32 %v494, %v2033
        %v2035 = vpop.f32.mrf.mxu0
        %v2036 = vadd.f32 %v498, %v2035
        %v2037 = vpop.f32.mrf.mxu0
        %v2038 = vadd.f32 %v494, %v2037
        %v2039 = vpop.f32.mrf.mxu0
        %v2040 = vadd.f32 %v498, %v2039
        %2041 = vmatprep.mubr.bf16.mxu0 0
        %2042 = vmatmul.mubr.bf16.gmra.mxu0 %v725
        %v2043 = vpop.f32.mrf.mxu0
        %v2044 = vadd.f32 %v494, %v2043
        %v2045 = vpop.f32.mrf.mxu0
        %v2046 = vadd.f32 %v498, %v2045
        %v2047 = vpop.f32.mrf.mxu0
        %v2048 = vadd.f32 %v494, %v2047
        %v2049 = vpop.f32.mrf.mxu0
        %v2050 = vadd.f32 %v498, %v2049
        %2051 = vmatprep.mubr.bf16.mxu0 0
        %2052 = vmatmul.mubr.bf16.gmra.mxu0 %v728
        %v2053 = vpop.f32.mrf.mxu0
        %v2054 = vadd.f32 %v494, %v2053
        %v2055 = vpop.f32.mrf.mxu0
        %v2056 = vadd.f32 %v498, %v2055
        %v2057 = vpop.f32.mrf.mxu0
        %v2058 = vadd.f32 %v494, %v2057
        %v2059 = vpop.f32.mrf.mxu0
        %v2060 = vadd.f32 %v498, %v2059
        %2061 = vmatprep.mubr.bf16.mxu0 0
        %2062 = vmatmul.mubr.bf16.gmra.mxu0 %v731
        %v2063 = vpop.f32.mrf.mxu0
        %v2064 = vadd.f32 %v494, %v2063
        %v2065 = vpop.f32.mrf.mxu0
        %v2066 = vadd.f32 %v498, %v2065
        %v2067 = vpop.f32.mrf.mxu0
        %v2068 = vadd.f32 %v494, %v2067
        %v2069 = vpop.f32.mrf.mxu0
        %v2070 = vadd.f32 %v498, %v2069
        %2071 = vmatprep.mubr.bf16.mxu0 0
        %2072 = vmatmul.mubr.bf16.gmra.mxu0 %v734
        %v2073 = vpop.f32.mrf.mxu0
        %v2074 = vadd.f32 %v494, %v2073
        %v2075 = vpop.f32.mrf.mxu0
        %v2076 = vadd.f32 %v498, %v2075
        %v2077 = vpop.f32.mrf.mxu0
        %v2078 = vadd.f32 %v494, %v2077
        %v2079 = vpop.f32.mrf.mxu0
        %v2080 = vadd.f32 %v498, %v2079
        %2081 = vdwg.mxu0
        %v2082 = vmax.f32 %v771, 0.0
        %v2083 = vmax.f32 %v773, 0.0
        %v2084 = vmax.f32 %v1444, 0.0
        %v2085 = vmax.f32 %v1446, 0.0
        %v2086 = vmax.f32 %v775, 0.0
        %v2087 = vmax.f32 %v777, 0.0
        %v2088 = vmax.f32 %v1448, 0.0
        %v2089 = vmax.f32 %v1450, 0.0
        %v2090 = vmax.f32 %v781, 0.0
        %v2091 = vmax.f32 %v783, 0.0
        %v2092 = vmax.f32 %v1454, 0.0
        %v2093 = vmax.f32 %v1456, 0.0
        %v2094 = vmax.f32 %v785, 0.0
        %v2095 = vmax.f32 %v787, 0.0
        %v2096 = vmax.f32 %v1458, 0.0
        %v2097 = vmax.f32 %v1460, 0.0
        %v2098 = vmax.f32 %v791, 0.0
        %v2099 = vmax.f32 %v793, 0.0
        %v2100 = vmax.f32 %v1464, 0.0
        %v2101 = vmax.f32 %v1466, 0.0
        %v2102 = vmax.f32 %v795, 0.0
        %v2103 = vmax.f32 %v797, 0.0
        %v2104 = vmax.f32 %v1468, 0.0
        %v2105 = vmax.f32 %v1470, 0.0
        %v2106 = vmax.f32 %v801, 0.0
        %v2107 = vmax.f32 %v803, 0.0
        %v2108 = vmax.f32 %v1474, 0.0
        %v2109 = vmax.f32 %v1476, 0.0
        %v2110 = vmax.f32 %v805, 0.0
        %v2111 = vmax.f32 %v807, 0.0
        %v2112 = vmax.f32 %v1478, 0.0
        %v2113 = vmax.f32 %v1480, 0.0
        %v2114 = vmax.f32 %v811, 0.0
        %v2115 = vmax.f32 %v813, 0.0
        %v2116 = vmax.f32 %v1484, 0.0
        %v2117 = vmax.f32 %v1486, 0.0
        %v2118 = vmax.f32 %v815, 0.0
        %v2119 = vmax.f32 %v817, 0.0
        %v2120 = vmax.f32 %v1488, 0.0
        %v2121 = vmax.f32 %v1490, 0.0
        %v2122 = vmax.f32 %v821, 0.0
        %v2123 = vmax.f32 %v823, 0.0
        %v2124 = vmax.f32 %v1494, 0.0
        %v2125 = vmax.f32 %v1496, 0.0
        %v2126 = vmax.f32 %v825, 0.0
        %v2127 = vmax.f32 %v827, 0.0
        %v2128 = vmax.f32 %v1498, 0.0
        %v2129 = vmax.f32 %v1500, 0.0
        %v2130 = vmax.f32 %v831, 0.0
        %v2131 = vmax.f32 %v833, 0.0
        %v2132 = vmax.f32 %v1504, 0.0
        %v2133 = vmax.f32 %v1506, 0.0
        %v2134 = vmax.f32 %v835, 0.0
        %v2135 = vmax.f32 %v837, 0.0
        %v2136 = vmax.f32 %v1508, 0.0
        %v2137 = vmax.f32 %v1510, 0.0
        %v2138 = vmax.f32 %v841, 0.0
        %v2139 = vmax.f32 %v843, 0.0
        %v2140 = vmax.f32 %v1514, 0.0
        %v2141 = vmax.f32 %v1516, 0.0
        %v2142 = vmax.f32 %v845, 0.0
        %v2143 = vmax.f32 %v847, 0.0
        %v2144 = vmax.f32 %v1518, 0.0
        %v2145 = vmax.f32 %v1520, 0.0
        %v2146 = vmax.f32 %v851, 0.0
        %v2147 = vmax.f32 %v853, 0.0
        %v2148 = vmax.f32 %v1524, 0.0
        %v2149 = vmax.f32 %v1526, 0.0
        %v2150 = vmax.f32 %v855, 0.0
        %v2151 = vmax.f32 %v857, 0.0
        %v2152 = vmax.f32 %v1528, 0.0
        %v2153 = vmax.f32 %v1530, 0.0
        %v2154 = vmax.f32 %v861, 0.0
        %v2155 = vmax.f32 %v863, 0.0
        %v2156 = vmax.f32 %v1534, 0.0
        %v2157 = vmax.f32 %v1536, 0.0
        %v2158 = vmax.f32 %v865, 0.0
        %v2159 = vmax.f32 %v867, 0.0
        %v2160 = vmax.f32 %v1538, 0.0
        %v2161 = vmax.f32 %v1540, 0.0
        %v2162 = vmax.f32 %v871, 0.0
        %v2163 = vmax.f32 %v873, 0.0
        %v2164 = vmax.f32 %v1544, 0.0
        %v2165 = vmax.f32 %v1546, 0.0
        %v2166 = vmax.f32 %v875, 0.0
        %v2167 = vmax.f32 %v877, 0.0
        %v2168 = vmax.f32 %v1548, 0.0
        %v2169 = vmax.f32 %v1550, 0.0
        %v2170 = vmax.f32 %v881, 0.0
        %v2171 = vmax.f32 %v883, 0.0
        %v2172 = vmax.f32 %v1554, 0.0
        %v2173 = vmax.f32 %v1556, 0.0
        %v2174 = vmax.f32 %v885, 0.0
        %v2175 = vmax.f32 %v887, 0.0
        %v2176 = vmax.f32 %v1558, 0.0
        %v2177 = vmax.f32 %v1560, 0.0
        %v2178 = vmax.f32 %v891, 0.0
        %v2179 = vmax.f32 %v893, 0.0
        %v2180 = vmax.f32 %v1564, 0.0
        %v2181 = vmax.f32 %v1566, 0.0
        %v2182 = vmax.f32 %v895, 0.0
        %v2183 = vmax.f32 %v897, 0.0
        %v2184 = vmax.f32 %v1568, 0.0
        %v2185 = vmax.f32 %v1570, 0.0
        %v2186 = vmax.f32 %v901, 0.0
        %v2187 = vmax.f32 %v903, 0.0
        %v2188 = vmax.f32 %v1574, 0.0
        %v2189 = vmax.f32 %v1576, 0.0
        %v2190 = vmax.f32 %v905, 0.0
        %v2191 = vmax.f32 %v907, 0.0
        %v2192 = vmax.f32 %v1578, 0.0
        %v2193 = vmax.f32 %v1580, 0.0
        %v2194 = vmax.f32 %v911, 0.0
        %v2195 = vmax.f32 %v913, 0.0
        %v2196 = vmax.f32 %v1584, 0.0
        %v2197 = vmax.f32 %v1586, 0.0
        %v2198 = vmax.f32 %v915, 0.0
        %v2199 = vmax.f32 %v917, 0.0
        %v2200 = vmax.f32 %v1588, 0.0
        %v2201 = vmax.f32 %v1590, 0.0
        %v2202 = vmax.f32 %v921, 0.0
        %v2203 = vmax.f32 %v923, 0.0
        %v2204 = vmax.f32 %v1594, 0.0
        %v2205 = vmax.f32 %v1596, 0.0
        %v2206 = vmax.f32 %v925, 0.0
        %v2207 = vmax.f32 %v927, 0.0
        %v2208 = vmax.f32 %v1598, 0.0
        %v2209 = vmax.f32 %v1600, 0.0
        %v2210 = vmax.f32 %v931, 0.0
        %v2211 = vmax.f32 %v933, 0.0
        %v2212 = vmax.f32 %v1604, 0.0
        %v2213 = vmax.f32 %v1606, 0.0
        %v2214 = vmax.f32 %v935, 0.0
        %v2215 = vmax.f32 %v937, 0.0
        %v2216 = vmax.f32 %v1608, 0.0
        %v2217 = vmax.f32 %v1610, 0.0
        %v2218 = vmax.f32 %v941, 0.0
        %v2219 = vmax.f32 %v943, 0.0
        %v2220 = vmax.f32 %v1614, 0.0
        %v2221 = vmax.f32 %v1616, 0.0
        %v2222 = vmax.f32 %v945, 0.0
        %v2223 = vmax.f32 %v947, 0.0
        %v2224 = vmax.f32 %v1618, 0.0
        %v2225 = vmax.f32 %v1620, 0.0
        %v2226 = vmax.f32 %v951, 0.0
        %v2227 = vmax.f32 %v953, 0.0
        %v2228 = vmax.f32 %v1624, 0.0
        %v2229 = vmax.f32 %v1626, 0.0
        %v2230 = vmax.f32 %v955, 0.0
        %v2231 = vmax.f32 %v957, 0.0
        %v2232 = vmax.f32 %v1628, 0.0
        %v2233 = vmax.f32 %v1630, 0.0
        %v2234 = vmax.f32 %v961, 0.0
        %v2235 = vmax.f32 %v963, 0.0
        %v2236 = vmax.f32 %v1634, 0.0
        %v2237 = vmax.f32 %v1636, 0.0
        %v2238 = vmax.f32 %v965, 0.0
        %v2239 = vmax.f32 %v967, 0.0
        %v2240 = vmax.f32 %v1638, 0.0
        %v2241 = vmax.f32 %v1640, 0.0
        %v2242 = vmax.f32 %v971, 0.0
        %v2243 = vmax.f32 %v973, 0.0
        %v2244 = vmax.f32 %v1644, 0.0
        %v2245 = vmax.f32 %v1646, 0.0
        %v2246 = vmax.f32 %v975, 0.0
        %v2247 = vmax.f32 %v977, 0.0
        %v2248 = vmax.f32 %v1648, 0.0
        %v2249 = vmax.f32 %v1650, 0.0
        %v2250 = vmax.f32 %v981, 0.0
        %v2251 = vmax.f32 %v983, 0.0
        %v2252 = vmax.f32 %v1654, 0.0
        %v2253 = vmax.f32 %v1656, 0.0
        %v2254 = vmax.f32 %v985, 0.0
        %v2255 = vmax.f32 %v987, 0.0
        %v2256 = vmax.f32 %v1658, 0.0
        %v2257 = vmax.f32 %v1660, 0.0
        %v2258 = vmax.f32 %v991, 0.0
        %v2259 = vmax.f32 %v993, 0.0
        %v2260 = vmax.f32 %v1664, 0.0
        %v2261 = vmax.f32 %v1666, 0.0
        %v2262 = vmax.f32 %v995, 0.0
        %v2263 = vmax.f32 %v997, 0.0
        %v2264 = vmax.f32 %v1668, 0.0
        %v2265 = vmax.f32 %v1670, 0.0
        %v2266 = vmax.f32 %v1001, 0.0
        %v2267 = vmax.f32 %v1003, 0.0
        %v2268 = vmax.f32 %v1674, 0.0
        %v2269 = vmax.f32 %v1676, 0.0
        %v2270 = vmax.f32 %v1005, 0.0
        %v2271 = vmax.f32 %v1007, 0.0
        %v2272 = vmax.f32 %v1678, 0.0
        %v2273 = vmax.f32 %v1680, 0.0
        %v2274 = vmax.f32 %v1011, 0.0
        %v2275 = vmax.f32 %v1013, 0.0
        %v2276 = vmax.f32 %v1684, 0.0
        %v2277 = vmax.f32 %v1686, 0.0
        %v2278 = vmax.f32 %v1015, 0.0
        %v2279 = vmax.f32 %v1017, 0.0
        %v2280 = vmax.f32 %v1688, 0.0
        %v2281 = vmax.f32 %v1690, 0.0
        %v2282 = vmax.f32 %v1021, 0.0
        %v2283 = vmax.f32 %v1023, 0.0
        %v2284 = vmax.f32 %v1694, 0.0
        %v2285 = vmax.f32 %v1696, 0.0
        %v2286 = vmax.f32 %v1025, 0.0
        %v2287 = vmax.f32 %v1027, 0.0
        %v2288 = vmax.f32 %v1698, 0.0
        %v2289 = vmax.f32 %v1700, 0.0
        %v2290 = vmax.f32 %v1031, 0.0
        %v2291 = vmax.f32 %v1033, 0.0
        %v2292 = vmax.f32 %v1704, 0.0
        %v2293 = vmax.f32 %v1706, 0.0
        %v2294 = vmax.f32 %v1035, 0.0
        %v2295 = vmax.f32 %v1037, 0.0
        %v2296 = vmax.f32 %v1708, 0.0
        %v2297 = vmax.f32 %v1710, 0.0
        %v2298 = vmax.f32 %v1041, 0.0
        %v2299 = vmax.f32 %v1043, 0.0
        %v2300 = vmax.f32 %v1714, 0.0
        %v2301 = vmax.f32 %v1716, 0.0
        %v2302 = vmax.f32 %v1045, 0.0
        %v2303 = vmax.f32 %v1047, 0.0
        %v2304 = vmax.f32 %v1718, 0.0
        %v2305 = vmax.f32 %v1720, 0.0
        %v2306 = vmax.f32 %v1051, 0.0
        %v2307 = vmax.f32 %v1053, 0.0
        %v2308 = vmax.f32 %v1724, 0.0
        %v2309 = vmax.f32 %v1726, 0.0
        %v2310 = vmax.f32 %v1055, 0.0
        %v2311 = vmax.f32 %v1057, 0.0
        %v2312 = vmax.f32 %v1728, 0.0
        %v2313 = vmax.f32 %v1730, 0.0
        %v2314 = vmax.f32 %v1061, 0.0
        %v2315 = vmax.f32 %v1063, 0.0
        %v2316 = vmax.f32 %v1734, 0.0
        %v2317 = vmax.f32 %v1736, 0.0
        %v2318 = vmax.f32 %v1065, 0.0
        %v2319 = vmax.f32 %v1067, 0.0
        %v2320 = vmax.f32 %v1738, 0.0
        %v2321 = vmax.f32 %v1740, 0.0
        %v2322 = vmax.f32 %v1071, 0.0
        %v2323 = vmax.f32 %v1073, 0.0
        %v2324 = vmax.f32 %v1744, 0.0
        %v2325 = vmax.f32 %v1746, 0.0
        %v2326 = vmax.f32 %v1075, 0.0
        %v2327 = vmax.f32 %v1077, 0.0
        %v2328 = vmax.f32 %v1748, 0.0
        %v2329 = vmax.f32 %v1750, 0.0
        %v2330 = vmax.f32 %v1081, 0.0
        %v2331 = vmax.f32 %v1083, 0.0
        %v2332 = vmax.f32 %v1754, 0.0
        %v2333 = vmax.f32 %v1756, 0.0
        %v2334 = vmax.f32 %v1085, 0.0
        %v2335 = vmax.f32 %v1087, 0.0
        %v2336 = vmax.f32 %v1758, 0.0
        %v2337 = vmax.f32 %v1760, 0.0
        %v2338 = vmax.f32 %v1091, 0.0
        %v2339 = vmax.f32 %v1093, 0.0
        %v2340 = vmax.f32 %v1764, 0.0
        %v2341 = vmax.f32 %v1766, 0.0
        %v2342 = vmax.f32 %v1095, 0.0
        %v2343 = vmax.f32 %v1097, 0.0
        %v2344 = vmax.f32 %v1768, 0.0
        %v2345 = vmax.f32 %v1770, 0.0
        %v2346 = vmax.f32 %v1101, 0.0
        %v2347 = vmax.f32 %v1103, 0.0
        %v2348 = vmax.f32 %v1774, 0.0
        %v2349 = vmax.f32 %v1776, 0.0
        %v2350 = vmax.f32 %v1105, 0.0
        %v2351 = vmax.f32 %v1107, 0.0
        %v2352 = vmax.f32 %v1778, 0.0
        %v2353 = vmax.f32 %v1780, 0.0
        %v2354 = vmax.f32 %v1111, 0.0
        %v2355 = vmax.f32 %v1113, 0.0
        %v2356 = vmax.f32 %v1784, 0.0
        %v2357 = vmax.f32 %v1786, 0.0
        %v2358 = vmax.f32 %v1115, 0.0
        %v2359 = vmax.f32 %v1117, 0.0
        %v2360 = vmax.f32 %v1788, 0.0
        %v2361 = vmax.f32 %v1790, 0.0
        %v2362 = vmax.f32 %v1121, 0.0
        %v2363 = vmax.f32 %v1123, 0.0
        %v2364 = vmax.f32 %v1794, 0.0
        %v2365 = vmax.f32 %v1796, 0.0
        %v2366 = vmax.f32 %v1125, 0.0
        %v2367 = vmax.f32 %v1127, 0.0
        %v2368 = vmax.f32 %v1798, 0.0
        %v2369 = vmax.f32 %v1800, 0.0
        %v2370 = vmax.f32 %v1131, 0.0
        %v2371 = vmax.f32 %v1133, 0.0
        %v2372 = vmax.f32 %v1804, 0.0
        %v2373 = vmax.f32 %v1806, 0.0
        %v2374 = vmax.f32 %v1135, 0.0
        %v2375 = vmax.f32 %v1137, 0.0
        %v2376 = vmax.f32 %v1808, 0.0
        %v2377 = vmax.f32 %v1810, 0.0
        %v2378 = vmax.f32 %v1141, 0.0
        %v2379 = vmax.f32 %v1143, 0.0
        %v2380 = vmax.f32 %v1814, 0.0
        %v2381 = vmax.f32 %v1816, 0.0
        %v2382 = vmax.f32 %v1145, 0.0
        %v2383 = vmax.f32 %v1147, 0.0
        %v2384 = vmax.f32 %v1818, 0.0
        %v2385 = vmax.f32 %v1820, 0.0
        %v2386 = vmax.f32 %v1151, 0.0
        %v2387 = vmax.f32 %v1153, 0.0
        %v2388 = vmax.f32 %v1824, 0.0
        %v2389 = vmax.f32 %v1826, 0.0
        %v2390 = vmax.f32 %v1155, 0.0
        %v2391 = vmax.f32 %v1157, 0.0
        %v2392 = vmax.f32 %v1828, 0.0
        %v2393 = vmax.f32 %v1830, 0.0
        %v2394 = vmax.f32 %v1161, 0.0
        %v2395 = vmax.f32 %v1163, 0.0
        %v2396 = vmax.f32 %v1834, 0.0
        %v2397 = vmax.f32 %v1836, 0.0
        %v2398 = vmax.f32 %v1165, 0.0
        %v2399 = vmax.f32 %v1167, 0.0
        %v2400 = vmax.f32 %v1838, 0.0
        %v2401 = vmax.f32 %v1840, 0.0
        %v2402 = vmax.f32 %v1171, 0.0
        %v2403 = vmax.f32 %v1173, 0.0
        %v2404 = vmax.f32 %v1844, 0.0
        %v2405 = vmax.f32 %v1846, 0.0
        %v2406 = vmax.f32 %v1175, 0.0
        %v2407 = vmax.f32 %v1177, 0.0
        %v2408 = vmax.f32 %v1848, 0.0
        %v2409 = vmax.f32 %v1850, 0.0
        %v2410 = vmax.f32 %v1181, 0.0
        %v2411 = vmax.f32 %v1183, 0.0
        %v2412 = vmax.f32 %v1854, 0.0
        %v2413 = vmax.f32 %v1856, 0.0
        %v2414 = vmax.f32 %v1185, 0.0
        %v2415 = vmax.f32 %v1187, 0.0
        %v2416 = vmax.f32 %v1858, 0.0
        %v2417 = vmax.f32 %v1860, 0.0
        %v2418 = vmax.f32 %v1191, 0.0
        %v2419 = vmax.f32 %v1193, 0.0
        %v2420 = vmax.f32 %v1864, 0.0
        %v2421 = vmax.f32 %v1866, 0.0
        %v2422 = vmax.f32 %v1195, 0.0
        %v2423 = vmax.f32 %v1197, 0.0
        %v2424 = vmax.f32 %v1868, 0.0
        %v2425 = vmax.f32 %v1870, 0.0
        %v2426 = vmax.f32 %v1201, 0.0
        %v2427 = vmax.f32 %v1203, 0.0
        %v2428 = vmax.f32 %v1874, 0.0
        %v2429 = vmax.f32 %v1876, 0.0
        %v2430 = vmax.f32 %v1205, 0.0
        %v2431 = vmax.f32 %v1207, 0.0
        %v2432 = vmax.f32 %v1878, 0.0
        %v2433 = vmax.f32 %v1880, 0.0
        %v2434 = vmax.f32 %v1211, 0.0
        %v2435 = vmax.f32 %v1213, 0.0
        %v2436 = vmax.f32 %v1884, 0.0
        %v2437 = vmax.f32 %v1886, 0.0
        %v2438 = vmax.f32 %v1215, 0.0
        %v2439 = vmax.f32 %v1217, 0.0
        %v2440 = vmax.f32 %v1888, 0.0
        %v2441 = vmax.f32 %v1890, 0.0
        %v2442 = vmax.f32 %v1221, 0.0
        %v2443 = vmax.f32 %v1223, 0.0
        %v2444 = vmax.f32 %v1894, 0.0
        %v2445 = vmax.f32 %v1896, 0.0
        %v2446 = vmax.f32 %v1225, 0.0
        %v2447 = vmax.f32 %v1227, 0.0
        %v2448 = vmax.f32 %v1898, 0.0
        %v2449 = vmax.f32 %v1900, 0.0
        %v2450 = vmax.f32 %v1231, 0.0
        %v2451 = vmax.f32 %v1233, 0.0
        %v2452 = vmax.f32 %v1904, 0.0
        %v2453 = vmax.f32 %v1906, 0.0
        %v2454 = vmax.f32 %v1235, 0.0
        %v2455 = vmax.f32 %v1237, 0.0
        %v2456 = vmax.f32 %v1908, 0.0
        %v2457 = vmax.f32 %v1910, 0.0
        %v2458 = vmax.f32 %v1241, 0.0
        %v2459 = vmax.f32 %v1243, 0.0
        %v2460 = vmax.f32 %v1914, 0.0
        %v2461 = vmax.f32 %v1916, 0.0
        %v2462 = vmax.f32 %v1245, 0.0
        %v2463 = vmax.f32 %v1247, 0.0
        %v2464 = vmax.f32 %v1918, 0.0
        %v2465 = vmax.f32 %v1920, 0.0
        %v2466 = vmax.f32 %v1251, 0.0
        %v2467 = vmax.f32 %v1253, 0.0
        %v2468 = vmax.f32 %v1924, 0.0
        %v2469 = vmax.f32 %v1926, 0.0
        %v2470 = vmax.f32 %v1255, 0.0
        %v2471 = vmax.f32 %v1257, 0.0
        %v2472 = vmax.f32 %v1928, 0.0
        %v2473 = vmax.f32 %v1930, 0.0
        %v2474 = vmax.f32 %v1261, 0.0
        %v2475 = vmax.f32 %v1263, 0.0
        %v2476 = vmax.f32 %v1934, 0.0
        %v2477 = vmax.f32 %v1936, 0.0
        %v2478 = vmax.f32 %v1265, 0.0
        %v2479 = vmax.f32 %v1267, 0.0
        %v2480 = vmax.f32 %v1938, 0.0
        %v2481 = vmax.f32 %v1940, 0.0
        %v2482 = vmax.f32 %v1271, 0.0
        %v2483 = vmax.f32 %v1273, 0.0
        %v2484 = vmax.f32 %v1944, 0.0
        %v2485 = vmax.f32 %v1946, 0.0
        %v2486 = vmax.f32 %v1275, 0.0
        %v2487 = vmax.f32 %v1277, 0.0
        %v2488 = vmax.f32 %v1948, 0.0
        %v2489 = vmax.f32 %v1950, 0.0
        %v2490 = vmax.f32 %v1281, 0.0
        %v2491 = vmax.f32 %v1283, 0.0
        %v2492 = vmax.f32 %v1954, 0.0
        %v2493 = vmax.f32 %v1956, 0.0
        %v2494 = vmax.f32 %v1285, 0.0
        %v2495 = vmax.f32 %v1287, 0.0
        %v2496 = vmax.f32 %v1958, 0.0
        %v2497 = vmax.f32 %v1960, 0.0
        %v2498 = vmax.f32 %v1291, 0.0
        %v2499 = vmax.f32 %v1293, 0.0
        %v2500 = vmax.f32 %v1964, 0.0
        %v2501 = vmax.f32 %v1966, 0.0
        %v2502 = vmax.f32 %v1295, 0.0
        %v2503 = vmax.f32 %v1297, 0.0
        %v2504 = vmax.f32 %v1968, 0.0
        %v2505 = vmax.f32 %v1970, 0.0
        %v2506 = vmax.f32 %v1301, 0.0
        %v2507 = vmax.f32 %v1303, 0.0
        %v2508 = vmax.f32 %v1974, 0.0
        %v2509 = vmax.f32 %v1976, 0.0
        %v2510 = vmax.f32 %v1305, 0.0
        %v2511 = vmax.f32 %v1307, 0.0
        %v2512 = vmax.f32 %v1978, 0.0
        %v2513 = vmax.f32 %v1980, 0.0
        %v2514 = vmax.f32 %v1311, 0.0
        %v2515 = vmax.f32 %v1313, 0.0
        %v2516 = vmax.f32 %v1984, 0.0
        %v2517 = vmax.f32 %v1986, 0.0
        %v2518 = vmax.f32 %v1315, 0.0
        %v2519 = vmax.f32 %v1317, 0.0
        %v2520 = vmax.f32 %v1988, 0.0
        %v2521 = vmax.f32 %v1990, 0.0
        %v2522 = vmax.f32 %v1321, 0.0
        %v2523 = vmax.f32 %v1323, 0.0
        %v2524 = vmax.f32 %v1994, 0.0
        %v2525 = vmax.f32 %v1996, 0.0
        %v2526 = vmax.f32 %v1325, 0.0
        %v2527 = vmax.f32 %v1327, 0.0
        %v2528 = vmax.f32 %v1998, 0.0
        %v2529 = vmax.f32 %v2000, 0.0
        %v2530 = vmax.f32 %v1331, 0.0
        %v2531 = vmax.f32 %v1333, 0.0
        %v2532 = vmax.f32 %v2004, 0.0
        %v2533 = vmax.f32 %v2006, 0.0
        %v2534 = vmax.f32 %v1335, 0.0
        %v2535 = vmax.f32 %v1337, 0.0
        %v2536 = vmax.f32 %v2008, 0.0
        %v2537 = vmax.f32 %v2010, 0.0
        %v2538 = vmax.f32 %v1341, 0.0
        %v2539 = vmax.f32 %v1343, 0.0
        %v2540 = vmax.f32 %v2014, 0.0
        %v2541 = vmax.f32 %v2016, 0.0
        %v2542 = vmax.f32 %v1345, 0.0
        %v2543 = vmax.f32 %v1347, 0.0
        %v2544 = vmax.f32 %v2018, 0.0
        %v2545 = vmax.f32 %v2020, 0.0
        %v2546 = vmax.f32 %v1351, 0.0
        %v2547 = vmax.f32 %v1353, 0.0
        %v2548 = vmax.f32 %v2024, 0.0
        %v2549 = vmax.f32 %v2026, 0.0
        %v2550 = vmax.f32 %v1355, 0.0
        %v2551 = vmax.f32 %v1357, 0.0
        %v2552 = vmax.f32 %v2028, 0.0
        %v2553 = vmax.f32 %v2030, 0.0
        %v2554 = vmax.f32 %v1361, 0.0
        %v2555 = vmax.f32 %v1363, 0.0
        %v2556 = vmax.f32 %v2034, 0.0
        %v2557 = vmax.f32 %v2036, 0.0
        %v2558 = vmax.f32 %v1365, 0.0
        %v2559 = vmax.f32 %v1367, 0.0
        %v2560 = vmax.f32 %v2038, 0.0
        %v2561 = vmax.f32 %v2040, 0.0
        %v2562 = vmax.f32 %v1371, 0.0
        %v2563 = vmax.f32 %v1373, 0.0
        %v2564 = vmax.f32 %v2044, 0.0
        %v2565 = vmax.f32 %v2046, 0.0
        %v2566 = vmax.f32 %v1375, 0.0
        %v2567 = vmax.f32 %v1377, 0.0
        %v2568 = vmax.f32 %v2048, 0.0
        %v2569 = vmax.f32 %v2050, 0.0
        %v2570 = vmax.f32 %v1381, 0.0
        %v2571 = vmax.f32 %v1383, 0.0
        %v2572 = vmax.f32 %v2054, 0.0
        %v2573 = vmax.f32 %v2056, 0.0
        %v2574 = vmax.f32 %v1385, 0.0
        %v2575 = vmax.f32 %v1387, 0.0
        %v2576 = vmax.f32 %v2058, 0.0
        %v2577 = vmax.f32 %v2060, 0.0
        %v2578 = vmax.f32 %v1391, 0.0
        %v2579 = vmax.f32 %v1393, 0.0
        %v2580 = vmax.f32 %v2064, 0.0
        %v2581 = vmax.f32 %v2066, 0.0
        %v2582 = vmax.f32 %v1395, 0.0
        %v2583 = vmax.f32 %v1397, 0.0
        %v2584 = vmax.f32 %v2068, 0.0
        %v2585 = vmax.f32 %v2070, 0.0
        %v2586 = vmax.f32 %v1401, 0.0
        %v2587 = vmax.f32 %v1403, 0.0
        %v2588 = vmax.f32 %v2074, 0.0
        %v2589 = vmax.f32 %v2076, 0.0
        %v2590 = vmax.f32 %v1405, 0.0
        %v2591 = vmax.f32 %v1407, 0.0
        %v2592 = vmax.f32 %v2078, 0.0
        %v2593 = vmax.f32 %v2080, 0.0
        %v2594 = vpack.c.bf16 %v2086, %v2082
        %v2595 = vpack.c.bf16 %v2087, %v2083
        %v2596 = vpack.c.bf16 %v2088, %v2084
        %v2597 = vpack.c.bf16 %v2089, %v2085
        %v2598 = vpack.c.bf16 %v2094, %v2090
        %v2599 = vpack.c.bf16 %v2095, %v2091
        %v2600 = vpack.c.bf16 %v2096, %v2092
        %v2601 = vpack.c.bf16 %v2097, %v2093
        %v2602 = vpack.c.bf16 %v2102, %v2098
        %v2603 = vpack.c.bf16 %v2103, %v2099
        %v2604 = vpack.c.bf16 %v2104, %v2100
        %v2605 = vpack.c.bf16 %v2105, %v2101
        %v2606 = vpack.c.bf16 %v2110, %v2106
        %v2607 = vpack.c.bf16 %v2111, %v2107
        %v2608 = vpack.c.bf16 %v2112, %v2108
        %v2609 = vpack.c.bf16 %v2113, %v2109
        %v2610 = vpack.c.bf16 %v2118, %v2114
        %v2611 = vpack.c.bf16 %v2119, %v2115
        %v2612 = vpack.c.bf16 %v2120, %v2116
        %v2613 = vpack.c.bf16 %v2121, %v2117
        %v2614 = vpack.c.bf16 %v2126, %v2122
        %v2615 = vpack.c.bf16 %v2127, %v2123
        %v2616 = vpack.c.bf16 %v2128, %v2124
        %v2617 = vpack.c.bf16 %v2129, %v2125
        %v2618 = vpack.c.bf16 %v2134, %v2130
        %v2619 = vpack.c.bf16 %v2135, %v2131
        %v2620 = vpack.c.bf16 %v2136, %v2132
        %v2621 = vpack.c.bf16 %v2137, %v2133
        %v2622 = vpack.c.bf16 %v2142, %v2138
        %v2623 = vpack.c.bf16 %v2143, %v2139
        %v2624 = vpack.c.bf16 %v2144, %v2140
        %v2625 = vpack.c.bf16 %v2145, %v2141
        %v2626 = vpack.c.bf16 %v2150, %v2146
        %v2627 = vpack.c.bf16 %v2151, %v2147
        %v2628 = vpack.c.bf16 %v2152, %v2148
        %v2629 = vpack.c.bf16 %v2153, %v2149
        %v2630 = vpack.c.bf16 %v2158, %v2154
        %v2631 = vpack.c.bf16 %v2159, %v2155
        %v2632 = vpack.c.bf16 %v2160, %v2156
        %v2633 = vpack.c.bf16 %v2161, %v2157
        %v2634 = vpack.c.bf16 %v2166, %v2162
        %v2635 = vpack.c.bf16 %v2167, %v2163
        %v2636 = vpack.c.bf16 %v2168, %v2164
        %v2637 = vpack.c.bf16 %v2169, %v2165
        %v2638 = vpack.c.bf16 %v2174, %v2170
        %v2639 = vpack.c.bf16 %v2175, %v2171
        %v2640 = vpack.c.bf16 %v2176, %v2172
        %v2641 = vpack.c.bf16 %v2177, %v2173
        %v2642 = vpack.c.bf16 %v2182, %v2178
        %v2643 = vpack.c.bf16 %v2183, %v2179
        %v2644 = vpack.c.bf16 %v2184, %v2180
        %v2645 = vpack.c.bf16 %v2185, %v2181
        %v2646 = vpack.c.bf16 %v2190, %v2186
        %v2647 = vpack.c.bf16 %v2191, %v2187
        %v2648 = vpack.c.bf16 %v2192, %v2188
        %v2649 = vpack.c.bf16 %v2193, %v2189
        %v2650 = vpack.c.bf16 %v2198, %v2194
        %v2651 = vpack.c.bf16 %v2199, %v2195
        %v2652 = vpack.c.bf16 %v2200, %v2196
        %v2653 = vpack.c.bf16 %v2201, %v2197
        %v2654 = vpack.c.bf16 %v2206, %v2202
        %v2655 = vpack.c.bf16 %v2207, %v2203
        %v2656 = vpack.c.bf16 %v2208, %v2204
        %v2657 = vpack.c.bf16 %v2209, %v2205
        %v2658 = vpack.c.bf16 %v2214, %v2210
        %v2659 = vpack.c.bf16 %v2215, %v2211
        %v2660 = vpack.c.bf16 %v2216, %v2212
        %v2661 = vpack.c.bf16 %v2217, %v2213
        %v2662 = vpack.c.bf16 %v2222, %v2218
        %v2663 = vpack.c.bf16 %v2223, %v2219
        %v2664 = vpack.c.bf16 %v2224, %v2220
        %v2665 = vpack.c.bf16 %v2225, %v2221
        %v2666 = vpack.c.bf16 %v2230, %v2226
        %v2667 = vpack.c.bf16 %v2231, %v2227
        %v2668 = vpack.c.bf16 %v2232, %v2228
        %v2669 = vpack.c.bf16 %v2233, %v2229
        %v2670 = vpack.c.bf16 %v2238, %v2234
        %v2671 = vpack.c.bf16 %v2239, %v2235
        %v2672 = vpack.c.bf16 %v2240, %v2236
        %v2673 = vpack.c.bf16 %v2241, %v2237
        %v2674 = vpack.c.bf16 %v2246, %v2242
        %v2675 = vpack.c.bf16 %v2247, %v2243
        %v2676 = vpack.c.bf16 %v2248, %v2244
        %v2677 = vpack.c.bf16 %v2249, %v2245
        %v2678 = vpack.c.bf16 %v2254, %v2250
        %v2679 = vpack.c.bf16 %v2255, %v2251
        %v2680 = vpack.c.bf16 %v2256, %v2252
        %v2681 = vpack.c.bf16 %v2257, %v2253
        %v2682 = vpack.c.bf16 %v2262, %v2258
        %v2683 = vpack.c.bf16 %v2263, %v2259
        %v2684 = vpack.c.bf16 %v2264, %v2260
        %v2685 = vpack.c.bf16 %v2265, %v2261
        %v2686 = vpack.c.bf16 %v2270, %v2266
        %v2687 = vpack.c.bf16 %v2271, %v2267
        %v2688 = vpack.c.bf16 %v2272, %v2268
        %v2689 = vpack.c.bf16 %v2273, %v2269
        %v2690 = vpack.c.bf16 %v2278, %v2274
        %v2691 = vpack.c.bf16 %v2279, %v2275
        %v2692 = vpack.c.bf16 %v2280, %v2276
        %v2693 = vpack.c.bf16 %v2281, %v2277
        %v2694 = vpack.c.bf16 %v2286, %v2282
        %v2695 = vpack.c.bf16 %v2287, %v2283
        %v2696 = vpack.c.bf16 %v2288, %v2284
        %v2697 = vpack.c.bf16 %v2289, %v2285
        %v2698 = vpack.c.bf16 %v2294, %v2290
        %v2699 = vpack.c.bf16 %v2295, %v2291
        %v2700 = vpack.c.bf16 %v2296, %v2292
        %v2701 = vpack.c.bf16 %v2297, %v2293
        %v2702 = vpack.c.bf16 %v2302, %v2298
        %v2703 = vpack.c.bf16 %v2303, %v2299
        %v2704 = vpack.c.bf16 %v2304, %v2300
        %v2705 = vpack.c.bf16 %v2305, %v2301
        %v2706 = vpack.c.bf16 %v2310, %v2306
        %v2707 = vpack.c.bf16 %v2311, %v2307
        %v2708 = vpack.c.bf16 %v2312, %v2308
        %v2709 = vpack.c.bf16 %v2313, %v2309
        %v2710 = vpack.c.bf16 %v2318, %v2314
        %v2711 = vpack.c.bf16 %v2319, %v2315
        %v2712 = vpack.c.bf16 %v2320, %v2316
        %v2713 = vpack.c.bf16 %v2321, %v2317
        %v2714 = vpack.c.bf16 %v2326, %v2322
        %v2715 = vpack.c.bf16 %v2327, %v2323
        %v2716 = vpack.c.bf16 %v2328, %v2324
        %v2717 = vpack.c.bf16 %v2329, %v2325
        %v2718 = vpack.c.bf16 %v2334, %v2330
        %v2719 = vpack.c.bf16 %v2335, %v2331
        %v2720 = vpack.c.bf16 %v2336, %v2332
        %v2721 = vpack.c.bf16 %v2337, %v2333
        %v2722 = vpack.c.bf16 %v2342, %v2338
        %v2723 = vpack.c.bf16 %v2343, %v2339
        %v2724 = vpack.c.bf16 %v2344, %v2340
        %v2725 = vpack.c.bf16 %v2345, %v2341
        %v2726 = vpack.c.bf16 %v2350, %v2346
        %v2727 = vpack.c.bf16 %v2351, %v2347
        %v2728 = vpack.c.bf16 %v2352, %v2348
        %v2729 = vpack.c.bf16 %v2353, %v2349
        %v2730 = vpack.c.bf16 %v2358, %v2354
        %v2731 = vpack.c.bf16 %v2359, %v2355
        %v2732 = vpack.c.bf16 %v2360, %v2356
        %v2733 = vpack.c.bf16 %v2361, %v2357
        %v2734 = vpack.c.bf16 %v2366, %v2362
        %v2735 = vpack.c.bf16 %v2367, %v2363
        %v2736 = vpack.c.bf16 %v2368, %v2364
        %v2737 = vpack.c.bf16 %v2369, %v2365
        %v2738 = vpack.c.bf16 %v2374, %v2370
        %v2739 = vpack.c.bf16 %v2375, %v2371
        %v2740 = vpack.c.bf16 %v2376, %v2372
        %v2741 = vpack.c.bf16 %v2377, %v2373
        %v2742 = vpack.c.bf16 %v2382, %v2378
        %v2743 = vpack.c.bf16 %v2383, %v2379
        %v2744 = vpack.c.bf16 %v2384, %v2380
        %v2745 = vpack.c.bf16 %v2385, %v2381
        %v2746 = vpack.c.bf16 %v2390, %v2386
        %v2747 = vpack.c.bf16 %v2391, %v2387
        %v2748 = vpack.c.bf16 %v2392, %v2388
        %v2749 = vpack.c.bf16 %v2393, %v2389
        %v2750 = vpack.c.bf16 %v2398, %v2394
        %v2751 = vpack.c.bf16 %v2399, %v2395
        %v2752 = vpack.c.bf16 %v2400, %v2396
        %v2753 = vpack.c.bf16 %v2401, %v2397
        %v2754 = vpack.c.bf16 %v2406, %v2402
        %v2755 = vpack.c.bf16 %v2407, %v2403
        %v2756 = vpack.c.bf16 %v2408, %v2404
        %v2757 = vpack.c.bf16 %v2409, %v2405
        %v2758 = vpack.c.bf16 %v2414, %v2410
        %v2759 = vpack.c.bf16 %v2415, %v2411
        %v2760 = vpack.c.bf16 %v2416, %v2412
        %v2761 = vpack.c.bf16 %v2417, %v2413
        %v2762 = vpack.c.bf16 %v2422, %v2418
        %v2763 = vpack.c.bf16 %v2423, %v2419
        %v2764 = vpack.c.bf16 %v2424, %v2420
        %v2765 = vpack.c.bf16 %v2425, %v2421
        %v2766 = vpack.c.bf16 %v2430, %v2426
        %v2767 = vpack.c.bf16 %v2431, %v2427
        %v2768 = vpack.c.bf16 %v2432, %v2428
        %v2769 = vpack.c.bf16 %v2433, %v2429
        %v2770 = vpack.c.bf16 %v2438, %v2434
        %v2771 = vpack.c.bf16 %v2439, %v2435
        %v2772 = vpack.c.bf16 %v2440, %v2436
        %v2773 = vpack.c.bf16 %v2441, %v2437
        %v2774 = vpack.c.bf16 %v2446, %v2442
        %v2775 = vpack.c.bf16 %v2447, %v2443
        %v2776 = vpack.c.bf16 %v2448, %v2444
        %v2777 = vpack.c.bf16 %v2449, %v2445
        %v2778 = vpack.c.bf16 %v2454, %v2450
        %v2779 = vpack.c.bf16 %v2455, %v2451
        %v2780 = vpack.c.bf16 %v2456, %v2452
        %v2781 = vpack.c.bf16 %v2457, %v2453
        %v2782 = vpack.c.bf16 %v2462, %v2458
        %v2783 = vpack.c.bf16 %v2463, %v2459
        %v2784 = vpack.c.bf16 %v2464, %v2460
        %v2785 = vpack.c.bf16 %v2465, %v2461
        %v2786 = vpack.c.bf16 %v2470, %v2466
        %v2787 = vpack.c.bf16 %v2471, %v2467
        %v2788 = vpack.c.bf16 %v2472, %v2468
        %v2789 = vpack.c.bf16 %v2473, %v2469
        %v2790 = vpack.c.bf16 %v2478, %v2474
        %v2791 = vpack.c.bf16 %v2479, %v2475
        %v2792 = vpack.c.bf16 %v2480, %v2476
        %v2793 = vpack.c.bf16 %v2481, %v2477
        %v2794 = vpack.c.bf16 %v2486, %v2482
        %v2795 = vpack.c.bf16 %v2487, %v2483
        %v2796 = vpack.c.bf16 %v2488, %v2484
        %v2797 = vpack.c.bf16 %v2489, %v2485
        %v2798 = vpack.c.bf16 %v2494, %v2490
        %v2799 = vpack.c.bf16 %v2495, %v2491
        %v2800 = vpack.c.bf16 %v2496, %v2492
        %v2801 = vpack.c.bf16 %v2497, %v2493
        %v2802 = vpack.c.bf16 %v2502, %v2498
        %v2803 = vpack.c.bf16 %v2503, %v2499
        %v2804 = vpack.c.bf16 %v2504, %v2500
        %v2805 = vpack.c.bf16 %v2505, %v2501
        %v2806 = vpack.c.bf16 %v2510, %v2506
        %v2807 = vpack.c.bf16 %v2511, %v2507
        %v2808 = vpack.c.bf16 %v2512, %v2508
        %v2809 = vpack.c.bf16 %v2513, %v2509
        %v2810 = vpack.c.bf16 %v2518, %v2514
        %v2811 = vpack.c.bf16 %v2519, %v2515
        %v2812 = vpack.c.bf16 %v2520, %v2516
        %v2813 = vpack.c.bf16 %v2521, %v2517
        %v2814 = vpack.c.bf16 %v2526, %v2522
        %v2815 = vpack.c.bf16 %v2527, %v2523
        %v2816 = vpack.c.bf16 %v2528, %v2524
        %v2817 = vpack.c.bf16 %v2529, %v2525
        %v2818 = vpack.c.bf16 %v2534, %v2530
        %v2819 = vpack.c.bf16 %v2535, %v2531
        %v2820 = vpack.c.bf16 %v2536, %v2532
        %v2821 = vpack.c.bf16 %v2537, %v2533
        %v2822 = vpack.c.bf16 %v2542, %v2538
        %v2823 = vpack.c.bf16 %v2543, %v2539
        %v2824 = vpack.c.bf16 %v2544, %v2540
        %v2825 = vpack.c.bf16 %v2545, %v2541
        %v2826 = vpack.c.bf16 %v2550, %v2546
        %v2827 = vpack.c.bf16 %v2551, %v2547
        %v2828 = vpack.c.bf16 %v2552, %v2548
        %v2829 = vpack.c.bf16 %v2553, %v2549
        %v2830 = vpack.c.bf16 %v2558, %v2554
        %v2831 = vpack.c.bf16 %v2559, %v2555
        %v2832 = vpack.c.bf16 %v2560, %v2556
        %v2833 = vpack.c.bf16 %v2561, %v2557
        %v2834 = vpack.c.bf16 %v2566, %v2562
        %v2835 = vpack.c.bf16 %v2567, %v2563
        %v2836 = vpack.c.bf16 %v2568, %v2564
        %v2837 = vpack.c.bf16 %v2569, %v2565
        %v2838 = vpack.c.bf16 %v2574, %v2570
        %v2839 = vpack.c.bf16 %v2575, %v2571
        %v2840 = vpack.c.bf16 %v2576, %v2572
        %v2841 = vpack.c.bf16 %v2577, %v2573
        %v2842 = vpack.c.bf16 %v2582, %v2578
        %v2843 = vpack.c.bf16 %v2583, %v2579
        %v2844 = vpack.c.bf16 %v2584, %v2580
        %v2845 = vpack.c.bf16 %v2585, %v2581
        %v2846 = vpack.c.bf16 %v2590, %v2586
        %v2847 = vpack.c.bf16 %v2591, %v2587
        %v2848 = vpack.c.bf16 %v2592, %v2588
        %v2849 = vpack.c.bf16 %v2593, %v2589
        %v2850 = vld [vmem:[%s3] sm:$0xff]
        %v2851 = vld [vmem:[%s3 + $0x8] sm:$0xff]
        %v2852 = vld [vmem:[%s3 + $0x10] sm:$0xff]
        %v2853 = vld [vmem:[%s3 + $0x18] sm:$0xff]
        %v2854 = vld [vmem:[%s3 + $0x20] sm:$0xff]
        %v2855 = vld [vmem:[%s3 + $0x28] sm:$0xff]
        %v2856 = vld [vmem:[%s3 + $0x30] sm:$0xff]
        %v2857 = vld [vmem:[%s3 + $0x38] sm:$0xff]
        %v2858 = vld [vmem:[%s3 + $0x40] sm:$0xff]
        %v2859 = vld [vmem:[%s3 + $0x48] sm:$0xff]
        %v2860 = vld [vmem:[%s3 + $0x50] sm:$0xff]
        %v2861 = vld [vmem:[%s3 + $0x58] sm:$0xff]
        %v2862 = vld [vmem:[%s3 + $0x60] sm:$0xff]
        %v2863 = vld [vmem:[%s3 + $0x68] sm:$0xff]
        %v2864 = vld [vmem:[%s3 + $0x70] sm:$0xff]
        %v2865 = vld [vmem:[%s3 + $0x78] sm:$0xff]
        %v2866 = vld [vmem:[%s3 + $0x80] sm:$0xff]
        %v2867 = vld [vmem:[%s3 + $0x88] sm:$0xff]
        %v2868 = vld [vmem:[%s3 + $0x90] sm:$0xff]
        %v2869 = vld [vmem:[%s3 + $0x98] sm:$0xff]
        %v2870 = vld [vmem:[%s3 + $0xa0] sm:$0xff]
        %v2871 = vld [vmem:[%s3 + $0xa8] sm:$0xff]
        %v2872 = vld [vmem:[%s3 + $0xb0] sm:$0xff]
        %v2873 = vld [vmem:[%s3 + $0xb8] sm:$0xff]
        %v2874 = vld [vmem:[%s3 + $0xc0] sm:$0xff]
        %v2875 = vld [vmem:[%s3 + $0xc8] sm:$0xff]
        %v2876 = vld [vmem:[%s3 + $0xd0] sm:$0xff]
        %v2877 = vld [vmem:[%s3 + $0xd8] sm:$0xff]
        %v2878 = vld [vmem:[%s3 + $0xe0] sm:$0xff]
        %v2879 = vld [vmem:[%s3 + $0xe8] sm:$0xff]
        %v2880 = vld [vmem:[%s3 + $0xf0] sm:$0xff]
        %v2881 = vld [vmem:[%s3 + $0xf8] sm:$0xff]
        %v2882 = vld [vmem:[%s3 + $0x100] sm:$0xff]
        %v2883 = vld [vmem:[%s3 + $0x108] sm:$0xff]
        %v2884 = vld [vmem:[%s3 + $0x110] sm:$0xff]
        %v2885 = vld [vmem:[%s3 + $0x118] sm:$0xff]
        %v2886 = vld [vmem:[%s3 + $0x120] sm:$0xff]
        %v2887 = vld [vmem:[%s3 + $0x128] sm:$0xff]
        %v2888 = vld [vmem:[%s3 + $0x130] sm:$0xff]
        %v2889 = vld [vmem:[%s3 + $0x138] sm:$0xff]
        %v2890 = vld [vmem:[%s3 + $0x140] sm:$0xff]
        %v2891 = vld [vmem:[%s3 + $0x148] sm:$0xff]
        %v2892 = vld [vmem:[%s3 + $0x150] sm:$0xff]
        %v2893 = vld [vmem:[%s3 + $0x158] sm:$0xff]
        %v2894 = vld [vmem:[%s3 + $0x160] sm:$0xff]
        %v2895 = vld [vmem:[%s3 + $0x168] sm:$0xff]
        %v2896 = vld [vmem:[%s3 + $0x170] sm:$0xff]
        %v2897 = vld [vmem:[%s3 + $0x178] sm:$0xff]
        %v2898 = vld [vmem:[%s3 + $0x180] sm:$0xff]
        %v2899 = vld [vmem:[%s3 + $0x188] sm:$0xff]
        %v2900 = vld [vmem:[%s3 + $0x190] sm:$0xff]
        %v2901 = vld [vmem:[%s3 + $0x198] sm:$0xff]
        %v2902 = vld [vmem:[%s3 + $0x1a0] sm:$0xff]
        %v2903 = vld [vmem:[%s3 + $0x1a8] sm:$0xff]
        %v2904 = vld [vmem:[%s3 + $0x1b0] sm:$0xff]
        %v2905 = vld [vmem:[%s3 + $0x1b8] sm:$0xff]
        %v2906 = vld [vmem:[%s3 + $0x1c0] sm:$0xff]
        %v2907 = vld [vmem:[%s3 + $0x1c8] sm:$0xff]
        %v2908 = vld [vmem:[%s3 + $0x1d0] sm:$0xff]
        %v2909 = vld [vmem:[%s3 + $0x1d8] sm:$0xff]
        %v2910 = vld [vmem:[%s3 + $0x1e0] sm:$0xff]
        %v2911 = vld [vmem:[%s3 + $0x1e8] sm:$0xff]
        %v2912 = vld [vmem:[%s3 + $0x1f0] sm:$0xff]
        %v2913 = vld [vmem:[%s3 + $0x1f8] sm:$0xff]
        %v2914 = vld [vmem:[%s3 + $0x200] sm:$0xff]
        %v2915 = vld [vmem:[%s3 + $0x208] sm:$0xff]
        %v2916 = vld [vmem:[%s3 + $0x210] sm:$0xff]
        %v2917 = vld [vmem:[%s3 + $0x218] sm:$0xff]
        %v2918 = vld [vmem:[%s3 + $0x220] sm:$0xff]
        %v2919 = vld [vmem:[%s3 + $0x228] sm:$0xff]
        %v2920 = vld [vmem:[%s3 + $0x230] sm:$0xff]
        %v2921 = vld [vmem:[%s3 + $0x238] sm:$0xff]
        %v2922 = vld [vmem:[%s3 + $0x240] sm:$0xff]
        %v2923 = vld [vmem:[%s3 + $0x248] sm:$0xff]
        %v2924 = vld [vmem:[%s3 + $0x250] sm:$0xff]
        %v2925 = vld [vmem:[%s3 + $0x258] sm:$0xff]
        %v2926 = vld [vmem:[%s3 + $0x260] sm:$0xff]
        %v2927 = vld [vmem:[%s3 + $0x268] sm:$0xff]
        %v2928 = vld [vmem:[%s3 + $0x270] sm:$0xff]
        %v2929 = vld [vmem:[%s3 + $0x278] sm:$0xff]
        %v2930 = vld [vmem:[%s3 + $0x280] sm:$0xff]
        %v2931 = vld [vmem:[%s3 + $0x288] sm:$0xff]
        %v2932 = vld [vmem:[%s3 + $0x290] sm:$0xff]
        %v2933 = vld [vmem:[%s3 + $0x298] sm:$0xff]
        %v2934 = vld [vmem:[%s3 + $0x2a0] sm:$0xff]
        %v2935 = vld [vmem:[%s3 + $0x2a8] sm:$0xff]
        %v2936 = vld [vmem:[%s3 + $0x2b0] sm:$0xff]
        %v2937 = vld [vmem:[%s3 + $0x2b8] sm:$0xff]
        %v2938 = vld [vmem:[%s3 + $0x2c0] sm:$0xff]
        %v2939 = vld [vmem:[%s3 + $0x2c8] sm:$0xff]
        %v2940 = vld [vmem:[%s3 + $0x2d0] sm:$0xff]
        %v2941 = vld [vmem:[%s3 + $0x2d8] sm:$0xff]
        %v2942 = vld [vmem:[%s3 + $0x2e0] sm:$0xff]
        %v2943 = vld [vmem:[%s3 + $0x2e8] sm:$0xff]
        %v2944 = vld [vmem:[%s3 + $0x2f0] sm:$0xff]
        %v2945 = vld [vmem:[%s3 + $0x2f8] sm:$0xff]
        %v2946 = vld [vmem:[%s3 + $0x300] sm:$0xff]
        %v2947 = vld [vmem:[%s3 + $0x308] sm:$0xff]
        %v2948 = vld [vmem:[%s3 + $0x310] sm:$0xff]
        %v2949 = vld [vmem:[%s3 + $0x318] sm:$0xff]
        %v2950 = vld [vmem:[%s3 + $0x320] sm:$0xff]
        %v2951 = vld [vmem:[%s3 + $0x328] sm:$0xff]
        %v2952 = vld [vmem:[%s3 + $0x330] sm:$0xff]
        %v2953 = vld [vmem:[%s3 + $0x338] sm:$0xff]
        %v2954 = vld [vmem:[%s3 + $0x340] sm:$0xff]
        %v2955 = vld [vmem:[%s3 + $0x348] sm:$0xff]
        %v2956 = vld [vmem:[%s3 + $0x350] sm:$0xff]
        %v2957 = vld [vmem:[%s3 + $0x358] sm:$0xff]
        %v2958 = vld [vmem:[%s3 + $0x360] sm:$0xff]
        %v2959 = vld [vmem:[%s3 + $0x368] sm:$0xff]
        %v2960 = vld [vmem:[%s3 + $0x370] sm:$0xff]
        %v2961 = vld [vmem:[%s3 + $0x378] sm:$0xff]
        %v2962 = vld [vmem:[%s3 + $0x380] sm:$0xff]
        %v2963 = vld [vmem:[%s3 + $0x388] sm:$0xff]
        %v2964 = vld [vmem:[%s3 + $0x390] sm:$0xff]
        %v2965 = vld [vmem:[%s3 + $0x398] sm:$0xff]
        %v2966 = vld [vmem:[%s3 + $0x3a0] sm:$0xff]
        %v2967 = vld [vmem:[%s3 + $0x3a8] sm:$0xff]
        %v2968 = vld [vmem:[%s3 + $0x3b0] sm:$0xff]
        %v2969 = vld [vmem:[%s3 + $0x3b8] sm:$0xff]
        %v2970 = vld [vmem:[%s3 + $0x3c0] sm:$0xff]
        %v2971 = vld [vmem:[%s3 + $0x3c8] sm:$0xff]
        %v2972 = vld [vmem:[%s3 + $0x3d0] sm:$0xff]
        %v2973 = vld [vmem:[%s3 + $0x3d8] sm:$0xff]
        %v2974 = vld [vmem:[%s3 + $0x3e0] sm:$0xff]
        %v2975 = vld [vmem:[%s3 + $0x3e8] sm:$0xff]
        %v2976 = vld [vmem:[%s3 + $0x3f0] sm:$0xff]
        %v2977 = vld [vmem:[%s3 + $0x3f8] sm:$0xff]
        %v2978 = vld [vmem:[%s4] sm:$0xf]
        %v2980 = vlaneseq
        %v2981 = vshrl.u32 %v2980, 7
        %v2982 = vsub.s32 0, %v2981
        %v2983 = vrot.slane %v2978, %v2982
        %v2984 = vlaneseq
        %v2985 = vshrl.u32 %v2984, 7
        %v2986 = vsub.s32 1, %v2985
        %v2987 = vrot.slane %v2978, %v2986
        %v2988 = vlaneseq
        %v2989 = vshrl.u32 %v2988, 7
        %v2990 = vsub.s32 2, %v2989
        %v2991 = vrot.slane %v2978, %v2990
        %v2992 = vlaneseq
        %v2993 = vshrl.u32 %v2992, 7
        %v2994 = vsub.s32 3, %v2993
        %v2995 = vrot.slane %v2978, %v2994
        %v3128 = vunpack.c.l.b16 %v2850
        %v3129 = vunpack.c.h.b16 %v2850
        %v3130 = vunpack.c.l.b16 %v2851
        %v3131 = vunpack.c.h.b16 %v2851
        %v3132 = vunpack.c.l.b16 %v2852
        %v3133 = vunpack.c.h.b16 %v2852
        %v3134 = vunpack.c.l.b16 %v2853
        %v3135 = vunpack.c.h.b16 %v2853
        %v3136 = vunpack.c.l.b16 %v2854
        %v3137 = vunpack.c.h.b16 %v2854
        %v3138 = vunpack.c.l.b16 %v2855
        %v3139 = vunpack.c.h.b16 %v2855
        %v3140 = vunpack.c.l.b16 %v2856
        %v3141 = vunpack.c.h.b16 %v2856
        %v3142 = vunpack.c.l.b16 %v2857
        %v3143 = vunpack.c.h.b16 %v2857
        %v3144 = vunpack.c.l.b16 %v2858
        %v3145 = vunpack.c.h.b16 %v2858
        %v3146 = vunpack.c.l.b16 %v2859
        %v3147 = vunpack.c.h.b16 %v2859
        %v3148 = vunpack.c.l.b16 %v2860
        %v3149 = vunpack.c.h.b16 %v2860
        %v3150 = vunpack.c.l.b16 %v2861
        %v3151 = vunpack.c.h.b16 %v2861
        %v3152 = vunpack.c.l.b16 %v2862
        %v3153 = vunpack.c.h.b16 %v2862
        %v3154 = vunpack.c.l.b16 %v2863
        %v3155 = vunpack.c.h.b16 %v2863
        %v3156 = vunpack.c.l.b16 %v2864
        %v3157 = vunpack.c.h.b16 %v2864
        %v3158 = vunpack.c.l.b16 %v2865
        %v3159 = vunpack.c.h.b16 %v2865
        %v3160 = vunpack.c.l.b16 %v2866
        %v3161 = vunpack.c.h.b16 %v2866
        %v3162 = vunpack.c.l.b16 %v2867
        %v3163 = vunpack.c.h.b16 %v2867
        %v3164 = vunpack.c.l.b16 %v2868
        %v3165 = vunpack.c.h.b16 %v2868
        %v3166 = vunpack.c.l.b16 %v2869
        %v3167 = vunpack.c.h.b16 %v2869
        %v3168 = vunpack.c.l.b16 %v2870
        %v3169 = vunpack.c.h.b16 %v2870
        %v3170 = vunpack.c.l.b16 %v2871
        %v3171 = vunpack.c.h.b16 %v2871
        %v3172 = vunpack.c.l.b16 %v2872
        %v3173 = vunpack.c.h.b16 %v2872
        %v3174 = vunpack.c.l.b16 %v2873
        %v3175 = vunpack.c.h.b16 %v2873
        %v3176 = vunpack.c.l.b16 %v2874
        %v3177 = vunpack.c.h.b16 %v2874
        %v3178 = vunpack.c.l.b16 %v2875
        %v3179 = vunpack.c.h.b16 %v2875
        %v3180 = vunpack.c.l.b16 %v2876
        %v3181 = vunpack.c.h.b16 %v2876
        %v3182 = vunpack.c.l.b16 %v2877
        %v3183 = vunpack.c.h.b16 %v2877
        %v3184 = vunpack.c.l.b16 %v2878
        %v3185 = vunpack.c.h.b16 %v2878
        %v3186 = vunpack.c.l.b16 %v2879
        %v3187 = vunpack.c.h.b16 %v2879
        %v3188 = vunpack.c.l.b16 %v2880
        %v3189 = vunpack.c.h.b16 %v2880
        %v3190 = vunpack.c.l.b16 %v2881
        %v3191 = vunpack.c.h.b16 %v2881
        %v3192 = vunpack.c.l.b16 %v2882
        %v3193 = vunpack.c.h.b16 %v2882
        %v3194 = vunpack.c.l.b16 %v2883
        %v3195 = vunpack.c.h.b16 %v2883
        %v3196 = vunpack.c.l.b16 %v2884
        %v3197 = vunpack.c.h.b16 %v2884
        %v3198 = vunpack.c.l.b16 %v2885
        %v3199 = vunpack.c.h.b16 %v2885
        %v3200 = vunpack.c.l.b16 %v2886
        %v3201 = vunpack.c.h.b16 %v2886
        %v3202 = vunpack.c.l.b16 %v2887
        %v3203 = vunpack.c.h.b16 %v2887
        %v3204 = vunpack.c.l.b16 %v2888
        %v3205 = vunpack.c.h.b16 %v2888
        %v3206 = vunpack.c.l.b16 %v2889
        %v3207 = vunpack.c.h.b16 %v2889
        %v3208 = vunpack.c.l.b16 %v2890
        %v3209 = vunpack.c.h.b16 %v2890
        %v3210 = vunpack.c.l.b16 %v2891
        %v3211 = vunpack.c.h.b16 %v2891
        %v3212 = vunpack.c.l.b16 %v2892
        %v3213 = vunpack.c.h.b16 %v2892
        %v3214 = vunpack.c.l.b16 %v2893
        %v3215 = vunpack.c.h.b16 %v2893
        %v3216 = vunpack.c.l.b16 %v2894
        %v3217 = vunpack.c.h.b16 %v2894
        %v3218 = vunpack.c.l.b16 %v2895
        %v3219 = vunpack.c.h.b16 %v2895
        %v3220 = vunpack.c.l.b16 %v2896
        %v3221 = vunpack.c.h.b16 %v2896
        %v3222 = vunpack.c.l.b16 %v2897
        %v3223 = vunpack.c.h.b16 %v2897
        %v3224 = vunpack.c.l.b16 %v2898
        %v3225 = vunpack.c.h.b16 %v2898
        %v3226 = vunpack.c.l.b16 %v2899
        %v3227 = vunpack.c.h.b16 %v2899
        %v3228 = vunpack.c.l.b16 %v2900
        %v3229 = vunpack.c.h.b16 %v2900
        %v3230 = vunpack.c.l.b16 %v2901
        %v3231 = vunpack.c.h.b16 %v2901
        %v3232 = vunpack.c.l.b16 %v2902
        %v3233 = vunpack.c.h.b16 %v2902
        %v3234 = vunpack.c.l.b16 %v2903
        %v3235 = vunpack.c.h.b16 %v2903
        %v3236 = vunpack.c.l.b16 %v2904
        %v3237 = vunpack.c.h.b16 %v2904
        %v3238 = vunpack.c.l.b16 %v2905
        %v3239 = vunpack.c.h.b16 %v2905
        %v3240 = vunpack.c.l.b16 %v2906
        %v3241 = vunpack.c.h.b16 %v2906
        %v3242 = vunpack.c.l.b16 %v2907
        %v3243 = vunpack.c.h.b16 %v2907
        %v3244 = vunpack.c.l.b16 %v2908
        %v3245 = vunpack.c.h.b16 %v2908
        %v3246 = vunpack.c.l.b16 %v2909
        %v3247 = vunpack.c.h.b16 %v2909
        %v3248 = vunpack.c.l.b16 %v2910
        %v3249 = vunpack.c.h.b16 %v2910
        %v3250 = vunpack.c.l.b16 %v2911
        %v3251 = vunpack.c.h.b16 %v2911
        %v3252 = vunpack.c.l.b16 %v2912
        %v3253 = vunpack.c.h.b16 %v2912
        %v3254 = vunpack.c.l.b16 %v2913
        %v3255 = vunpack.c.h.b16 %v2913
        %v3256 = vunpack.c.l.b16 %v2914
        %v3257 = vunpack.c.h.b16 %v2914
        %v3258 = vunpack.c.l.b16 %v2915
        %v3259 = vunpack.c.h.b16 %v2915
        %v3260 = vunpack.c.l.b16 %v2916
        %v3261 = vunpack.c.h.b16 %v2916
        %v3262 = vunpack.c.l.b16 %v2917
        %v3263 = vunpack.c.h.b16 %v2917
        %v3264 = vunpack.c.l.b16 %v2918
        %v3265 = vunpack.c.h.b16 %v2918
        %v3266 = vunpack.c.l.b16 %v2919
        %v3267 = vunpack.c.h.b16 %v2919
        %v3268 = vunpack.c.l.b16 %v2920
        %v3269 = vunpack.c.h.b16 %v2920
        %v3270 = vunpack.c.l.b16 %v2921
        %v3271 = vunpack.c.h.b16 %v2921
        %v3272 = vunpack.c.l.b16 %v2922
        %v3273 = vunpack.c.h.b16 %v2922
        %v3274 = vunpack.c.l.b16 %v2923
        %v3275 = vunpack.c.h.b16 %v2923
        %v3276 = vunpack.c.l.b16 %v2924
        %v3277 = vunpack.c.h.b16 %v2924
        %v3278 = vunpack.c.l.b16 %v2925
        %v3279 = vunpack.c.h.b16 %v2925
        %v3280 = vunpack.c.l.b16 %v2926
        %v3281 = vunpack.c.h.b16 %v2926
        %v3282 = vunpack.c.l.b16 %v2927
        %v3283 = vunpack.c.h.b16 %v2927
        %v3284 = vunpack.c.l.b16 %v2928
        %v3285 = vunpack.c.h.b16 %v2928
        %v3286 = vunpack.c.l.b16 %v2929
        %v3287 = vunpack.c.h.b16 %v2929
        %v3288 = vunpack.c.l.b16 %v2930
        %v3289 = vunpack.c.h.b16 %v2930
        %v3290 = vunpack.c.l.b16 %v2931
        %v3291 = vunpack.c.h.b16 %v2931
        %v3292 = vunpack.c.l.b16 %v2932
        %v3293 = vunpack.c.h.b16 %v2932
        %v3294 = vunpack.c.l.b16 %v2933
        %v3295 = vunpack.c.h.b16 %v2933
        %v3296 = vunpack.c.l.b16 %v2934
        %v3297 = vunpack.c.h.b16 %v2934
        %v3298 = vunpack.c.l.b16 %v2935
        %v3299 = vunpack.c.h.b16 %v2935
        %v3300 = vunpack.c.l.b16 %v2936
        %v3301 = vunpack.c.h.b16 %v2936
        %v3302 = vunpack.c.l.b16 %v2937
        %v3303 = vunpack.c.h.b16 %v2937
        %v3304 = vunpack.c.l.b16 %v2938
        %v3305 = vunpack.c.h.b16 %v2938
        %v3306 = vunpack.c.l.b16 %v2939
        %v3307 = vunpack.c.h.b16 %v2939
        %v3308 = vunpack.c.l.b16 %v2940
        %v3309 = vunpack.c.h.b16 %v2940
        %v3310 = vunpack.c.l.b16 %v2941
        %v3311 = vunpack.c.h.b16 %v2941
        %v3312 = vunpack.c.l.b16 %v2942
        %v3313 = vunpack.c.h.b16 %v2942
        %v3314 = vunpack.c.l.b16 %v2943
        %v3315 = vunpack.c.h.b16 %v2943
        %v3316 = vunpack.c.l.b16 %v2944
        %v3317 = vunpack.c.h.b16 %v2944
        %v3318 = vunpack.c.l.b16 %v2945
        %v3319 = vunpack.c.h.b16 %v2945
        %v3320 = vunpack.c.l.b16 %v2946
        %v3321 = vunpack.c.h.b16 %v2946
        %v3322 = vunpack.c.l.b16 %v2947
        %v3323 = vunpack.c.h.b16 %v2947
        %v3324 = vunpack.c.l.b16 %v2948
        %v3325 = vunpack.c.h.b16 %v2948
        %v3326 = vunpack.c.l.b16 %v2949
        %v3327 = vunpack.c.h.b16 %v2949
        %v3328 = vunpack.c.l.b16 %v2950
        %v3329 = vunpack.c.h.b16 %v2950
        %v3330 = vunpack.c.l.b16 %v2951
        %v3331 = vunpack.c.h.b16 %v2951
        %v3332 = vunpack.c.l.b16 %v2952
        %v3333 = vunpack.c.h.b16 %v2952
        %v3334 = vunpack.c.l.b16 %v2953
        %v3335 = vunpack.c.h.b16 %v2953
        %v3336 = vunpack.c.l.b16 %v2954
        %v3337 = vunpack.c.h.b16 %v2954
        %v3338 = vunpack.c.l.b16 %v2955
        %v3339 = vunpack.c.h.b16 %v2955
        %v3340 = vunpack.c.l.b16 %v2956
        %v3341 = vunpack.c.h.b16 %v2956
        %v3342 = vunpack.c.l.b16 %v2957
        %v3343 = vunpack.c.h.b16 %v2957
        %v3344 = vunpack.c.l.b16 %v2958
        %v3345 = vunpack.c.h.b16 %v2958
        %v3346 = vunpack.c.l.b16 %v2959
        %v3347 = vunpack.c.h.b16 %v2959
        %v3348 = vunpack.c.l.b16 %v2960
        %v3349 = vunpack.c.h.b16 %v2960
        %v3350 = vunpack.c.l.b16 %v2961
        %v3351 = vunpack.c.h.b16 %v2961
        %v3352 = vunpack.c.l.b16 %v2962
        %v3353 = vunpack.c.h.b16 %v2962
        %v3354 = vunpack.c.l.b16 %v2963
        %v3355 = vunpack.c.h.b16 %v2963
        %v3356 = vunpack.c.l.b16 %v2964
        %v3357 = vunpack.c.h.b16 %v2964
        %v3358 = vunpack.c.l.b16 %v2965
        %v3359 = vunpack.c.h.b16 %v2965
        %v3360 = vunpack.c.l.b16 %v2966
        %v3361 = vunpack.c.h.b16 %v2966
        %v3362 = vunpack.c.l.b16 %v2967
        %v3363 = vunpack.c.h.b16 %v2967
        %v3364 = vunpack.c.l.b16 %v2968
        %v3365 = vunpack.c.h.b16 %v2968
        %v3366 = vunpack.c.l.b16 %v2969
        %v3367 = vunpack.c.h.b16 %v2969
        %v3368 = vunpack.c.l.b16 %v2970
        %v3369 = vunpack.c.h.b16 %v2970
        %v3370 = vunpack.c.l.b16 %v2971
        %v3371 = vunpack.c.h.b16 %v2971
        %v3372 = vunpack.c.l.b16 %v2972
        %v3373 = vunpack.c.h.b16 %v2972
        %v3374 = vunpack.c.l.b16 %v2973
        %v3375 = vunpack.c.h.b16 %v2973
        %v3376 = vunpack.c.l.b16 %v2974
        %v3377 = vunpack.c.h.b16 %v2974
        %v3378 = vunpack.c.l.b16 %v2975
        %v3379 = vunpack.c.h.b16 %v2975
        %v3380 = vunpack.c.l.b16 %v2976
        %v3381 = vunpack.c.h.b16 %v2976
        %v3382 = vunpack.c.l.b16 %v2977
        %v3383 = vunpack.c.h.b16 %v2977
        %v3384 = vpack.c.b16 %v3132, %v3128
        %v3385 = vpack.c.b16 %v3133, %v3129
        %v3386 = vpack.c.b16 %v3134, %v3130
        %v3387 = vpack.c.b16 %v3135, %v3131
        %v3388 = vpack.c.b16 %v3140, %v3136
        %v3389 = vpack.c.b16 %v3141, %v3137
        %v3390 = vpack.c.b16 %v3142, %v3138
        %v3391 = vpack.c.b16 %v3143, %v3139
        %v3392 = vpack.c.b16 %v3148, %v3144
        %v3393 = vpack.c.b16 %v3149, %v3145
        %v3394 = vpack.c.b16 %v3150, %v3146
        %v3395 = vpack.c.b16 %v3151, %v3147
        %v3396 = vpack.c.b16 %v3156, %v3152
        %v3397 = vpack.c.b16 %v3157, %v3153
        %v3398 = vpack.c.b16 %v3158, %v3154
        %v3399 = vpack.c.b16 %v3159, %v3155
        %v3400 = vpack.c.b16 %v3164, %v3160
        %v3401 = vpack.c.b16 %v3165, %v3161
        %v3402 = vpack.c.b16 %v3166, %v3162
        %v3403 = vpack.c.b16 %v3167, %v3163
        %v3404 = vpack.c.b16 %v3172, %v3168
        %v3405 = vpack.c.b16 %v3173, %v3169
        %v3406 = vpack.c.b16 %v3174, %v3170
        %v3407 = vpack.c.b16 %v3175, %v3171
        %v3408 = vpack.c.b16 %v3180, %v3176
        %v3409 = vpack.c.b16 %v3181, %v3177
        %v3410 = vpack.c.b16 %v3182, %v3178
        %v3411 = vpack.c.b16 %v3183, %v3179
        %v3412 = vpack.c.b16 %v3188, %v3184
        %v3413 = vpack.c.b16 %v3189, %v3185
        %v3414 = vpack.c.b16 %v3190, %v3186
        %v3415 = vpack.c.b16 %v3191, %v3187
        %v3416 = vpack.c.b16 %v3196, %v3192
        %v3417 = vpack.c.b16 %v3197, %v3193
        %v3418 = vpack.c.b16 %v3198, %v3194
        %v3419 = vpack.c.b16 %v3199, %v3195
        %v3420 = vpack.c.b16 %v3204, %v3200
        %v3421 = vpack.c.b16 %v3205, %v3201
        %v3422 = vpack.c.b16 %v3206, %v3202
        %v3423 = vpack.c.b16 %v3207, %v3203
        %v3424 = vpack.c.b16 %v3212, %v3208
        %v3425 = vpack.c.b16 %v3213, %v3209
        %v3426 = vpack.c.b16 %v3214, %v3210
        %v3427 = vpack.c.b16 %v3215, %v3211
        %v3428 = vpack.c.b16 %v3220, %v3216
        %v3429 = vpack.c.b16 %v3221, %v3217
        %v3430 = vpack.c.b16 %v3222, %v3218
        %v3431 = vpack.c.b16 %v3223, %v3219
        %v3432 = vpack.c.b16 %v3228, %v3224
        %v3433 = vpack.c.b16 %v3229, %v3225
        %v3434 = vpack.c.b16 %v3230, %v3226
        %v3435 = vpack.c.b16 %v3231, %v3227
        %v3436 = vpack.c.b16 %v3236, %v3232
        %v3437 = vpack.c.b16 %v3237, %v3233
        %v3438 = vpack.c.b16 %v3238, %v3234
        %v3439 = vpack.c.b16 %v3239, %v3235
        %v3440 = vpack.c.b16 %v3244, %v3240
        %v3441 = vpack.c.b16 %v3245, %v3241
        %v3442 = vpack.c.b16 %v3246, %v3242
        %v3443 = vpack.c.b16 %v3247, %v3243
        %v3444 = vpack.c.b16 %v3252, %v3248
        %v3445 = vpack.c.b16 %v3253, %v3249
        %v3446 = vpack.c.b16 %v3254, %v3250
        %v3447 = vpack.c.b16 %v3255, %v3251
        %v3448 = vpack.c.b16 %v3260, %v3256
        %v3449 = vpack.c.b16 %v3261, %v3257
        %v3450 = vpack.c.b16 %v3262, %v3258
        %v3451 = vpack.c.b16 %v3263, %v3259
        %v3452 = vpack.c.b16 %v3268, %v3264
        %v3453 = vpack.c.b16 %v3269, %v3265
        %v3454 = vpack.c.b16 %v3270, %v3266
        %v3455 = vpack.c.b16 %v3271, %v3267
        %v3456 = vpack.c.b16 %v3276, %v3272
        %v3457 = vpack.c.b16 %v3277, %v3273
        %v3458 = vpack.c.b16 %v3278, %v3274
        %v3459 = vpack.c.b16 %v3279, %v3275
        %v3460 = vpack.c.b16 %v3284, %v3280
        %v3461 = vpack.c.b16 %v3285, %v3281
        %v3462 = vpack.c.b16 %v3286, %v3282
        %v3463 = vpack.c.b16 %v3287, %v3283
        %v3464 = vpack.c.b16 %v3292, %v3288
        %v3465 = vpack.c.b16 %v3293, %v3289
        %v3466 = vpack.c.b16 %v3294, %v3290
        %v3467 = vpack.c.b16 %v3295, %v3291
        %v3468 = vpack.c.b16 %v3300, %v3296
        %v3469 = vpack.c.b16 %v3301, %v3297
        %v3470 = vpack.c.b16 %v3302, %v3298
        %v3471 = vpack.c.b16 %v3303, %v3299
        %v3472 = vpack.c.b16 %v3308, %v3304
        %v3473 = vpack.c.b16 %v3309, %v3305
        %v3474 = vpack.c.b16 %v3310, %v3306
        %v3475 = vpack.c.b16 %v3311, %v3307
        %v3476 = vpack.c.b16 %v3316, %v3312
        %v3477 = vpack.c.b16 %v3317, %v3313
        %v3478 = vpack.c.b16 %v3318, %v3314
        %v3479 = vpack.c.b16 %v3319, %v3315
        %v3480 = vpack.c.b16 %v3324, %v3320
        %v3481 = vpack.c.b16 %v3325, %v3321
        %v3482 = vpack.c.b16 %v3326, %v3322
        %v3483 = vpack.c.b16 %v3327, %v3323
        %v3484 = vpack.c.b16 %v3332, %v3328
        %v3485 = vpack.c.b16 %v3333, %v3329
        %v3486 = vpack.c.b16 %v3334, %v3330
        %v3487 = vpack.c.b16 %v3335, %v3331
        %v3488 = vpack.c.b16 %v3340, %v3336
        %v3489 = vpack.c.b16 %v3341, %v3337
        %v3490 = vpack.c.b16 %v3342, %v3338
        %v3491 = vpack.c.b16 %v3343, %v3339
        %v3492 = vpack.c.b16 %v3348, %v3344
        %v3493 = vpack.c.b16 %v3349, %v3345
        %v3494 = vpack.c.b16 %v3350, %v3346
        %v3495 = vpack.c.b16 %v3351, %v3347
        %v3496 = vpack.c.b16 %v3356, %v3352
        %v3497 = vpack.c.b16 %v3357, %v3353
        %v3498 = vpack.c.b16 %v3358, %v3354
        %v3499 = vpack.c.b16 %v3359, %v3355
        %v3500 = vpack.c.b16 %v3364, %v3360
        %v3501 = vpack.c.b16 %v3365, %v3361
        %v3502 = vpack.c.b16 %v3366, %v3362
        %v3503 = vpack.c.b16 %v3367, %v3363
        %v3504 = vpack.c.b16 %v3372, %v3368
        %v3505 = vpack.c.b16 %v3373, %v3369
        %v3506 = vpack.c.b16 %v3374, %v3370
        %v3507 = vpack.c.b16 %v3375, %v3371
        %v3508 = vpack.c.b16 %v3380, %v3376
        %v3509 = vpack.c.b16 %v3381, %v3377
        %v3510 = vpack.c.b16 %v3382, %v3378
        %v3511 = vpack.c.b16 %v3383, %v3379
        %3640 = vmatprep.subr.bf16.mxu0 %v3413
        %3641 = vmatpush1.bf16.msra.mxu0 %v3412
        %3642 = vmatprep.subr.bf16.mxu0 %v3409
        %3643 = vmatpush1.bf16.msra.mxu0 %v3408
        %3644 = vmatprep.subr.bf16.mxu0 %v3405
        %3645 = vmatpush1.bf16.msra.mxu0 %v3404
        %3646 = vmatprep.subr.bf16.mxu0 %v3401
        %3647 = vmatpush1.bf16.msra.mxu0 %v3400
        %3648 = vmatprep.subr.bf16.mxu0 %v3397
        %3649 = vmatpush1.bf16.msra.mxu0 %v3396
        %3650 = vmatprep.subr.bf16.mxu0 %v3393
        %3651 = vmatpush1.bf16.msra.mxu0 %v3392
        %3652 = vmatprep.subr.bf16.mxu0 %v3389
        %3653 = vmatpush1.bf16.msra.mxu0 %v3388
        %3654 = vmatprep.subr.bf16.mxu0 %v3385
        %3655 = vmatpush1.bf16.msra.mxu0 %v3384
        %3656 = vmatprep.subr.bf16.mxu0 %v3445
        %3657 = vmatpush2.bf16.msra.mxu0 %v3444
        %3658 = vmatprep.subr.bf16.mxu0 %v3441
        %3659 = vmatpush2.bf16.msra.mxu0 %v3440
        %3660 = vmatprep.subr.bf16.mxu0 %v3437
        %3661 = vmatpush2.bf16.msra.mxu0 %v3436
        %3662 = vmatprep.subr.bf16.mxu0 %v3433
        %3663 = vmatpush2.bf16.msra.mxu0 %v3432
        %3664 = vmatprep.subr.bf16.mxu0 %v3429
        %3665 = vmatpush2.bf16.msra.mxu0 %v3428
        %3666 = vmatprep.subr.bf16.mxu0 %v3425
        %3667 = vmatpush2.bf16.msra.mxu0 %v3424
        %3668 = vmatprep.subr.bf16.mxu0 %v3421
        %3669 = vmatpush2.bf16.msra.mxu0 %v3420
        %3670 = vmatprep.subr.bf16.mxu0 %v3417
        %3671 = vmatpush2.bf16.msra.mxu0 %v3416
        %3672 = vmatprep.mubr.bf16.mxu0 %v2595
        %3673 = vmatmul.mubr.bf16.gmra.mxu0 %v2594
        %v3674 = vpop.f32.mrf.mxu0
        %v3675 = vadd.f32 %v2983, %v3674
        %v3676 = vpop.f32.mrf.mxu0
        %v3677 = vadd.f32 %v2987, %v3676
        %v3678 = vpop.f32.mrf.mxu0
        %v3679 = vadd.f32 %v2983, %v3678
        %v3680 = vpop.f32.mrf.mxu0
        %v3681 = vadd.f32 %v2987, %v3680
        %3682 = vmatprep.mubr.bf16.mxu0 %v2599
        %3683 = vmatmul.mubr.bf16.gmra.mxu0 %v2598
        %v3684 = vpop.f32.mrf.mxu0
        %v3685 = vadd.f32 %v2983, %v3684
        %v3686 = vpop.f32.mrf.mxu0
        %v3687 = vadd.f32 %v2987, %v3686
        %v3688 = vpop.f32.mrf.mxu0
        %v3689 = vadd.f32 %v2983, %v3688
        %v3690 = vpop.f32.mrf.mxu0
        %v3691 = vadd.f32 %v2987, %v3690
        %3692 = vmatprep.mubr.bf16.mxu0 %v2603
        %3693 = vmatmul.mubr.bf16.gmra.mxu0 %v2602
        %v3694 = vpop.f32.mrf.mxu0
        %v3695 = vadd.f32 %v2983, %v3694
        %v3696 = vpop.f32.mrf.mxu0
        %v3697 = vadd.f32 %v2987, %v3696
        %v3698 = vpop.f32.mrf.mxu0
        %v3699 = vadd.f32 %v2983, %v3698
        %v3700 = vpop.f32.mrf.mxu0
        %v3701 = vadd.f32 %v2987, %v3700
        %3702 = vmatprep.mubr.bf16.mxu0 %v2607
        %3703 = vmatmul.mubr.bf16.gmra.mxu0 %v2606
        %v3704 = vpop.f32.mrf.mxu0
        %v3705 = vadd.f32 %v2983, %v3704
        %v3706 = vpop.f32.mrf.mxu0
        %v3707 = vadd.f32 %v2987, %v3706
        %v3708 = vpop.f32.mrf.mxu0
        %v3709 = vadd.f32 %v2983, %v3708
        %v3710 = vpop.f32.mrf.mxu0
        %v3711 = vadd.f32 %v2987, %v3710
        %3712 = vmatprep.mubr.bf16.mxu0 %v2611
        %3713 = vmatmul.mubr.bf16.gmra.mxu0 %v2610
        %v3714 = vpop.f32.mrf.mxu0
        %v3715 = vadd.f32 %v2983, %v3714
        %v3716 = vpop.f32.mrf.mxu0
        %v3717 = vadd.f32 %v2987, %v3716
        %v3718 = vpop.f32.mrf.mxu0
        %v3719 = vadd.f32 %v2983, %v3718
        %v3720 = vpop.f32.mrf.mxu0
        %v3721 = vadd.f32 %v2987, %v3720
        %3722 = vmatprep.mubr.bf16.mxu0 %v2615
        %3723 = vmatmul.mubr.bf16.gmra.mxu0 %v2614
        %v3724 = vpop.f32.mrf.mxu0
        %v3725 = vadd.f32 %v2983, %v3724
        %v3726 = vpop.f32.mrf.mxu0
        %v3727 = vadd.f32 %v2987, %v3726
        %v3728 = vpop.f32.mrf.mxu0
        %v3729 = vadd.f32 %v2983, %v3728
        %v3730 = vpop.f32.mrf.mxu0
        %v3731 = vadd.f32 %v2987, %v3730
        %3732 = vmatprep.mubr.bf16.mxu0 %v2619
        %3733 = vmatmul.mubr.bf16.gmra.mxu0 %v2618
        %v3734 = vpop.f32.mrf.mxu0
        %v3735 = vadd.f32 %v2983, %v3734
        %v3736 = vpop.f32.mrf.mxu0
        %v3737 = vadd.f32 %v2987, %v3736
        %v3738 = vpop.f32.mrf.mxu0
        %v3739 = vadd.f32 %v2983, %v3738
        %v3740 = vpop.f32.mrf.mxu0
        %v3741 = vadd.f32 %v2987, %v3740
        %3742 = vmatprep.mubr.bf16.mxu0 %v2623
        %3743 = vmatmul.mubr.bf16.gmra.mxu0 %v2622
        %v3744 = vpop.f32.mrf.mxu0
        %v3745 = vadd.f32 %v2983, %v3744
        %v3746 = vpop.f32.mrf.mxu0
        %v3747 = vadd.f32 %v2987, %v3746
        %v3748 = vpop.f32.mrf.mxu0
        %v3749 = vadd.f32 %v2983, %v3748
        %v3750 = vpop.f32.mrf.mxu0
        %v3751 = vadd.f32 %v2987, %v3750
        %3752 = vmatprep.mubr.bf16.mxu0 %v2627
        %3753 = vmatmul.mubr.bf16.gmra.mxu0 %v2626
        %v3754 = vpop.f32.mrf.mxu0
        %v3755 = vadd.f32 %v2983, %v3754
        %v3756 = vpop.f32.mrf.mxu0
        %v3757 = vadd.f32 %v2987, %v3756
        %v3758 = vpop.f32.mrf.mxu0
        %v3759 = vadd.f32 %v2983, %v3758
        %v3760 = vpop.f32.mrf.mxu0
        %v3761 = vadd.f32 %v2987, %v3760
        %3762 = vmatprep.mubr.bf16.mxu0 %v2631
        %3763 = vmatmul.mubr.bf16.gmra.mxu0 %v2630
        %v3764 = vpop.f32.mrf.mxu0
        %v3765 = vadd.f32 %v2983, %v3764
        %v3766 = vpop.f32.mrf.mxu0
        %v3767 = vadd.f32 %v2987, %v3766
        %v3768 = vpop.f32.mrf.mxu0
        %v3769 = vadd.f32 %v2983, %v3768
        %v3770 = vpop.f32.mrf.mxu0
        %v3771 = vadd.f32 %v2987, %v3770
        %3772 = vmatprep.mubr.bf16.mxu0 %v2635
        %3773 = vmatmul.mubr.bf16.gmra.mxu0 %v2634
        %v3774 = vpop.f32.mrf.mxu0
        %v3775 = vadd.f32 %v2983, %v3774
        %v3776 = vpop.f32.mrf.mxu0
        %v3777 = vadd.f32 %v2987, %v3776
        %v3778 = vpop.f32.mrf.mxu0
        %v3779 = vadd.f32 %v2983, %v3778
        %v3780 = vpop.f32.mrf.mxu0
        %v3781 = vadd.f32 %v2987, %v3780
        %3782 = vmatprep.mubr.bf16.mxu0 %v2639
        %3783 = vmatmul.mubr.bf16.gmra.mxu0 %v2638
        %v3784 = vpop.f32.mrf.mxu0
        %v3785 = vadd.f32 %v2983, %v3784
        %v3786 = vpop.f32.mrf.mxu0
        %v3787 = vadd.f32 %v2987, %v3786
        %v3788 = vpop.f32.mrf.mxu0
        %v3789 = vadd.f32 %v2983, %v3788
        %v3790 = vpop.f32.mrf.mxu0
        %v3791 = vadd.f32 %v2987, %v3790
        %3792 = vmatprep.mubr.bf16.mxu0 %v2643
        %3793 = vmatmul.mubr.bf16.gmra.mxu0 %v2642
        %v3794 = vpop.f32.mrf.mxu0
        %v3795 = vadd.f32 %v2983, %v3794
        %v3796 = vpop.f32.mrf.mxu0
        %v3797 = vadd.f32 %v2987, %v3796
        %v3798 = vpop.f32.mrf.mxu0
        %v3799 = vadd.f32 %v2983, %v3798
        %v3800 = vpop.f32.mrf.mxu0
        %v3801 = vadd.f32 %v2987, %v3800
        %3802 = vmatprep.mubr.bf16.mxu0 %v2647
        %3803 = vmatmul.mubr.bf16.gmra.mxu0 %v2646
        %v3804 = vpop.f32.mrf.mxu0
        %v3805 = vadd.f32 %v2983, %v3804
        %v3806 = vpop.f32.mrf.mxu0
        %v3807 = vadd.f32 %v2987, %v3806
        %v3808 = vpop.f32.mrf.mxu0
        %v3809 = vadd.f32 %v2983, %v3808
        %v3810 = vpop.f32.mrf.mxu0
        %v3811 = vadd.f32 %v2987, %v3810
        %3812 = vmatprep.mubr.bf16.mxu0 %v2651
        %3813 = vmatmul.mubr.bf16.gmra.mxu0 %v2650
        %v3814 = vpop.f32.mrf.mxu0
        %v3815 = vadd.f32 %v2983, %v3814
        %v3816 = vpop.f32.mrf.mxu0
        %v3817 = vadd.f32 %v2987, %v3816
        %v3818 = vpop.f32.mrf.mxu0
        %v3819 = vadd.f32 %v2983, %v3818
        %v3820 = vpop.f32.mrf.mxu0
        %v3821 = vadd.f32 %v2987, %v3820
        %3822 = vmatprep.mubr.bf16.mxu0 %v2655
        %3823 = vmatmul.mubr.bf16.gmra.mxu0 %v2654
        %v3824 = vpop.f32.mrf.mxu0
        %v3825 = vadd.f32 %v2983, %v3824
        %v3826 = vpop.f32.mrf.mxu0
        %v3827 = vadd.f32 %v2987, %v3826
        %v3828 = vpop.f32.mrf.mxu0
        %v3829 = vadd.f32 %v2983, %v3828
        %v3830 = vpop.f32.mrf.mxu0
        %v3831 = vadd.f32 %v2987, %v3830
        %3832 = vmatprep.mubr.bf16.mxu0 %v2659
        %3833 = vmatmul.mubr.bf16.gmra.mxu0 %v2658
        %v3834 = vpop.f32.mrf.mxu0
        %v3835 = vadd.f32 %v2983, %v3834
        %v3836 = vpop.f32.mrf.mxu0
        %v3837 = vadd.f32 %v2987, %v3836
        %v3838 = vpop.f32.mrf.mxu0
        %v3839 = vadd.f32 %v2983, %v3838
        %v3840 = vpop.f32.mrf.mxu0
        %v3841 = vadd.f32 %v2987, %v3840
        %3842 = vmatprep.mubr.bf16.mxu0 %v2663
        %3843 = vmatmul.mubr.bf16.gmra.mxu0 %v2662
        %v3844 = vpop.f32.mrf.mxu0
        %v3845 = vadd.f32 %v2983, %v3844
        %v3846 = vpop.f32.mrf.mxu0
        %v3847 = vadd.f32 %v2987, %v3846
        %v3848 = vpop.f32.mrf.mxu0
        %v3849 = vadd.f32 %v2983, %v3848
        %v3850 = vpop.f32.mrf.mxu0
        %v3851 = vadd.f32 %v2987, %v3850
        %3852 = vmatprep.mubr.bf16.mxu0 %v2667
        %3853 = vmatmul.mubr.bf16.gmra.mxu0 %v2666
        %v3854 = vpop.f32.mrf.mxu0
        %v3855 = vadd.f32 %v2983, %v3854
        %v3856 = vpop.f32.mrf.mxu0
        %v3857 = vadd.f32 %v2987, %v3856
        %v3858 = vpop.f32.mrf.mxu0
        %v3859 = vadd.f32 %v2983, %v3858
        %v3860 = vpop.f32.mrf.mxu0
        %v3861 = vadd.f32 %v2987, %v3860
        %3862 = vmatprep.mubr.bf16.mxu0 %v2671
        %3863 = vmatmul.mubr.bf16.gmra.mxu0 %v2670
        %v3864 = vpop.f32.mrf.mxu0
        %v3865 = vadd.f32 %v2983, %v3864
        %v3866 = vpop.f32.mrf.mxu0
        %v3867 = vadd.f32 %v2987, %v3866
        %v3868 = vpop.f32.mrf.mxu0
        %v3869 = vadd.f32 %v2983, %v3868
        %v3870 = vpop.f32.mrf.mxu0
        %v3871 = vadd.f32 %v2987, %v3870
        %3872 = vmatprep.mubr.bf16.mxu0 %v2675
        %3873 = vmatmul.mubr.bf16.gmra.mxu0 %v2674
        %v3874 = vpop.f32.mrf.mxu0
        %v3875 = vadd.f32 %v2983, %v3874
        %v3876 = vpop.f32.mrf.mxu0
        %v3877 = vadd.f32 %v2987, %v3876
        %v3878 = vpop.f32.mrf.mxu0
        %v3879 = vadd.f32 %v2983, %v3878
        %v3880 = vpop.f32.mrf.mxu0
        %v3881 = vadd.f32 %v2987, %v3880
        %3882 = vmatprep.mubr.bf16.mxu0 %v2679
        %3883 = vmatmul.mubr.bf16.gmra.mxu0 %v2678
        %v3884 = vpop.f32.mrf.mxu0
        %v3885 = vadd.f32 %v2983, %v3884
        %v3886 = vpop.f32.mrf.mxu0
        %v3887 = vadd.f32 %v2987, %v3886
        %v3888 = vpop.f32.mrf.mxu0
        %v3889 = vadd.f32 %v2983, %v3888
        %v3890 = vpop.f32.mrf.mxu0
        %v3891 = vadd.f32 %v2987, %v3890
        %3892 = vmatprep.mubr.bf16.mxu0 %v2683
        %3893 = vmatmul.mubr.bf16.gmra.mxu0 %v2682
        %v3894 = vpop.f32.mrf.mxu0
        %v3895 = vadd.f32 %v2983, %v3894
        %v3896 = vpop.f32.mrf.mxu0
        %v3897 = vadd.f32 %v2987, %v3896
        %v3898 = vpop.f32.mrf.mxu0
        %v3899 = vadd.f32 %v2983, %v3898
        %v3900 = vpop.f32.mrf.mxu0
        %v3901 = vadd.f32 %v2987, %v3900
        %3902 = vmatprep.mubr.bf16.mxu0 %v2687
        %3903 = vmatmul.mubr.bf16.gmra.mxu0 %v2686
        %v3904 = vpop.f32.mrf.mxu0
        %v3905 = vadd.f32 %v2983, %v3904
        %v3906 = vpop.f32.mrf.mxu0
        %v3907 = vadd.f32 %v2987, %v3906
        %v3908 = vpop.f32.mrf.mxu0
        %v3909 = vadd.f32 %v2983, %v3908
        %v3910 = vpop.f32.mrf.mxu0
        %v3911 = vadd.f32 %v2987, %v3910
        %3912 = vmatprep.mubr.bf16.mxu0 %v2691
        %3913 = vmatmul.mubr.bf16.gmra.mxu0 %v2690
        %v3914 = vpop.f32.mrf.mxu0
        %v3915 = vadd.f32 %v2983, %v3914
        %v3916 = vpop.f32.mrf.mxu0
        %v3917 = vadd.f32 %v2987, %v3916
        %v3918 = vpop.f32.mrf.mxu0
        %v3919 = vadd.f32 %v2983, %v3918
        %v3920 = vpop.f32.mrf.mxu0
        %v3921 = vadd.f32 %v2987, %v3920
        %3922 = vmatprep.mubr.bf16.mxu0 %v2695
        %3923 = vmatmul.mubr.bf16.gmra.mxu0 %v2694
        %v3924 = vpop.f32.mrf.mxu0
        %v3925 = vadd.f32 %v2983, %v3924
        %v3926 = vpop.f32.mrf.mxu0
        %v3927 = vadd.f32 %v2987, %v3926
        %v3928 = vpop.f32.mrf.mxu0
        %v3929 = vadd.f32 %v2983, %v3928
        %v3930 = vpop.f32.mrf.mxu0
        %v3931 = vadd.f32 %v2987, %v3930
        %3932 = vmatprep.mubr.bf16.mxu0 %v2699
        %3933 = vmatmul.mubr.bf16.gmra.mxu0 %v2698
        %v3934 = vpop.f32.mrf.mxu0
        %v3935 = vadd.f32 %v2983, %v3934
        %v3936 = vpop.f32.mrf.mxu0
        %v3937 = vadd.f32 %v2987, %v3936
        %v3938 = vpop.f32.mrf.mxu0
        %v3939 = vadd.f32 %v2983, %v3938
        %v3940 = vpop.f32.mrf.mxu0
        %v3941 = vadd.f32 %v2987, %v3940
        %3942 = vmatprep.mubr.bf16.mxu0 %v2703
        %3943 = vmatmul.mubr.bf16.gmra.mxu0 %v2702
        %v3944 = vpop.f32.mrf.mxu0
        %v3945 = vadd.f32 %v2983, %v3944
        %v3946 = vpop.f32.mrf.mxu0
        %v3947 = vadd.f32 %v2987, %v3946
        %v3948 = vpop.f32.mrf.mxu0
        %v3949 = vadd.f32 %v2983, %v3948
        %v3950 = vpop.f32.mrf.mxu0
        %v3951 = vadd.f32 %v2987, %v3950
        %3952 = vmatprep.mubr.bf16.mxu0 %v2707
        %3953 = vmatmul.mubr.bf16.gmra.mxu0 %v2706
        %v3954 = vpop.f32.mrf.mxu0
        %v3955 = vadd.f32 %v2983, %v3954
        %v3956 = vpop.f32.mrf.mxu0
        %v3957 = vadd.f32 %v2987, %v3956
        %v3958 = vpop.f32.mrf.mxu0
        %v3959 = vadd.f32 %v2983, %v3958
        %v3960 = vpop.f32.mrf.mxu0
        %v3961 = vadd.f32 %v2987, %v3960
        %3962 = vmatprep.mubr.bf16.mxu0 %v2711
        %3963 = vmatmul.mubr.bf16.gmra.mxu0 %v2710
        %v3964 = vpop.f32.mrf.mxu0
        %v3965 = vadd.f32 %v2983, %v3964
        %v3966 = vpop.f32.mrf.mxu0
        %v3967 = vadd.f32 %v2987, %v3966
        %v3968 = vpop.f32.mrf.mxu0
        %v3969 = vadd.f32 %v2983, %v3968
        %v3970 = vpop.f32.mrf.mxu0
        %v3971 = vadd.f32 %v2987, %v3970
        %3972 = vmatprep.mubr.bf16.mxu0 %v2715
        %3973 = vmatmul.mubr.bf16.gmra.mxu0 %v2714
        %v3974 = vpop.f32.mrf.mxu0
        %v3975 = vadd.f32 %v2983, %v3974
        %v3976 = vpop.f32.mrf.mxu0
        %v3977 = vadd.f32 %v2987, %v3976
        %v3978 = vpop.f32.mrf.mxu0
        %v3979 = vadd.f32 %v2983, %v3978
        %v3980 = vpop.f32.mrf.mxu0
        %v3981 = vadd.f32 %v2987, %v3980
        %3982 = vmatprep.mubr.bf16.mxu0 %v2719
        %3983 = vmatmul.mubr.bf16.gmra.mxu0 %v2718
        %v3984 = vpop.f32.mrf.mxu0
        %v3985 = vadd.f32 %v2983, %v3984
        %v3986 = vpop.f32.mrf.mxu0
        %v3987 = vadd.f32 %v2987, %v3986
        %v3988 = vpop.f32.mrf.mxu0
        %v3989 = vadd.f32 %v2983, %v3988
        %v3990 = vpop.f32.mrf.mxu0
        %v3991 = vadd.f32 %v2987, %v3990
        %3992 = vmatprep.mubr.bf16.mxu0 %v2723
        %3993 = vmatmul.mubr.bf16.gmra.mxu0 %v2722
        %v3994 = vpop.f32.mrf.mxu0
        %v3995 = vadd.f32 %v2983, %v3994
        %v3996 = vpop.f32.mrf.mxu0
        %v3997 = vadd.f32 %v2987, %v3996
        %v3998 = vpop.f32.mrf.mxu0
        %v3999 = vadd.f32 %v2983, %v3998
        %v4000 = vpop.f32.mrf.mxu0
        %v4001 = vadd.f32 %v2987, %v4000
        %4002 = vmatprep.mubr.bf16.mxu0 %v2727
        %4003 = vmatmul.mubr.bf16.gmra.mxu0 %v2726
        %v4004 = vpop.f32.mrf.mxu0
        %v4005 = vadd.f32 %v2983, %v4004
        %v4006 = vpop.f32.mrf.mxu0
        %v4007 = vadd.f32 %v2987, %v4006
        %v4008 = vpop.f32.mrf.mxu0
        %v4009 = vadd.f32 %v2983, %v4008
        %v4010 = vpop.f32.mrf.mxu0
        %v4011 = vadd.f32 %v2987, %v4010
        %4012 = vmatprep.mubr.bf16.mxu0 %v2731
        %4013 = vmatmul.mubr.bf16.gmra.mxu0 %v2730
        %v4014 = vpop.f32.mrf.mxu0
        %v4015 = vadd.f32 %v2983, %v4014
        %v4016 = vpop.f32.mrf.mxu0
        %v4017 = vadd.f32 %v2987, %v4016
        %v4018 = vpop.f32.mrf.mxu0
        %v4019 = vadd.f32 %v2983, %v4018
        %v4020 = vpop.f32.mrf.mxu0
        %v4021 = vadd.f32 %v2987, %v4020
        %4022 = vmatprep.mubr.bf16.mxu0 %v2735
        %4023 = vmatmul.mubr.bf16.gmra.mxu0 %v2734
        %v4024 = vpop.f32.mrf.mxu0
        %v4025 = vadd.f32 %v2983, %v4024
        %v4026 = vpop.f32.mrf.mxu0
        %v4027 = vadd.f32 %v2987, %v4026
        %v4028 = vpop.f32.mrf.mxu0
        %v4029 = vadd.f32 %v2983, %v4028
        %v4030 = vpop.f32.mrf.mxu0
        %v4031 = vadd.f32 %v2987, %v4030
        %4032 = vmatprep.mubr.bf16.mxu0 %v2739
        %4033 = vmatmul.mubr.bf16.gmra.mxu0 %v2738
        %v4034 = vpop.f32.mrf.mxu0
        %v4035 = vadd.f32 %v2983, %v4034
        %v4036 = vpop.f32.mrf.mxu0
        %v4037 = vadd.f32 %v2987, %v4036
        %v4038 = vpop.f32.mrf.mxu0
        %v4039 = vadd.f32 %v2983, %v4038
        %v4040 = vpop.f32.mrf.mxu0
        %v4041 = vadd.f32 %v2987, %v4040
        %4042 = vmatprep.mubr.bf16.mxu0 %v2743
        %4043 = vmatmul.mubr.bf16.gmra.mxu0 %v2742
        %v4044 = vpop.f32.mrf.mxu0
        %v4045 = vadd.f32 %v2983, %v4044
        %v4046 = vpop.f32.mrf.mxu0
        %v4047 = vadd.f32 %v2987, %v4046
        %v4048 = vpop.f32.mrf.mxu0
        %v4049 = vadd.f32 %v2983, %v4048
        %v4050 = vpop.f32.mrf.mxu0
        %v4051 = vadd.f32 %v2987, %v4050
        %4052 = vmatprep.mubr.bf16.mxu0 %v2747
        %4053 = vmatmul.mubr.bf16.gmra.mxu0 %v2746
        %v4054 = vpop.f32.mrf.mxu0
        %v4055 = vadd.f32 %v2983, %v4054
        %v4056 = vpop.f32.mrf.mxu0
        %v4057 = vadd.f32 %v2987, %v4056
        %v4058 = vpop.f32.mrf.mxu0
        %v4059 = vadd.f32 %v2983, %v4058
        %v4060 = vpop.f32.mrf.mxu0
        %v4061 = vadd.f32 %v2987, %v4060
        %4062 = vmatprep.mubr.bf16.mxu0 %v2751
        %4063 = vmatmul.mubr.bf16.gmra.mxu0 %v2750
        %v4064 = vpop.f32.mrf.mxu0
        %v4065 = vadd.f32 %v2983, %v4064
        %v4066 = vpop.f32.mrf.mxu0
        %v4067 = vadd.f32 %v2987, %v4066
        %v4068 = vpop.f32.mrf.mxu0
        %v4069 = vadd.f32 %v2983, %v4068
        %v4070 = vpop.f32.mrf.mxu0
        %v4071 = vadd.f32 %v2987, %v4070
        %4072 = vmatprep.mubr.bf16.mxu0 %v2755
        %4073 = vmatmul.mubr.bf16.gmra.mxu0 %v2754
        %v4074 = vpop.f32.mrf.mxu0
        %v4075 = vadd.f32 %v2983, %v4074
        %v4076 = vpop.f32.mrf.mxu0
        %v4077 = vadd.f32 %v2987, %v4076
        %v4078 = vpop.f32.mrf.mxu0
        %v4079 = vadd.f32 %v2983, %v4078
        %v4080 = vpop.f32.mrf.mxu0
        %v4081 = vadd.f32 %v2987, %v4080
        %4082 = vmatprep.mubr.bf16.mxu0 %v2759
        %4083 = vmatmul.mubr.bf16.gmra.mxu0 %v2758
        %v4084 = vpop.f32.mrf.mxu0
        %v4085 = vadd.f32 %v2983, %v4084
        %v4086 = vpop.f32.mrf.mxu0
        %v4087 = vadd.f32 %v2987, %v4086
        %v4088 = vpop.f32.mrf.mxu0
        %v4089 = vadd.f32 %v2983, %v4088
        %v4090 = vpop.f32.mrf.mxu0
        %v4091 = vadd.f32 %v2987, %v4090
        %4092 = vmatprep.mubr.bf16.mxu0 %v2763
        %4093 = vmatmul.mubr.bf16.gmra.mxu0 %v2762
        %v4094 = vpop.f32.mrf.mxu0
        %v4095 = vadd.f32 %v2983, %v4094
        %v4096 = vpop.f32.mrf.mxu0
        %v4097 = vadd.f32 %v2987, %v4096
        %v4098 = vpop.f32.mrf.mxu0
        %v4099 = vadd.f32 %v2983, %v4098
        %v4100 = vpop.f32.mrf.mxu0
        %v4101 = vadd.f32 %v2987, %v4100
        %4102 = vmatprep.mubr.bf16.mxu0 %v2767
        %4103 = vmatmul.mubr.bf16.gmra.mxu0 %v2766
        %v4104 = vpop.f32.mrf.mxu0
        %v4105 = vadd.f32 %v2983, %v4104
        %v4106 = vpop.f32.mrf.mxu0
        %v4107 = vadd.f32 %v2987, %v4106
        %v4108 = vpop.f32.mrf.mxu0
        %v4109 = vadd.f32 %v2983, %v4108
        %v4110 = vpop.f32.mrf.mxu0
        %v4111 = vadd.f32 %v2987, %v4110
        %4112 = vmatprep.mubr.bf16.mxu0 %v2771
        %4113 = vmatmul.mubr.bf16.gmra.mxu0 %v2770
        %v4114 = vpop.f32.mrf.mxu0
        %v4115 = vadd.f32 %v2983, %v4114
        %v4116 = vpop.f32.mrf.mxu0
        %v4117 = vadd.f32 %v2987, %v4116
        %v4118 = vpop.f32.mrf.mxu0
        %v4119 = vadd.f32 %v2983, %v4118
        %v4120 = vpop.f32.mrf.mxu0
        %v4121 = vadd.f32 %v2987, %v4120
        %4122 = vmatprep.mubr.bf16.mxu0 %v2775
        %4123 = vmatmul.mubr.bf16.gmra.mxu0 %v2774
        %v4124 = vpop.f32.mrf.mxu0
        %v4125 = vadd.f32 %v2983, %v4124
        %v4126 = vpop.f32.mrf.mxu0
        %v4127 = vadd.f32 %v2987, %v4126
        %v4128 = vpop.f32.mrf.mxu0
        %v4129 = vadd.f32 %v2983, %v4128
        %v4130 = vpop.f32.mrf.mxu0
        %v4131 = vadd.f32 %v2987, %v4130
        %4132 = vmatprep.mubr.bf16.mxu0 %v2779
        %4133 = vmatmul.mubr.bf16.gmra.mxu0 %v2778
        %v4134 = vpop.f32.mrf.mxu0
        %v4135 = vadd.f32 %v2983, %v4134
        %v4136 = vpop.f32.mrf.mxu0
        %v4137 = vadd.f32 %v2987, %v4136
        %v4138 = vpop.f32.mrf.mxu0
        %v4139 = vadd.f32 %v2983, %v4138
        %v4140 = vpop.f32.mrf.mxu0
        %v4141 = vadd.f32 %v2987, %v4140
        %4142 = vmatprep.mubr.bf16.mxu0 %v2783
        %4143 = vmatmul.mubr.bf16.gmra.mxu0 %v2782
        %v4144 = vpop.f32.mrf.mxu0
        %v4145 = vadd.f32 %v2983, %v4144
        %v4146 = vpop.f32.mrf.mxu0
        %v4147 = vadd.f32 %v2987, %v4146
        %v4148 = vpop.f32.mrf.mxu0
        %v4149 = vadd.f32 %v2983, %v4148
        %v4150 = vpop.f32.mrf.mxu0
        %v4151 = vadd.f32 %v2987, %v4150
        %4152 = vmatprep.mubr.bf16.mxu0 %v2787
        %4153 = vmatmul.mubr.bf16.gmra.mxu0 %v2786
        %v4154 = vpop.f32.mrf.mxu0
        %v4155 = vadd.f32 %v2983, %v4154
        %v4156 = vpop.f32.mrf.mxu0
        %v4157 = vadd.f32 %v2987, %v4156
        %v4158 = vpop.f32.mrf.mxu0
        %v4159 = vadd.f32 %v2983, %v4158
        %v4160 = vpop.f32.mrf.mxu0
        %v4161 = vadd.f32 %v2987, %v4160
        %4162 = vmatprep.mubr.bf16.mxu0 %v2791
        %4163 = vmatmul.mubr.bf16.gmra.mxu0 %v2790
        %v4164 = vpop.f32.mrf.mxu0
        %v4165 = vadd.f32 %v2983, %v4164
        %v4166 = vpop.f32.mrf.mxu0
        %v4167 = vadd.f32 %v2987, %v4166
        %v4168 = vpop.f32.mrf.mxu0
        %v4169 = vadd.f32 %v2983, %v4168
        %v4170 = vpop.f32.mrf.mxu0
        %v4171 = vadd.f32 %v2987, %v4170
        %4172 = vmatprep.mubr.bf16.mxu0 %v2795
        %4173 = vmatmul.mubr.bf16.gmra.mxu0 %v2794
        %v4174 = vpop.f32.mrf.mxu0
        %v4175 = vadd.f32 %v2983, %v4174
        %v4176 = vpop.f32.mrf.mxu0
        %v4177 = vadd.f32 %v2987, %v4176
        %v4178 = vpop.f32.mrf.mxu0
        %v4179 = vadd.f32 %v2983, %v4178
        %v4180 = vpop.f32.mrf.mxu0
        %v4181 = vadd.f32 %v2987, %v4180
        %4182 = vmatprep.mubr.bf16.mxu0 %v2799
        %4183 = vmatmul.mubr.bf16.gmra.mxu0 %v2798
        %v4184 = vpop.f32.mrf.mxu0
        %v4185 = vadd.f32 %v2983, %v4184
        %v4186 = vpop.f32.mrf.mxu0
        %v4187 = vadd.f32 %v2987, %v4186
        %v4188 = vpop.f32.mrf.mxu0
        %v4189 = vadd.f32 %v2983, %v4188
        %v4190 = vpop.f32.mrf.mxu0
        %v4191 = vadd.f32 %v2987, %v4190
        %4192 = vmatprep.mubr.bf16.mxu0 %v2803
        %4193 = vmatmul.mubr.bf16.gmra.mxu0 %v2802
        %v4194 = vpop.f32.mrf.mxu0
        %v4195 = vadd.f32 %v2983, %v4194
        %v4196 = vpop.f32.mrf.mxu0
        %v4197 = vadd.f32 %v2987, %v4196
        %v4198 = vpop.f32.mrf.mxu0
        %v4199 = vadd.f32 %v2983, %v4198
        %v4200 = vpop.f32.mrf.mxu0
        %v4201 = vadd.f32 %v2987, %v4200
        %4202 = vmatprep.mubr.bf16.mxu0 %v2807
        %4203 = vmatmul.mubr.bf16.gmra.mxu0 %v2806
        %v4204 = vpop.f32.mrf.mxu0
        %v4205 = vadd.f32 %v2983, %v4204
        %v4206 = vpop.f32.mrf.mxu0
        %v4207 = vadd.f32 %v2987, %v4206
        %v4208 = vpop.f32.mrf.mxu0
        %v4209 = vadd.f32 %v2983, %v4208
        %v4210 = vpop.f32.mrf.mxu0
        %v4211 = vadd.f32 %v2987, %v4210
        %4212 = vmatprep.mubr.bf16.mxu0 %v2811
        %4213 = vmatmul.mubr.bf16.gmra.mxu0 %v2810
        %v4214 = vpop.f32.mrf.mxu0
        %v4215 = vadd.f32 %v2983, %v4214
        %v4216 = vpop.f32.mrf.mxu0
        %v4217 = vadd.f32 %v2987, %v4216
        %v4218 = vpop.f32.mrf.mxu0
        %v4219 = vadd.f32 %v2983, %v4218
        %v4220 = vpop.f32.mrf.mxu0
        %v4221 = vadd.f32 %v2987, %v4220
        %4222 = vmatprep.mubr.bf16.mxu0 %v2815
        %4223 = vmatmul.mubr.bf16.gmra.mxu0 %v2814
        %v4224 = vpop.f32.mrf.mxu0
        %v4225 = vadd.f32 %v2983, %v4224
        %v4226 = vpop.f32.mrf.mxu0
        %v4227 = vadd.f32 %v2987, %v4226
        %v4228 = vpop.f32.mrf.mxu0
        %v4229 = vadd.f32 %v2983, %v4228
        %v4230 = vpop.f32.mrf.mxu0
        %v4231 = vadd.f32 %v2987, %v4230
        %4232 = vmatprep.mubr.bf16.mxu0 %v2819
        %4233 = vmatmul.mubr.bf16.gmra.mxu0 %v2818
        %v4234 = vpop.f32.mrf.mxu0
        %v4235 = vadd.f32 %v2983, %v4234
        %v4236 = vpop.f32.mrf.mxu0
        %v4237 = vadd.f32 %v2987, %v4236
        %v4238 = vpop.f32.mrf.mxu0
        %v4239 = vadd.f32 %v2983, %v4238
        %v4240 = vpop.f32.mrf.mxu0
        %v4241 = vadd.f32 %v2987, %v4240
        %4242 = vmatprep.mubr.bf16.mxu0 %v2823
        %4243 = vmatmul.mubr.bf16.gmra.mxu0 %v2822
        %v4244 = vpop.f32.mrf.mxu0
        %v4245 = vadd.f32 %v2983, %v4244
        %v4246 = vpop.f32.mrf.mxu0
        %v4247 = vadd.f32 %v2987, %v4246
        %v4248 = vpop.f32.mrf.mxu0
        %v4249 = vadd.f32 %v2983, %v4248
        %v4250 = vpop.f32.mrf.mxu0
        %v4251 = vadd.f32 %v2987, %v4250
        %4252 = vmatprep.mubr.bf16.mxu0 %v2827
        %4253 = vmatmul.mubr.bf16.gmra.mxu0 %v2826
        %v4254 = vpop.f32.mrf.mxu0
        %v4255 = vadd.f32 %v2983, %v4254
        %v4256 = vpop.f32.mrf.mxu0
        %v4257 = vadd.f32 %v2987, %v4256
        %v4258 = vpop.f32.mrf.mxu0
        %v4259 = vadd.f32 %v2983, %v4258
        %v4260 = vpop.f32.mrf.mxu0
        %v4261 = vadd.f32 %v2987, %v4260
        %4262 = vmatprep.mubr.bf16.mxu0 %v2831
        %4263 = vmatmul.mubr.bf16.gmra.mxu0 %v2830
        %v4264 = vpop.f32.mrf.mxu0
        %v4265 = vadd.f32 %v2983, %v4264
        %v4266 = vpop.f32.mrf.mxu0
        %v4267 = vadd.f32 %v2987, %v4266
        %v4268 = vpop.f32.mrf.mxu0
        %v4269 = vadd.f32 %v2983, %v4268
        %v4270 = vpop.f32.mrf.mxu0
        %v4271 = vadd.f32 %v2987, %v4270
        %4272 = vmatprep.mubr.bf16.mxu0 %v2835
        %4273 = vmatmul.mubr.bf16.gmra.mxu0 %v2834
        %v4274 = vpop.f32.mrf.mxu0
        %v4275 = vadd.f32 %v2983, %v4274
        %v4276 = vpop.f32.mrf.mxu0
        %v4277 = vadd.f32 %v2987, %v4276
        %v4278 = vpop.f32.mrf.mxu0
        %v4279 = vadd.f32 %v2983, %v4278
        %v4280 = vpop.f32.mrf.mxu0
        %v4281 = vadd.f32 %v2987, %v4280
        %4282 = vmatprep.mubr.bf16.mxu0 %v2839
        %4283 = vmatmul.mubr.bf16.gmra.mxu0 %v2838
        %v4284 = vpop.f32.mrf.mxu0
        %v4285 = vadd.f32 %v2983, %v4284
        %v4286 = vpop.f32.mrf.mxu0
        %v4287 = vadd.f32 %v2987, %v4286
        %v4288 = vpop.f32.mrf.mxu0
        %v4289 = vadd.f32 %v2983, %v4288
        %v4290 = vpop.f32.mrf.mxu0
        %v4291 = vadd.f32 %v2987, %v4290
        %4292 = vmatprep.mubr.bf16.mxu0 %v2843
        %4293 = vmatmul.mubr.bf16.gmra.mxu0 %v2842
        %v4294 = vpop.f32.mrf.mxu0
        %v4295 = vadd.f32 %v2983, %v4294
        %v4296 = vpop.f32.mrf.mxu0
        %v4297 = vadd.f32 %v2987, %v4296
        %v4298 = vpop.f32.mrf.mxu0
        %v4299 = vadd.f32 %v2983, %v4298
        %v4300 = vpop.f32.mrf.mxu0
        %v4301 = vadd.f32 %v2987, %v4300
        %4302 = vmatprep.mubr.bf16.mxu0 %v2847
        %4303 = vmatmul.mubr.bf16.gmra.mxu0 %v2846
        %v4304 = vpop.f32.mrf.mxu0
        %v4305 = vadd.f32 %v2983, %v4304
        %v4306 = vpop.f32.mrf.mxu0
        %v4307 = vadd.f32 %v2987, %v4306
        %v4308 = vpop.f32.mrf.mxu0
        %v4309 = vadd.f32 %v2983, %v4308
        %v4310 = vpop.f32.mrf.mxu0
        %v4311 = vadd.f32 %v2987, %v4310
        %4312 = vdwg.mxu0
        %4313 = vmatprep.subr.bf16.mxu0 %v3477
        %4314 = vmatpush1.bf16.msra.mxu0 %v3476
        %4315 = vmatprep.subr.bf16.mxu0 %v3473
        %4316 = vmatpush1.bf16.msra.mxu0 %v3472
        %4317 = vmatprep.subr.bf16.mxu0 %v3469
        %4318 = vmatpush1.bf16.msra.mxu0 %v3468
        %4319 = vmatprep.subr.bf16.mxu0 %v3465
        %4320 = vmatpush1.bf16.msra.mxu0 %v3464
        %4321 = vmatprep.subr.bf16.mxu0 %v3461
        %4322 = vmatpush1.bf16.msra.mxu0 %v3460
        %4323 = vmatprep.subr.bf16.mxu0 %v3457
        %4324 = vmatpush1.bf16.msra.mxu0 %v3456
        %4325 = vmatprep.subr.bf16.mxu0 %v3453
        %4326 = vmatpush1.bf16.msra.mxu0 %v3452
        %4327 = vmatprep.subr.bf16.mxu0 %v3449
        %4328 = vmatpush1.bf16.msra.mxu0 %v3448
        %4329 = vmatprep.subr.bf16.mxu0 %v3509
        %4330 = vmatpush2.bf16.msra.mxu0 %v3508
        %4331 = vmatprep.subr.bf16.mxu0 %v3505
        %4332 = vmatpush2.bf16.msra.mxu0 %v3504
        %4333 = vmatprep.subr.bf16.mxu0 %v3501
        %4334 = vmatpush2.bf16.msra.mxu0 %v3500
        %4335 = vmatprep.subr.bf16.mxu0 %v3497
        %4336 = vmatpush2.bf16.msra.mxu0 %v3496
        %4337 = vmatprep.subr.bf16.mxu0 %v3493
        %4338 = vmatpush2.bf16.msra.mxu0 %v3492
        %4339 = vmatprep.subr.bf16.mxu0 %v3489
        %4340 = vmatpush2.bf16.msra.mxu0 %v3488
        %4341 = vmatprep.subr.bf16.mxu0 %v3485
        %4342 = vmatpush2.bf16.msra.mxu0 %v3484
        %4343 = vmatprep.subr.bf16.mxu0 %v3481
        %4344 = vmatpush2.bf16.msra.mxu0 %v3480
        %4345 = vmatprep.mubr.bf16.mxu0 %v2597
        %4346 = vmatmul.mubr.bf16.gmra.mxu0 %v2596
        %v4347 = vpop.f32.mrf.mxu0
        %v4348 = vadd.f32 %v3675, %v4347
        %v4349 = vpop.f32.mrf.mxu0
        %v4350 = vadd.f32 %v3677, %v4349
        %v4351 = vpop.f32.mrf.mxu0
        %v4352 = vadd.f32 %v3679, %v4351
        %v4353 = vpop.f32.mrf.mxu0
        %v4354 = vadd.f32 %v3681, %v4353
        %4355 = vmatprep.mubr.bf16.mxu0 %v2601
        %4356 = vmatmul.mubr.bf16.gmra.mxu0 %v2600
        %v4357 = vpop.f32.mrf.mxu0
        %v4358 = vadd.f32 %v3685, %v4357
        %v4359 = vpop.f32.mrf.mxu0
        %v4360 = vadd.f32 %v3687, %v4359
        %v4361 = vpop.f32.mrf.mxu0
        %v4362 = vadd.f32 %v3689, %v4361
        %v4363 = vpop.f32.mrf.mxu0
        %v4364 = vadd.f32 %v3691, %v4363
        %4365 = vmatprep.mubr.bf16.mxu0 %v2605
        %4366 = vmatmul.mubr.bf16.gmra.mxu0 %v2604
        %v4367 = vpop.f32.mrf.mxu0
        %v4368 = vadd.f32 %v3695, %v4367
        %v4369 = vpop.f32.mrf.mxu0
        %v4370 = vadd.f32 %v3697, %v4369
        %v4371 = vpop.f32.mrf.mxu0
        %v4372 = vadd.f32 %v3699, %v4371
        %v4373 = vpop.f32.mrf.mxu0
        %v4374 = vadd.f32 %v3701, %v4373
        %4375 = vmatprep.mubr.bf16.mxu0 %v2609
        %4376 = vmatmul.mubr.bf16.gmra.mxu0 %v2608
        %v4377 = vpop.f32.mrf.mxu0
        %v4378 = vadd.f32 %v3705, %v4377
        %v4379 = vpop.f32.mrf.mxu0
        %v4380 = vadd.f32 %v3707, %v4379
        %v4381 = vpop.f32.mrf.mxu0
        %v4382 = vadd.f32 %v3709, %v4381
        %v4383 = vpop.f32.mrf.mxu0
        %v4384 = vadd.f32 %v3711, %v4383
        %4385 = vmatprep.mubr.bf16.mxu0 %v2613
        %4386 = vmatmul.mubr.bf16.gmra.mxu0 %v2612
        %v4387 = vpop.f32.mrf.mxu0
        %v4388 = vadd.f32 %v3715, %v4387
        %v4389 = vpop.f32.mrf.mxu0
        %v4390 = vadd.f32 %v3717, %v4389
        %v4391 = vpop.f32.mrf.mxu0
        %v4392 = vadd.f32 %v3719, %v4391
        %v4393 = vpop.f32.mrf.mxu0
        %v4394 = vadd.f32 %v3721, %v4393
        %4395 = vmatprep.mubr.bf16.mxu0 %v2617
        %4396 = vmatmul.mubr.bf16.gmra.mxu0 %v2616
        %v4397 = vpop.f32.mrf.mxu0
        %v4398 = vadd.f32 %v3725, %v4397
        %v4399 = vpop.f32.mrf.mxu0
        %v4400 = vadd.f32 %v3727, %v4399
        %v4401 = vpop.f32.mrf.mxu0
        %v4402 = vadd.f32 %v3729, %v4401
        %v4403 = vpop.f32.mrf.mxu0
        %v4404 = vadd.f32 %v3731, %v4403
        %4405 = vmatprep.mubr.bf16.mxu0 %v2621
        %4406 = vmatmul.mubr.bf16.gmra.mxu0 %v2620
        %v4407 = vpop.f32.mrf.mxu0
        %v4408 = vadd.f32 %v3735, %v4407
        %v4409 = vpop.f32.mrf.mxu0
        %v4410 = vadd.f32 %v3737, %v4409
        %v4411 = vpop.f32.mrf.mxu0
        %v4412 = vadd.f32 %v3739, %v4411
        %v4413 = vpop.f32.mrf.mxu0
        %v4414 = vadd.f32 %v3741, %v4413
        %4415 = vmatprep.mubr.bf16.mxu0 %v2625
        %4416 = vmatmul.mubr.bf16.gmra.mxu0 %v2624
        %v4417 = vpop.f32.mrf.mxu0
        %v4418 = vadd.f32 %v3745, %v4417
        %v4419 = vpop.f32.mrf.mxu0
        %v4420 = vadd.f32 %v3747, %v4419
        %v4421 = vpop.f32.mrf.mxu0
        %v4422 = vadd.f32 %v3749, %v4421
        %v4423 = vpop.f32.mrf.mxu0
        %v4424 = vadd.f32 %v3751, %v4423
        %4425 = vmatprep.mubr.bf16.mxu0 %v2629
        %4426 = vmatmul.mubr.bf16.gmra.mxu0 %v2628
        %v4427 = vpop.f32.mrf.mxu0
        %v4428 = vadd.f32 %v3755, %v4427
        %v4429 = vpop.f32.mrf.mxu0
        %v4430 = vadd.f32 %v3757, %v4429
        %v4431 = vpop.f32.mrf.mxu0
        %v4432 = vadd.f32 %v3759, %v4431
        %v4433 = vpop.f32.mrf.mxu0
        %v4434 = vadd.f32 %v3761, %v4433
        %4435 = vmatprep.mubr.bf16.mxu0 %v2633
        %4436 = vmatmul.mubr.bf16.gmra.mxu0 %v2632
        %v4437 = vpop.f32.mrf.mxu0
        %v4438 = vadd.f32 %v3765, %v4437
        %v4439 = vpop.f32.mrf.mxu0
        %v4440 = vadd.f32 %v3767, %v4439
        %v4441 = vpop.f32.mrf.mxu0
        %v4442 = vadd.f32 %v3769, %v4441
        %v4443 = vpop.f32.mrf.mxu0
        %v4444 = vadd.f32 %v3771, %v4443
        %4445 = vmatprep.mubr.bf16.mxu0 %v2637
        %4446 = vmatmul.mubr.bf16.gmra.mxu0 %v2636
        %v4447 = vpop.f32.mrf.mxu0
        %v4448 = vadd.f32 %v3775, %v4447
        %v4449 = vpop.f32.mrf.mxu0
        %v4450 = vadd.f32 %v3777, %v4449
        %v4451 = vpop.f32.mrf.mxu0
        %v4452 = vadd.f32 %v3779, %v4451
        %v4453 = vpop.f32.mrf.mxu0
        %v4454 = vadd.f32 %v3781, %v4453
        %4455 = vmatprep.mubr.bf16.mxu0 %v2641
        %4456 = vmatmul.mubr.bf16.gmra.mxu0 %v2640
        %v4457 = vpop.f32.mrf.mxu0
        %v4458 = vadd.f32 %v3785, %v4457
        %v4459 = vpop.f32.mrf.mxu0
        %v4460 = vadd.f32 %v3787, %v4459
        %v4461 = vpop.f32.mrf.mxu0
        %v4462 = vadd.f32 %v3789, %v4461
        %v4463 = vpop.f32.mrf.mxu0
        %v4464 = vadd.f32 %v3791, %v4463
        %4465 = vmatprep.mubr.bf16.mxu0 %v2645
        %4466 = vmatmul.mubr.bf16.gmra.mxu0 %v2644
        %v4467 = vpop.f32.mrf.mxu0
        %v4468 = vadd.f32 %v3795, %v4467
        %v4469 = vpop.f32.mrf.mxu0
        %v4470 = vadd.f32 %v3797, %v4469
        %v4471 = vpop.f32.mrf.mxu0
        %v4472 = vadd.f32 %v3799, %v4471
        %v4473 = vpop.f32.mrf.mxu0
        %v4474 = vadd.f32 %v3801, %v4473
        %4475 = vmatprep.mubr.bf16.mxu0 %v2649
        %4476 = vmatmul.mubr.bf16.gmra.mxu0 %v2648
        %v4477 = vpop.f32.mrf.mxu0
        %v4478 = vadd.f32 %v3805, %v4477
        %v4479 = vpop.f32.mrf.mxu0
        %v4480 = vadd.f32 %v3807, %v4479
        %v4481 = vpop.f32.mrf.mxu0
        %v4482 = vadd.f32 %v3809, %v4481
        %v4483 = vpop.f32.mrf.mxu0
        %v4484 = vadd.f32 %v3811, %v4483
        %4485 = vmatprep.mubr.bf16.mxu0 %v2653
        %4486 = vmatmul.mubr.bf16.gmra.mxu0 %v2652
        %v4487 = vpop.f32.mrf.mxu0
        %v4488 = vadd.f32 %v3815, %v4487
        %v4489 = vpop.f32.mrf.mxu0
        %v4490 = vadd.f32 %v3817, %v4489
        %v4491 = vpop.f32.mrf.mxu0
        %v4492 = vadd.f32 %v3819, %v4491
        %v4493 = vpop.f32.mrf.mxu0
        %v4494 = vadd.f32 %v3821, %v4493
        %4495 = vmatprep.mubr.bf16.mxu0 %v2657
        %4496 = vmatmul.mubr.bf16.gmra.mxu0 %v2656
        %v4497 = vpop.f32.mrf.mxu0
        %v4498 = vadd.f32 %v3825, %v4497
        %v4499 = vpop.f32.mrf.mxu0
        %v4500 = vadd.f32 %v3827, %v4499
        %v4501 = vpop.f32.mrf.mxu0
        %v4502 = vadd.f32 %v3829, %v4501
        %v4503 = vpop.f32.mrf.mxu0
        %v4504 = vadd.f32 %v3831, %v4503
        %4505 = vmatprep.mubr.bf16.mxu0 %v2661
        %4506 = vmatmul.mubr.bf16.gmra.mxu0 %v2660
        %v4507 = vpop.f32.mrf.mxu0
        %v4508 = vadd.f32 %v3835, %v4507
        %v4509 = vpop.f32.mrf.mxu0
        %v4510 = vadd.f32 %v3837, %v4509
        %v4511 = vpop.f32.mrf.mxu0
        %v4512 = vadd.f32 %v3839, %v4511
        %v4513 = vpop.f32.mrf.mxu0
        %v4514 = vadd.f32 %v3841, %v4513
        %4515 = vmatprep.mubr.bf16.mxu0 %v2665
        %4516 = vmatmul.mubr.bf16.gmra.mxu0 %v2664
        %v4517 = vpop.f32.mrf.mxu0
        %v4518 = vadd.f32 %v3845, %v4517
        %v4519 = vpop.f32.mrf.mxu0
        %v4520 = vadd.f32 %v3847, %v4519
        %v4521 = vpop.f32.mrf.mxu0
        %v4522 = vadd.f32 %v3849, %v4521
        %v4523 = vpop.f32.mrf.mxu0
        %v4524 = vadd.f32 %v3851, %v4523
        %4525 = vmatprep.mubr.bf16.mxu0 %v2669
        %4526 = vmatmul.mubr.bf16.gmra.mxu0 %v2668
        %v4527 = vpop.f32.mrf.mxu0
        %v4528 = vadd.f32 %v3855, %v4527
        %v4529 = vpop.f32.mrf.mxu0
        %v4530 = vadd.f32 %v3857, %v4529
        %v4531 = vpop.f32.mrf.mxu0
        %v4532 = vadd.f32 %v3859, %v4531
        %v4533 = vpop.f32.mrf.mxu0
        %v4534 = vadd.f32 %v3861, %v4533
        %4535 = vmatprep.mubr.bf16.mxu0 %v2673
        %4536 = vmatmul.mubr.bf16.gmra.mxu0 %v2672
        %v4537 = vpop.f32.mrf.mxu0
        %v4538 = vadd.f32 %v3865, %v4537
        %v4539 = vpop.f32.mrf.mxu0
        %v4540 = vadd.f32 %v3867, %v4539
        %v4541 = vpop.f32.mrf.mxu0
        %v4542 = vadd.f32 %v3869, %v4541
        %v4543 = vpop.f32.mrf.mxu0
        %v4544 = vadd.f32 %v3871, %v4543
        %4545 = vmatprep.mubr.bf16.mxu0 %v2677
        %4546 = vmatmul.mubr.bf16.gmra.mxu0 %v2676
        %v4547 = vpop.f32.mrf.mxu0
        %v4548 = vadd.f32 %v3875, %v4547
        %v4549 = vpop.f32.mrf.mxu0
        %v4550 = vadd.f32 %v3877, %v4549
        %v4551 = vpop.f32.mrf.mxu0
        %v4552 = vadd.f32 %v3879, %v4551
        %v4553 = vpop.f32.mrf.mxu0
        %v4554 = vadd.f32 %v3881, %v4553
        %4555 = vmatprep.mubr.bf16.mxu0 %v2681
        %4556 = vmatmul.mubr.bf16.gmra.mxu0 %v2680
        %v4557 = vpop.f32.mrf.mxu0
        %v4558 = vadd.f32 %v3885, %v4557
        %v4559 = vpop.f32.mrf.mxu0
        %v4560 = vadd.f32 %v3887, %v4559
        %v4561 = vpop.f32.mrf.mxu0
        %v4562 = vadd.f32 %v3889, %v4561
        %v4563 = vpop.f32.mrf.mxu0
        %v4564 = vadd.f32 %v3891, %v4563
        %4565 = vmatprep.mubr.bf16.mxu0 %v2685
        %4566 = vmatmul.mubr.bf16.gmra.mxu0 %v2684
        %v4567 = vpop.f32.mrf.mxu0
        %v4568 = vadd.f32 %v3895, %v4567
        %v4569 = vpop.f32.mrf.mxu0
        %v4570 = vadd.f32 %v3897, %v4569
        %v4571 = vpop.f32.mrf.mxu0
        %v4572 = vadd.f32 %v3899, %v4571
        %v4573 = vpop.f32.mrf.mxu0
        %v4574 = vadd.f32 %v3901, %v4573
        %4575 = vmatprep.mubr.bf16.mxu0 %v2689
        %4576 = vmatmul.mubr.bf16.gmra.mxu0 %v2688
        %v4577 = vpop.f32.mrf.mxu0
        %v4578 = vadd.f32 %v3905, %v4577
        %v4579 = vpop.f32.mrf.mxu0
        %v4580 = vadd.f32 %v3907, %v4579
        %v4581 = vpop.f32.mrf.mxu0
        %v4582 = vadd.f32 %v3909, %v4581
        %v4583 = vpop.f32.mrf.mxu0
        %v4584 = vadd.f32 %v3911, %v4583
        %4585 = vmatprep.mubr.bf16.mxu0 %v2693
        %4586 = vmatmul.mubr.bf16.gmra.mxu0 %v2692
        %v4587 = vpop.f32.mrf.mxu0
        %v4588 = vadd.f32 %v3915, %v4587
        %v4589 = vpop.f32.mrf.mxu0
        %v4590 = vadd.f32 %v3917, %v4589
        %v4591 = vpop.f32.mrf.mxu0
        %v4592 = vadd.f32 %v3919, %v4591
        %v4593 = vpop.f32.mrf.mxu0
        %v4594 = vadd.f32 %v3921, %v4593
        %4595 = vmatprep.mubr.bf16.mxu0 %v2697
        %4596 = vmatmul.mubr.bf16.gmra.mxu0 %v2696
        %v4597 = vpop.f32.mrf.mxu0
        %v4598 = vadd.f32 %v3925, %v4597
        %v4599 = vpop.f32.mrf.mxu0
        %v4600 = vadd.f32 %v3927, %v4599
        %v4601 = vpop.f32.mrf.mxu0
        %v4602 = vadd.f32 %v3929, %v4601
        %v4603 = vpop.f32.mrf.mxu0
        %v4604 = vadd.f32 %v3931, %v4603
        %4605 = vmatprep.mubr.bf16.mxu0 %v2701
        %4606 = vmatmul.mubr.bf16.gmra.mxu0 %v2700
        %v4607 = vpop.f32.mrf.mxu0
        %v4608 = vadd.f32 %v3935, %v4607
        %v4609 = vpop.f32.mrf.mxu0
        %v4610 = vadd.f32 %v3937, %v4609
        %v4611 = vpop.f32.mrf.mxu0
        %v4612 = vadd.f32 %v3939, %v4611
        %v4613 = vpop.f32.mrf.mxu0
        %v4614 = vadd.f32 %v3941, %v4613
        %4615 = vmatprep.mubr.bf16.mxu0 %v2705
        %4616 = vmatmul.mubr.bf16.gmra.mxu0 %v2704
        %v4617 = vpop.f32.mrf.mxu0
        %v4618 = vadd.f32 %v3945, %v4617
        %v4619 = vpop.f32.mrf.mxu0
        %v4620 = vadd.f32 %v3947, %v4619
        %v4621 = vpop.f32.mrf.mxu0
        %v4622 = vadd.f32 %v3949, %v4621
        %v4623 = vpop.f32.mrf.mxu0
        %v4624 = vadd.f32 %v3951, %v4623
        %4625 = vmatprep.mubr.bf16.mxu0 %v2709
        %4626 = vmatmul.mubr.bf16.gmra.mxu0 %v2708
        %v4627 = vpop.f32.mrf.mxu0
        %v4628 = vadd.f32 %v3955, %v4627
        %v4629 = vpop.f32.mrf.mxu0
        %v4630 = vadd.f32 %v3957, %v4629
        %v4631 = vpop.f32.mrf.mxu0
        %v4632 = vadd.f32 %v3959, %v4631
        %v4633 = vpop.f32.mrf.mxu0
        %v4634 = vadd.f32 %v3961, %v4633
        %4635 = vmatprep.mubr.bf16.mxu0 %v2713
        %4636 = vmatmul.mubr.bf16.gmra.mxu0 %v2712
        %v4637 = vpop.f32.mrf.mxu0
        %v4638 = vadd.f32 %v3965, %v4637
        %v4639 = vpop.f32.mrf.mxu0
        %v4640 = vadd.f32 %v3967, %v4639
        %v4641 = vpop.f32.mrf.mxu0
        %v4642 = vadd.f32 %v3969, %v4641
        %v4643 = vpop.f32.mrf.mxu0
        %v4644 = vadd.f32 %v3971, %v4643
        %4645 = vmatprep.mubr.bf16.mxu0 %v2717
        %4646 = vmatmul.mubr.bf16.gmra.mxu0 %v2716
        %v4647 = vpop.f32.mrf.mxu0
        %v4648 = vadd.f32 %v3975, %v4647
        %v4649 = vpop.f32.mrf.mxu0
        %v4650 = vadd.f32 %v3977, %v4649
        %v4651 = vpop.f32.mrf.mxu0
        %v4652 = vadd.f32 %v3979, %v4651
        %v4653 = vpop.f32.mrf.mxu0
        %v4654 = vadd.f32 %v3981, %v4653
        %4655 = vmatprep.mubr.bf16.mxu0 %v2721
        %4656 = vmatmul.mubr.bf16.gmra.mxu0 %v2720
        %v4657 = vpop.f32.mrf.mxu0
        %v4658 = vadd.f32 %v3985, %v4657
        %v4659 = vpop.f32.mrf.mxu0
        %v4660 = vadd.f32 %v3987, %v4659
        %v4661 = vpop.f32.mrf.mxu0
        %v4662 = vadd.f32 %v3989, %v4661
        %v4663 = vpop.f32.mrf.mxu0
        %v4664 = vadd.f32 %v3991, %v4663
        %4665 = vmatprep.mubr.bf16.mxu0 %v2725
        %4666 = vmatmul.mubr.bf16.gmra.mxu0 %v2724
        %v4667 = vpop.f32.mrf.mxu0
        %v4668 = vadd.f32 %v3995, %v4667
        %v4669 = vpop.f32.mrf.mxu0
        %v4670 = vadd.f32 %v3997, %v4669
        %v4671 = vpop.f32.mrf.mxu0
        %v4672 = vadd.f32 %v3999, %v4671
        %v4673 = vpop.f32.mrf.mxu0
        %v4674 = vadd.f32 %v4001, %v4673
        %4675 = vmatprep.mubr.bf16.mxu0 %v2729
        %4676 = vmatmul.mubr.bf16.gmra.mxu0 %v2728
        %v4677 = vpop.f32.mrf.mxu0
        %v4678 = vadd.f32 %v4005, %v4677
        %v4679 = vpop.f32.mrf.mxu0
        %v4680 = vadd.f32 %v4007, %v4679
        %v4681 = vpop.f32.mrf.mxu0
        %v4682 = vadd.f32 %v4009, %v4681
        %v4683 = vpop.f32.mrf.mxu0
        %v4684 = vadd.f32 %v4011, %v4683
        %4685 = vmatprep.mubr.bf16.mxu0 %v2733
        %4686 = vmatmul.mubr.bf16.gmra.mxu0 %v2732
        %v4687 = vpop.f32.mrf.mxu0
        %v4688 = vadd.f32 %v4015, %v4687
        %v4689 = vpop.f32.mrf.mxu0
        %v4690 = vadd.f32 %v4017, %v4689
        %v4691 = vpop.f32.mrf.mxu0
        %v4692 = vadd.f32 %v4019, %v4691
        %v4693 = vpop.f32.mrf.mxu0
        %v4694 = vadd.f32 %v4021, %v4693
        %4695 = vmatprep.mubr.bf16.mxu0 %v2737
        %4696 = vmatmul.mubr.bf16.gmra.mxu0 %v2736
        %v4697 = vpop.f32.mrf.mxu0
        %v4698 = vadd.f32 %v4025, %v4697
        %v4699 = vpop.f32.mrf.mxu0
        %v4700 = vadd.f32 %v4027, %v4699
        %v4701 = vpop.f32.mrf.mxu0
        %v4702 = vadd.f32 %v4029, %v4701
        %v4703 = vpop.f32.mrf.mxu0
        %v4704 = vadd.f32 %v4031, %v4703
        %4705 = vmatprep.mubr.bf16.mxu0 %v2741
        %4706 = vmatmul.mubr.bf16.gmra.mxu0 %v2740
        %v4707 = vpop.f32.mrf.mxu0
        %v4708 = vadd.f32 %v4035, %v4707
        %v4709 = vpop.f32.mrf.mxu0
        %v4710 = vadd.f32 %v4037, %v4709
        %v4711 = vpop.f32.mrf.mxu0
        %v4712 = vadd.f32 %v4039, %v4711
        %v4713 = vpop.f32.mrf.mxu0
        %v4714 = vadd.f32 %v4041, %v4713
        %4715 = vmatprep.mubr.bf16.mxu0 %v2745
        %4716 = vmatmul.mubr.bf16.gmra.mxu0 %v2744
        %v4717 = vpop.f32.mrf.mxu0
        %v4718 = vadd.f32 %v4045, %v4717
        %v4719 = vpop.f32.mrf.mxu0
        %v4720 = vadd.f32 %v4047, %v4719
        %v4721 = vpop.f32.mrf.mxu0
        %v4722 = vadd.f32 %v4049, %v4721
        %v4723 = vpop.f32.mrf.mxu0
        %v4724 = vadd.f32 %v4051, %v4723
        %4725 = vmatprep.mubr.bf16.mxu0 %v2749
        %4726 = vmatmul.mubr.bf16.gmra.mxu0 %v2748
        %v4727 = vpop.f32.mrf.mxu0
        %v4728 = vadd.f32 %v4055, %v4727
        %v4729 = vpop.f32.mrf.mxu0
        %v4730 = vadd.f32 %v4057, %v4729
        %v4731 = vpop.f32.mrf.mxu0
        %v4732 = vadd.f32 %v4059, %v4731
        %v4733 = vpop.f32.mrf.mxu0
        %v4734 = vadd.f32 %v4061, %v4733
        %4735 = vmatprep.mubr.bf16.mxu0 %v2753
        %4736 = vmatmul.mubr.bf16.gmra.mxu0 %v2752
        %v4737 = vpop.f32.mrf.mxu0
        %v4738 = vadd.f32 %v4065, %v4737
        %v4739 = vpop.f32.mrf.mxu0
        %v4740 = vadd.f32 %v4067, %v4739
        %v4741 = vpop.f32.mrf.mxu0
        %v4742 = vadd.f32 %v4069, %v4741
        %v4743 = vpop.f32.mrf.mxu0
        %v4744 = vadd.f32 %v4071, %v4743
        %4745 = vmatprep.mubr.bf16.mxu0 %v2757
        %4746 = vmatmul.mubr.bf16.gmra.mxu0 %v2756
        %v4747 = vpop.f32.mrf.mxu0
        %v4748 = vadd.f32 %v4075, %v4747
        %v4749 = vpop.f32.mrf.mxu0
        %v4750 = vadd.f32 %v4077, %v4749
        %v4751 = vpop.f32.mrf.mxu0
        %v4752 = vadd.f32 %v4079, %v4751
        %v4753 = vpop.f32.mrf.mxu0
        %v4754 = vadd.f32 %v4081, %v4753
        %4755 = vmatprep.mubr.bf16.mxu0 %v2761
        %4756 = vmatmul.mubr.bf16.gmra.mxu0 %v2760
        %v4757 = vpop.f32.mrf.mxu0
        %v4758 = vadd.f32 %v4085, %v4757
        %v4759 = vpop.f32.mrf.mxu0
        %v4760 = vadd.f32 %v4087, %v4759
        %v4761 = vpop.f32.mrf.mxu0
        %v4762 = vadd.f32 %v4089, %v4761
        %v4763 = vpop.f32.mrf.mxu0
        %v4764 = vadd.f32 %v4091, %v4763
        %4765 = vmatprep.mubr.bf16.mxu0 %v2765
        %4766 = vmatmul.mubr.bf16.gmra.mxu0 %v2764
        %v4767 = vpop.f32.mrf.mxu0
        %v4768 = vadd.f32 %v4095, %v4767
        %v4769 = vpop.f32.mrf.mxu0
        %v4770 = vadd.f32 %v4097, %v4769
        %v4771 = vpop.f32.mrf.mxu0
        %v4772 = vadd.f32 %v4099, %v4771
        %v4773 = vpop.f32.mrf.mxu0
        %v4774 = vadd.f32 %v4101, %v4773
        %4775 = vmatprep.mubr.bf16.mxu0 %v2769
        %4776 = vmatmul.mubr.bf16.gmra.mxu0 %v2768
        %v4777 = vpop.f32.mrf.mxu0
        %v4778 = vadd.f32 %v4105, %v4777
        %v4779 = vpop.f32.mrf.mxu0
        %v4780 = vadd.f32 %v4107, %v4779
        %v4781 = vpop.f32.mrf.mxu0
        %v4782 = vadd.f32 %v4109, %v4781
        %v4783 = vpop.f32.mrf.mxu0
        %v4784 = vadd.f32 %v4111, %v4783
        %4785 = vmatprep.mubr.bf16.mxu0 %v2773
        %4786 = vmatmul.mubr.bf16.gmra.mxu0 %v2772
        %v4787 = vpop.f32.mrf.mxu0
        %v4788 = vadd.f32 %v4115, %v4787
        %v4789 = vpop.f32.mrf.mxu0
        %v4790 = vadd.f32 %v4117, %v4789
        %v4791 = vpop.f32.mrf.mxu0
        %v4792 = vadd.f32 %v4119, %v4791
        %v4793 = vpop.f32.mrf.mxu0
        %v4794 = vadd.f32 %v4121, %v4793
        %4795 = vmatprep.mubr.bf16.mxu0 %v2777
        %4796 = vmatmul.mubr.bf16.gmra.mxu0 %v2776
        %v4797 = vpop.f32.mrf.mxu0
        %v4798 = vadd.f32 %v4125, %v4797
        %v4799 = vpop.f32.mrf.mxu0
        %v4800 = vadd.f32 %v4127, %v4799
        %v4801 = vpop.f32.mrf.mxu0
        %v4802 = vadd.f32 %v4129, %v4801
        %v4803 = vpop.f32.mrf.mxu0
        %v4804 = vadd.f32 %v4131, %v4803
        %4805 = vmatprep.mubr.bf16.mxu0 %v2781
        %4806 = vmatmul.mubr.bf16.gmra.mxu0 %v2780
        %v4807 = vpop.f32.mrf.mxu0
        %v4808 = vadd.f32 %v4135, %v4807
        %v4809 = vpop.f32.mrf.mxu0
        %v4810 = vadd.f32 %v4137, %v4809
        %v4811 = vpop.f32.mrf.mxu0
        %v4812 = vadd.f32 %v4139, %v4811
        %v4813 = vpop.f32.mrf.mxu0
        %v4814 = vadd.f32 %v4141, %v4813
        %4815 = vmatprep.mubr.bf16.mxu0 %v2785
        %4816 = vmatmul.mubr.bf16.gmra.mxu0 %v2784
        %v4817 = vpop.f32.mrf.mxu0
        %v4818 = vadd.f32 %v4145, %v4817
        %v4819 = vpop.f32.mrf.mxu0
        %v4820 = vadd.f32 %v4147, %v4819
        %v4821 = vpop.f32.mrf.mxu0
        %v4822 = vadd.f32 %v4149, %v4821
        %v4823 = vpop.f32.mrf.mxu0
        %v4824 = vadd.f32 %v4151, %v4823
        %4825 = vmatprep.mubr.bf16.mxu0 %v2789
        %4826 = vmatmul.mubr.bf16.gmra.mxu0 %v2788
        %v4827 = vpop.f32.mrf.mxu0
        %v4828 = vadd.f32 %v4155, %v4827
        %v4829 = vpop.f32.mrf.mxu0
        %v4830 = vadd.f32 %v4157, %v4829
        %v4831 = vpop.f32.mrf.mxu0
        %v4832 = vadd.f32 %v4159, %v4831
        %v4833 = vpop.f32.mrf.mxu0
        %v4834 = vadd.f32 %v4161, %v4833
        %4835 = vmatprep.mubr.bf16.mxu0 %v2793
        %4836 = vmatmul.mubr.bf16.gmra.mxu0 %v2792
        %v4837 = vpop.f32.mrf.mxu0
        %v4838 = vadd.f32 %v4165, %v4837
        %v4839 = vpop.f32.mrf.mxu0
        %v4840 = vadd.f32 %v4167, %v4839
        %v4841 = vpop.f32.mrf.mxu0
        %v4842 = vadd.f32 %v4169, %v4841
        %v4843 = vpop.f32.mrf.mxu0
        %v4844 = vadd.f32 %v4171, %v4843
        %4845 = vmatprep.mubr.bf16.mxu0 %v2797
        %4846 = vmatmul.mubr.bf16.gmra.mxu0 %v2796
        %v4847 = vpop.f32.mrf.mxu0
        %v4848 = vadd.f32 %v4175, %v4847
        %v4849 = vpop.f32.mrf.mxu0
        %v4850 = vadd.f32 %v4177, %v4849
        %v4851 = vpop.f32.mrf.mxu0
        %v4852 = vadd.f32 %v4179, %v4851
        %v4853 = vpop.f32.mrf.mxu0
        %v4854 = vadd.f32 %v4181, %v4853
        %4855 = vmatprep.mubr.bf16.mxu0 %v2801
        %4856 = vmatmul.mubr.bf16.gmra.mxu0 %v2800
        %v4857 = vpop.f32.mrf.mxu0
        %v4858 = vadd.f32 %v4185, %v4857
        %v4859 = vpop.f32.mrf.mxu0
        %v4860 = vadd.f32 %v4187, %v4859
        %v4861 = vpop.f32.mrf.mxu0
        %v4862 = vadd.f32 %v4189, %v4861
        %v4863 = vpop.f32.mrf.mxu0
        %v4864 = vadd.f32 %v4191, %v4863
        %4865 = vmatprep.mubr.bf16.mxu0 %v2805
        %4866 = vmatmul.mubr.bf16.gmra.mxu0 %v2804
        %v4867 = vpop.f32.mrf.mxu0
        %v4868 = vadd.f32 %v4195, %v4867
        %v4869 = vpop.f32.mrf.mxu0
        %v4870 = vadd.f32 %v4197, %v4869
        %v4871 = vpop.f32.mrf.mxu0
        %v4872 = vadd.f32 %v4199, %v4871
        %v4873 = vpop.f32.mrf.mxu0
        %v4874 = vadd.f32 %v4201, %v4873
        %4875 = vmatprep.mubr.bf16.mxu0 %v2809
        %4876 = vmatmul.mubr.bf16.gmra.mxu0 %v2808
        %v4877 = vpop.f32.mrf.mxu0
        %v4878 = vadd.f32 %v4205, %v4877
        %v4879 = vpop.f32.mrf.mxu0
        %v4880 = vadd.f32 %v4207, %v4879
        %v4881 = vpop.f32.mrf.mxu0
        %v4882 = vadd.f32 %v4209, %v4881
        %v4883 = vpop.f32.mrf.mxu0
        %v4884 = vadd.f32 %v4211, %v4883
        %4885 = vmatprep.mubr.bf16.mxu0 %v2813
        %4886 = vmatmul.mubr.bf16.gmra.mxu0 %v2812
        %v4887 = vpop.f32.mrf.mxu0
        %v4888 = vadd.f32 %v4215, %v4887
        %v4889 = vpop.f32.mrf.mxu0
        %v4890 = vadd.f32 %v4217, %v4889
        %v4891 = vpop.f32.mrf.mxu0
        %v4892 = vadd.f32 %v4219, %v4891
        %v4893 = vpop.f32.mrf.mxu0
        %v4894 = vadd.f32 %v4221, %v4893
        %4895 = vmatprep.mubr.bf16.mxu0 %v2817
        %4896 = vmatmul.mubr.bf16.gmra.mxu0 %v2816
        %v4897 = vpop.f32.mrf.mxu0
        %v4898 = vadd.f32 %v4225, %v4897
        %v4899 = vpop.f32.mrf.mxu0
        %v4900 = vadd.f32 %v4227, %v4899
        %v4901 = vpop.f32.mrf.mxu0
        %v4902 = vadd.f32 %v4229, %v4901
        %v4903 = vpop.f32.mrf.mxu0
        %v4904 = vadd.f32 %v4231, %v4903
        %4905 = vmatprep.mubr.bf16.mxu0 %v2821
        %4906 = vmatmul.mubr.bf16.gmra.mxu0 %v2820
        %v4907 = vpop.f32.mrf.mxu0
        %v4908 = vadd.f32 %v4235, %v4907
        %v4909 = vpop.f32.mrf.mxu0
        %v4910 = vadd.f32 %v4237, %v4909
        %v4911 = vpop.f32.mrf.mxu0
        %v4912 = vadd.f32 %v4239, %v4911
        %v4913 = vpop.f32.mrf.mxu0
        %v4914 = vadd.f32 %v4241, %v4913
        %4915 = vmatprep.mubr.bf16.mxu0 %v2825
        %4916 = vmatmul.mubr.bf16.gmra.mxu0 %v2824
        %v4917 = vpop.f32.mrf.mxu0
        %v4918 = vadd.f32 %v4245, %v4917
        %v4919 = vpop.f32.mrf.mxu0
        %v4920 = vadd.f32 %v4247, %v4919
        %v4921 = vpop.f32.mrf.mxu0
        %v4922 = vadd.f32 %v4249, %v4921
        %v4923 = vpop.f32.mrf.mxu0
        %v4924 = vadd.f32 %v4251, %v4923
        %4925 = vmatprep.mubr.bf16.mxu0 %v2829
        %4926 = vmatmul.mubr.bf16.gmra.mxu0 %v2828
        %v4927 = vpop.f32.mrf.mxu0
        %v4928 = vadd.f32 %v4255, %v4927
        %v4929 = vpop.f32.mrf.mxu0
        %v4930 = vadd.f32 %v4257, %v4929
        %v4931 = vpop.f32.mrf.mxu0
        %v4932 = vadd.f32 %v4259, %v4931
        %v4933 = vpop.f32.mrf.mxu0
        %v4934 = vadd.f32 %v4261, %v4933
        %4935 = vmatprep.mubr.bf16.mxu0 %v2833
        %4936 = vmatmul.mubr.bf16.gmra.mxu0 %v2832
        %v4937 = vpop.f32.mrf.mxu0
        %v4938 = vadd.f32 %v4265, %v4937
        %v4939 = vpop.f32.mrf.mxu0
        %v4940 = vadd.f32 %v4267, %v4939
        %v4941 = vpop.f32.mrf.mxu0
        %v4942 = vadd.f32 %v4269, %v4941
        %v4943 = vpop.f32.mrf.mxu0
        %v4944 = vadd.f32 %v4271, %v4943
        %4945 = vmatprep.mubr.bf16.mxu0 %v2837
        %4946 = vmatmul.mubr.bf16.gmra.mxu0 %v2836
        %v4947 = vpop.f32.mrf.mxu0
        %v4948 = vadd.f32 %v4275, %v4947
        %v4949 = vpop.f32.mrf.mxu0
        %v4950 = vadd.f32 %v4277, %v4949
        %v4951 = vpop.f32.mrf.mxu0
        %v4952 = vadd.f32 %v4279, %v4951
        %v4953 = vpop.f32.mrf.mxu0
        %v4954 = vadd.f32 %v4281, %v4953
        %4955 = vmatprep.mubr.bf16.mxu0 %v2841
        %4956 = vmatmul.mubr.bf16.gmra.mxu0 %v2840
        %v4957 = vpop.f32.mrf.mxu0
        %v4958 = vadd.f32 %v4285, %v4957
        %v4959 = vpop.f32.mrf.mxu0
        %v4960 = vadd.f32 %v4287, %v4959
        %v4961 = vpop.f32.mrf.mxu0
        %v4962 = vadd.f32 %v4289, %v4961
        %v4963 = vpop.f32.mrf.mxu0
        %v4964 = vadd.f32 %v4291, %v4963
        %4965 = vmatprep.mubr.bf16.mxu0 %v2845
        %4966 = vmatmul.mubr.bf16.gmra.mxu0 %v2844
        %v4967 = vpop.f32.mrf.mxu0
        %v4968 = vadd.f32 %v4295, %v4967
        %v4969 = vpop.f32.mrf.mxu0
        %v4970 = vadd.f32 %v4297, %v4969
        %v4971 = vpop.f32.mrf.mxu0
        %v4972 = vadd.f32 %v4299, %v4971
        %v4973 = vpop.f32.mrf.mxu0
        %v4974 = vadd.f32 %v4301, %v4973
        %4975 = vmatprep.mubr.bf16.mxu0 %v2849
        %4976 = vmatmul.mubr.bf16.gmra.mxu0 %v2848
        %v4977 = vpop.f32.mrf.mxu0
        %v4978 = vadd.f32 %v4305, %v4977
        %v4979 = vpop.f32.mrf.mxu0
        %v4980 = vadd.f32 %v4307, %v4979
        %v4981 = vpop.f32.mrf.mxu0
        %v4982 = vadd.f32 %v4309, %v4981
        %v4983 = vpop.f32.mrf.mxu0
        %v4984 = vadd.f32 %v4311, %v4983
        %4985 = vdwg.mxu0
        %4986 = vmatprep.subr.bf16.mxu0 %v3415
        %4987 = vmatpush1.bf16.msra.mxu0 %v3414
        %4988 = vmatprep.subr.bf16.mxu0 %v3411
        %4989 = vmatpush1.bf16.msra.mxu0 %v3410
        %4990 = vmatprep.subr.bf16.mxu0 %v3407
        %4991 = vmatpush1.bf16.msra.mxu0 %v3406
        %4992 = vmatprep.subr.bf16.mxu0 %v3403
        %4993 = vmatpush1.bf16.msra.mxu0 %v3402
        %4994 = vmatprep.subr.bf16.mxu0 %v3399
        %4995 = vmatpush1.bf16.msra.mxu0 %v3398
        %4996 = vmatprep.subr.bf16.mxu0 %v3395
        %4997 = vmatpush1.bf16.msra.mxu0 %v3394
        %4998 = vmatprep.subr.bf16.mxu0 %v3391
        %4999 = vmatpush1.bf16.msra.mxu0 %v3390
        %5000 = vmatprep.subr.bf16.mxu0 %v3387
        %5001 = vmatpush1.bf16.msra.mxu0 %v3386
        %5002 = vmatprep.subr.bf16.mxu0 %v3447
        %5003 = vmatpush2.bf16.msra.mxu0 %v3446
        %5004 = vmatprep.subr.bf16.mxu0 %v3443
        %5005 = vmatpush2.bf16.msra.mxu0 %v3442
        %5006 = vmatprep.subr.bf16.mxu0 %v3439
        %5007 = vmatpush2.bf16.msra.mxu0 %v3438
        %5008 = vmatprep.subr.bf16.mxu0 %v3435
        %5009 = vmatpush2.bf16.msra.mxu0 %v3434
        %5010 = vmatprep.subr.bf16.mxu0 %v3431
        %5011 = vmatpush2.bf16.msra.mxu0 %v3430
        %5012 = vmatprep.subr.bf16.mxu0 %v3427
        %5013 = vmatpush2.bf16.msra.mxu0 %v3426
        %5014 = vmatprep.subr.bf16.mxu0 %v3423
        %5015 = vmatpush2.bf16.msra.mxu0 %v3422
        %5016 = vmatprep.subr.bf16.mxu0 %v3419
        %5017 = vmatpush2.bf16.msra.mxu0 %v3418
        %5018 = vmatprep.mubr.bf16.mxu0 %v2595
        %5019 = vmatmul.mubr.bf16.gmra.mxu0 %v2594
        %v5020 = vpop.f32.mrf.mxu0
        %v5021 = vadd.f32 %v2991, %v5020
        %v5022 = vpop.f32.mrf.mxu0
        %v5023 = vadd.f32 %v2995, %v5022
        %v5024 = vpop.f32.mrf.mxu0
        %v5025 = vadd.f32 %v2991, %v5024
        %v5026 = vpop.f32.mrf.mxu0
        %v5027 = vadd.f32 %v2995, %v5026
        %5028 = vmatprep.mubr.bf16.mxu0 %v2599
        %5029 = vmatmul.mubr.bf16.gmra.mxu0 %v2598
        %v5030 = vpop.f32.mrf.mxu0
        %v5031 = vadd.f32 %v2991, %v5030
        %v5032 = vpop.f32.mrf.mxu0
        %v5033 = vadd.f32 %v2995, %v5032
        %v5034 = vpop.f32.mrf.mxu0
        %v5035 = vadd.f32 %v2991, %v5034
        %v5036 = vpop.f32.mrf.mxu0
        %v5037 = vadd.f32 %v2995, %v5036
        %5038 = vmatprep.mubr.bf16.mxu0 %v2603
        %5039 = vmatmul.mubr.bf16.gmra.mxu0 %v2602
        %v5040 = vpop.f32.mrf.mxu0
        %v5041 = vadd.f32 %v2991, %v5040
        %v5042 = vpop.f32.mrf.mxu0
        %v5043 = vadd.f32 %v2995, %v5042
        %v5044 = vpop.f32.mrf.mxu0
        %v5045 = vadd.f32 %v2991, %v5044
        %v5046 = vpop.f32.mrf.mxu0
        %v5047 = vadd.f32 %v2995, %v5046
        %5048 = vmatprep.mubr.bf16.mxu0 %v2607
        %5049 = vmatmul.mubr.bf16.gmra.mxu0 %v2606
        %v5050 = vpop.f32.mrf.mxu0
        %v5051 = vadd.f32 %v2991, %v5050
        %v5052 = vpop.f32.mrf.mxu0
        %v5053 = vadd.f32 %v2995, %v5052
        %v5054 = vpop.f32.mrf.mxu0
        %v5055 = vadd.f32 %v2991, %v5054
        %v5056 = vpop.f32.mrf.mxu0
        %v5057 = vadd.f32 %v2995, %v5056
        %5058 = vmatprep.mubr.bf16.mxu0 %v2611
        %5059 = vmatmul.mubr.bf16.gmra.mxu0 %v2610
        %v5060 = vpop.f32.mrf.mxu0
        %v5061 = vadd.f32 %v2991, %v5060
        %v5062 = vpop.f32.mrf.mxu0
        %v5063 = vadd.f32 %v2995, %v5062
        %v5064 = vpop.f32.mrf.mxu0
        %v5065 = vadd.f32 %v2991, %v5064
        %v5066 = vpop.f32.mrf.mxu0
        %v5067 = vadd.f32 %v2995, %v5066
        %5068 = vmatprep.mubr.bf16.mxu0 %v2615
        %5069 = vmatmul.mubr.bf16.gmra.mxu0 %v2614
        %v5070 = vpop.f32.mrf.mxu0
        %v5071 = vadd.f32 %v2991, %v5070
        %v5072 = vpop.f32.mrf.mxu0
        %v5073 = vadd.f32 %v2995, %v5072
        %v5074 = vpop.f32.mrf.mxu0
        %v5075 = vadd.f32 %v2991, %v5074
        %v5076 = vpop.f32.mrf.mxu0
        %v5077 = vadd.f32 %v2995, %v5076
        %5078 = vmatprep.mubr.bf16.mxu0 %v2619
        %5079 = vmatmul.mubr.bf16.gmra.mxu0 %v2618
        %v5080 = vpop.f32.mrf.mxu0
        %v5081 = vadd.f32 %v2991, %v5080
        %v5082 = vpop.f32.mrf.mxu0
        %v5083 = vadd.f32 %v2995, %v5082
        %v5084 = vpop.f32.mrf.mxu0
        %v5085 = vadd.f32 %v2991, %v5084
        %v5086 = vpop.f32.mrf.mxu0
        %v5087 = vadd.f32 %v2995, %v5086
        %5088 = vmatprep.mubr.bf16.mxu0 %v2623
        %5089 = vmatmul.mubr.bf16.gmra.mxu0 %v2622
        %v5090 = vpop.f32.mrf.mxu0
        %v5091 = vadd.f32 %v2991, %v5090
        %v5092 = vpop.f32.mrf.mxu0
        %v5093 = vadd.f32 %v2995, %v5092
        %v5094 = vpop.f32.mrf.mxu0
        %v5095 = vadd.f32 %v2991, %v5094
        %v5096 = vpop.f32.mrf.mxu0
        %v5097 = vadd.f32 %v2995, %v5096
        %5098 = vmatprep.mubr.bf16.mxu0 %v2627
        %5099 = vmatmul.mubr.bf16.gmra.mxu0 %v2626
        %v5100 = vpop.f32.mrf.mxu0
        %v5101 = vadd.f32 %v2991, %v5100
        %v5102 = vpop.f32.mrf.mxu0
        %v5103 = vadd.f32 %v2995, %v5102
        %v5104 = vpop.f32.mrf.mxu0
        %v5105 = vadd.f32 %v2991, %v5104
        %v5106 = vpop.f32.mrf.mxu0
        %v5107 = vadd.f32 %v2995, %v5106
        %5108 = vmatprep.mubr.bf16.mxu0 %v2631
        %5109 = vmatmul.mubr.bf16.gmra.mxu0 %v2630
        %v5110 = vpop.f32.mrf.mxu0
        %v5111 = vadd.f32 %v2991, %v5110
        %v5112 = vpop.f32.mrf.mxu0
        %v5113 = vadd.f32 %v2995, %v5112
        %v5114 = vpop.f32.mrf.mxu0
        %v5115 = vadd.f32 %v2991, %v5114
        %v5116 = vpop.f32.mrf.mxu0
        %v5117 = vadd.f32 %v2995, %v5116
        %5118 = vmatprep.mubr.bf16.mxu0 %v2635
        %5119 = vmatmul.mubr.bf16.gmra.mxu0 %v2634
        %v5120 = vpop.f32.mrf.mxu0
        %v5121 = vadd.f32 %v2991, %v5120
        %v5122 = vpop.f32.mrf.mxu0
        %v5123 = vadd.f32 %v2995, %v5122
        %v5124 = vpop.f32.mrf.mxu0
        %v5125 = vadd.f32 %v2991, %v5124
        %v5126 = vpop.f32.mrf.mxu0
        %v5127 = vadd.f32 %v2995, %v5126
        %5128 = vmatprep.mubr.bf16.mxu0 %v2639
        %5129 = vmatmul.mubr.bf16.gmra.mxu0 %v2638
        %v5130 = vpop.f32.mrf.mxu0
        %v5131 = vadd.f32 %v2991, %v5130
        %v5132 = vpop.f32.mrf.mxu0
        %v5133 = vadd.f32 %v2995, %v5132
        %v5134 = vpop.f32.mrf.mxu0
        %v5135 = vadd.f32 %v2991, %v5134
        %v5136 = vpop.f32.mrf.mxu0
        %v5137 = vadd.f32 %v2995, %v5136
        %5138 = vmatprep.mubr.bf16.mxu0 %v2643
        %5139 = vmatmul.mubr.bf16.gmra.mxu0 %v2642
        %v5140 = vpop.f32.mrf.mxu0
        %v5141 = vadd.f32 %v2991, %v5140
        %v5142 = vpop.f32.mrf.mxu0
        %v5143 = vadd.f32 %v2995, %v5142
        %v5144 = vpop.f32.mrf.mxu0
        %v5145 = vadd.f32 %v2991, %v5144
        %v5146 = vpop.f32.mrf.mxu0
        %v5147 = vadd.f32 %v2995, %v5146
        %5148 = vmatprep.mubr.bf16.mxu0 %v2647
        %5149 = vmatmul.mubr.bf16.gmra.mxu0 %v2646
        %v5150 = vpop.f32.mrf.mxu0
        %v5151 = vadd.f32 %v2991, %v5150
        %v5152 = vpop.f32.mrf.mxu0
        %v5153 = vadd.f32 %v2995, %v5152
        %v5154 = vpop.f32.mrf.mxu0
        %v5155 = vadd.f32 %v2991, %v5154
        %v5156 = vpop.f32.mrf.mxu0
        %v5157 = vadd.f32 %v2995, %v5156
        %5158 = vmatprep.mubr.bf16.mxu0 %v2651
        %5159 = vmatmul.mubr.bf16.gmra.mxu0 %v2650
        %v5160 = vpop.f32.mrf.mxu0
        %v5161 = vadd.f32 %v2991, %v5160
        %v5162 = vpop.f32.mrf.mxu0
        %v5163 = vadd.f32 %v2995, %v5162
        %v5164 = vpop.f32.mrf.mxu0
        %v5165 = vadd.f32 %v2991, %v5164
        %v5166 = vpop.f32.mrf.mxu0
        %v5167 = vadd.f32 %v2995, %v5166
        %5168 = vmatprep.mubr.bf16.mxu0 %v2655
        %5169 = vmatmul.mubr.bf16.gmra.mxu0 %v2654
        %v5170 = vpop.f32.mrf.mxu0
        %v5171 = vadd.f32 %v2991, %v5170
        %v5172 = vpop.f32.mrf.mxu0
        %v5173 = vadd.f32 %v2995, %v5172
        %v5174 = vpop.f32.mrf.mxu0
        %v5175 = vadd.f32 %v2991, %v5174
        %v5176 = vpop.f32.mrf.mxu0
        %v5177 = vadd.f32 %v2995, %v5176
        %5178 = vmatprep.mubr.bf16.mxu0 %v2659
        %5179 = vmatmul.mubr.bf16.gmra.mxu0 %v2658
        %v5180 = vpop.f32.mrf.mxu0
        %v5181 = vadd.f32 %v2991, %v5180
        %v5182 = vpop.f32.mrf.mxu0
        %v5183 = vadd.f32 %v2995, %v5182
        %v5184 = vpop.f32.mrf.mxu0
        %v5185 = vadd.f32 %v2991, %v5184
        %v5186 = vpop.f32.mrf.mxu0
        %v5187 = vadd.f32 %v2995, %v5186
        %5188 = vmatprep.mubr.bf16.mxu0 %v2663
        %5189 = vmatmul.mubr.bf16.gmra.mxu0 %v2662
        %v5190 = vpop.f32.mrf.mxu0
        %v5191 = vadd.f32 %v2991, %v5190
        %v5192 = vpop.f32.mrf.mxu0
        %v5193 = vadd.f32 %v2995, %v5192
        %v5194 = vpop.f32.mrf.mxu0
        %v5195 = vadd.f32 %v2991, %v5194
        %v5196 = vpop.f32.mrf.mxu0
        %v5197 = vadd.f32 %v2995, %v5196
        %5198 = vmatprep.mubr.bf16.mxu0 %v2667
        %5199 = vmatmul.mubr.bf16.gmra.mxu0 %v2666
        %v5200 = vpop.f32.mrf.mxu0
        %v5201 = vadd.f32 %v2991, %v5200
        %v5202 = vpop.f32.mrf.mxu0
        %v5203 = vadd.f32 %v2995, %v5202
        %v5204 = vpop.f32.mrf.mxu0
        %v5205 = vadd.f32 %v2991, %v5204
        %v5206 = vpop.f32.mrf.mxu0
        %v5207 = vadd.f32 %v2995, %v5206
        %5208 = vmatprep.mubr.bf16.mxu0 %v2671
        %5209 = vmatmul.mubr.bf16.gmra.mxu0 %v2670
        %v5210 = vpop.f32.mrf.mxu0
        %v5211 = vadd.f32 %v2991, %v5210
        %v5212 = vpop.f32.mrf.mxu0
        %v5213 = vadd.f32 %v2995, %v5212
        %v5214 = vpop.f32.mrf.mxu0
        %v5215 = vadd.f32 %v2991, %v5214
        %v5216 = vpop.f32.mrf.mxu0
        %v5217 = vadd.f32 %v2995, %v5216
        %5218 = vmatprep.mubr.bf16.mxu0 %v2675
        %5219 = vmatmul.mubr.bf16.gmra.mxu0 %v2674
        %v5220 = vpop.f32.mrf.mxu0
        %v5221 = vadd.f32 %v2991, %v5220
        %v5222 = vpop.f32.mrf.mxu0
        %v5223 = vadd.f32 %v2995, %v5222
        %v5224 = vpop.f32.mrf.mxu0
        %v5225 = vadd.f32 %v2991, %v5224
        %v5226 = vpop.f32.mrf.mxu0
        %v5227 = vadd.f32 %v2995, %v5226
        %5228 = vmatprep.mubr.bf16.mxu0 %v2679
        %5229 = vmatmul.mubr.bf16.gmra.mxu0 %v2678
        %v5230 = vpop.f32.mrf.mxu0
        %v5231 = vadd.f32 %v2991, %v5230
        %v5232 = vpop.f32.mrf.mxu0
        %v5233 = vadd.f32 %v2995, %v5232
        %v5234 = vpop.f32.mrf.mxu0
        %v5235 = vadd.f32 %v2991, %v5234
        %v5236 = vpop.f32.mrf.mxu0
        %v5237 = vadd.f32 %v2995, %v5236
        %5238 = vmatprep.mubr.bf16.mxu0 %v2683
        %5239 = vmatmul.mubr.bf16.gmra.mxu0 %v2682
        %v5240 = vpop.f32.mrf.mxu0
        %v5241 = vadd.f32 %v2991, %v5240
        %v5242 = vpop.f32.mrf.mxu0
        %v5243 = vadd.f32 %v2995, %v5242
        %v5244 = vpop.f32.mrf.mxu0
        %v5245 = vadd.f32 %v2991, %v5244
        %v5246 = vpop.f32.mrf.mxu0
        %v5247 = vadd.f32 %v2995, %v5246
        %5248 = vmatprep.mubr.bf16.mxu0 %v2687
        %5249 = vmatmul.mubr.bf16.gmra.mxu0 %v2686
        %v5250 = vpop.f32.mrf.mxu0
        %v5251 = vadd.f32 %v2991, %v5250
        %v5252 = vpop.f32.mrf.mxu0
        %v5253 = vadd.f32 %v2995, %v5252
        %v5254 = vpop.f32.mrf.mxu0
        %v5255 = vadd.f32 %v2991, %v5254
        %v5256 = vpop.f32.mrf.mxu0
        %v5257 = vadd.f32 %v2995, %v5256
        %5258 = vmatprep.mubr.bf16.mxu0 %v2691
        %5259 = vmatmul.mubr.bf16.gmra.mxu0 %v2690
        %v5260 = vpop.f32.mrf.mxu0
        %v5261 = vadd.f32 %v2991, %v5260
        %v5262 = vpop.f32.mrf.mxu0
        %v5263 = vadd.f32 %v2995, %v5262
        %v5264 = vpop.f32.mrf.mxu0
        %v5265 = vadd.f32 %v2991, %v5264
        %v5266 = vpop.f32.mrf.mxu0
        %v5267 = vadd.f32 %v2995, %v5266
        %5268 = vmatprep.mubr.bf16.mxu0 %v2695
        %5269 = vmatmul.mubr.bf16.gmra.mxu0 %v2694
        %v5270 = vpop.f32.mrf.mxu0
        %v5271 = vadd.f32 %v2991, %v5270
        %v5272 = vpop.f32.mrf.mxu0
        %v5273 = vadd.f32 %v2995, %v5272
        %v5274 = vpop.f32.mrf.mxu0
        %v5275 = vadd.f32 %v2991, %v5274
        %v5276 = vpop.f32.mrf.mxu0
        %v5277 = vadd.f32 %v2995, %v5276
        %5278 = vmatprep.mubr.bf16.mxu0 %v2699
        %5279 = vmatmul.mubr.bf16.gmra.mxu0 %v2698
        %v5280 = vpop.f32.mrf.mxu0
        %v5281 = vadd.f32 %v2991, %v5280
        %v5282 = vpop.f32.mrf.mxu0
        %v5283 = vadd.f32 %v2995, %v5282
        %v5284 = vpop.f32.mrf.mxu0
        %v5285 = vadd.f32 %v2991, %v5284
        %v5286 = vpop.f32.mrf.mxu0
        %v5287 = vadd.f32 %v2995, %v5286
        %5288 = vmatprep.mubr.bf16.mxu0 %v2703
        %5289 = vmatmul.mubr.bf16.gmra.mxu0 %v2702
        %v5290 = vpop.f32.mrf.mxu0
        %v5291 = vadd.f32 %v2991, %v5290
        %v5292 = vpop.f32.mrf.mxu0
        %v5293 = vadd.f32 %v2995, %v5292
        %v5294 = vpop.f32.mrf.mxu0
        %v5295 = vadd.f32 %v2991, %v5294
        %v5296 = vpop.f32.mrf.mxu0
        %v5297 = vadd.f32 %v2995, %v5296
        %5298 = vmatprep.mubr.bf16.mxu0 %v2707
        %5299 = vmatmul.mubr.bf16.gmra.mxu0 %v2706
        %v5300 = vpop.f32.mrf.mxu0
        %v5301 = vadd.f32 %v2991, %v5300
        %v5302 = vpop.f32.mrf.mxu0
        %v5303 = vadd.f32 %v2995, %v5302
        %v5304 = vpop.f32.mrf.mxu0
        %v5305 = vadd.f32 %v2991, %v5304
        %v5306 = vpop.f32.mrf.mxu0
        %v5307 = vadd.f32 %v2995, %v5306
        %5308 = vmatprep.mubr.bf16.mxu0 %v2711
        %5309 = vmatmul.mubr.bf16.gmra.mxu0 %v2710
        %v5310 = vpop.f32.mrf.mxu0
        %v5311 = vadd.f32 %v2991, %v5310
        %v5312 = vpop.f32.mrf.mxu0
        %v5313 = vadd.f32 %v2995, %v5312
        %v5314 = vpop.f32.mrf.mxu0
        %v5315 = vadd.f32 %v2991, %v5314
        %v5316 = vpop.f32.mrf.mxu0
        %v5317 = vadd.f32 %v2995, %v5316
        %5318 = vmatprep.mubr.bf16.mxu0 %v2715
        %5319 = vmatmul.mubr.bf16.gmra.mxu0 %v2714
        %v5320 = vpop.f32.mrf.mxu0
        %v5321 = vadd.f32 %v2991, %v5320
        %v5322 = vpop.f32.mrf.mxu0
        %v5323 = vadd.f32 %v2995, %v5322
        %v5324 = vpop.f32.mrf.mxu0
        %v5325 = vadd.f32 %v2991, %v5324
        %v5326 = vpop.f32.mrf.mxu0
        %v5327 = vadd.f32 %v2995, %v5326
        %5328 = vmatprep.mubr.bf16.mxu0 %v2719
        %5329 = vmatmul.mubr.bf16.gmra.mxu0 %v2718
        %v5330 = vpop.f32.mrf.mxu0
        %v5331 = vadd.f32 %v2991, %v5330
        %v5332 = vpop.f32.mrf.mxu0
        %v5333 = vadd.f32 %v2995, %v5332
        %v5334 = vpop.f32.mrf.mxu0
        %v5335 = vadd.f32 %v2991, %v5334
        %v5336 = vpop.f32.mrf.mxu0
        %v5337 = vadd.f32 %v2995, %v5336
        %5338 = vmatprep.mubr.bf16.mxu0 %v2723
        %5339 = vmatmul.mubr.bf16.gmra.mxu0 %v2722
        %v5340 = vpop.f32.mrf.mxu0
        %v5341 = vadd.f32 %v2991, %v5340
        %v5342 = vpop.f32.mrf.mxu0
        %v5343 = vadd.f32 %v2995, %v5342
        %v5344 = vpop.f32.mrf.mxu0
        %v5345 = vadd.f32 %v2991, %v5344
        %v5346 = vpop.f32.mrf.mxu0
        %v5347 = vadd.f32 %v2995, %v5346
        %5348 = vmatprep.mubr.bf16.mxu0 %v2727
        %5349 = vmatmul.mubr.bf16.gmra.mxu0 %v2726
        %v5350 = vpop.f32.mrf.mxu0
        %v5351 = vadd.f32 %v2991, %v5350
        %v5352 = vpop.f32.mrf.mxu0
        %v5353 = vadd.f32 %v2995, %v5352
        %v5354 = vpop.f32.mrf.mxu0
        %v5355 = vadd.f32 %v2991, %v5354
        %v5356 = vpop.f32.mrf.mxu0
        %v5357 = vadd.f32 %v2995, %v5356
        %5358 = vmatprep.mubr.bf16.mxu0 %v2731
        %5359 = vmatmul.mubr.bf16.gmra.mxu0 %v2730
        %v5360 = vpop.f32.mrf.mxu0
        %v5361 = vadd.f32 %v2991, %v5360
        %v5362 = vpop.f32.mrf.mxu0
        %v5363 = vadd.f32 %v2995, %v5362
        %v5364 = vpop.f32.mrf.mxu0
        %v5365 = vadd.f32 %v2991, %v5364
        %v5366 = vpop.f32.mrf.mxu0
        %v5367 = vadd.f32 %v2995, %v5366
        %5368 = vmatprep.mubr.bf16.mxu0 %v2735
        %5369 = vmatmul.mubr.bf16.gmra.mxu0 %v2734
        %v5370 = vpop.f32.mrf.mxu0
        %v5371 = vadd.f32 %v2991, %v5370
        %v5372 = vpop.f32.mrf.mxu0
        %v5373 = vadd.f32 %v2995, %v5372
        %v5374 = vpop.f32.mrf.mxu0
        %v5375 = vadd.f32 %v2991, %v5374
        %v5376 = vpop.f32.mrf.mxu0
        %v5377 = vadd.f32 %v2995, %v5376
        %5378 = vmatprep.mubr.bf16.mxu0 %v2739
        %5379 = vmatmul.mubr.bf16.gmra.mxu0 %v2738
        %v5380 = vpop.f32.mrf.mxu0
        %v5381 = vadd.f32 %v2991, %v5380
        %v5382 = vpop.f32.mrf.mxu0
        %v5383 = vadd.f32 %v2995, %v5382
        %v5384 = vpop.f32.mrf.mxu0
        %v5385 = vadd.f32 %v2991, %v5384
        %v5386 = vpop.f32.mrf.mxu0
        %v5387 = vadd.f32 %v2995, %v5386
        %5388 = vmatprep.mubr.bf16.mxu0 %v2743
        %5389 = vmatmul.mubr.bf16.gmra.mxu0 %v2742
        %v5390 = vpop.f32.mrf.mxu0
        %v5391 = vadd.f32 %v2991, %v5390
        %v5392 = vpop.f32.mrf.mxu0
        %v5393 = vadd.f32 %v2995, %v5392
        %v5394 = vpop.f32.mrf.mxu0
        %v5395 = vadd.f32 %v2991, %v5394
        %v5396 = vpop.f32.mrf.mxu0
        %v5397 = vadd.f32 %v2995, %v5396
        %5398 = vmatprep.mubr.bf16.mxu0 %v2747
        %5399 = vmatmul.mubr.bf16.gmra.mxu0 %v2746
        %v5400 = vpop.f32.mrf.mxu0
        %v5401 = vadd.f32 %v2991, %v5400
        %v5402 = vpop.f32.mrf.mxu0
        %v5403 = vadd.f32 %v2995, %v5402
        %v5404 = vpop.f32.mrf.mxu0
        %v5405 = vadd.f32 %v2991, %v5404
        %v5406 = vpop.f32.mrf.mxu0
        %v5407 = vadd.f32 %v2995, %v5406
        %5408 = vmatprep.mubr.bf16.mxu0 %v2751
        %5409 = vmatmul.mubr.bf16.gmra.mxu0 %v2750
        %v5410 = vpop.f32.mrf.mxu0
        %v5411 = vadd.f32 %v2991, %v5410
        %v5412 = vpop.f32.mrf.mxu0
        %v5413 = vadd.f32 %v2995, %v5412
        %v5414 = vpop.f32.mrf.mxu0
        %v5415 = vadd.f32 %v2991, %v5414
        %v5416 = vpop.f32.mrf.mxu0
        %v5417 = vadd.f32 %v2995, %v5416
        %5418 = vmatprep.mubr.bf16.mxu0 %v2755
        %5419 = vmatmul.mubr.bf16.gmra.mxu0 %v2754
        %v5420 = vpop.f32.mrf.mxu0
        %v5421 = vadd.f32 %v2991, %v5420
        %v5422 = vpop.f32.mrf.mxu0
        %v5423 = vadd.f32 %v2995, %v5422
        %v5424 = vpop.f32.mrf.mxu0
        %v5425 = vadd.f32 %v2991, %v5424
        %v5426 = vpop.f32.mrf.mxu0
        %v5427 = vadd.f32 %v2995, %v5426
        %5428 = vmatprep.mubr.bf16.mxu0 %v2759
        %5429 = vmatmul.mubr.bf16.gmra.mxu0 %v2758
        %v5430 = vpop.f32.mrf.mxu0
        %v5431 = vadd.f32 %v2991, %v5430
        %v5432 = vpop.f32.mrf.mxu0
        %v5433 = vadd.f32 %v2995, %v5432
        %v5434 = vpop.f32.mrf.mxu0
        %v5435 = vadd.f32 %v2991, %v5434
        %v5436 = vpop.f32.mrf.mxu0
        %v5437 = vadd.f32 %v2995, %v5436
        %5438 = vmatprep.mubr.bf16.mxu0 %v2763
        %5439 = vmatmul.mubr.bf16.gmra.mxu0 %v2762
        %v5440 = vpop.f32.mrf.mxu0
        %v5441 = vadd.f32 %v2991, %v5440
        %v5442 = vpop.f32.mrf.mxu0
        %v5443 = vadd.f32 %v2995, %v5442
        %v5444 = vpop.f32.mrf.mxu0
        %v5445 = vadd.f32 %v2991, %v5444
        %v5446 = vpop.f32.mrf.mxu0
        %v5447 = vadd.f32 %v2995, %v5446
        %5448 = vmatprep.mubr.bf16.mxu0 %v2767
        %5449 = vmatmul.mubr.bf16.gmra.mxu0 %v2766
        %v5450 = vpop.f32.mrf.mxu0
        %v5451 = vadd.f32 %v2991, %v5450
        %v5452 = vpop.f32.mrf.mxu0
        %v5453 = vadd.f32 %v2995, %v5452
        %v5454 = vpop.f32.mrf.mxu0
        %v5455 = vadd.f32 %v2991, %v5454
        %v5456 = vpop.f32.mrf.mxu0
        %v5457 = vadd.f32 %v2995, %v5456
        %5458 = vmatprep.mubr.bf16.mxu0 %v2771
        %5459 = vmatmul.mubr.bf16.gmra.mxu0 %v2770
        %v5460 = vpop.f32.mrf.mxu0
        %v5461 = vadd.f32 %v2991, %v5460
        %v5462 = vpop.f32.mrf.mxu0
        %v5463 = vadd.f32 %v2995, %v5462
        %v5464 = vpop.f32.mrf.mxu0
        %v5465 = vadd.f32 %v2991, %v5464
        %v5466 = vpop.f32.mrf.mxu0
        %v5467 = vadd.f32 %v2995, %v5466
        %5468 = vmatprep.mubr.bf16.mxu0 %v2775
        %5469 = vmatmul.mubr.bf16.gmra.mxu0 %v2774
        %v5470 = vpop.f32.mrf.mxu0
        %v5471 = vadd.f32 %v2991, %v5470
        %v5472 = vpop.f32.mrf.mxu0
        %v5473 = vadd.f32 %v2995, %v5472
        %v5474 = vpop.f32.mrf.mxu0
        %v5475 = vadd.f32 %v2991, %v5474
        %v5476 = vpop.f32.mrf.mxu0
        %v5477 = vadd.f32 %v2995, %v5476
        %5478 = vmatprep.mubr.bf16.mxu0 %v2779
        %5479 = vmatmul.mubr.bf16.gmra.mxu0 %v2778
        %v5480 = vpop.f32.mrf.mxu0
        %v5481 = vadd.f32 %v2991, %v5480
        %v5482 = vpop.f32.mrf.mxu0
        %v5483 = vadd.f32 %v2995, %v5482
        %v5484 = vpop.f32.mrf.mxu0
        %v5485 = vadd.f32 %v2991, %v5484
        %v5486 = vpop.f32.mrf.mxu0
        %v5487 = vadd.f32 %v2995, %v5486
        %5488 = vmatprep.mubr.bf16.mxu0 %v2783
        %5489 = vmatmul.mubr.bf16.gmra.mxu0 %v2782
        %v5490 = vpop.f32.mrf.mxu0
        %v5491 = vadd.f32 %v2991, %v5490
        %v5492 = vpop.f32.mrf.mxu0
        %v5493 = vadd.f32 %v2995, %v5492
        %v5494 = vpop.f32.mrf.mxu0
        %v5495 = vadd.f32 %v2991, %v5494
        %v5496 = vpop.f32.mrf.mxu0
        %v5497 = vadd.f32 %v2995, %v5496
        %5498 = vmatprep.mubr.bf16.mxu0 %v2787
        %5499 = vmatmul.mubr.bf16.gmra.mxu0 %v2786
        %v5500 = vpop.f32.mrf.mxu0
        %v5501 = vadd.f32 %v2991, %v5500
        %v5502 = vpop.f32.mrf.mxu0
        %v5503 = vadd.f32 %v2995, %v5502
        %v5504 = vpop.f32.mrf.mxu0
        %v5505 = vadd.f32 %v2991, %v5504
        %v5506 = vpop.f32.mrf.mxu0
        %v5507 = vadd.f32 %v2995, %v5506
        %5508 = vmatprep.mubr.bf16.mxu0 %v2791
        %5509 = vmatmul.mubr.bf16.gmra.mxu0 %v2790
        %v5510 = vpop.f32.mrf.mxu0
        %v5511 = vadd.f32 %v2991, %v5510
        %v5512 = vpop.f32.mrf.mxu0
        %v5513 = vadd.f32 %v2995, %v5512
        %v5514 = vpop.f32.mrf.mxu0
        %v5515 = vadd.f32 %v2991, %v5514
        %v5516 = vpop.f32.mrf.mxu0
        %v5517 = vadd.f32 %v2995, %v5516
        %5518 = vmatprep.mubr.bf16.mxu0 %v2795
        %5519 = vmatmul.mubr.bf16.gmra.mxu0 %v2794
        %v5520 = vpop.f32.mrf.mxu0
        %v5521 = vadd.f32 %v2991, %v5520
        %v5522 = vpop.f32.mrf.mxu0
        %v5523 = vadd.f32 %v2995, %v5522
        %v5524 = vpop.f32.mrf.mxu0
        %v5525 = vadd.f32 %v2991, %v5524
        %v5526 = vpop.f32.mrf.mxu0
        %v5527 = vadd.f32 %v2995, %v5526
        %5528 = vmatprep.mubr.bf16.mxu0 %v2799
        %5529 = vmatmul.mubr.bf16.gmra.mxu0 %v2798
        %v5530 = vpop.f32.mrf.mxu0
        %v5531 = vadd.f32 %v2991, %v5530
        %v5532 = vpop.f32.mrf.mxu0
        %v5533 = vadd.f32 %v2995, %v5532
        %v5534 = vpop.f32.mrf.mxu0
        %v5535 = vadd.f32 %v2991, %v5534
        %v5536 = vpop.f32.mrf.mxu0
        %v5537 = vadd.f32 %v2995, %v5536
        %5538 = vmatprep.mubr.bf16.mxu0 %v2803
        %5539 = vmatmul.mubr.bf16.gmra.mxu0 %v2802
        %v5540 = vpop.f32.mrf.mxu0
        %v5541 = vadd.f32 %v2991, %v5540
        %v5542 = vpop.f32.mrf.mxu0
        %v5543 = vadd.f32 %v2995, %v5542
        %v5544 = vpop.f32.mrf.mxu0
        %v5545 = vadd.f32 %v2991, %v5544
        %v5546 = vpop.f32.mrf.mxu0
        %v5547 = vadd.f32 %v2995, %v5546
        %5548 = vmatprep.mubr.bf16.mxu0 %v2807
        %5549 = vmatmul.mubr.bf16.gmra.mxu0 %v2806
        %v5550 = vpop.f32.mrf.mxu0
        %v5551 = vadd.f32 %v2991, %v5550
        %v5552 = vpop.f32.mrf.mxu0
        %v5553 = vadd.f32 %v2995, %v5552
        %v5554 = vpop.f32.mrf.mxu0
        %v5555 = vadd.f32 %v2991, %v5554
        %v5556 = vpop.f32.mrf.mxu0
        %v5557 = vadd.f32 %v2995, %v5556
        %5558 = vmatprep.mubr.bf16.mxu0 %v2811
        %5559 = vmatmul.mubr.bf16.gmra.mxu0 %v2810
        %v5560 = vpop.f32.mrf.mxu0
        %v5561 = vadd.f32 %v2991, %v5560
        %v5562 = vpop.f32.mrf.mxu0
        %v5563 = vadd.f32 %v2995, %v5562
        %v5564 = vpop.f32.mrf.mxu0
        %v5565 = vadd.f32 %v2991, %v5564
        %v5566 = vpop.f32.mrf.mxu0
        %v5567 = vadd.f32 %v2995, %v5566
        %5568 = vmatprep.mubr.bf16.mxu0 %v2815
        %5569 = vmatmul.mubr.bf16.gmra.mxu0 %v2814
        %v5570 = vpop.f32.mrf.mxu0
        %v5571 = vadd.f32 %v2991, %v5570
        %v5572 = vpop.f32.mrf.mxu0
        %v5573 = vadd.f32 %v2995, %v5572
        %v5574 = vpop.f32.mrf.mxu0
        %v5575 = vadd.f32 %v2991, %v5574
        %v5576 = vpop.f32.mrf.mxu0
        %v5577 = vadd.f32 %v2995, %v5576
        %5578 = vmatprep.mubr.bf16.mxu0 %v2819
        %5579 = vmatmul.mubr.bf16.gmra.mxu0 %v2818
        %v5580 = vpop.f32.mrf.mxu0
        %v5581 = vadd.f32 %v2991, %v5580
        %v5582 = vpop.f32.mrf.mxu0
        %v5583 = vadd.f32 %v2995, %v5582
        %v5584 = vpop.f32.mrf.mxu0
        %v5585 = vadd.f32 %v2991, %v5584
        %v5586 = vpop.f32.mrf.mxu0
        %v5587 = vadd.f32 %v2995, %v5586
        %5588 = vmatprep.mubr.bf16.mxu0 %v2823
        %5589 = vmatmul.mubr.bf16.gmra.mxu0 %v2822
        %v5590 = vpop.f32.mrf.mxu0
        %v5591 = vadd.f32 %v2991, %v5590
        %v5592 = vpop.f32.mrf.mxu0
        %v5593 = vadd.f32 %v2995, %v5592
        %v5594 = vpop.f32.mrf.mxu0
        %v5595 = vadd.f32 %v2991, %v5594
        %v5596 = vpop.f32.mrf.mxu0
        %v5597 = vadd.f32 %v2995, %v5596
        %5598 = vmatprep.mubr.bf16.mxu0 %v2827
        %5599 = vmatmul.mubr.bf16.gmra.mxu0 %v2826
        %v5600 = vpop.f32.mrf.mxu0
        %v5601 = vadd.f32 %v2991, %v5600
        %v5602 = vpop.f32.mrf.mxu0
        %v5603 = vadd.f32 %v2995, %v5602
        %v5604 = vpop.f32.mrf.mxu0
        %v5605 = vadd.f32 %v2991, %v5604
        %v5606 = vpop.f32.mrf.mxu0
        %v5607 = vadd.f32 %v2995, %v5606
        %5608 = vmatprep.mubr.bf16.mxu0 %v2831
        %5609 = vmatmul.mubr.bf16.gmra.mxu0 %v2830
        %v5610 = vpop.f32.mrf.mxu0
        %v5611 = vadd.f32 %v2991, %v5610
        %v5612 = vpop.f32.mrf.mxu0
        %v5613 = vadd.f32 %v2995, %v5612
        %v5614 = vpop.f32.mrf.mxu0
        %v5615 = vadd.f32 %v2991, %v5614
        %v5616 = vpop.f32.mrf.mxu0
        %v5617 = vadd.f32 %v2995, %v5616
        %5618 = vmatprep.mubr.bf16.mxu0 %v2835
        %5619 = vmatmul.mubr.bf16.gmra.mxu0 %v2834
        %v5620 = vpop.f32.mrf.mxu0
        %v5621 = vadd.f32 %v2991, %v5620
        %v5622 = vpop.f32.mrf.mxu0
        %v5623 = vadd.f32 %v2995, %v5622
        %v5624 = vpop.f32.mrf.mxu0
        %v5625 = vadd.f32 %v2991, %v5624
        %v5626 = vpop.f32.mrf.mxu0
        %v5627 = vadd.f32 %v2995, %v5626
        %5628 = vmatprep.mubr.bf16.mxu0 %v2839
        %5629 = vmatmul.mubr.bf16.gmra.mxu0 %v2838
        %v5630 = vpop.f32.mrf.mxu0
        %v5631 = vadd.f32 %v2991, %v5630
        %v5632 = vpop.f32.mrf.mxu0
        %v5633 = vadd.f32 %v2995, %v5632
        %v5634 = vpop.f32.mrf.mxu0
        %v5635 = vadd.f32 %v2991, %v5634
        %v5636 = vpop.f32.mrf.mxu0
        %v5637 = vadd.f32 %v2995, %v5636
        %5638 = vmatprep.mubr.bf16.mxu0 %v2843
        %5639 = vmatmul.mubr.bf16.gmra.mxu0 %v2842
        %v5640 = vpop.f32.mrf.mxu0
        %v5641 = vadd.f32 %v2991, %v5640
        %v5642 = vpop.f32.mrf.mxu0
        %v5643 = vadd.f32 %v2995, %v5642
        %v5644 = vpop.f32.mrf.mxu0
        %v5645 = vadd.f32 %v2991, %v5644
        %v5646 = vpop.f32.mrf.mxu0
        %v5647 = vadd.f32 %v2995, %v5646
        %5648 = vmatprep.mubr.bf16.mxu0 %v2847
        %5649 = vmatmul.mubr.bf16.gmra.mxu0 %v2846
        %v5650 = vpop.f32.mrf.mxu0
        %v5651 = vadd.f32 %v2991, %v5650
        %v5652 = vpop.f32.mrf.mxu0
        %v5653 = vadd.f32 %v2995, %v5652
        %v5654 = vpop.f32.mrf.mxu0
        %v5655 = vadd.f32 %v2991, %v5654
        %v5656 = vpop.f32.mrf.mxu0
        %v5657 = vadd.f32 %v2995, %v5656
        %5658 = vdwg.mxu0
        %5659 = vmatprep.subr.bf16.mxu0 %v3479
        %5660 = vmatpush1.bf16.msra.mxu0 %v3478
        %5661 = vmatprep.subr.bf16.mxu0 %v3475
        %5662 = vmatpush1.bf16.msra.mxu0 %v3474
        %5663 = vmatprep.subr.bf16.mxu0 %v3471
        %5664 = vmatpush1.bf16.msra.mxu0 %v3470
        %5665 = vmatprep.subr.bf16.mxu0 %v3467
        %5666 = vmatpush1.bf16.msra.mxu0 %v3466
        %5667 = vmatprep.subr.bf16.mxu0 %v3463
        %5668 = vmatpush1.bf16.msra.mxu0 %v3462
        %5669 = vmatprep.subr.bf16.mxu0 %v3459
        %5670 = vmatpush1.bf16.msra.mxu0 %v3458
        %5671 = vmatprep.subr.bf16.mxu0 %v3455
        %5672 = vmatpush1.bf16.msra.mxu0 %v3454
        %5673 = vmatprep.subr.bf16.mxu0 %v3451
        %5674 = vmatpush1.bf16.msra.mxu0 %v3450
        %5675 = vmatprep.subr.bf16.mxu0 %v3511
        %5676 = vmatpush2.bf16.msra.mxu0 %v3510
        %5677 = vmatprep.subr.bf16.mxu0 %v3507
        %5678 = vmatpush2.bf16.msra.mxu0 %v3506
        %5679 = vmatprep.subr.bf16.mxu0 %v3503
        %5680 = vmatpush2.bf16.msra.mxu0 %v3502
        %5681 = vmatprep.subr.bf16.mxu0 %v3499
        %5682 = vmatpush2.bf16.msra.mxu0 %v3498
        %5683 = vmatprep.subr.bf16.mxu0 %v3495
        %5684 = vmatpush2.bf16.msra.mxu0 %v3494
        %5685 = vmatprep.subr.bf16.mxu0 %v3491
        %5686 = vmatpush2.bf16.msra.mxu0 %v3490
        %5687 = vmatprep.subr.bf16.mxu0 %v3487
        %5688 = vmatpush2.bf16.msra.mxu0 %v3486
        %5689 = vmatprep.subr.bf16.mxu0 %v3483
        %5690 = vmatpush2.bf16.msra.mxu0 %v3482
        %5691 = vmatprep.mubr.bf16.mxu0 %v2597
        %5692 = vmatmul.mubr.bf16.gmra.mxu0 %v2596
        %v5693 = vpop.f32.mrf.mxu0
        %v5694 = vadd.f32 %v5021, %v5693
        %v5695 = vpop.f32.mrf.mxu0
        %v5696 = vadd.f32 %v5023, %v5695
        %v5697 = vpop.f32.mrf.mxu0
        %v5698 = vadd.f32 %v5025, %v5697
        %v5699 = vpop.f32.mrf.mxu0
        %v5700 = vadd.f32 %v5027, %v5699
        %5701 = vmatprep.mubr.bf16.mxu0 %v2601
        %5702 = vmatmul.mubr.bf16.gmra.mxu0 %v2600
        %v5703 = vpop.f32.mrf.mxu0
        %v5704 = vadd.f32 %v5031, %v5703
        %v5705 = vpop.f32.mrf.mxu0
        %v5706 = vadd.f32 %v5033, %v5705
        %v5707 = vpop.f32.mrf.mxu0
        %v5708 = vadd.f32 %v5035, %v5707
        %v5709 = vpop.f32.mrf.mxu0
        %v5710 = vadd.f32 %v5037, %v5709
        %5711 = vmatprep.mubr.bf16.mxu0 %v2605
        %5712 = vmatmul.mubr.bf16.gmra.mxu0 %v2604
        %v5713 = vpop.f32.mrf.mxu0
        %v5714 = vadd.f32 %v5041, %v5713
        %v5715 = vpop.f32.mrf.mxu0
        %v5716 = vadd.f32 %v5043, %v5715
        %v5717 = vpop.f32.mrf.mxu0
        %v5718 = vadd.f32 %v5045, %v5717
        %v5719 = vpop.f32.mrf.mxu0
        %v5720 = vadd.f32 %v5047, %v5719
        %5721 = vmatprep.mubr.bf16.mxu0 %v2609
        %5722 = vmatmul.mubr.bf16.gmra.mxu0 %v2608
        %v5723 = vpop.f32.mrf.mxu0
        %v5724 = vadd.f32 %v5051, %v5723
        %v5725 = vpop.f32.mrf.mxu0
        %v5726 = vadd.f32 %v5053, %v5725
        %v5727 = vpop.f32.mrf.mxu0
        %v5728 = vadd.f32 %v5055, %v5727
        %v5729 = vpop.f32.mrf.mxu0
        %v5730 = vadd.f32 %v5057, %v5729
        %5731 = vmatprep.mubr.bf16.mxu0 %v2613
        %5732 = vmatmul.mubr.bf16.gmra.mxu0 %v2612
        %v5733 = vpop.f32.mrf.mxu0
        %v5734 = vadd.f32 %v5061, %v5733
        %v5735 = vpop.f32.mrf.mxu0
        %v5736 = vadd.f32 %v5063, %v5735
        %v5737 = vpop.f32.mrf.mxu0
        %v5738 = vadd.f32 %v5065, %v5737
        %v5739 = vpop.f32.mrf.mxu0
        %v5740 = vadd.f32 %v5067, %v5739
        %5741 = vmatprep.mubr.bf16.mxu0 %v2617
        %5742 = vmatmul.mubr.bf16.gmra.mxu0 %v2616
        %v5743 = vpop.f32.mrf.mxu0
        %v5744 = vadd.f32 %v5071, %v5743
        %v5745 = vpop.f32.mrf.mxu0
        %v5746 = vadd.f32 %v5073, %v5745
        %v5747 = vpop.f32.mrf.mxu0
        %v5748 = vadd.f32 %v5075, %v5747
        %v5749 = vpop.f32.mrf.mxu0
        %v5750 = vadd.f32 %v5077, %v5749
        %5751 = vmatprep.mubr.bf16.mxu0 %v2621
        %5752 = vmatmul.mubr.bf16.gmra.mxu0 %v2620
        %v5753 = vpop.f32.mrf.mxu0
        %v5754 = vadd.f32 %v5081, %v5753
        %v5755 = vpop.f32.mrf.mxu0
        %v5756 = vadd.f32 %v5083, %v5755
        %v5757 = vpop.f32.mrf.mxu0
        %v5758 = vadd.f32 %v5085, %v5757
        %v5759 = vpop.f32.mrf.mxu0
        %v5760 = vadd.f32 %v5087, %v5759
        %5761 = vmatprep.mubr.bf16.mxu0 %v2625
        %5762 = vmatmul.mubr.bf16.gmra.mxu0 %v2624
        %v5763 = vpop.f32.mrf.mxu0
        %v5764 = vadd.f32 %v5091, %v5763
        %v5765 = vpop.f32.mrf.mxu0
        %v5766 = vadd.f32 %v5093, %v5765
        %v5767 = vpop.f32.mrf.mxu0
        %v5768 = vadd.f32 %v5095, %v5767
        %v5769 = vpop.f32.mrf.mxu0
        %v5770 = vadd.f32 %v5097, %v5769
        %5771 = vmatprep.mubr.bf16.mxu0 %v2629
        %5772 = vmatmul.mubr.bf16.gmra.mxu0 %v2628
        %v5773 = vpop.f32.mrf.mxu0
        %v5774 = vadd.f32 %v5101, %v5773
        %v5775 = vpop.f32.mrf.mxu0
        %v5776 = vadd.f32 %v5103, %v5775
        %v5777 = vpop.f32.mrf.mxu0
        %v5778 = vadd.f32 %v5105, %v5777
        %v5779 = vpop.f32.mrf.mxu0
        %v5780 = vadd.f32 %v5107, %v5779
        %5781 = vmatprep.mubr.bf16.mxu0 %v2633
        %5782 = vmatmul.mubr.bf16.gmra.mxu0 %v2632
        %v5783 = vpop.f32.mrf.mxu0
        %v5784 = vadd.f32 %v5111, %v5783
        %v5785 = vpop.f32.mrf.mxu0
        %v5786 = vadd.f32 %v5113, %v5785
        %v5787 = vpop.f32.mrf.mxu0
        %v5788 = vadd.f32 %v5115, %v5787
        %v5789 = vpop.f32.mrf.mxu0
        %v5790 = vadd.f32 %v5117, %v5789
        %5791 = vmatprep.mubr.bf16.mxu0 %v2637
        %5792 = vmatmul.mubr.bf16.gmra.mxu0 %v2636
        %v5793 = vpop.f32.mrf.mxu0
        %v5794 = vadd.f32 %v5121, %v5793
        %v5795 = vpop.f32.mrf.mxu0
        %v5796 = vadd.f32 %v5123, %v5795
        %v5797 = vpop.f32.mrf.mxu0
        %v5798 = vadd.f32 %v5125, %v5797
        %v5799 = vpop.f32.mrf.mxu0
        %v5800 = vadd.f32 %v5127, %v5799
        %5801 = vmatprep.mubr.bf16.mxu0 %v2641
        %5802 = vmatmul.mubr.bf16.gmra.mxu0 %v2640
        %v5803 = vpop.f32.mrf.mxu0
        %v5804 = vadd.f32 %v5131, %v5803
        %v5805 = vpop.f32.mrf.mxu0
        %v5806 = vadd.f32 %v5133, %v5805
        %v5807 = vpop.f32.mrf.mxu0
        %v5808 = vadd.f32 %v5135, %v5807
        %v5809 = vpop.f32.mrf.mxu0
        %v5810 = vadd.f32 %v5137, %v5809
        %5811 = vmatprep.mubr.bf16.mxu0 %v2645
        %5812 = vmatmul.mubr.bf16.gmra.mxu0 %v2644
        %v5813 = vpop.f32.mrf.mxu0
        %v5814 = vadd.f32 %v5141, %v5813
        %v5815 = vpop.f32.mrf.mxu0
        %v5816 = vadd.f32 %v5143, %v5815
        %v5817 = vpop.f32.mrf.mxu0
        %v5818 = vadd.f32 %v5145, %v5817
        %v5819 = vpop.f32.mrf.mxu0
        %v5820 = vadd.f32 %v5147, %v5819
        %5821 = vmatprep.mubr.bf16.mxu0 %v2649
        %5822 = vmatmul.mubr.bf16.gmra.mxu0 %v2648
        %v5823 = vpop.f32.mrf.mxu0
        %v5824 = vadd.f32 %v5151, %v5823
        %v5825 = vpop.f32.mrf.mxu0
        %v5826 = vadd.f32 %v5153, %v5825
        %v5827 = vpop.f32.mrf.mxu0
        %v5828 = vadd.f32 %v5155, %v5827
        %v5829 = vpop.f32.mrf.mxu0
        %v5830 = vadd.f32 %v5157, %v5829
        %5831 = vmatprep.mubr.bf16.mxu0 %v2653
        %5832 = vmatmul.mubr.bf16.gmra.mxu0 %v2652
        %v5833 = vpop.f32.mrf.mxu0
        %v5834 = vadd.f32 %v5161, %v5833
        %v5835 = vpop.f32.mrf.mxu0
        %v5836 = vadd.f32 %v5163, %v5835
        %v5837 = vpop.f32.mrf.mxu0
        %v5838 = vadd.f32 %v5165, %v5837
        %v5839 = vpop.f32.mrf.mxu0
        %v5840 = vadd.f32 %v5167, %v5839
        %5841 = vmatprep.mubr.bf16.mxu0 %v2657
        %5842 = vmatmul.mubr.bf16.gmra.mxu0 %v2656
        %v5843 = vpop.f32.mrf.mxu0
        %v5844 = vadd.f32 %v5171, %v5843
        %v5845 = vpop.f32.mrf.mxu0
        %v5846 = vadd.f32 %v5173, %v5845
        %v5847 = vpop.f32.mrf.mxu0
        %v5848 = vadd.f32 %v5175, %v5847
        %v5849 = vpop.f32.mrf.mxu0
        %v5850 = vadd.f32 %v5177, %v5849
        %5851 = vmatprep.mubr.bf16.mxu0 %v2661
        %5852 = vmatmul.mubr.bf16.gmra.mxu0 %v2660
        %v5853 = vpop.f32.mrf.mxu0
        %v5854 = vadd.f32 %v5181, %v5853
        %v5855 = vpop.f32.mrf.mxu0
        %v5856 = vadd.f32 %v5183, %v5855
        %v5857 = vpop.f32.mrf.mxu0
        %v5858 = vadd.f32 %v5185, %v5857
        %v5859 = vpop.f32.mrf.mxu0
        %v5860 = vadd.f32 %v5187, %v5859
        %5861 = vmatprep.mubr.bf16.mxu0 %v2665
        %5862 = vmatmul.mubr.bf16.gmra.mxu0 %v2664
        %v5863 = vpop.f32.mrf.mxu0
        %v5864 = vadd.f32 %v5191, %v5863
        %v5865 = vpop.f32.mrf.mxu0
        %v5866 = vadd.f32 %v5193, %v5865
        %v5867 = vpop.f32.mrf.mxu0
        %v5868 = vadd.f32 %v5195, %v5867
        %v5869 = vpop.f32.mrf.mxu0
        %v5870 = vadd.f32 %v5197, %v5869
        %5871 = vmatprep.mubr.bf16.mxu0 %v2669
        %5872 = vmatmul.mubr.bf16.gmra.mxu0 %v2668
        %v5873 = vpop.f32.mrf.mxu0
        %v5874 = vadd.f32 %v5201, %v5873
        %v5875 = vpop.f32.mrf.mxu0
        %v5876 = vadd.f32 %v5203, %v5875
        %v5877 = vpop.f32.mrf.mxu0
        %v5878 = vadd.f32 %v5205, %v5877
        %v5879 = vpop.f32.mrf.mxu0
        %v5880 = vadd.f32 %v5207, %v5879
        %5881 = vmatprep.mubr.bf16.mxu0 %v2673
        %5882 = vmatmul.mubr.bf16.gmra.mxu0 %v2672
        %v5883 = vpop.f32.mrf.mxu0
        %v5884 = vadd.f32 %v5211, %v5883
        %v5885 = vpop.f32.mrf.mxu0
        %v5886 = vadd.f32 %v5213, %v5885
        %v5887 = vpop.f32.mrf.mxu0
        %v5888 = vadd.f32 %v5215, %v5887
        %v5889 = vpop.f32.mrf.mxu0
        %v5890 = vadd.f32 %v5217, %v5889
        %5891 = vmatprep.mubr.bf16.mxu0 %v2677
        %5892 = vmatmul.mubr.bf16.gmra.mxu0 %v2676
        %v5893 = vpop.f32.mrf.mxu0
        %v5894 = vadd.f32 %v5221, %v5893
        %v5895 = vpop.f32.mrf.mxu0
        %v5896 = vadd.f32 %v5223, %v5895
        %v5897 = vpop.f32.mrf.mxu0
        %v5898 = vadd.f32 %v5225, %v5897
        %v5899 = vpop.f32.mrf.mxu0
        %v5900 = vadd.f32 %v5227, %v5899
        %5901 = vmatprep.mubr.bf16.mxu0 %v2681
        %5902 = vmatmul.mubr.bf16.gmra.mxu0 %v2680
        %v5903 = vpop.f32.mrf.mxu0
        %v5904 = vadd.f32 %v5231, %v5903
        %v5905 = vpop.f32.mrf.mxu0
        %v5906 = vadd.f32 %v5233, %v5905
        %v5907 = vpop.f32.mrf.mxu0
        %v5908 = vadd.f32 %v5235, %v5907
        %v5909 = vpop.f32.mrf.mxu0
        %v5910 = vadd.f32 %v5237, %v5909
        %5911 = vmatprep.mubr.bf16.mxu0 %v2685
        %5912 = vmatmul.mubr.bf16.gmra.mxu0 %v2684
        %v5913 = vpop.f32.mrf.mxu0
        %v5914 = vadd.f32 %v5241, %v5913
        %v5915 = vpop.f32.mrf.mxu0
        %v5916 = vadd.f32 %v5243, %v5915
        %v5917 = vpop.f32.mrf.mxu0
        %v5918 = vadd.f32 %v5245, %v5917
        %v5919 = vpop.f32.mrf.mxu0
        %v5920 = vadd.f32 %v5247, %v5919
        %5921 = vmatprep.mubr.bf16.mxu0 %v2689
        %5922 = vmatmul.mubr.bf16.gmra.mxu0 %v2688
        %v5923 = vpop.f32.mrf.mxu0
        %v5924 = vadd.f32 %v5251, %v5923
        %v5925 = vpop.f32.mrf.mxu0
        %v5926 = vadd.f32 %v5253, %v5925
        %v5927 = vpop.f32.mrf.mxu0
        %v5928 = vadd.f32 %v5255, %v5927
        %v5929 = vpop.f32.mrf.mxu0
        %v5930 = vadd.f32 %v5257, %v5929
        %5931 = vmatprep.mubr.bf16.mxu0 %v2693
        %5932 = vmatmul.mubr.bf16.gmra.mxu0 %v2692
        %v5933 = vpop.f32.mrf.mxu0
        %v5934 = vadd.f32 %v5261, %v5933
        %v5935 = vpop.f32.mrf.mxu0
        %v5936 = vadd.f32 %v5263, %v5935
        %v5937 = vpop.f32.mrf.mxu0
        %v5938 = vadd.f32 %v5265, %v5937
        %v5939 = vpop.f32.mrf.mxu0
        %v5940 = vadd.f32 %v5267, %v5939
        %5941 = vmatprep.mubr.bf16.mxu0 %v2697
        %5942 = vmatmul.mubr.bf16.gmra.mxu0 %v2696
        %v5943 = vpop.f32.mrf.mxu0
        %v5944 = vadd.f32 %v5271, %v5943
        %v5945 = vpop.f32.mrf.mxu0
        %v5946 = vadd.f32 %v5273, %v5945
        %v5947 = vpop.f32.mrf.mxu0
        %v5948 = vadd.f32 %v5275, %v5947
        %v5949 = vpop.f32.mrf.mxu0
        %v5950 = vadd.f32 %v5277, %v5949
        %5951 = vmatprep.mubr.bf16.mxu0 %v2701
        %5952 = vmatmul.mubr.bf16.gmra.mxu0 %v2700
        %v5953 = vpop.f32.mrf.mxu0
        %v5954 = vadd.f32 %v5281, %v5953
        %v5955 = vpop.f32.mrf.mxu0
        %v5956 = vadd.f32 %v5283, %v5955
        %v5957 = vpop.f32.mrf.mxu0
        %v5958 = vadd.f32 %v5285, %v5957
        %v5959 = vpop.f32.mrf.mxu0
        %v5960 = vadd.f32 %v5287, %v5959
        %5961 = vmatprep.mubr.bf16.mxu0 %v2705
        %5962 = vmatmul.mubr.bf16.gmra.mxu0 %v2704
        %v5963 = vpop.f32.mrf.mxu0
        %v5964 = vadd.f32 %v5291, %v5963
        %v5965 = vpop.f32.mrf.mxu0
        %v5966 = vadd.f32 %v5293, %v5965
        %v5967 = vpop.f32.mrf.mxu0
        %v5968 = vadd.f32 %v5295, %v5967
        %v5969 = vpop.f32.mrf.mxu0
        %v5970 = vadd.f32 %v5297, %v5969
        %5971 = vmatprep.mubr.bf16.mxu0 %v2709
        %5972 = vmatmul.mubr.bf16.gmra.mxu0 %v2708
        %v5973 = vpop.f32.mrf.mxu0
        %v5974 = vadd.f32 %v5301, %v5973
        %v5975 = vpop.f32.mrf.mxu0
        %v5976 = vadd.f32 %v5303, %v5975
        %v5977 = vpop.f32.mrf.mxu0
        %v5978 = vadd.f32 %v5305, %v5977
        %v5979 = vpop.f32.mrf.mxu0
        %v5980 = vadd.f32 %v5307, %v5979
        %5981 = vmatprep.mubr.bf16.mxu0 %v2713
        %5982 = vmatmul.mubr.bf16.gmra.mxu0 %v2712
        %v5983 = vpop.f32.mrf.mxu0
        %v5984 = vadd.f32 %v5311, %v5983
        %v5985 = vpop.f32.mrf.mxu0
        %v5986 = vadd.f32 %v5313, %v5985
        %v5987 = vpop.f32.mrf.mxu0
        %v5988 = vadd.f32 %v5315, %v5987
        %v5989 = vpop.f32.mrf.mxu0
        %v5990 = vadd.f32 %v5317, %v5989
        %5991 = vmatprep.mubr.bf16.mxu0 %v2717
        %5992 = vmatmul.mubr.bf16.gmra.mxu0 %v2716
        %v5993 = vpop.f32.mrf.mxu0
        %v5994 = vadd.f32 %v5321, %v5993
        %v5995 = vpop.f32.mrf.mxu0
        %v5996 = vadd.f32 %v5323, %v5995
        %v5997 = vpop.f32.mrf.mxu0
        %v5998 = vadd.f32 %v5325, %v5997
        %v5999 = vpop.f32.mrf.mxu0
        %v6000 = vadd.f32 %v5327, %v5999
        %6001 = vmatprep.mubr.bf16.mxu0 %v2721
        %6002 = vmatmul.mubr.bf16.gmra.mxu0 %v2720
        %v6003 = vpop.f32.mrf.mxu0
        %v6004 = vadd.f32 %v5331, %v6003
        %v6005 = vpop.f32.mrf.mxu0
        %v6006 = vadd.f32 %v5333, %v6005
        %v6007 = vpop.f32.mrf.mxu0
        %v6008 = vadd.f32 %v5335, %v6007
        %v6009 = vpop.f32.mrf.mxu0
        %v6010 = vadd.f32 %v5337, %v6009
        %6011 = vmatprep.mubr.bf16.mxu0 %v2725
        %6012 = vmatmul.mubr.bf16.gmra.mxu0 %v2724
        %v6013 = vpop.f32.mrf.mxu0
        %v6014 = vadd.f32 %v5341, %v6013
        %v6015 = vpop.f32.mrf.mxu0
        %v6016 = vadd.f32 %v5343, %v6015
        %v6017 = vpop.f32.mrf.mxu0
        %v6018 = vadd.f32 %v5345, %v6017
        %v6019 = vpop.f32.mrf.mxu0
        %v6020 = vadd.f32 %v5347, %v6019
        %6021 = vmatprep.mubr.bf16.mxu0 %v2729
        %6022 = vmatmul.mubr.bf16.gmra.mxu0 %v2728
        %v6023 = vpop.f32.mrf.mxu0
        %v6024 = vadd.f32 %v5351, %v6023
        %v6025 = vpop.f32.mrf.mxu0
        %v6026 = vadd.f32 %v5353, %v6025
        %v6027 = vpop.f32.mrf.mxu0
        %v6028 = vadd.f32 %v5355, %v6027
        %v6029 = vpop.f32.mrf.mxu0
        %v6030 = vadd.f32 %v5357, %v6029
        %6031 = vmatprep.mubr.bf16.mxu0 %v2733
        %6032 = vmatmul.mubr.bf16.gmra.mxu0 %v2732
        %v6033 = vpop.f32.mrf.mxu0
        %v6034 = vadd.f32 %v5361, %v6033
        %v6035 = vpop.f32.mrf.mxu0
        %v6036 = vadd.f32 %v5363, %v6035
        %v6037 = vpop.f32.mrf.mxu0
        %v6038 = vadd.f32 %v5365, %v6037
        %v6039 = vpop.f32.mrf.mxu0
        %v6040 = vadd.f32 %v5367, %v6039
        %6041 = vmatprep.mubr.bf16.mxu0 %v2737
        %6042 = vmatmul.mubr.bf16.gmra.mxu0 %v2736
        %v6043 = vpop.f32.mrf.mxu0
        %v6044 = vadd.f32 %v5371, %v6043
        %v6045 = vpop.f32.mrf.mxu0
        %v6046 = vadd.f32 %v5373, %v6045
        %v6047 = vpop.f32.mrf.mxu0
        %v6048 = vadd.f32 %v5375, %v6047
        %v6049 = vpop.f32.mrf.mxu0
        %v6050 = vadd.f32 %v5377, %v6049
        %6051 = vmatprep.mubr.bf16.mxu0 %v2741
        %6052 = vmatmul.mubr.bf16.gmra.mxu0 %v2740
        %v6053 = vpop.f32.mrf.mxu0
        %v6054 = vadd.f32 %v5381, %v6053
        %v6055 = vpop.f32.mrf.mxu0
        %v6056 = vadd.f32 %v5383, %v6055
        %v6057 = vpop.f32.mrf.mxu0
        %v6058 = vadd.f32 %v5385, %v6057
        %v6059 = vpop.f32.mrf.mxu0
        %v6060 = vadd.f32 %v5387, %v6059
        %6061 = vmatprep.mubr.bf16.mxu0 %v2745
        %6062 = vmatmul.mubr.bf16.gmra.mxu0 %v2744
        %v6063 = vpop.f32.mrf.mxu0
        %v6064 = vadd.f32 %v5391, %v6063
        %v6065 = vpop.f32.mrf.mxu0
        %v6066 = vadd.f32 %v5393, %v6065
        %v6067 = vpop.f32.mrf.mxu0
        %v6068 = vadd.f32 %v5395, %v6067
        %v6069 = vpop.f32.mrf.mxu0
        %v6070 = vadd.f32 %v5397, %v6069
        %6071 = vmatprep.mubr.bf16.mxu0 %v2749
        %6072 = vmatmul.mubr.bf16.gmra.mxu0 %v2748
        %v6073 = vpop.f32.mrf.mxu0
        %v6074 = vadd.f32 %v5401, %v6073
        %v6075 = vpop.f32.mrf.mxu0
        %v6076 = vadd.f32 %v5403, %v6075
        %v6077 = vpop.f32.mrf.mxu0
        %v6078 = vadd.f32 %v5405, %v6077
        %v6079 = vpop.f32.mrf.mxu0
        %v6080 = vadd.f32 %v5407, %v6079
        %6081 = vmatprep.mubr.bf16.mxu0 %v2753
        %6082 = vmatmul.mubr.bf16.gmra.mxu0 %v2752
        %v6083 = vpop.f32.mrf.mxu0
        %v6084 = vadd.f32 %v5411, %v6083
        %v6085 = vpop.f32.mrf.mxu0
        %v6086 = vadd.f32 %v5413, %v6085
        %v6087 = vpop.f32.mrf.mxu0
        %v6088 = vadd.f32 %v5415, %v6087
        %v6089 = vpop.f32.mrf.mxu0
        %v6090 = vadd.f32 %v5417, %v6089
        %6091 = vmatprep.mubr.bf16.mxu0 %v2757
        %6092 = vmatmul.mubr.bf16.gmra.mxu0 %v2756
        %v6093 = vpop.f32.mrf.mxu0
        %v6094 = vadd.f32 %v5421, %v6093
        %v6095 = vpop.f32.mrf.mxu0
        %v6096 = vadd.f32 %v5423, %v6095
        %v6097 = vpop.f32.mrf.mxu0
        %v6098 = vadd.f32 %v5425, %v6097
        %v6099 = vpop.f32.mrf.mxu0
        %v6100 = vadd.f32 %v5427, %v6099
        %6101 = vmatprep.mubr.bf16.mxu0 %v2761
        %6102 = vmatmul.mubr.bf16.gmra.mxu0 %v2760
        %v6103 = vpop.f32.mrf.mxu0
        %v6104 = vadd.f32 %v5431, %v6103
        %v6105 = vpop.f32.mrf.mxu0
        %v6106 = vadd.f32 %v5433, %v6105
        %v6107 = vpop.f32.mrf.mxu0
        %v6108 = vadd.f32 %v5435, %v6107
        %v6109 = vpop.f32.mrf.mxu0
        %v6110 = vadd.f32 %v5437, %v6109
        %6111 = vmatprep.mubr.bf16.mxu0 %v2765
        %6112 = vmatmul.mubr.bf16.gmra.mxu0 %v2764
        %v6113 = vpop.f32.mrf.mxu0
        %v6114 = vadd.f32 %v5441, %v6113
        %v6115 = vpop.f32.mrf.mxu0
        %v6116 = vadd.f32 %v5443, %v6115
        %v6117 = vpop.f32.mrf.mxu0
        %v6118 = vadd.f32 %v5445, %v6117
        %v6119 = vpop.f32.mrf.mxu0
        %v6120 = vadd.f32 %v5447, %v6119
        %6121 = vmatprep.mubr.bf16.mxu0 %v2769
        %6122 = vmatmul.mubr.bf16.gmra.mxu0 %v2768
        %v6123 = vpop.f32.mrf.mxu0
        %v6124 = vadd.f32 %v5451, %v6123
        %v6125 = vpop.f32.mrf.mxu0
        %v6126 = vadd.f32 %v5453, %v6125
        %v6127 = vpop.f32.mrf.mxu0
        %v6128 = vadd.f32 %v5455, %v6127
        %v6129 = vpop.f32.mrf.mxu0
        %v6130 = vadd.f32 %v5457, %v6129
        %6131 = vmatprep.mubr.bf16.mxu0 %v2773
        %6132 = vmatmul.mubr.bf16.gmra.mxu0 %v2772
        %v6133 = vpop.f32.mrf.mxu0
        %v6134 = vadd.f32 %v5461, %v6133
        %v6135 = vpop.f32.mrf.mxu0
        %v6136 = vadd.f32 %v5463, %v6135
        %v6137 = vpop.f32.mrf.mxu0
        %v6138 = vadd.f32 %v5465, %v6137
        %v6139 = vpop.f32.mrf.mxu0
        %v6140 = vadd.f32 %v5467, %v6139
        %6141 = vmatprep.mubr.bf16.mxu0 %v2777
        %6142 = vmatmul.mubr.bf16.gmra.mxu0 %v2776
        %v6143 = vpop.f32.mrf.mxu0
        %v6144 = vadd.f32 %v5471, %v6143
        %v6145 = vpop.f32.mrf.mxu0
        %v6146 = vadd.f32 %v5473, %v6145
        %v6147 = vpop.f32.mrf.mxu0
        %v6148 = vadd.f32 %v5475, %v6147
        %v6149 = vpop.f32.mrf.mxu0
        %v6150 = vadd.f32 %v5477, %v6149
        %6151 = vmatprep.mubr.bf16.mxu0 %v2781
        %6152 = vmatmul.mubr.bf16.gmra.mxu0 %v2780
        %v6153 = vpop.f32.mrf.mxu0
        %v6154 = vadd.f32 %v5481, %v6153
        %v6155 = vpop.f32.mrf.mxu0
        %v6156 = vadd.f32 %v5483, %v6155
        %v6157 = vpop.f32.mrf.mxu0
        %v6158 = vadd.f32 %v5485, %v6157
        %v6159 = vpop.f32.mrf.mxu0
        %v6160 = vadd.f32 %v5487, %v6159
        %6161 = vmatprep.mubr.bf16.mxu0 %v2785
        %6162 = vmatmul.mubr.bf16.gmra.mxu0 %v2784
        %v6163 = vpop.f32.mrf.mxu0
        %v6164 = vadd.f32 %v5491, %v6163
        %v6165 = vpop.f32.mrf.mxu0
        %v6166 = vadd.f32 %v5493, %v6165
        %v6167 = vpop.f32.mrf.mxu0
        %v6168 = vadd.f32 %v5495, %v6167
        %v6169 = vpop.f32.mrf.mxu0
        %v6170 = vadd.f32 %v5497, %v6169
        %6171 = vmatprep.mubr.bf16.mxu0 %v2789
        %6172 = vmatmul.mubr.bf16.gmra.mxu0 %v2788
        %v6173 = vpop.f32.mrf.mxu0
        %v6174 = vadd.f32 %v5501, %v6173
        %v6175 = vpop.f32.mrf.mxu0
        %v6176 = vadd.f32 %v5503, %v6175
        %v6177 = vpop.f32.mrf.mxu0
        %v6178 = vadd.f32 %v5505, %v6177
        %v6179 = vpop.f32.mrf.mxu0
        %v6180 = vadd.f32 %v5507, %v6179
        %6181 = vmatprep.mubr.bf16.mxu0 %v2793
        %6182 = vmatmul.mubr.bf16.gmra.mxu0 %v2792
        %v6183 = vpop.f32.mrf.mxu0
        %v6184 = vadd.f32 %v5511, %v6183
        %v6185 = vpop.f32.mrf.mxu0
        %v6186 = vadd.f32 %v5513, %v6185
        %v6187 = vpop.f32.mrf.mxu0
        %v6188 = vadd.f32 %v5515, %v6187
        %v6189 = vpop.f32.mrf.mxu0
        %v6190 = vadd.f32 %v5517, %v6189
        %6191 = vmatprep.mubr.bf16.mxu0 %v2797
        %6192 = vmatmul.mubr.bf16.gmra.mxu0 %v2796
        %v6193 = vpop.f32.mrf.mxu0
        %v6194 = vadd.f32 %v5521, %v6193
        %v6195 = vpop.f32.mrf.mxu0
        %v6196 = vadd.f32 %v5523, %v6195
        %v6197 = vpop.f32.mrf.mxu0
        %v6198 = vadd.f32 %v5525, %v6197
        %v6199 = vpop.f32.mrf.mxu0
        %v6200 = vadd.f32 %v5527, %v6199
        %6201 = vmatprep.mubr.bf16.mxu0 %v2801
        %6202 = vmatmul.mubr.bf16.gmra.mxu0 %v2800
        %v6203 = vpop.f32.mrf.mxu0
        %v6204 = vadd.f32 %v5531, %v6203
        %v6205 = vpop.f32.mrf.mxu0
        %v6206 = vadd.f32 %v5533, %v6205
        %v6207 = vpop.f32.mrf.mxu0
        %v6208 = vadd.f32 %v5535, %v6207
        %v6209 = vpop.f32.mrf.mxu0
        %v6210 = vadd.f32 %v5537, %v6209
        %6211 = vmatprep.mubr.bf16.mxu0 %v2805
        %6212 = vmatmul.mubr.bf16.gmra.mxu0 %v2804
        %v6213 = vpop.f32.mrf.mxu0
        %v6214 = vadd.f32 %v5541, %v6213
        %v6215 = vpop.f32.mrf.mxu0
        %v6216 = vadd.f32 %v5543, %v6215
        %v6217 = vpop.f32.mrf.mxu0
        %v6218 = vadd.f32 %v5545, %v6217
        %v6219 = vpop.f32.mrf.mxu0
        %v6220 = vadd.f32 %v5547, %v6219
        %6221 = vmatprep.mubr.bf16.mxu0 %v2809
        %6222 = vmatmul.mubr.bf16.gmra.mxu0 %v2808
        %v6223 = vpop.f32.mrf.mxu0
        %v6224 = vadd.f32 %v5551, %v6223
        %v6225 = vpop.f32.mrf.mxu0
        %v6226 = vadd.f32 %v5553, %v6225
        %v6227 = vpop.f32.mrf.mxu0
        %v6228 = vadd.f32 %v5555, %v6227
        %v6229 = vpop.f32.mrf.mxu0
        %v6230 = vadd.f32 %v5557, %v6229
        %6231 = vmatprep.mubr.bf16.mxu0 %v2813
        %6232 = vmatmul.mubr.bf16.gmra.mxu0 %v2812
        %v6233 = vpop.f32.mrf.mxu0
        %v6234 = vadd.f32 %v5561, %v6233
        %v6235 = vpop.f32.mrf.mxu0
        %v6236 = vadd.f32 %v5563, %v6235
        %v6237 = vpop.f32.mrf.mxu0
        %v6238 = vadd.f32 %v5565, %v6237
        %v6239 = vpop.f32.mrf.mxu0
        %v6240 = vadd.f32 %v5567, %v6239
        %6241 = vmatprep.mubr.bf16.mxu0 %v2817
        %6242 = vmatmul.mubr.bf16.gmra.mxu0 %v2816
        %v6243 = vpop.f32.mrf.mxu0
        %v6244 = vadd.f32 %v5571, %v6243
        %v6245 = vpop.f32.mrf.mxu0
        %v6246 = vadd.f32 %v5573, %v6245
        %v6247 = vpop.f32.mrf.mxu0
        %v6248 = vadd.f32 %v5575, %v6247
        %v6249 = vpop.f32.mrf.mxu0
        %v6250 = vadd.f32 %v5577, %v6249
        %6251 = vmatprep.mubr.bf16.mxu0 %v2821
        %6252 = vmatmul.mubr.bf16.gmra.mxu0 %v2820
        %v6253 = vpop.f32.mrf.mxu0
        %v6254 = vadd.f32 %v5581, %v6253
        %v6255 = vpop.f32.mrf.mxu0
        %v6256 = vadd.f32 %v5583, %v6255
        %v6257 = vpop.f32.mrf.mxu0
        %v6258 = vadd.f32 %v5585, %v6257
        %v6259 = vpop.f32.mrf.mxu0
        %v6260 = vadd.f32 %v5587, %v6259
        %6261 = vmatprep.mubr.bf16.mxu0 %v2825
        %6262 = vmatmul.mubr.bf16.gmra.mxu0 %v2824
        %v6263 = vpop.f32.mrf.mxu0
        %v6264 = vadd.f32 %v5591, %v6263
        %v6265 = vpop.f32.mrf.mxu0
        %v6266 = vadd.f32 %v5593, %v6265
        %v6267 = vpop.f32.mrf.mxu0
        %v6268 = vadd.f32 %v5595, %v6267
        %v6269 = vpop.f32.mrf.mxu0
        %v6270 = vadd.f32 %v5597, %v6269
        %6271 = vmatprep.mubr.bf16.mxu0 %v2829
        %6272 = vmatmul.mubr.bf16.gmra.mxu0 %v2828
        %v6273 = vpop.f32.mrf.mxu0
        %v6274 = vadd.f32 %v5601, %v6273
        %v6275 = vpop.f32.mrf.mxu0
        %v6276 = vadd.f32 %v5603, %v6275
        %v6277 = vpop.f32.mrf.mxu0
        %v6278 = vadd.f32 %v5605, %v6277
        %v6279 = vpop.f32.mrf.mxu0
        %v6280 = vadd.f32 %v5607, %v6279
        %6281 = vmatprep.mubr.bf16.mxu0 %v2833
        %6282 = vmatmul.mubr.bf16.gmra.mxu0 %v2832
        %v6283 = vpop.f32.mrf.mxu0
        %v6284 = vadd.f32 %v5611, %v6283
        %v6285 = vpop.f32.mrf.mxu0
        %v6286 = vadd.f32 %v5613, %v6285
        %v6287 = vpop.f32.mrf.mxu0
        %v6288 = vadd.f32 %v5615, %v6287
        %v6289 = vpop.f32.mrf.mxu0
        %v6290 = vadd.f32 %v5617, %v6289
        %6291 = vmatprep.mubr.bf16.mxu0 %v2837
        %6292 = vmatmul.mubr.bf16.gmra.mxu0 %v2836
        %v6293 = vpop.f32.mrf.mxu0
        %v6294 = vadd.f32 %v5621, %v6293
        %v6295 = vpop.f32.mrf.mxu0
        %v6296 = vadd.f32 %v5623, %v6295
        %v6297 = vpop.f32.mrf.mxu0
        %v6298 = vadd.f32 %v5625, %v6297
        %v6299 = vpop.f32.mrf.mxu0
        %v6300 = vadd.f32 %v5627, %v6299
        %6301 = vmatprep.mubr.bf16.mxu0 %v2841
        %6302 = vmatmul.mubr.bf16.gmra.mxu0 %v2840
        %v6303 = vpop.f32.mrf.mxu0
        %v6304 = vadd.f32 %v5631, %v6303
        %v6305 = vpop.f32.mrf.mxu0
        %v6306 = vadd.f32 %v5633, %v6305
        %v6307 = vpop.f32.mrf.mxu0
        %v6308 = vadd.f32 %v5635, %v6307
        %v6309 = vpop.f32.mrf.mxu0
        %v6310 = vadd.f32 %v5637, %v6309
        %6311 = vmatprep.mubr.bf16.mxu0 %v2845
        %6312 = vmatmul.mubr.bf16.gmra.mxu0 %v2844
        %v6313 = vpop.f32.mrf.mxu0
        %v6314 = vadd.f32 %v5641, %v6313
        %v6315 = vpop.f32.mrf.mxu0
        %v6316 = vadd.f32 %v5643, %v6315
        %v6317 = vpop.f32.mrf.mxu0
        %v6318 = vadd.f32 %v5645, %v6317
        %v6319 = vpop.f32.mrf.mxu0
        %v6320 = vadd.f32 %v5647, %v6319
        %6321 = vmatprep.mubr.bf16.mxu0 %v2849
        %6322 = vmatmul.mubr.bf16.gmra.mxu0 %v2848
        %v6323 = vpop.f32.mrf.mxu0
        %v6324 = vadd.f32 %v5651, %v6323
        %v6325 = vpop.f32.mrf.mxu0
        %v6326 = vadd.f32 %v5653, %v6325
        %v6327 = vpop.f32.mrf.mxu0
        %v6328 = vadd.f32 %v5655, %v6327
        %v6329 = vpop.f32.mrf.mxu0
        %v6330 = vadd.f32 %v5657, %v6329
        %6331 = vdwg.mxu0
        %v6332 = vmax.f32 %v4348, 0.0
        %v6333 = vmax.f32 %v4350, 0.0
        %v6334 = vmax.f32 %v5694, 0.0
        %v6335 = vmax.f32 %v5696, 0.0
        %v6336 = vmax.f32 %v4352, 0.0
        %v6337 = vmax.f32 %v4354, 0.0
        %v6338 = vmax.f32 %v5698, 0.0
        %v6339 = vmax.f32 %v5700, 0.0
        %v6340 = vmax.f32 %v4358, 0.0
        %v6341 = vmax.f32 %v4360, 0.0
        %v6342 = vmax.f32 %v5704, 0.0
        %v6343 = vmax.f32 %v5706, 0.0
        %v6344 = vmax.f32 %v4362, 0.0
        %v6345 = vmax.f32 %v4364, 0.0
        %v6346 = vmax.f32 %v5708, 0.0
        %v6347 = vmax.f32 %v5710, 0.0
        %v6348 = vmax.f32 %v4368, 0.0
        %v6349 = vmax.f32 %v4370, 0.0
        %v6350 = vmax.f32 %v5714, 0.0
        %v6351 = vmax.f32 %v5716, 0.0
        %v6352 = vmax.f32 %v4372, 0.0
        %v6353 = vmax.f32 %v4374, 0.0
        %v6354 = vmax.f32 %v5718, 0.0
        %v6355 = vmax.f32 %v5720, 0.0
        %v6356 = vmax.f32 %v4378, 0.0
        %v6357 = vmax.f32 %v4380, 0.0
        %v6358 = vmax.f32 %v5724, 0.0
        %v6359 = vmax.f32 %v5726, 0.0
        %v6360 = vmax.f32 %v4382, 0.0
        %v6361 = vmax.f32 %v4384, 0.0
        %v6362 = vmax.f32 %v5728, 0.0
        %v6363 = vmax.f32 %v5730, 0.0
        %v6364 = vmax.f32 %v4388, 0.0
        %v6365 = vmax.f32 %v4390, 0.0
        %v6366 = vmax.f32 %v5734, 0.0
        %v6367 = vmax.f32 %v5736, 0.0
        %v6368 = vmax.f32 %v4392, 0.0
        %v6369 = vmax.f32 %v4394, 0.0
        %v6370 = vmax.f32 %v5738, 0.0
        %v6371 = vmax.f32 %v5740, 0.0
        %v6372 = vmax.f32 %v4398, 0.0
        %v6373 = vmax.f32 %v4400, 0.0
        %v6374 = vmax.f32 %v5744, 0.0
        %v6375 = vmax.f32 %v5746, 0.0
        %v6376 = vmax.f32 %v4402, 0.0
        %v6377 = vmax.f32 %v4404, 0.0
        %v6378 = vmax.f32 %v5748, 0.0
        %v6379 = vmax.f32 %v5750, 0.0
        %v6380 = vmax.f32 %v4408, 0.0
        %v6381 = vmax.f32 %v4410, 0.0
        %v6382 = vmax.f32 %v5754, 0.0
        %v6383 = vmax.f32 %v5756, 0.0
        %v6384 = vmax.f32 %v4412, 0.0
        %v6385 = vmax.f32 %v4414, 0.0
        %v6386 = vmax.f32 %v5758, 0.0
        %v6387 = vmax.f32 %v5760, 0.0
        %v6388 = vmax.f32 %v4418, 0.0
        %v6389 = vmax.f32 %v4420, 0.0
        %v6390 = vmax.f32 %v5764, 0.0
        %v6391 = vmax.f32 %v5766, 0.0
        %v6392 = vmax.f32 %v4422, 0.0
        %v6393 = vmax.f32 %v4424, 0.0
        %v6394 = vmax.f32 %v5768, 0.0
        %v6395 = vmax.f32 %v5770, 0.0
        %v6396 = vmax.f32 %v4428, 0.0
        %v6397 = vmax.f32 %v4430, 0.0
        %v6398 = vmax.f32 %v5774, 0.0
        %v6399 = vmax.f32 %v5776, 0.0
        %v6400 = vmax.f32 %v4432, 0.0
        %v6401 = vmax.f32 %v4434, 0.0
        %v6402 = vmax.f32 %v5778, 0.0
        %v6403 = vmax.f32 %v5780, 0.0
        %v6404 = vmax.f32 %v4438, 0.0
        %v6405 = vmax.f32 %v4440, 0.0
        %v6406 = vmax.f32 %v5784, 0.0
        %v6407 = vmax.f32 %v5786, 0.0
        %v6408 = vmax.f32 %v4442, 0.0
        %v6409 = vmax.f32 %v4444, 0.0
        %v6410 = vmax.f32 %v5788, 0.0
        %v6411 = vmax.f32 %v5790, 0.0
        %v6412 = vmax.f32 %v4448, 0.0
        %v6413 = vmax.f32 %v4450, 0.0
        %v6414 = vmax.f32 %v5794, 0.0
        %v6415 = vmax.f32 %v5796, 0.0
        %v6416 = vmax.f32 %v4452, 0.0
        %v6417 = vmax.f32 %v4454, 0.0
        %v6418 = vmax.f32 %v5798, 0.0
        %v6419 = vmax.f32 %v5800, 0.0
        %v6420 = vmax.f32 %v4458, 0.0
        %v6421 = vmax.f32 %v4460, 0.0
        %v6422 = vmax.f32 %v5804, 0.0
        %v6423 = vmax.f32 %v5806, 0.0
        %v6424 = vmax.f32 %v4462, 0.0
        %v6425 = vmax.f32 %v4464, 0.0
        %v6426 = vmax.f32 %v5808, 0.0
        %v6427 = vmax.f32 %v5810, 0.0
        %v6428 = vmax.f32 %v4468, 0.0
        %v6429 = vmax.f32 %v4470, 0.0
        %v6430 = vmax.f32 %v5814, 0.0
        %v6431 = vmax.f32 %v5816, 0.0
        %v6432 = vmax.f32 %v4472, 0.0
        %v6433 = vmax.f32 %v4474, 0.0
        %v6434 = vmax.f32 %v5818, 0.0
        %v6435 = vmax.f32 %v5820, 0.0
        %v6436 = vmax.f32 %v4478, 0.0
        %v6437 = vmax.f32 %v4480, 0.0
        %v6438 = vmax.f32 %v5824, 0.0
        %v6439 = vmax.f32 %v5826, 0.0
        %v6440 = vmax.f32 %v4482, 0.0
        %v6441 = vmax.f32 %v4484, 0.0
        %v6442 = vmax.f32 %v5828, 0.0
        %v6443 = vmax.f32 %v5830, 0.0
        %v6444 = vmax.f32 %v4488, 0.0
        %v6445 = vmax.f32 %v4490, 0.0
        %v6446 = vmax.f32 %v5834, 0.0
        %v6447 = vmax.f32 %v5836, 0.0
        %v6448 = vmax.f32 %v4492, 0.0
        %v6449 = vmax.f32 %v4494, 0.0
        %v6450 = vmax.f32 %v5838, 0.0
        %v6451 = vmax.f32 %v5840, 0.0
        %v6452 = vmax.f32 %v4498, 0.0
        %v6453 = vmax.f32 %v4500, 0.0
        %v6454 = vmax.f32 %v5844, 0.0
        %v6455 = vmax.f32 %v5846, 0.0
        %v6456 = vmax.f32 %v4502, 0.0
        %v6457 = vmax.f32 %v4504, 0.0
        %v6458 = vmax.f32 %v5848, 0.0
        %v6459 = vmax.f32 %v5850, 0.0
        %v6460 = vmax.f32 %v4508, 0.0
        %v6461 = vmax.f32 %v4510, 0.0
        %v6462 = vmax.f32 %v5854, 0.0
        %v6463 = vmax.f32 %v5856, 0.0
        %v6464 = vmax.f32 %v4512, 0.0
        %v6465 = vmax.f32 %v4514, 0.0
        %v6466 = vmax.f32 %v5858, 0.0
        %v6467 = vmax.f32 %v5860, 0.0
        %v6468 = vmax.f32 %v4518, 0.0
        %v6469 = vmax.f32 %v4520, 0.0
        %v6470 = vmax.f32 %v5864, 0.0
        %v6471 = vmax.f32 %v5866, 0.0
        %v6472 = vmax.f32 %v4522, 0.0
        %v6473 = vmax.f32 %v4524, 0.0
        %v6474 = vmax.f32 %v5868, 0.0
        %v6475 = vmax.f32 %v5870, 0.0
        %v6476 = vmax.f32 %v4528, 0.0
        %v6477 = vmax.f32 %v4530, 0.0
        %v6478 = vmax.f32 %v5874, 0.0
        %v6479 = vmax.f32 %v5876, 0.0
        %v6480 = vmax.f32 %v4532, 0.0
        %v6481 = vmax.f32 %v4534, 0.0
        %v6482 = vmax.f32 %v5878, 0.0
        %v6483 = vmax.f32 %v5880, 0.0
        %v6484 = vmax.f32 %v4538, 0.0
        %v6485 = vmax.f32 %v4540, 0.0
        %v6486 = vmax.f32 %v5884, 0.0
        %v6487 = vmax.f32 %v5886, 0.0
        %v6488 = vmax.f32 %v4542, 0.0
        %v6489 = vmax.f32 %v4544, 0.0
        %v6490 = vmax.f32 %v5888, 0.0
        %v6491 = vmax.f32 %v5890, 0.0
        %v6492 = vmax.f32 %v4548, 0.0
        %v6493 = vmax.f32 %v4550, 0.0
        %v6494 = vmax.f32 %v5894, 0.0
        %v6495 = vmax.f32 %v5896, 0.0
        %v6496 = vmax.f32 %v4552, 0.0
        %v6497 = vmax.f32 %v4554, 0.0
        %v6498 = vmax.f32 %v5898, 0.0
        %v6499 = vmax.f32 %v5900, 0.0
        %v6500 = vmax.f32 %v4558, 0.0
        %v6501 = vmax.f32 %v4560, 0.0
        %v6502 = vmax.f32 %v5904, 0.0
        %v6503 = vmax.f32 %v5906, 0.0
        %v6504 = vmax.f32 %v4562, 0.0
        %v6505 = vmax.f32 %v4564, 0.0
        %v6506 = vmax.f32 %v5908, 0.0
        %v6507 = vmax.f32 %v5910, 0.0
        %v6508 = vmax.f32 %v4568, 0.0
        %v6509 = vmax.f32 %v4570, 0.0
        %v6510 = vmax.f32 %v5914, 0.0
        %v6511 = vmax.f32 %v5916, 0.0
        %v6512 = vmax.f32 %v4572, 0.0
        %v6513 = vmax.f32 %v4574, 0.0
        %v6514 = vmax.f32 %v5918, 0.0
        %v6515 = vmax.f32 %v5920, 0.0
        %v6516 = vmax.f32 %v4578, 0.0
        %v6517 = vmax.f32 %v4580, 0.0
        %v6518 = vmax.f32 %v5924, 0.0
        %v6519 = vmax.f32 %v5926, 0.0
        %v6520 = vmax.f32 %v4582, 0.0
        %v6521 = vmax.f32 %v4584, 0.0
        %v6522 = vmax.f32 %v5928, 0.0
        %v6523 = vmax.f32 %v5930, 0.0
        %v6524 = vmax.f32 %v4588, 0.0
        %v6525 = vmax.f32 %v4590, 0.0
        %v6526 = vmax.f32 %v5934, 0.0
        %v6527 = vmax.f32 %v5936, 0.0
        %v6528 = vmax.f32 %v4592, 0.0
        %v6529 = vmax.f32 %v4594, 0.0
        %v6530 = vmax.f32 %v5938, 0.0
        %v6531 = vmax.f32 %v5940, 0.0
        %v6532 = vmax.f32 %v4598, 0.0
        %v6533 = vmax.f32 %v4600, 0.0
        %v6534 = vmax.f32 %v5944, 0.0
        %v6535 = vmax.f32 %v5946, 0.0
        %v6536 = vmax.f32 %v4602, 0.0
        %v6537 = vmax.f32 %v4604, 0.0
        %v6538 = vmax.f32 %v5948, 0.0
        %v6539 = vmax.f32 %v5950, 0.0
        %v6540 = vmax.f32 %v4608, 0.0
        %v6541 = vmax.f32 %v4610, 0.0
        %v6542 = vmax.f32 %v5954, 0.0
        %v6543 = vmax.f32 %v5956, 0.0
        %v6544 = vmax.f32 %v4612, 0.0
        %v6545 = vmax.f32 %v4614, 0.0
        %v6546 = vmax.f32 %v5958, 0.0
        %v6547 = vmax.f32 %v5960, 0.0
        %v6548 = vmax.f32 %v4618, 0.0
        %v6549 = vmax.f32 %v4620, 0.0
        %v6550 = vmax.f32 %v5964, 0.0
        %v6551 = vmax.f32 %v5966, 0.0
        %v6552 = vmax.f32 %v4622, 0.0
        %v6553 = vmax.f32 %v4624, 0.0
        %v6554 = vmax.f32 %v5968, 0.0
        %v6555 = vmax.f32 %v5970, 0.0
        %v6556 = vmax.f32 %v4628, 0.0
        %v6557 = vmax.f32 %v4630, 0.0
        %v6558 = vmax.f32 %v5974, 0.0
        %v6559 = vmax.f32 %v5976, 0.0
        %v6560 = vmax.f32 %v4632, 0.0
        %v6561 = vmax.f32 %v4634, 0.0
        %v6562 = vmax.f32 %v5978, 0.0
        %v6563 = vmax.f32 %v5980, 0.0
        %v6564 = vmax.f32 %v4638, 0.0
        %v6565 = vmax.f32 %v4640, 0.0
        %v6566 = vmax.f32 %v5984, 0.0
        %v6567 = vmax.f32 %v5986, 0.0
        %v6568 = vmax.f32 %v4642, 0.0
        %v6569 = vmax.f32 %v4644, 0.0
        %v6570 = vmax.f32 %v5988, 0.0
        %v6571 = vmax.f32 %v5990, 0.0
        %v6572 = vmax.f32 %v4648, 0.0
        %v6573 = vmax.f32 %v4650, 0.0
        %v6574 = vmax.f32 %v5994, 0.0
        %v6575 = vmax.f32 %v5996, 0.0
        %v6576 = vmax.f32 %v4652, 0.0
        %v6577 = vmax.f32 %v4654, 0.0
        %v6578 = vmax.f32 %v5998, 0.0
        %v6579 = vmax.f32 %v6000, 0.0
        %v6580 = vmax.f32 %v4658, 0.0
        %v6581 = vmax.f32 %v4660, 0.0
        %v6582 = vmax.f32 %v6004, 0.0
        %v6583 = vmax.f32 %v6006, 0.0
        %v6584 = vmax.f32 %v4662, 0.0
        %v6585 = vmax.f32 %v4664, 0.0
        %v6586 = vmax.f32 %v6008, 0.0
        %v6587 = vmax.f32 %v6010, 0.0
        %v6588 = vmax.f32 %v4668, 0.0
        %v6589 = vmax.f32 %v4670, 0.0
        %v6590 = vmax.f32 %v6014, 0.0
        %v6591 = vmax.f32 %v6016, 0.0
        %v6592 = vmax.f32 %v4672, 0.0
        %v6593 = vmax.f32 %v4674, 0.0
        %v6594 = vmax.f32 %v6018, 0.0
        %v6595 = vmax.f32 %v6020, 0.0
        %v6596 = vmax.f32 %v4678, 0.0
        %v6597 = vmax.f32 %v4680, 0.0
        %v6598 = vmax.f32 %v6024, 0.0
        %v6599 = vmax.f32 %v6026, 0.0
        %v6600 = vmax.f32 %v4682, 0.0
        %v6601 = vmax.f32 %v4684, 0.0
        %v6602 = vmax.f32 %v6028, 0.0
        %v6603 = vmax.f32 %v6030, 0.0
        %v6604 = vmax.f32 %v4688, 0.0
        %v6605 = vmax.f32 %v4690, 0.0
        %v6606 = vmax.f32 %v6034, 0.0
        %v6607 = vmax.f32 %v6036, 0.0
        %v6608 = vmax.f32 %v4692, 0.0
        %v6609 = vmax.f32 %v4694, 0.0
        %v6610 = vmax.f32 %v6038, 0.0
        %v6611 = vmax.f32 %v6040, 0.0
        %v6612 = vmax.f32 %v4698, 0.0
        %v6613 = vmax.f32 %v4700, 0.0
        %v6614 = vmax.f32 %v6044, 0.0
        %v6615 = vmax.f32 %v6046, 0.0
        %v6616 = vmax.f32 %v4702, 0.0
        %v6617 = vmax.f32 %v4704, 0.0
        %v6618 = vmax.f32 %v6048, 0.0
        %v6619 = vmax.f32 %v6050, 0.0
        %v6620 = vmax.f32 %v4708, 0.0
        %v6621 = vmax.f32 %v4710, 0.0
        %v6622 = vmax.f32 %v6054, 0.0
        %v6623 = vmax.f32 %v6056, 0.0
        %v6624 = vmax.f32 %v4712, 0.0
        %v6625 = vmax.f32 %v4714, 0.0
        %v6626 = vmax.f32 %v6058, 0.0
        %v6627 = vmax.f32 %v6060, 0.0
        %v6628 = vmax.f32 %v4718, 0.0
        %v6629 = vmax.f32 %v4720, 0.0
        %v6630 = vmax.f32 %v6064, 0.0
        %v6631 = vmax.f32 %v6066, 0.0
        %v6632 = vmax.f32 %v4722, 0.0
        %v6633 = vmax.f32 %v4724, 0.0
        %v6634 = vmax.f32 %v6068, 0.0
        %v6635 = vmax.f32 %v6070, 0.0
        %v6636 = vmax.f32 %v4728, 0.0
        %v6637 = vmax.f32 %v4730, 0.0
        %v6638 = vmax.f32 %v6074, 0.0
        %v6639 = vmax.f32 %v6076, 0.0
        %v6640 = vmax.f32 %v4732, 0.0
        %v6641 = vmax.f32 %v4734, 0.0
        %v6642 = vmax.f32 %v6078, 0.0
        %v6643 = vmax.f32 %v6080, 0.0
        %v6644 = vmax.f32 %v4738, 0.0
        %v6645 = vmax.f32 %v4740, 0.0
        %v6646 = vmax.f32 %v6084, 0.0
        %v6647 = vmax.f32 %v6086, 0.0
        %v6648 = vmax.f32 %v4742, 0.0
        %v6649 = vmax.f32 %v4744, 0.0
        %v6650 = vmax.f32 %v6088, 0.0
        %v6651 = vmax.f32 %v6090, 0.0
        %v6652 = vmax.f32 %v4748, 0.0
        %v6653 = vmax.f32 %v4750, 0.0
        %v6654 = vmax.f32 %v6094, 0.0
        %v6655 = vmax.f32 %v6096, 0.0
        %v6656 = vmax.f32 %v4752, 0.0
        %v6657 = vmax.f32 %v4754, 0.0
        %v6658 = vmax.f32 %v6098, 0.0
        %v6659 = vmax.f32 %v6100, 0.0
        %v6660 = vmax.f32 %v4758, 0.0
        %v6661 = vmax.f32 %v4760, 0.0
        %v6662 = vmax.f32 %v6104, 0.0
        %v6663 = vmax.f32 %v6106, 0.0
        %v6664 = vmax.f32 %v4762, 0.0
        %v6665 = vmax.f32 %v4764, 0.0
        %v6666 = vmax.f32 %v6108, 0.0
        %v6667 = vmax.f32 %v6110, 0.0
        %v6668 = vmax.f32 %v4768, 0.0
        %v6669 = vmax.f32 %v4770, 0.0
        %v6670 = vmax.f32 %v6114, 0.0
        %v6671 = vmax.f32 %v6116, 0.0
        %v6672 = vmax.f32 %v4772, 0.0
        %v6673 = vmax.f32 %v4774, 0.0
        %v6674 = vmax.f32 %v6118, 0.0
        %v6675 = vmax.f32 %v6120, 0.0
        %v6676 = vmax.f32 %v4778, 0.0
        %v6677 = vmax.f32 %v4780, 0.0
        %v6678 = vmax.f32 %v6124, 0.0
        %v6679 = vmax.f32 %v6126, 0.0
        %v6680 = vmax.f32 %v4782, 0.0
        %v6681 = vmax.f32 %v4784, 0.0
        %v6682 = vmax.f32 %v6128, 0.0
        %v6683 = vmax.f32 %v6130, 0.0
        %v6684 = vmax.f32 %v4788, 0.0
        %v6685 = vmax.f32 %v4790, 0.0
        %v6686 = vmax.f32 %v6134, 0.0
        %v6687 = vmax.f32 %v6136, 0.0
        %v6688 = vmax.f32 %v4792, 0.0
        %v6689 = vmax.f32 %v4794, 0.0
        %v6690 = vmax.f32 %v6138, 0.0
        %v6691 = vmax.f32 %v6140, 0.0
        %v6692 = vmax.f32 %v4798, 0.0
        %v6693 = vmax.f32 %v4800, 0.0
        %v6694 = vmax.f32 %v6144, 0.0
        %v6695 = vmax.f32 %v6146, 0.0
        %v6696 = vmax.f32 %v4802, 0.0
        %v6697 = vmax.f32 %v4804, 0.0
        %v6698 = vmax.f32 %v6148, 0.0
        %v6699 = vmax.f32 %v6150, 0.0
        %v6700 = vmax.f32 %v4808, 0.0
        %v6701 = vmax.f32 %v4810, 0.0
        %v6702 = vmax.f32 %v6154, 0.0
        %v6703 = vmax.f32 %v6156, 0.0
        %v6704 = vmax.f32 %v4812, 0.0
        %v6705 = vmax.f32 %v4814, 0.0
        %v6706 = vmax.f32 %v6158, 0.0
        %v6707 = vmax.f32 %v6160, 0.0
        %v6708 = vmax.f32 %v4818, 0.0
        %v6709 = vmax.f32 %v4820, 0.0
        %v6710 = vmax.f32 %v6164, 0.0
        %v6711 = vmax.f32 %v6166, 0.0
        %v6712 = vmax.f32 %v4822, 0.0
        %v6713 = vmax.f32 %v4824, 0.0
        %v6714 = vmax.f32 %v6168, 0.0
        %v6715 = vmax.f32 %v6170, 0.0
        %v6716 = vmax.f32 %v4828, 0.0
        %v6717 = vmax.f32 %v4830, 0.0
        %v6718 = vmax.f32 %v6174, 0.0
        %v6719 = vmax.f32 %v6176, 0.0
        %v6720 = vmax.f32 %v4832, 0.0
        %v6721 = vmax.f32 %v4834, 0.0
        %v6722 = vmax.f32 %v6178, 0.0
        %v6723 = vmax.f32 %v6180, 0.0
        %v6724 = vmax.f32 %v4838, 0.0
        %v6725 = vmax.f32 %v4840, 0.0
        %v6726 = vmax.f32 %v6184, 0.0
        %v6727 = vmax.f32 %v6186, 0.0
        %v6728 = vmax.f32 %v4842, 0.0
        %v6729 = vmax.f32 %v4844, 0.0
        %v6730 = vmax.f32 %v6188, 0.0
        %v6731 = vmax.f32 %v6190, 0.0
        %v6732 = vmax.f32 %v4848, 0.0
        %v6733 = vmax.f32 %v4850, 0.0
        %v6734 = vmax.f32 %v6194, 0.0
        %v6735 = vmax.f32 %v6196, 0.0
        %v6736 = vmax.f32 %v4852, 0.0
        %v6737 = vmax.f32 %v4854, 0.0
        %v6738 = vmax.f32 %v6198, 0.0
        %v6739 = vmax.f32 %v6200, 0.0
        %v6740 = vmax.f32 %v4858, 0.0
        %v6741 = vmax.f32 %v4860, 0.0
        %v6742 = vmax.f32 %v6204, 0.0
        %v6743 = vmax.f32 %v6206, 0.0
        %v6744 = vmax.f32 %v4862, 0.0
        %v6745 = vmax.f32 %v4864, 0.0
        %v6746 = vmax.f32 %v6208, 0.0
        %v6747 = vmax.f32 %v6210, 0.0
        %v6748 = vmax.f32 %v4868, 0.0
        %v6749 = vmax.f32 %v4870, 0.0
        %v6750 = vmax.f32 %v6214, 0.0
        %v6751 = vmax.f32 %v6216, 0.0
        %v6752 = vmax.f32 %v4872, 0.0
        %v6753 = vmax.f32 %v4874, 0.0
        %v6754 = vmax.f32 %v6218, 0.0
        %v6755 = vmax.f32 %v6220, 0.0
        %v6756 = vmax.f32 %v4878, 0.0
        %v6757 = vmax.f32 %v4880, 0.0
        %v6758 = vmax.f32 %v6224, 0.0
        %v6759 = vmax.f32 %v6226, 0.0
        %v6760 = vmax.f32 %v4882, 0.0
        %v6761 = vmax.f32 %v4884, 0.0
        %v6762 = vmax.f32 %v6228, 0.0
        %v6763 = vmax.f32 %v6230, 0.0
        %v6764 = vmax.f32 %v4888, 0.0
        %v6765 = vmax.f32 %v4890, 0.0
        %v6766 = vmax.f32 %v6234, 0.0
        %v6767 = vmax.f32 %v6236, 0.0
        %v6768 = vmax.f32 %v4892, 0.0
        %v6769 = vmax.f32 %v4894, 0.0
        %v6770 = vmax.f32 %v6238, 0.0
        %v6771 = vmax.f32 %v6240, 0.0
        %v6772 = vmax.f32 %v4898, 0.0
        %v6773 = vmax.f32 %v4900, 0.0
        %v6774 = vmax.f32 %v6244, 0.0
        %v6775 = vmax.f32 %v6246, 0.0
        %v6776 = vmax.f32 %v4902, 0.0
        %v6777 = vmax.f32 %v4904, 0.0
        %v6778 = vmax.f32 %v6248, 0.0
        %v6779 = vmax.f32 %v6250, 0.0
        %v6780 = vmax.f32 %v4908, 0.0
        %v6781 = vmax.f32 %v4910, 0.0
        %v6782 = vmax.f32 %v6254, 0.0
        %v6783 = vmax.f32 %v6256, 0.0
        %v6784 = vmax.f32 %v4912, 0.0
        %v6785 = vmax.f32 %v4914, 0.0
        %v6786 = vmax.f32 %v6258, 0.0
        %v6787 = vmax.f32 %v6260, 0.0
        %v6788 = vmax.f32 %v4918, 0.0
        %v6789 = vmax.f32 %v4920, 0.0
        %v6790 = vmax.f32 %v6264, 0.0
        %v6791 = vmax.f32 %v6266, 0.0
        %v6792 = vmax.f32 %v4922, 0.0
        %v6793 = vmax.f32 %v4924, 0.0
        %v6794 = vmax.f32 %v6268, 0.0
        %v6795 = vmax.f32 %v6270, 0.0
        %v6796 = vmax.f32 %v4928, 0.0
        %v6797 = vmax.f32 %v4930, 0.0
        %v6798 = vmax.f32 %v6274, 0.0
        %v6799 = vmax.f32 %v6276, 0.0
        %v6800 = vmax.f32 %v4932, 0.0
        %v6801 = vmax.f32 %v4934, 0.0
        %v6802 = vmax.f32 %v6278, 0.0
        %v6803 = vmax.f32 %v6280, 0.0
        %v6804 = vmax.f32 %v4938, 0.0
        %v6805 = vmax.f32 %v4940, 0.0
        %v6806 = vmax.f32 %v6284, 0.0
        %v6807 = vmax.f32 %v6286, 0.0
        %v6808 = vmax.f32 %v4942, 0.0
        %v6809 = vmax.f32 %v4944, 0.0
        %v6810 = vmax.f32 %v6288, 0.0
        %v6811 = vmax.f32 %v6290, 0.0
        %v6812 = vmax.f32 %v4948, 0.0
        %v6813 = vmax.f32 %v4950, 0.0
        %v6814 = vmax.f32 %v6294, 0.0
        %v6815 = vmax.f32 %v6296, 0.0
        %v6816 = vmax.f32 %v4952, 0.0
        %v6817 = vmax.f32 %v4954, 0.0
        %v6818 = vmax.f32 %v6298, 0.0
        %v6819 = vmax.f32 %v6300, 0.0
        %v6820 = vmax.f32 %v4958, 0.0
        %v6821 = vmax.f32 %v4960, 0.0
        %v6822 = vmax.f32 %v6304, 0.0
        %v6823 = vmax.f32 %v6306, 0.0
        %v6824 = vmax.f32 %v4962, 0.0
        %v6825 = vmax.f32 %v4964, 0.0
        %v6826 = vmax.f32 %v6308, 0.0
        %v6827 = vmax.f32 %v6310, 0.0
        %v6828 = vmax.f32 %v4968, 0.0
        %v6829 = vmax.f32 %v4970, 0.0
        %v6830 = vmax.f32 %v6314, 0.0
        %v6831 = vmax.f32 %v6316, 0.0
        %v6832 = vmax.f32 %v4972, 0.0
        %v6833 = vmax.f32 %v4974, 0.0
        %v6834 = vmax.f32 %v6318, 0.0
        %v6835 = vmax.f32 %v6320, 0.0
        %v6836 = vmax.f32 %v4978, 0.0
        %v6837 = vmax.f32 %v4980, 0.0
        %v6838 = vmax.f32 %v6324, 0.0
        %v6839 = vmax.f32 %v6326, 0.0
        %v6840 = vmax.f32 %v4982, 0.0
        %v6841 = vmax.f32 %v4984, 0.0
        %v6842 = vmax.f32 %v6328, 0.0
        %v6843 = vmax.f32 %v6330, 0.0
        %v6844 = vpack.c.bf16 %v6336, %v6332
        %v6845 = vpack.c.bf16 %v6337, %v6333
        %v6846 = vpack.c.bf16 %v6338, %v6334
        %v6847 = vpack.c.bf16 %v6339, %v6335
        %v6848 = vpack.c.bf16 %v6344, %v6340
        %v6849 = vpack.c.bf16 %v6345, %v6341
        %v6850 = vpack.c.bf16 %v6346, %v6342
        %v6851 = vpack.c.bf16 %v6347, %v6343
        %v6852 = vpack.c.bf16 %v6352, %v6348
        %v6853 = vpack.c.bf16 %v6353, %v6349
        %v6854 = vpack.c.bf16 %v6354, %v6350
        %v6855 = vpack.c.bf16 %v6355, %v6351
        %v6856 = vpack.c.bf16 %v6360, %v6356
        %v6857 = vpack.c.bf16 %v6361, %v6357
        %v6858 = vpack.c.bf16 %v6362, %v6358
        %v6859 = vpack.c.bf16 %v6363, %v6359
        %v6860 = vpack.c.bf16 %v6368, %v6364
        %v6861 = vpack.c.bf16 %v6369, %v6365
        %v6862 = vpack.c.bf16 %v6370, %v6366
        %v6863 = vpack.c.bf16 %v6371, %v6367
        %v6864 = vpack.c.bf16 %v6376, %v6372
        %v6865 = vpack.c.bf16 %v6377, %v6373
        %v6866 = vpack.c.bf16 %v6378, %v6374
        %v6867 = vpack.c.bf16 %v6379, %v6375
        %v6868 = vpack.c.bf16 %v6384, %v6380
        %v6869 = vpack.c.bf16 %v6385, %v6381
        %v6870 = vpack.c.bf16 %v6386, %v6382
        %v6871 = vpack.c.bf16 %v6387, %v6383
        %v6872 = vpack.c.bf16 %v6392, %v6388
        %v6873 = vpack.c.bf16 %v6393, %v6389
        %v6874 = vpack.c.bf16 %v6394, %v6390
        %v6875 = vpack.c.bf16 %v6395, %v6391
        %v6876 = vpack.c.bf16 %v6400, %v6396
        %v6877 = vpack.c.bf16 %v6401, %v6397
        %v6878 = vpack.c.bf16 %v6402, %v6398
        %v6879 = vpack.c.bf16 %v6403, %v6399
        %v6880 = vpack.c.bf16 %v6408, %v6404
        %v6881 = vpack.c.bf16 %v6409, %v6405
        %v6882 = vpack.c.bf16 %v6410, %v6406
        %v6883 = vpack.c.bf16 %v6411, %v6407
        %v6884 = vpack.c.bf16 %v6416, %v6412
        %v6885 = vpack.c.bf16 %v6417, %v6413
        %v6886 = vpack.c.bf16 %v6418, %v6414
        %v6887 = vpack.c.bf16 %v6419, %v6415
        %v6888 = vpack.c.bf16 %v6424, %v6420
        %v6889 = vpack.c.bf16 %v6425, %v6421
        %v6890 = vpack.c.bf16 %v6426, %v6422
        %v6891 = vpack.c.bf16 %v6427, %v6423
        %v6892 = vpack.c.bf16 %v6432, %v6428
        %v6893 = vpack.c.bf16 %v6433, %v6429
        %v6894 = vpack.c.bf16 %v6434, %v6430
        %v6895 = vpack.c.bf16 %v6435, %v6431
        %v6896 = vpack.c.bf16 %v6440, %v6436
        %v6897 = vpack.c.bf16 %v6441, %v6437
        %v6898 = vpack.c.bf16 %v6442, %v6438
        %v6899 = vpack.c.bf16 %v6443, %v6439
        %v6900 = vpack.c.bf16 %v6448, %v6444
        %v6901 = vpack.c.bf16 %v6449, %v6445
        %v6902 = vpack.c.bf16 %v6450, %v6446
        %v6903 = vpack.c.bf16 %v6451, %v6447
        %v6904 = vpack.c.bf16 %v6456, %v6452
        %v6905 = vpack.c.bf16 %v6457, %v6453
        %v6906 = vpack.c.bf16 %v6458, %v6454
        %v6907 = vpack.c.bf16 %v6459, %v6455
        %v6908 = vpack.c.bf16 %v6464, %v6460
        %v6909 = vpack.c.bf16 %v6465, %v6461
        %v6910 = vpack.c.bf16 %v6466, %v6462
        %v6911 = vpack.c.bf16 %v6467, %v6463
        %v6912 = vpack.c.bf16 %v6472, %v6468
        %v6913 = vpack.c.bf16 %v6473, %v6469
        %v6914 = vpack.c.bf16 %v6474, %v6470
        %v6915 = vpack.c.bf16 %v6475, %v6471
        %v6916 = vpack.c.bf16 %v6480, %v6476
        %v6917 = vpack.c.bf16 %v6481, %v6477
        %v6918 = vpack.c.bf16 %v6482, %v6478
        %v6919 = vpack.c.bf16 %v6483, %v6479
        %v6920 = vpack.c.bf16 %v6488, %v6484
        %v6921 = vpack.c.bf16 %v6489, %v6485
        %v6922 = vpack.c.bf16 %v6490, %v6486
        %v6923 = vpack.c.bf16 %v6491, %v6487
        %v6924 = vpack.c.bf16 %v6496, %v6492
        %v6925 = vpack.c.bf16 %v6497, %v6493
        %v6926 = vpack.c.bf16 %v6498, %v6494
        %v6927 = vpack.c.bf16 %v6499, %v6495
        %v6928 = vpack.c.bf16 %v6504, %v6500
        %v6929 = vpack.c.bf16 %v6505, %v6501
        %v6930 = vpack.c.bf16 %v6506, %v6502
        %v6931 = vpack.c.bf16 %v6507, %v6503
        %v6932 = vpack.c.bf16 %v6512, %v6508
        %v6933 = vpack.c.bf16 %v6513, %v6509
        %v6934 = vpack.c.bf16 %v6514, %v6510
        %v6935 = vpack.c.bf16 %v6515, %v6511
        %v6936 = vpack.c.bf16 %v6520, %v6516
        %v6937 = vpack.c.bf16 %v6521, %v6517
        %v6938 = vpack.c.bf16 %v6522, %v6518
        %v6939 = vpack.c.bf16 %v6523, %v6519
        %v6940 = vpack.c.bf16 %v6528, %v6524
        %v6941 = vpack.c.bf16 %v6529, %v6525
        %v6942 = vpack.c.bf16 %v6530, %v6526
        %v6943 = vpack.c.bf16 %v6531, %v6527
        %v6944 = vpack.c.bf16 %v6536, %v6532
        %v6945 = vpack.c.bf16 %v6537, %v6533
        %v6946 = vpack.c.bf16 %v6538, %v6534
        %v6947 = vpack.c.bf16 %v6539, %v6535
        %v6948 = vpack.c.bf16 %v6544, %v6540
        %v6949 = vpack.c.bf16 %v6545, %v6541
        %v6950 = vpack.c.bf16 %v6546, %v6542
        %v6951 = vpack.c.bf16 %v6547, %v6543
        %v6952 = vpack.c.bf16 %v6552, %v6548
        %v6953 = vpack.c.bf16 %v6553, %v6549
        %v6954 = vpack.c.bf16 %v6554, %v6550
        %v6955 = vpack.c.bf16 %v6555, %v6551
        %v6956 = vpack.c.bf16 %v6560, %v6556
        %v6957 = vpack.c.bf16 %v6561, %v6557
        %v6958 = vpack.c.bf16 %v6562, %v6558
        %v6959 = vpack.c.bf16 %v6563, %v6559
        %v6960 = vpack.c.bf16 %v6568, %v6564
        %v6961 = vpack.c.bf16 %v6569, %v6565
        %v6962 = vpack.c.bf16 %v6570, %v6566
        %v6963 = vpack.c.bf16 %v6571, %v6567
        %v6964 = vpack.c.bf16 %v6576, %v6572
        %v6965 = vpack.c.bf16 %v6577, %v6573
        %v6966 = vpack.c.bf16 %v6578, %v6574
        %v6967 = vpack.c.bf16 %v6579, %v6575
        %v6968 = vpack.c.bf16 %v6584, %v6580
        %v6969 = vpack.c.bf16 %v6585, %v6581
        %v6970 = vpack.c.bf16 %v6586, %v6582
        %v6971 = vpack.c.bf16 %v6587, %v6583
        %v6972 = vpack.c.bf16 %v6592, %v6588
        %v6973 = vpack.c.bf16 %v6593, %v6589
        %v6974 = vpack.c.bf16 %v6594, %v6590
        %v6975 = vpack.c.bf16 %v6595, %v6591
        %v6976 = vpack.c.bf16 %v6600, %v6596
        %v6977 = vpack.c.bf16 %v6601, %v6597
        %v6978 = vpack.c.bf16 %v6602, %v6598
        %v6979 = vpack.c.bf16 %v6603, %v6599
        %v6980 = vpack.c.bf16 %v6608, %v6604
        %v6981 = vpack.c.bf16 %v6609, %v6605
        %v6982 = vpack.c.bf16 %v6610, %v6606
        %v6983 = vpack.c.bf16 %v6611, %v6607
        %v6984 = vpack.c.bf16 %v6616, %v6612
        %v6985 = vpack.c.bf16 %v6617, %v6613
        %v6986 = vpack.c.bf16 %v6618, %v6614
        %v6987 = vpack.c.bf16 %v6619, %v6615
        %v6988 = vpack.c.bf16 %v6624, %v6620
        %v6989 = vpack.c.bf16 %v6625, %v6621
        %v6990 = vpack.c.bf16 %v6626, %v6622
        %v6991 = vpack.c.bf16 %v6627, %v6623
        %v6992 = vpack.c.bf16 %v6632, %v6628
        %v6993 = vpack.c.bf16 %v6633, %v6629
        %v6994 = vpack.c.bf16 %v6634, %v6630
        %v6995 = vpack.c.bf16 %v6635, %v6631
        %v6996 = vpack.c.bf16 %v6640, %v6636
        %v6997 = vpack.c.bf16 %v6641, %v6637
        %v6998 = vpack.c.bf16 %v6642, %v6638
        %v6999 = vpack.c.bf16 %v6643, %v6639
        %v7000 = vpack.c.bf16 %v6648, %v6644
        %v7001 = vpack.c.bf16 %v6649, %v6645
        %v7002 = vpack.c.bf16 %v6650, %v6646
        %v7003 = vpack.c.bf16 %v6651, %v6647
        %v7004 = vpack.c.bf16 %v6656, %v6652
        %v7005 = vpack.c.bf16 %v6657, %v6653
        %v7006 = vpack.c.bf16 %v6658, %v6654
        %v7007 = vpack.c.bf16 %v6659, %v6655
        %v7008 = vpack.c.bf16 %v6664, %v6660
        %v7009 = vpack.c.bf16 %v6665, %v6661
        %v7010 = vpack.c.bf16 %v6666, %v6662
        %v7011 = vpack.c.bf16 %v6667, %v6663
        %v7012 = vpack.c.bf16 %v6672, %v6668
        %v7013 = vpack.c.bf16 %v6673, %v6669
        %v7014 = vpack.c.bf16 %v6674, %v6670
        %v7015 = vpack.c.bf16 %v6675, %v6671
        %v7016 = vpack.c.bf16 %v6680, %v6676
        %v7017 = vpack.c.bf16 %v6681, %v6677
        %v7018 = vpack.c.bf16 %v6682, %v6678
        %v7019 = vpack.c.bf16 %v6683, %v6679
        %v7020 = vpack.c.bf16 %v6688, %v6684
        %v7021 = vpack.c.bf16 %v6689, %v6685
        %v7022 = vpack.c.bf16 %v6690, %v6686
        %v7023 = vpack.c.bf16 %v6691, %v6687
        %v7024 = vpack.c.bf16 %v6696, %v6692
        %v7025 = vpack.c.bf16 %v6697, %v6693
        %v7026 = vpack.c.bf16 %v6698, %v6694
        %v7027 = vpack.c.bf16 %v6699, %v6695
        %v7028 = vpack.c.bf16 %v6704, %v6700
        %v7029 = vpack.c.bf16 %v6705, %v6701
        %v7030 = vpack.c.bf16 %v6706, %v6702
        %v7031 = vpack.c.bf16 %v6707, %v6703
        %v7032 = vpack.c.bf16 %v6712, %v6708
        %v7033 = vpack.c.bf16 %v6713, %v6709
        %v7034 = vpack.c.bf16 %v6714, %v6710
        %v7035 = vpack.c.bf16 %v6715, %v6711
        %v7036 = vpack.c.bf16 %v6720, %v6716
        %v7037 = vpack.c.bf16 %v6721, %v6717
        %v7038 = vpack.c.bf16 %v6722, %v6718
        %v7039 = vpack.c.bf16 %v6723, %v6719
        %v7040 = vpack.c.bf16 %v6728, %v6724
        %v7041 = vpack.c.bf16 %v6729, %v6725
        %v7042 = vpack.c.bf16 %v6730, %v6726
        %v7043 = vpack.c.bf16 %v6731, %v6727
        %v7044 = vpack.c.bf16 %v6736, %v6732
        %v7045 = vpack.c.bf16 %v6737, %v6733
        %v7046 = vpack.c.bf16 %v6738, %v6734
        %v7047 = vpack.c.bf16 %v6739, %v6735
        %v7048 = vpack.c.bf16 %v6744, %v6740
        %v7049 = vpack.c.bf16 %v6745, %v6741
        %v7050 = vpack.c.bf16 %v6746, %v6742
        %v7051 = vpack.c.bf16 %v6747, %v6743
        %v7052 = vpack.c.bf16 %v6752, %v6748
        %v7053 = vpack.c.bf16 %v6753, %v6749
        %v7054 = vpack.c.bf16 %v6754, %v6750
        %v7055 = vpack.c.bf16 %v6755, %v6751
        %v7056 = vpack.c.bf16 %v6760, %v6756
        %v7057 = vpack.c.bf16 %v6761, %v6757
        %v7058 = vpack.c.bf16 %v6762, %v6758
        %v7059 = vpack.c.bf16 %v6763, %v6759
        %v7060 = vpack.c.bf16 %v6768, %v6764
        %v7061 = vpack.c.bf16 %v6769, %v6765
        %v7062 = vpack.c.bf16 %v6770, %v6766
        %v7063 = vpack.c.bf16 %v6771, %v6767
        %v7064 = vpack.c.bf16 %v6776, %v6772
        %v7065 = vpack.c.bf16 %v6777, %v6773
        %v7066 = vpack.c.bf16 %v6778, %v6774
        %v7067 = vpack.c.bf16 %v6779, %v6775
        %v7068 = vpack.c.bf16 %v6784, %v6780
        %v7069 = vpack.c.bf16 %v6785, %v6781
        %v7070 = vpack.c.bf16 %v6786, %v6782
        %v7071 = vpack.c.bf16 %v6787, %v6783
        %v7072 = vpack.c.bf16 %v6792, %v6788
        %v7073 = vpack.c.bf16 %v6793, %v6789
        %v7074 = vpack.c.bf16 %v6794, %v6790
        %v7075 = vpack.c.bf16 %v6795, %v6791
        %v7076 = vpack.c.bf16 %v6800, %v6796
        %v7077 = vpack.c.bf16 %v6801, %v6797
        %v7078 = vpack.c.bf16 %v6802, %v6798
        %v7079 = vpack.c.bf16 %v6803, %v6799
        %v7080 = vpack.c.bf16 %v6808, %v6804
        %v7081 = vpack.c.bf16 %v6809, %v6805
        %v7082 = vpack.c.bf16 %v6810, %v6806
        %v7083 = vpack.c.bf16 %v6811, %v6807
        %v7084 = vpack.c.bf16 %v6816, %v6812
        %v7085 = vpack.c.bf16 %v6817, %v6813
        %v7086 = vpack.c.bf16 %v6818, %v6814
        %v7087 = vpack.c.bf16 %v6819, %v6815
        %v7088 = vpack.c.bf16 %v6824, %v6820
        %v7089 = vpack.c.bf16 %v6825, %v6821
        %v7090 = vpack.c.bf16 %v6826, %v6822
        %v7091 = vpack.c.bf16 %v6827, %v6823
        %v7092 = vpack.c.bf16 %v6832, %v6828
        %v7093 = vpack.c.bf16 %v6833, %v6829
        %v7094 = vpack.c.bf16 %v6834, %v6830
        %v7095 = vpack.c.bf16 %v6835, %v6831
        %v7096 = vpack.c.bf16 %v6840, %v6836
        %v7097 = vpack.c.bf16 %v6841, %v6837
        %v7098 = vpack.c.bf16 %v6842, %v6838
        %v7099 = vpack.c.bf16 %v6843, %v6839
        %v7100 = vld [vmem:[%s5] sm:$0xf]
        %v7101 = vld [vmem:[%s5 + $0x4] sm:$0xf]
        %v7102 = vld [vmem:[%s5 + $0x8] sm:$0xf]
        %v7103 = vld [vmem:[%s5 + $0xc] sm:$0xf]
        %v7104 = vld [vmem:[%s5 + $0x10] sm:$0xf]
        %v7105 = vld [vmem:[%s5 + $0x14] sm:$0xf]
        %v7106 = vld [vmem:[%s5 + $0x18] sm:$0xf]
        %v7107 = vld [vmem:[%s5 + $0x1c] sm:$0xf]
        %v7108 = vld [vmem:[%s5 + $0x20] sm:$0xf]
        %v7109 = vld [vmem:[%s5 + $0x24] sm:$0xf]
        %v7110 = vld [vmem:[%s5 + $0x28] sm:$0xf]
        %v7111 = vld [vmem:[%s5 + $0x2c] sm:$0xf]
        %v7112 = vld [vmem:[%s5 + $0x30] sm:$0xf]
        %v7113 = vld [vmem:[%s5 + $0x34] sm:$0xf]
        %v7114 = vld [vmem:[%s5 + $0x38] sm:$0xf]
        %v7115 = vld [vmem:[%s5 + $0x3c] sm:$0xf]
        %v7116 = vld [vmem:[%s5 + $0x40] sm:$0xf]
        %v7117 = vld [vmem:[%s5 + $0x44] sm:$0xf]
        %v7118 = vld [vmem:[%s5 + $0x48] sm:$0xf]
        %v7119 = vld [vmem:[%s5 + $0x4c] sm:$0xf]
        %v7120 = vld [vmem:[%s5 + $0x50] sm:$0xf]
        %v7121 = vld [vmem:[%s5 + $0x54] sm:$0xf]
        %v7122 = vld [vmem:[%s5 + $0x58] sm:$0xf]
        %v7123 = vld [vmem:[%s5 + $0x5c] sm:$0xf]
        %v7124 = vld [vmem:[%s5 + $0x60] sm:$0xf]
        %v7125 = vld [vmem:[%s5 + $0x64] sm:$0xf]
        %v7126 = vld [vmem:[%s5 + $0x68] sm:$0xf]
        %v7127 = vld [vmem:[%s5 + $0x6c] sm:$0xf]
        %v7128 = vld [vmem:[%s5 + $0x70] sm:$0xf]
        %v7129 = vld [vmem:[%s5 + $0x74] sm:$0xf]
        %v7130 = vld [vmem:[%s5 + $0x78] sm:$0xf]
        %v7131 = vld [vmem:[%s5 + $0x7c] sm:$0xf]
        %v7132 = vld [vmem:[%s5 + $0x80] sm:$0xf]
        %v7133 = vld [vmem:[%s5 + $0x84] sm:$0xf]
        %v7134 = vld [vmem:[%s5 + $0x88] sm:$0xf]
        %v7135 = vld [vmem:[%s5 + $0x8c] sm:$0xf]
        %v7136 = vld [vmem:[%s5 + $0x90] sm:$0xf]
        %v7137 = vld [vmem:[%s5 + $0x94] sm:$0xf]
        %v7138 = vld [vmem:[%s5 + $0x98] sm:$0xf]
        %v7139 = vld [vmem:[%s5 + $0x9c] sm:$0xf]
        %v7140 = vld [vmem:[%s5 + $0xa0] sm:$0xf]
        %v7141 = vld [vmem:[%s5 + $0xa4] sm:$0xf]
        %v7142 = vld [vmem:[%s5 + $0xa8] sm:$0xf]
        %v7143 = vld [vmem:[%s5 + $0xac] sm:$0xf]
        %v7144 = vld [vmem:[%s5 + $0xb0] sm:$0xf]
        %v7145 = vld [vmem:[%s5 + $0xb4] sm:$0xf]
        %v7146 = vld [vmem:[%s5 + $0xb8] sm:$0xf]
        %v7147 = vld [vmem:[%s5 + $0xbc] sm:$0xf]
        %v7148 = vld [vmem:[%s5 + $0xc0] sm:$0xf]
        %v7149 = vld [vmem:[%s5 + $0xc4] sm:$0xf]
        %v7150 = vld [vmem:[%s5 + $0xc8] sm:$0xf]
        %v7151 = vld [vmem:[%s5 + $0xcc] sm:$0xf]
        %v7152 = vld [vmem:[%s5 + $0xd0] sm:$0xf]
        %v7153 = vld [vmem:[%s5 + $0xd4] sm:$0xf]
        %v7154 = vld [vmem:[%s5 + $0xd8] sm:$0xf]
        %v7155 = vld [vmem:[%s5 + $0xdc] sm:$0xf]
        %v7156 = vld [vmem:[%s5 + $0xe0] sm:$0xf]
        %v7157 = vld [vmem:[%s5 + $0xe4] sm:$0xf]
        %v7158 = vld [vmem:[%s5 + $0xe8] sm:$0xf]
        %v7159 = vld [vmem:[%s5 + $0xec] sm:$0xf]
        %v7160 = vld [vmem:[%s5 + $0xf0] sm:$0xf]
        %v7161 = vld [vmem:[%s5 + $0xf4] sm:$0xf]
        %v7162 = vld [vmem:[%s5 + $0xf8] sm:$0xf]
        %v7163 = vld [vmem:[%s5 + $0xfc] sm:$0xf]
        %v7164 = vld [vmem:[%s6] sm:$0x1]
        %v7166 = vlaneseq
        %v7167 = vshrl.u32 %v7166, 7
        %v7168 = vsub.s32 0, %v7167
        %v7169 = vrot.slane %v7164, %v7168
        %v7235 = vunpack.c.l.b16 %v7100
        %v7236 = vunpack.c.l.b16 %v7101
        %v7237 = vunpack.c.l.b16 %v7102
        %v7238 = vunpack.c.l.b16 %v7103
        %v7239 = vunpack.c.l.b16 %v7104
        %v7240 = vunpack.c.l.b16 %v7105
        %v7241 = vunpack.c.l.b16 %v7106
        %v7242 = vunpack.c.l.b16 %v7107
        %v7243 = vunpack.c.l.b16 %v7108
        %v7244 = vunpack.c.l.b16 %v7109
        %v7245 = vunpack.c.l.b16 %v7110
        %v7246 = vunpack.c.l.b16 %v7111
        %v7247 = vunpack.c.l.b16 %v7112
        %v7248 = vunpack.c.l.b16 %v7113
        %v7249 = vunpack.c.l.b16 %v7114
        %v7250 = vunpack.c.l.b16 %v7115
        %v7251 = vunpack.c.l.b16 %v7116
        %v7252 = vunpack.c.l.b16 %v7117
        %v7253 = vunpack.c.l.b16 %v7118
        %v7254 = vunpack.c.l.b16 %v7119
        %v7255 = vunpack.c.l.b16 %v7120
        %v7256 = vunpack.c.l.b16 %v7121
        %v7257 = vunpack.c.l.b16 %v7122
        %v7258 = vunpack.c.l.b16 %v7123
        %v7259 = vunpack.c.l.b16 %v7124
        %v7260 = vunpack.c.l.b16 %v7125
        %v7261 = vunpack.c.l.b16 %v7126
        %v7262 = vunpack.c.l.b16 %v7127
        %v7263 = vunpack.c.l.b16 %v7128
        %v7264 = vunpack.c.l.b16 %v7129
        %v7265 = vunpack.c.l.b16 %v7130
        %v7266 = vunpack.c.l.b16 %v7131
        %v7267 = vunpack.c.l.b16 %v7132
        %v7268 = vunpack.c.l.b16 %v7133
        %v7269 = vunpack.c.l.b16 %v7134
        %v7270 = vunpack.c.l.b16 %v7135
        %v7271 = vunpack.c.l.b16 %v7136
        %v7272 = vunpack.c.l.b16 %v7137
        %v7273 = vunpack.c.l.b16 %v7138
        %v7274 = vunpack.c.l.b16 %v7139
        %v7275 = vunpack.c.l.b16 %v7140
        %v7276 = vunpack.c.l.b16 %v7141
        %v7277 = vunpack.c.l.b16 %v7142
        %v7278 = vunpack.c.l.b16 %v7143
        %v7279 = vunpack.c.l.b16 %v7144
        %v7280 = vunpack.c.l.b16 %v7145
        %v7281 = vunpack.c.l.b16 %v7146
        %v7282 = vunpack.c.l.b16 %v7147
        %v7283 = vunpack.c.l.b16 %v7148
        %v7284 = vunpack.c.l.b16 %v7149
        %v7285 = vunpack.c.l.b16 %v7150
        %v7286 = vunpack.c.l.b16 %v7151
        %v7287 = vunpack.c.l.b16 %v7152
        %v7288 = vunpack.c.l.b16 %v7153
        %v7289 = vunpack.c.l.b16 %v7154
        %v7290 = vunpack.c.l.b16 %v7155
        %v7291 = vunpack.c.l.b16 %v7156
        %v7292 = vunpack.c.l.b16 %v7157
        %v7293 = vunpack.c.l.b16 %v7158
        %v7294 = vunpack.c.l.b16 %v7159
        %v7295 = vunpack.c.l.b16 %v7160
        %v7296 = vunpack.c.l.b16 %v7161
        %v7297 = vunpack.c.l.b16 %v7162
        %v7298 = vunpack.c.l.b16 %v7163
        %v7299 = vpack.c.b16 %v7236, %v7235
        %v7300 = vpack.c.b16 %v7238, %v7237
        %v7301 = vpack.c.b16 %v7240, %v7239
        %v7302 = vpack.c.b16 %v7242, %v7241
        %v7303 = vpack.c.b16 %v7244, %v7243
        %v7304 = vpack.c.b16 %v7246, %v7245
        %v7305 = vpack.c.b16 %v7248, %v7247
        %v7306 = vpack.c.b16 %v7250, %v7249
        %v7307 = vpack.c.b16 %v7252, %v7251
        %v7308 = vpack.c.b16 %v7254, %v7253
        %v7309 = vpack.c.b16 %v7256, %v7255
        %v7310 = vpack.c.b16 %v7258, %v7257
        %v7311 = vpack.c.b16 %v7260, %v7259
        %v7312 = vpack.c.b16 %v7262, %v7261
        %v7313 = vpack.c.b16 %v7264, %v7263
        %v7314 = vpack.c.b16 %v7266, %v7265
        %v7315 = vpack.c.b16 %v7268, %v7267
        %v7316 = vpack.c.b16 %v7270, %v7269
        %v7317 = vpack.c.b16 %v7272, %v7271
        %v7318 = vpack.c.b16 %v7274, %v7273
        %v7319 = vpack.c.b16 %v7276, %v7275
        %v7320 = vpack.c.b16 %v7278, %v7277
        %v7321 = vpack.c.b16 %v7280, %v7279
        %v7322 = vpack.c.b16 %v7282, %v7281
        %v7323 = vpack.c.b16 %v7284, %v7283
        %v7324 = vpack.c.b16 %v7286, %v7285
        %v7325 = vpack.c.b16 %v7288, %v7287
        %v7326 = vpack.c.b16 %v7290, %v7289
        %v7327 = vpack.c.b16 %v7292, %v7291
        %v7328 = vpack.c.b16 %v7294, %v7293
        %v7329 = vpack.c.b16 %v7296, %v7295
        %v7330 = vpack.c.b16 %v7298, %v7297
        %7363 = vmatprep.subr.bf16.mxu0 0
        %7364 = vmatpush1.bf16.msra.mxu0 %v7306
        %7365 = vmatprep.subr.bf16.mxu0 0
        %7366 = vmatpush1.bf16.msra.mxu0 %v7305
        %7367 = vmatprep.subr.bf16.mxu0 0
        %7368 = vmatpush1.bf16.msra.mxu0 %v7304
        %7369 = vmatprep.subr.bf16.mxu0 0
        %7370 = vmatpush1.bf16.msra.mxu0 %v7303
        %7371 = vmatprep.subr.bf16.mxu0 0
        %7372 = vmatpush1.bf16.msra.mxu0 %v7302
        %7373 = vmatprep.subr.bf16.mxu0 0
        %7374 = vmatpush1.bf16.msra.mxu0 %v7301
        %7375 = vmatprep.subr.bf16.mxu0 0
        %7376 = vmatpush1.bf16.msra.mxu0 %v7300
        %7377 = vmatprep.subr.bf16.mxu0 0
        %7378 = vmatpush1.bf16.msra.mxu0 %v7299
        %7379 = vmatprep.subr.bf16.mxu0 0
        %7380 = vmatpush2.bf16.msra.mxu0 %v7314
        %7381 = vmatprep.subr.bf16.mxu0 0
        %7382 = vmatpush2.bf16.msra.mxu0 %v7313
        %7383 = vmatprep.subr.bf16.mxu0 0
        %7384 = vmatpush2.bf16.msra.mxu0 %v7312
        %7385 = vmatprep.subr.bf16.mxu0 0
        %7386 = vmatpush2.bf16.msra.mxu0 %v7311
        %7387 = vmatprep.subr.bf16.mxu0 0
        %7388 = vmatpush2.bf16.msra.mxu0 %v7310
        %7389 = vmatprep.subr.bf16.mxu0 0
        %7390 = vmatpush2.bf16.msra.mxu0 %v7309
        %7391 = vmatprep.subr.bf16.mxu0 0
        %7392 = vmatpush2.bf16.msra.mxu0 %v7308
        %7393 = vmatprep.subr.bf16.mxu0 0
        %7394 = vmatpush2.bf16.msra.mxu0 %v7307
        %7395 = vmatprep.mubr.bf16.mxu0 %v6845
        %7396 = vmatmul.mubr.bf16.gmra.mxu0 %v6844
        %v7397 = vpop.f32.mrf.mxu0
        %v7398 = vadd.f32 %v7169, %v7397
        %v7399 = vpop.f32.mrf.mxu0
        %v7400 = vpop.f32.mrf.mxu0
        %v7401 = vadd.f32 %v7169, %v7400
        %v7402 = vpop.f32.mrf.mxu0
        %7403 = vmatprep.mubr.bf16.mxu0 %v6849
        %7404 = vmatmul.mubr.bf16.gmra.mxu0 %v6848
        %v7405 = vpop.f32.mrf.mxu0
        %v7406 = vadd.f32 %v7169, %v7405
        %v7407 = vpop.f32.mrf.mxu0
        %v7408 = vpop.f32.mrf.mxu0
        %v7409 = vadd.f32 %v7169, %v7408
        %v7410 = vpop.f32.mrf.mxu0
        %7411 = vmatprep.mubr.bf16.mxu0 %v6853
        %7412 = vmatmul.mubr.bf16.gmra.mxu0 %v6852
        %v7413 = vpop.f32.mrf.mxu0
        %v7414 = vadd.f32 %v7169, %v7413
        %v7415 = vpop.f32.mrf.mxu0
        %v7416 = vpop.f32.mrf.mxu0
        %v7417 = vadd.f32 %v7169, %v7416
        %v7418 = vpop.f32.mrf.mxu0
        %7419 = vmatprep.mubr.bf16.mxu0 %v6857
        %7420 = vmatmul.mubr.bf16.gmra.mxu0 %v6856
        %v7421 = vpop.f32.mrf.mxu0
        %v7422 = vadd.f32 %v7169, %v7421
        %v7423 = vpop.f32.mrf.mxu0
        %v7424 = vpop.f32.mrf.mxu0
        %v7425 = vadd.f32 %v7169, %v7424
        %v7426 = vpop.f32.mrf.mxu0
        %7427 = vmatprep.mubr.bf16.mxu0 %v6861
        %7428 = vmatmul.mubr.bf16.gmra.mxu0 %v6860
        %v7429 = vpop.f32.mrf.mxu0
        %v7430 = vadd.f32 %v7169, %v7429
        %v7431 = vpop.f32.mrf.mxu0
        %v7432 = vpop.f32.mrf.mxu0
        %v7433 = vadd.f32 %v7169, %v7432
        %v7434 = vpop.f32.mrf.mxu0
        %7435 = vmatprep.mubr.bf16.mxu0 %v6865
        %7436 = vmatmul.mubr.bf16.gmra.mxu0 %v6864
        %v7437 = vpop.f32.mrf.mxu0
        %v7438 = vadd.f32 %v7169, %v7437
        %v7439 = vpop.f32.mrf.mxu0
        %v7440 = vpop.f32.mrf.mxu0
        %v7441 = vadd.f32 %v7169, %v7440
        %v7442 = vpop.f32.mrf.mxu0
        %7443 = vmatprep.mubr.bf16.mxu0 %v6869
        %7444 = vmatmul.mubr.bf16.gmra.mxu0 %v6868
        %v7445 = vpop.f32.mrf.mxu0
        %v7446 = vadd.f32 %v7169, %v7445
        %v7447 = vpop.f32.mrf.mxu0
        %v7448 = vpop.f32.mrf.mxu0
        %v7449 = vadd.f32 %v7169, %v7448
        %v7450 = vpop.f32.mrf.mxu0
        %7451 = vmatprep.mubr.bf16.mxu0 %v6873
        %7452 = vmatmul.mubr.bf16.gmra.mxu0 %v6872
        %v7453 = vpop.f32.mrf.mxu0
        %v7454 = vadd.f32 %v7169, %v7453
        %v7455 = vpop.f32.mrf.mxu0
        %v7456 = vpop.f32.mrf.mxu0
        %v7457 = vadd.f32 %v7169, %v7456
        %v7458 = vpop.f32.mrf.mxu0
        %7459 = vmatprep.mubr.bf16.mxu0 %v6877
        %7460 = vmatmul.mubr.bf16.gmra.mxu0 %v6876
        %v7461 = vpop.f32.mrf.mxu0
        %v7462 = vadd.f32 %v7169, %v7461
        %v7463 = vpop.f32.mrf.mxu0
        %v7464 = vpop.f32.mrf.mxu0
        %v7465 = vadd.f32 %v7169, %v7464
        %v7466 = vpop.f32.mrf.mxu0
        %7467 = vmatprep.mubr.bf16.mxu0 %v6881
        %7468 = vmatmul.mubr.bf16.gmra.mxu0 %v6880
        %v7469 = vpop.f32.mrf.mxu0
        %v7470 = vadd.f32 %v7169, %v7469
        %v7471 = vpop.f32.mrf.mxu0
        %v7472 = vpop.f32.mrf.mxu0
        %v7473 = vadd.f32 %v7169, %v7472
        %v7474 = vpop.f32.mrf.mxu0
        %7475 = vmatprep.mubr.bf16.mxu0 %v6885
        %7476 = vmatmul.mubr.bf16.gmra.mxu0 %v6884
        %v7477 = vpop.f32.mrf.mxu0
        %v7478 = vadd.f32 %v7169, %v7477
        %v7479 = vpop.f32.mrf.mxu0
        %v7480 = vpop.f32.mrf.mxu0
        %v7481 = vadd.f32 %v7169, %v7480
        %v7482 = vpop.f32.mrf.mxu0
        %7483 = vmatprep.mubr.bf16.mxu0 %v6889
        %7484 = vmatmul.mubr.bf16.gmra.mxu0 %v6888
        %v7485 = vpop.f32.mrf.mxu0
        %v7486 = vadd.f32 %v7169, %v7485
        %v7487 = vpop.f32.mrf.mxu0
        %v7488 = vpop.f32.mrf.mxu0
        %v7489 = vadd.f32 %v7169, %v7488
        %v7490 = vpop.f32.mrf.mxu0
        %7491 = vmatprep.mubr.bf16.mxu0 %v6893
        %7492 = vmatmul.mubr.bf16.gmra.mxu0 %v6892
        %v7493 = vpop.f32.mrf.mxu0
        %v7494 = vadd.f32 %v7169, %v7493
        %v7495 = vpop.f32.mrf.mxu0
        %v7496 = vpop.f32.mrf.mxu0
        %v7497 = vadd.f32 %v7169, %v7496
        %v7498 = vpop.f32.mrf.mxu0
        %7499 = vmatprep.mubr.bf16.mxu0 %v6897
        %7500 = vmatmul.mubr.bf16.gmra.mxu0 %v6896
        %v7501 = vpop.f32.mrf.mxu0
        %v7502 = vadd.f32 %v7169, %v7501
        %v7503 = vpop.f32.mrf.mxu0
        %v7504 = vpop.f32.mrf.mxu0
        %v7505 = vadd.f32 %v7169, %v7504
        %v7506 = vpop.f32.mrf.mxu0
        %7507 = vmatprep.mubr.bf16.mxu0 %v6901
        %7508 = vmatmul.mubr.bf16.gmra.mxu0 %v6900
        %v7509 = vpop.f32.mrf.mxu0
        %v7510 = vadd.f32 %v7169, %v7509
        %v7511 = vpop.f32.mrf.mxu0
        %v7512 = vpop.f32.mrf.mxu0
        %v7513 = vadd.f32 %v7169, %v7512
        %v7514 = vpop.f32.mrf.mxu0
        %7515 = vmatprep.mubr.bf16.mxu0 %v6905
        %7516 = vmatmul.mubr.bf16.gmra.mxu0 %v6904
        %v7517 = vpop.f32.mrf.mxu0
        %v7518 = vadd.f32 %v7169, %v7517
        %v7519 = vpop.f32.mrf.mxu0
        %v7520 = vpop.f32.mrf.mxu0
        %v7521 = vadd.f32 %v7169, %v7520
        %v7522 = vpop.f32.mrf.mxu0
        %7523 = vmatprep.mubr.bf16.mxu0 %v6909
        %7524 = vmatmul.mubr.bf16.gmra.mxu0 %v6908
        %v7525 = vpop.f32.mrf.mxu0
        %v7526 = vadd.f32 %v7169, %v7525
        %v7527 = vpop.f32.mrf.mxu0
        %v7528 = vpop.f32.mrf.mxu0
        %v7529 = vadd.f32 %v7169, %v7528
        %v7530 = vpop.f32.mrf.mxu0
        %7531 = vmatprep.mubr.bf16.mxu0 %v6913
        %7532 = vmatmul.mubr.bf16.gmra.mxu0 %v6912
        %v7533 = vpop.f32.mrf.mxu0
        %v7534 = vadd.f32 %v7169, %v7533
        %v7535 = vpop.f32.mrf.mxu0
        %v7536 = vpop.f32.mrf.mxu0
        %v7537 = vadd.f32 %v7169, %v7536
        %v7538 = vpop.f32.mrf.mxu0
        %7539 = vmatprep.mubr.bf16.mxu0 %v6917
        %7540 = vmatmul.mubr.bf16.gmra.mxu0 %v6916
        %v7541 = vpop.f32.mrf.mxu0
        %v7542 = vadd.f32 %v7169, %v7541
        %v7543 = vpop.f32.mrf.mxu0
        %v7544 = vpop.f32.mrf.mxu0
        %v7545 = vadd.f32 %v7169, %v7544
        %v7546 = vpop.f32.mrf.mxu0
        %7547 = vmatprep.mubr.bf16.mxu0 %v6921
        %7548 = vmatmul.mubr.bf16.gmra.mxu0 %v6920
        %v7549 = vpop.f32.mrf.mxu0
        %v7550 = vadd.f32 %v7169, %v7549
        %v7551 = vpop.f32.mrf.mxu0
        %v7552 = vpop.f32.mrf.mxu0
        %v7553 = vadd.f32 %v7169, %v7552
        %v7554 = vpop.f32.mrf.mxu0
        %7555 = vmatprep.mubr.bf16.mxu0 %v6925
        %7556 = vmatmul.mubr.bf16.gmra.mxu0 %v6924
        %v7557 = vpop.f32.mrf.mxu0
        %v7558 = vadd.f32 %v7169, %v7557
        %v7559 = vpop.f32.mrf.mxu0
        %v7560 = vpop.f32.mrf.mxu0
        %v7561 = vadd.f32 %v7169, %v7560
        %v7562 = vpop.f32.mrf.mxu0
        %7563 = vmatprep.mubr.bf16.mxu0 %v6929
        %7564 = vmatmul.mubr.bf16.gmra.mxu0 %v6928
        %v7565 = vpop.f32.mrf.mxu0
        %v7566 = vadd.f32 %v7169, %v7565
        %v7567 = vpop.f32.mrf.mxu0
        %v7568 = vpop.f32.mrf.mxu0
        %v7569 = vadd.f32 %v7169, %v7568
        %v7570 = vpop.f32.mrf.mxu0
        %7571 = vmatprep.mubr.bf16.mxu0 %v6933
        %7572 = vmatmul.mubr.bf16.gmra.mxu0 %v6932
        %v7573 = vpop.f32.mrf.mxu0
        %v7574 = vadd.f32 %v7169, %v7573
        %v7575 = vpop.f32.mrf.mxu0
        %v7576 = vpop.f32.mrf.mxu0
        %v7577 = vadd.f32 %v7169, %v7576
        %v7578 = vpop.f32.mrf.mxu0
        %7579 = vmatprep.mubr.bf16.mxu0 %v6937
        %7580 = vmatmul.mubr.bf16.gmra.mxu0 %v6936
        %v7581 = vpop.f32.mrf.mxu0
        %v7582 = vadd.f32 %v7169, %v7581
        %v7583 = vpop.f32.mrf.mxu0
        %v7584 = vpop.f32.mrf.mxu0
        %v7585 = vadd.f32 %v7169, %v7584
        %v7586 = vpop.f32.mrf.mxu0
        %7587 = vmatprep.mubr.bf16.mxu0 %v6941
        %7588 = vmatmul.mubr.bf16.gmra.mxu0 %v6940
        %v7589 = vpop.f32.mrf.mxu0
        %v7590 = vadd.f32 %v7169, %v7589
        %v7591 = vpop.f32.mrf.mxu0
        %v7592 = vpop.f32.mrf.mxu0
        %v7593 = vadd.f32 %v7169, %v7592
        %v7594 = vpop.f32.mrf.mxu0
        %7595 = vmatprep.mubr.bf16.mxu0 %v6945
        %7596 = vmatmul.mubr.bf16.gmra.mxu0 %v6944
        %v7597 = vpop.f32.mrf.mxu0
        %v7598 = vadd.f32 %v7169, %v7597
        %v7599 = vpop.f32.mrf.mxu0
        %v7600 = vpop.f32.mrf.mxu0
        %v7601 = vadd.f32 %v7169, %v7600
        %v7602 = vpop.f32.mrf.mxu0
        %7603 = vmatprep.mubr.bf16.mxu0 %v6949
        %7604 = vmatmul.mubr.bf16.gmra.mxu0 %v6948
        %v7605 = vpop.f32.mrf.mxu0
        %v7606 = vadd.f32 %v7169, %v7605
        %v7607 = vpop.f32.mrf.mxu0
        %v7608 = vpop.f32.mrf.mxu0
        %v7609 = vadd.f32 %v7169, %v7608
        %v7610 = vpop.f32.mrf.mxu0
        %7611 = vmatprep.mubr.bf16.mxu0 %v6953
        %7612 = vmatmul.mubr.bf16.gmra.mxu0 %v6952
        %v7613 = vpop.f32.mrf.mxu0
        %v7614 = vadd.f32 %v7169, %v7613
        %v7615 = vpop.f32.mrf.mxu0
        %v7616 = vpop.f32.mrf.mxu0
        %v7617 = vadd.f32 %v7169, %v7616
        %v7618 = vpop.f32.mrf.mxu0
        %7619 = vmatprep.mubr.bf16.mxu0 %v6957
        %7620 = vmatmul.mubr.bf16.gmra.mxu0 %v6956
        %v7621 = vpop.f32.mrf.mxu0
        %v7622 = vadd.f32 %v7169, %v7621
        %v7623 = vpop.f32.mrf.mxu0
        %v7624 = vpop.f32.mrf.mxu0
        %v7625 = vadd.f32 %v7169, %v7624
        %v7626 = vpop.f32.mrf.mxu0
        %7627 = vmatprep.mubr.bf16.mxu0 %v6961
        %7628 = vmatmul.mubr.bf16.gmra.mxu0 %v6960
        %v7629 = vpop.f32.mrf.mxu0
        %v7630 = vadd.f32 %v7169, %v7629
        %v7631 = vpop.f32.mrf.mxu0
        %v7632 = vpop.f32.mrf.mxu0
        %v7633 = vadd.f32 %v7169, %v7632
        %v7634 = vpop.f32.mrf.mxu0
        %7635 = vmatprep.mubr.bf16.mxu0 %v6965
        %7636 = vmatmul.mubr.bf16.gmra.mxu0 %v6964
        %v7637 = vpop.f32.mrf.mxu0
        %v7638 = vadd.f32 %v7169, %v7637
        %v7639 = vpop.f32.mrf.mxu0
        %v7640 = vpop.f32.mrf.mxu0
        %v7641 = vadd.f32 %v7169, %v7640
        %v7642 = vpop.f32.mrf.mxu0
        %7643 = vmatprep.mubr.bf16.mxu0 %v6969
        %7644 = vmatmul.mubr.bf16.gmra.mxu0 %v6968
        %v7645 = vpop.f32.mrf.mxu0
        %v7646 = vadd.f32 %v7169, %v7645
        %v7647 = vpop.f32.mrf.mxu0
        %v7648 = vpop.f32.mrf.mxu0
        %v7649 = vadd.f32 %v7169, %v7648
        %v7650 = vpop.f32.mrf.mxu0
        %7651 = vmatprep.mubr.bf16.mxu0 %v6973
        %7652 = vmatmul.mubr.bf16.gmra.mxu0 %v6972
        %v7653 = vpop.f32.mrf.mxu0
        %v7654 = vadd.f32 %v7169, %v7653
        %v7655 = vpop.f32.mrf.mxu0
        %v7656 = vpop.f32.mrf.mxu0
        %v7657 = vadd.f32 %v7169, %v7656
        %v7658 = vpop.f32.mrf.mxu0
        %7659 = vmatprep.mubr.bf16.mxu0 %v6977
        %7660 = vmatmul.mubr.bf16.gmra.mxu0 %v6976
        %v7661 = vpop.f32.mrf.mxu0
        %v7662 = vadd.f32 %v7169, %v7661
        %v7663 = vpop.f32.mrf.mxu0
        %v7664 = vpop.f32.mrf.mxu0
        %v7665 = vadd.f32 %v7169, %v7664
        %v7666 = vpop.f32.mrf.mxu0
        %7667 = vmatprep.mubr.bf16.mxu0 %v6981
        %7668 = vmatmul.mubr.bf16.gmra.mxu0 %v6980
        %v7669 = vpop.f32.mrf.mxu0
        %v7670 = vadd.f32 %v7169, %v7669
        %v7671 = vpop.f32.mrf.mxu0
        %v7672 = vpop.f32.mrf.mxu0
        %v7673 = vadd.f32 %v7169, %v7672
        %v7674 = vpop.f32.mrf.mxu0
        %7675 = vmatprep.mubr.bf16.mxu0 %v6985
        %7676 = vmatmul.mubr.bf16.gmra.mxu0 %v6984
        %v7677 = vpop.f32.mrf.mxu0
        %v7678 = vadd.f32 %v7169, %v7677
        %v7679 = vpop.f32.mrf.mxu0
        %v7680 = vpop.f32.mrf.mxu0
        %v7681 = vadd.f32 %v7169, %v7680
        %v7682 = vpop.f32.mrf.mxu0
        %7683 = vmatprep.mubr.bf16.mxu0 %v6989
        %7684 = vmatmul.mubr.bf16.gmra.mxu0 %v6988
        %v7685 = vpop.f32.mrf.mxu0
        %v7686 = vadd.f32 %v7169, %v7685
        %v7687 = vpop.f32.mrf.mxu0
        %v7688 = vpop.f32.mrf.mxu0
        %v7689 = vadd.f32 %v7169, %v7688
        %v7690 = vpop.f32.mrf.mxu0
        %7691 = vmatprep.mubr.bf16.mxu0 %v6993
        %7692 = vmatmul.mubr.bf16.gmra.mxu0 %v6992
        %v7693 = vpop.f32.mrf.mxu0
        %v7694 = vadd.f32 %v7169, %v7693
        %v7695 = vpop.f32.mrf.mxu0
        %v7696 = vpop.f32.mrf.mxu0
        %v7697 = vadd.f32 %v7169, %v7696
        %v7698 = vpop.f32.mrf.mxu0
        %7699 = vmatprep.mubr.bf16.mxu0 %v6997
        %7700 = vmatmul.mubr.bf16.gmra.mxu0 %v6996
        %v7701 = vpop.f32.mrf.mxu0
        %v7702 = vadd.f32 %v7169, %v7701
        %v7703 = vpop.f32.mrf.mxu0
        %v7704 = vpop.f32.mrf.mxu0
        %v7705 = vadd.f32 %v7169, %v7704
        %v7706 = vpop.f32.mrf.mxu0
        %7707 = vmatprep.mubr.bf16.mxu0 %v7001
        %7708 = vmatmul.mubr.bf16.gmra.mxu0 %v7000
        %v7709 = vpop.f32.mrf.mxu0
        %v7710 = vadd.f32 %v7169, %v7709
        %v7711 = vpop.f32.mrf.mxu0
        %v7712 = vpop.f32.mrf.mxu0
        %v7713 = vadd.f32 %v7169, %v7712
        %v7714 = vpop.f32.mrf.mxu0
        %7715 = vmatprep.mubr.bf16.mxu0 %v7005
        %7716 = vmatmul.mubr.bf16.gmra.mxu0 %v7004
        %v7717 = vpop.f32.mrf.mxu0
        %v7718 = vadd.f32 %v7169, %v7717
        %v7719 = vpop.f32.mrf.mxu0
        %v7720 = vpop.f32.mrf.mxu0
        %v7721 = vadd.f32 %v7169, %v7720
        %v7722 = vpop.f32.mrf.mxu0
        %7723 = vmatprep.mubr.bf16.mxu0 %v7009
        %7724 = vmatmul.mubr.bf16.gmra.mxu0 %v7008
        %v7725 = vpop.f32.mrf.mxu0
        %v7726 = vadd.f32 %v7169, %v7725
        %v7727 = vpop.f32.mrf.mxu0
        %v7728 = vpop.f32.mrf.mxu0
        %v7729 = vadd.f32 %v7169, %v7728
        %v7730 = vpop.f32.mrf.mxu0
        %7731 = vmatprep.mubr.bf16.mxu0 %v7013
        %7732 = vmatmul.mubr.bf16.gmra.mxu0 %v7012
        %v7733 = vpop.f32.mrf.mxu0
        %v7734 = vadd.f32 %v7169, %v7733
        %v7735 = vpop.f32.mrf.mxu0
        %v7736 = vpop.f32.mrf.mxu0
        %v7737 = vadd.f32 %v7169, %v7736
        %v7738 = vpop.f32.mrf.mxu0
        %7739 = vmatprep.mubr.bf16.mxu0 %v7017
        %7740 = vmatmul.mubr.bf16.gmra.mxu0 %v7016
        %v7741 = vpop.f32.mrf.mxu0
        %v7742 = vadd.f32 %v7169, %v7741
        %v7743 = vpop.f32.mrf.mxu0
        %v7744 = vpop.f32.mrf.mxu0
        %v7745 = vadd.f32 %v7169, %v7744
        %v7746 = vpop.f32.mrf.mxu0
        %7747 = vmatprep.mubr.bf16.mxu0 %v7021
        %7748 = vmatmul.mubr.bf16.gmra.mxu0 %v7020
        %v7749 = vpop.f32.mrf.mxu0
        %v7750 = vadd.f32 %v7169, %v7749
        %v7751 = vpop.f32.mrf.mxu0
        %v7752 = vpop.f32.mrf.mxu0
        %v7753 = vadd.f32 %v7169, %v7752
        %v7754 = vpop.f32.mrf.mxu0
        %7755 = vmatprep.mubr.bf16.mxu0 %v7025
        %7756 = vmatmul.mubr.bf16.gmra.mxu0 %v7024
        %v7757 = vpop.f32.mrf.mxu0
        %v7758 = vadd.f32 %v7169, %v7757
        %v7759 = vpop.f32.mrf.mxu0
        %v7760 = vpop.f32.mrf.mxu0
        %v7761 = vadd.f32 %v7169, %v7760
        %v7762 = vpop.f32.mrf.mxu0
        %7763 = vmatprep.mubr.bf16.mxu0 %v7029
        %7764 = vmatmul.mubr.bf16.gmra.mxu0 %v7028
        %v7765 = vpop.f32.mrf.mxu0
        %v7766 = vadd.f32 %v7169, %v7765
        %v7767 = vpop.f32.mrf.mxu0
        %v7768 = vpop.f32.mrf.mxu0
        %v7769 = vadd.f32 %v7169, %v7768
        %v7770 = vpop.f32.mrf.mxu0
        %7771 = vmatprep.mubr.bf16.mxu0 %v7033
        %7772 = vmatmul.mubr.bf16.gmra.mxu0 %v7032
        %v7773 = vpop.f32.mrf.mxu0
        %v7774 = vadd.f32 %v7169, %v7773
        %v7775 = vpop.f32.mrf.mxu0
        %v7776 = vpop.f32.mrf.mxu0
        %v7777 = vadd.f32 %v7169, %v7776
        %v7778 = vpop.f32.mrf.mxu0
        %7779 = vmatprep.mubr.bf16.mxu0 %v7037
        %7780 = vmatmul.mubr.bf16.gmra.mxu0 %v7036
        %v7781 = vpop.f32.mrf.mxu0
        %v7782 = vadd.f32 %v7169, %v7781
        %v7783 = vpop.f32.mrf.mxu0
        %v7784 = vpop.f32.mrf.mxu0
        %v7785 = vadd.f32 %v7169, %v7784
        %v7786 = vpop.f32.mrf.mxu0
        %7787 = vmatprep.mubr.bf16.mxu0 %v7041
        %7788 = vmatmul.mubr.bf16.gmra.mxu0 %v7040
        %v7789 = vpop.f32.mrf.mxu0
        %v7790 = vadd.f32 %v7169, %v7789
        %v7791 = vpop.f32.mrf.mxu0
        %v7792 = vpop.f32.mrf.mxu0
        %v7793 = vadd.f32 %v7169, %v7792
        %v7794 = vpop.f32.mrf.mxu0
        %7795 = vmatprep.mubr.bf16.mxu0 %v7045
        %7796 = vmatmul.mubr.bf16.gmra.mxu0 %v7044
        %v7797 = vpop.f32.mrf.mxu0
        %v7798 = vadd.f32 %v7169, %v7797
        %v7799 = vpop.f32.mrf.mxu0
        %v7800 = vpop.f32.mrf.mxu0
        %v7801 = vadd.f32 %v7169, %v7800
        %v7802 = vpop.f32.mrf.mxu0
        %7803 = vmatprep.mubr.bf16.mxu0 %v7049
        %7804 = vmatmul.mubr.bf16.gmra.mxu0 %v7048
        %v7805 = vpop.f32.mrf.mxu0
        %v7806 = vadd.f32 %v7169, %v7805
        %v7807 = vpop.f32.mrf.mxu0
        %v7808 = vpop.f32.mrf.mxu0
        %v7809 = vadd.f32 %v7169, %v7808
        %v7810 = vpop.f32.mrf.mxu0
        %7811 = vmatprep.mubr.bf16.mxu0 %v7053
        %7812 = vmatmul.mubr.bf16.gmra.mxu0 %v7052
        %v7813 = vpop.f32.mrf.mxu0
        %v7814 = vadd.f32 %v7169, %v7813
        %v7815 = vpop.f32.mrf.mxu0
        %v7816 = vpop.f32.mrf.mxu0
        %v7817 = vadd.f32 %v7169, %v7816
        %v7818 = vpop.f32.mrf.mxu0
        %7819 = vmatprep.mubr.bf16.mxu0 %v7057
        %7820 = vmatmul.mubr.bf16.gmra.mxu0 %v7056
        %v7821 = vpop.f32.mrf.mxu0
        %v7822 = vadd.f32 %v7169, %v7821
        %v7823 = vpop.f32.mrf.mxu0
        %v7824 = vpop.f32.mrf.mxu0
        %v7825 = vadd.f32 %v7169, %v7824
        %v7826 = vpop.f32.mrf.mxu0
        %7827 = vmatprep.mubr.bf16.mxu0 %v7061
        %7828 = vmatmul.mubr.bf16.gmra.mxu0 %v7060
        %v7829 = vpop.f32.mrf.mxu0
        %v7830 = vadd.f32 %v7169, %v7829
        %v7831 = vpop.f32.mrf.mxu0
        %v7832 = vpop.f32.mrf.mxu0
        %v7833 = vadd.f32 %v7169, %v7832
        %v7834 = vpop.f32.mrf.mxu0
        %7835 = vmatprep.mubr.bf16.mxu0 %v7065
        %7836 = vmatmul.mubr.bf16.gmra.mxu0 %v7064
        %v7837 = vpop.f32.mrf.mxu0
        %v7838 = vadd.f32 %v7169, %v7837
        %v7839 = vpop.f32.mrf.mxu0
        %v7840 = vpop.f32.mrf.mxu0
        %v7841 = vadd.f32 %v7169, %v7840
        %v7842 = vpop.f32.mrf.mxu0
        %7843 = vmatprep.mubr.bf16.mxu0 %v7069
        %7844 = vmatmul.mubr.bf16.gmra.mxu0 %v7068
        %v7845 = vpop.f32.mrf.mxu0
        %v7846 = vadd.f32 %v7169, %v7845
        %v7847 = vpop.f32.mrf.mxu0
        %v7848 = vpop.f32.mrf.mxu0
        %v7849 = vadd.f32 %v7169, %v7848
        %v7850 = vpop.f32.mrf.mxu0
        %7851 = vmatprep.mubr.bf16.mxu0 %v7073
        %7852 = vmatmul.mubr.bf16.gmra.mxu0 %v7072
        %v7853 = vpop.f32.mrf.mxu0
        %v7854 = vadd.f32 %v7169, %v7853
        %v7855 = vpop.f32.mrf.mxu0
        %v7856 = vpop.f32.mrf.mxu0
        %v7857 = vadd.f32 %v7169, %v7856
        %v7858 = vpop.f32.mrf.mxu0
        %7859 = vmatprep.mubr.bf16.mxu0 %v7077
        %7860 = vmatmul.mubr.bf16.gmra.mxu0 %v7076
        %v7861 = vpop.f32.mrf.mxu0
        %v7862 = vadd.f32 %v7169, %v7861
        %v7863 = vpop.f32.mrf.mxu0
        %v7864 = vpop.f32.mrf.mxu0
        %v7865 = vadd.f32 %v7169, %v7864
        %v7866 = vpop.f32.mrf.mxu0
        %7867 = vmatprep.mubr.bf16.mxu0 %v7081
        %7868 = vmatmul.mubr.bf16.gmra.mxu0 %v7080
        %v7869 = vpop.f32.mrf.mxu0
        %v7870 = vadd.f32 %v7169, %v7869
        %v7871 = vpop.f32.mrf.mxu0
        %v7872 = vpop.f32.mrf.mxu0
        %v7873 = vadd.f32 %v7169, %v7872
        %v7874 = vpop.f32.mrf.mxu0
        %7875 = vmatprep.mubr.bf16.mxu0 %v7085
        %7876 = vmatmul.mubr.bf16.gmra.mxu0 %v7084
        %v7877 = vpop.f32.mrf.mxu0
        %v7878 = vadd.f32 %v7169, %v7877
        %v7879 = vpop.f32.mrf.mxu0
        %v7880 = vpop.f32.mrf.mxu0
        %v7881 = vadd.f32 %v7169, %v7880
        %v7882 = vpop.f32.mrf.mxu0
        %7883 = vmatprep.mubr.bf16.mxu0 %v7089
        %7884 = vmatmul.mubr.bf16.gmra.mxu0 %v7088
        %v7885 = vpop.f32.mrf.mxu0
        %v7886 = vadd.f32 %v7169, %v7885
        %v7887 = vpop.f32.mrf.mxu0
        %v7888 = vpop.f32.mrf.mxu0
        %v7889 = vadd.f32 %v7169, %v7888
        %v7890 = vpop.f32.mrf.mxu0
        %7891 = vmatprep.mubr.bf16.mxu0 %v7093
        %7892 = vmatmul.mubr.bf16.gmra.mxu0 %v7092
        %v7893 = vpop.f32.mrf.mxu0
        %v7894 = vadd.f32 %v7169, %v7893
        %v7895 = vpop.f32.mrf.mxu0
        %v7896 = vpop.f32.mrf.mxu0
        %v7897 = vadd.f32 %v7169, %v7896
        %v7898 = vpop.f32.mrf.mxu0
        %7899 = vmatprep.mubr.bf16.mxu0 %v7097
        %7900 = vmatmul.mubr.bf16.gmra.mxu0 %v7096
        %v7901 = vpop.f32.mrf.mxu0
        %v7902 = vadd.f32 %v7169, %v7901
        %v7903 = vpop.f32.mrf.mxu0
        %v7904 = vpop.f32.mrf.mxu0
        %v7905 = vadd.f32 %v7169, %v7904
        %v7906 = vpop.f32.mrf.mxu0
        %7907 = vdwg.mxu0
        %7908 = vmatprep.subr.bf16.mxu0 0
        %7909 = vmatpush1.bf16.msra.mxu0 %v7322
        %7910 = vmatprep.subr.bf16.mxu0 0
        %7911 = vmatpush1.bf16.msra.mxu0 %v7321
        %7912 = vmatprep.subr.bf16.mxu0 0
        %7913 = vmatpush1.bf16.msra.mxu0 %v7320
        %7914 = vmatprep.subr.bf16.mxu0 0
        %7915 = vmatpush1.bf16.msra.mxu0 %v7319
        %7916 = vmatprep.subr.bf16.mxu0 0
        %7917 = vmatpush1.bf16.msra.mxu0 %v7318
        %7918 = vmatprep.subr.bf16.mxu0 0
        %7919 = vmatpush1.bf16.msra.mxu0 %v7317
        %7920 = vmatprep.subr.bf16.mxu0 0
        %7921 = vmatpush1.bf16.msra.mxu0 %v7316
        %7922 = vmatprep.subr.bf16.mxu0 0
        %7923 = vmatpush1.bf16.msra.mxu0 %v7315
        %7924 = vmatprep.subr.bf16.mxu0 0
        %7925 = vmatpush2.bf16.msra.mxu0 %v7330
        %7926 = vmatprep.subr.bf16.mxu0 0
        %7927 = vmatpush2.bf16.msra.mxu0 %v7329
        %7928 = vmatprep.subr.bf16.mxu0 0
        %7929 = vmatpush2.bf16.msra.mxu0 %v7328
        %7930 = vmatprep.subr.bf16.mxu0 0
        %7931 = vmatpush2.bf16.msra.mxu0 %v7327
        %7932 = vmatprep.subr.bf16.mxu0 0
        %7933 = vmatpush2.bf16.msra.mxu0 %v7326
        %7934 = vmatprep.subr.bf16.mxu0 0
        %7935 = vmatpush2.bf16.msra.mxu0 %v7325
        %7936 = vmatprep.subr.bf16.mxu0 0
        %7937 = vmatpush2.bf16.msra.mxu0 %v7324
        %7938 = vmatprep.subr.bf16.mxu0 0
        %7939 = vmatpush2.bf16.msra.mxu0 %v7323
        %7940 = vmatprep.mubr.bf16.mxu0 %v6847
        %7941 = vmatmul.mubr.bf16.gmra.mxu0 %v6846
        %v7942 = vpop.f32.mrf.mxu0
        %v7943 = vadd.f32 %v7398, %v7942
        %v7944 = vpop.f32.mrf.mxu0
        %v7945 = vpop.f32.mrf.mxu0
        %v7946 = vadd.f32 %v7401, %v7945
        %v7947 = vpop.f32.mrf.mxu0
        %7948 = vmatprep.mubr.bf16.mxu0 %v6851
        %7949 = vmatmul.mubr.bf16.gmra.mxu0 %v6850
        %v7950 = vpop.f32.mrf.mxu0
        %v7951 = vadd.f32 %v7406, %v7950
        %v7952 = vpop.f32.mrf.mxu0
        %v7953 = vpop.f32.mrf.mxu0
        %v7954 = vadd.f32 %v7409, %v7953
        %v7955 = vpop.f32.mrf.mxu0
        %7956 = vmatprep.mubr.bf16.mxu0 %v6855
        %7957 = vmatmul.mubr.bf16.gmra.mxu0 %v6854
        %v7958 = vpop.f32.mrf.mxu0
        %v7959 = vadd.f32 %v7414, %v7958
        %v7960 = vpop.f32.mrf.mxu0
        %v7961 = vpop.f32.mrf.mxu0
        %v7962 = vadd.f32 %v7417, %v7961
        %v7963 = vpop.f32.mrf.mxu0
        %7964 = vmatprep.mubr.bf16.mxu0 %v6859
        %7965 = vmatmul.mubr.bf16.gmra.mxu0 %v6858
        %v7966 = vpop.f32.mrf.mxu0
        %v7967 = vadd.f32 %v7422, %v7966
        %v7968 = vpop.f32.mrf.mxu0
        %v7969 = vpop.f32.mrf.mxu0
        %v7970 = vadd.f32 %v7425, %v7969
        %v7971 = vpop.f32.mrf.mxu0
        %7972 = vmatprep.mubr.bf16.mxu0 %v6863
        %7973 = vmatmul.mubr.bf16.gmra.mxu0 %v6862
        %v7974 = vpop.f32.mrf.mxu0
        %v7975 = vadd.f32 %v7430, %v7974
        %v7976 = vpop.f32.mrf.mxu0
        %v7977 = vpop.f32.mrf.mxu0
        %v7978 = vadd.f32 %v7433, %v7977
        %v7979 = vpop.f32.mrf.mxu0
        %7980 = vmatprep.mubr.bf16.mxu0 %v6867
        %7981 = vmatmul.mubr.bf16.gmra.mxu0 %v6866
        %v7982 = vpop.f32.mrf.mxu0
        %v7983 = vadd.f32 %v7438, %v7982
        %v7984 = vpop.f32.mrf.mxu0
        %v7985 = vpop.f32.mrf.mxu0
        %v7986 = vadd.f32 %v7441, %v7985
        %v7987 = vpop.f32.mrf.mxu0
        %7988 = vmatprep.mubr.bf16.mxu0 %v6871
        %7989 = vmatmul.mubr.bf16.gmra.mxu0 %v6870
        %v7990 = vpop.f32.mrf.mxu0
        %v7991 = vadd.f32 %v7446, %v7990
        %v7992 = vpop.f32.mrf.mxu0
        %v7993 = vpop.f32.mrf.mxu0
        %v7994 = vadd.f32 %v7449, %v7993
        %v7995 = vpop.f32.mrf.mxu0
        %7996 = vmatprep.mubr.bf16.mxu0 %v6875
        %7997 = vmatmul.mubr.bf16.gmra.mxu0 %v6874
        %v7998 = vpop.f32.mrf.mxu0
        %v7999 = vadd.f32 %v7454, %v7998
        %v8000 = vpop.f32.mrf.mxu0
        %v8001 = vpop.f32.mrf.mxu0
        %v8002 = vadd.f32 %v7457, %v8001
        %v8003 = vpop.f32.mrf.mxu0
        %8004 = vmatprep.mubr.bf16.mxu0 %v6879
        %8005 = vmatmul.mubr.bf16.gmra.mxu0 %v6878
        %v8006 = vpop.f32.mrf.mxu0
        %v8007 = vadd.f32 %v7462, %v8006
        %v8008 = vpop.f32.mrf.mxu0
        %v8009 = vpop.f32.mrf.mxu0
        %v8010 = vadd.f32 %v7465, %v8009
        %v8011 = vpop.f32.mrf.mxu0
        %8012 = vmatprep.mubr.bf16.mxu0 %v6883
        %8013 = vmatmul.mubr.bf16.gmra.mxu0 %v6882
        %v8014 = vpop.f32.mrf.mxu0
        %v8015 = vadd.f32 %v7470, %v8014
        %v8016 = vpop.f32.mrf.mxu0
        %v8017 = vpop.f32.mrf.mxu0
        %v8018 = vadd.f32 %v7473, %v8017
        %v8019 = vpop.f32.mrf.mxu0
        %8020 = vmatprep.mubr.bf16.mxu0 %v6887
        %8021 = vmatmul.mubr.bf16.gmra.mxu0 %v6886
        %v8022 = vpop.f32.mrf.mxu0
        %v8023 = vadd.f32 %v7478, %v8022
        %v8024 = vpop.f32.mrf.mxu0
        %v8025 = vpop.f32.mrf.mxu0
        %v8026 = vadd.f32 %v7481, %v8025
        %v8027 = vpop.f32.mrf.mxu0
        %8028 = vmatprep.mubr.bf16.mxu0 %v6891
        %8029 = vmatmul.mubr.bf16.gmra.mxu0 %v6890
        %v8030 = vpop.f32.mrf.mxu0
        %v8031 = vadd.f32 %v7486, %v8030
        %v8032 = vpop.f32.mrf.mxu0
        %v8033 = vpop.f32.mrf.mxu0
        %v8034 = vadd.f32 %v7489, %v8033
        %v8035 = vpop.f32.mrf.mxu0
        %8036 = vmatprep.mubr.bf16.mxu0 %v6895
        %8037 = vmatmul.mubr.bf16.gmra.mxu0 %v6894
        %v8038 = vpop.f32.mrf.mxu0
        %v8039 = vadd.f32 %v7494, %v8038
        %v8040 = vpop.f32.mrf.mxu0
        %v8041 = vpop.f32.mrf.mxu0
        %v8042 = vadd.f32 %v7497, %v8041
        %v8043 = vpop.f32.mrf.mxu0
        %8044 = vmatprep.mubr.bf16.mxu0 %v6899
        %8045 = vmatmul.mubr.bf16.gmra.mxu0 %v6898
        %v8046 = vpop.f32.mrf.mxu0
        %v8047 = vadd.f32 %v7502, %v8046
        %v8048 = vpop.f32.mrf.mxu0
        %v8049 = vpop.f32.mrf.mxu0
        %v8050 = vadd.f32 %v7505, %v8049
        %v8051 = vpop.f32.mrf.mxu0
        %8052 = vmatprep.mubr.bf16.mxu0 %v6903
        %8053 = vmatmul.mubr.bf16.gmra.mxu0 %v6902
        %v8054 = vpop.f32.mrf.mxu0
        %v8055 = vadd.f32 %v7510, %v8054
        %v8056 = vpop.f32.mrf.mxu0
        %v8057 = vpop.f32.mrf.mxu0
        %v8058 = vadd.f32 %v7513, %v8057
        %v8059 = vpop.f32.mrf.mxu0
        %8060 = vmatprep.mubr.bf16.mxu0 %v6907
        %8061 = vmatmul.mubr.bf16.gmra.mxu0 %v6906
        %v8062 = vpop.f32.mrf.mxu0
        %v8063 = vadd.f32 %v7518, %v8062
        %v8064 = vpop.f32.mrf.mxu0
        %v8065 = vpop.f32.mrf.mxu0
        %v8066 = vadd.f32 %v7521, %v8065
        %v8067 = vpop.f32.mrf.mxu0
        %8068 = vmatprep.mubr.bf16.mxu0 %v6911
        %8069 = vmatmul.mubr.bf16.gmra.mxu0 %v6910
        %v8070 = vpop.f32.mrf.mxu0
        %v8071 = vadd.f32 %v7526, %v8070
        %v8072 = vpop.f32.mrf.mxu0
        %v8073 = vpop.f32.mrf.mxu0
        %v8074 = vadd.f32 %v7529, %v8073
        %v8075 = vpop.f32.mrf.mxu0
        %8076 = vmatprep.mubr.bf16.mxu0 %v6915
        %8077 = vmatmul.mubr.bf16.gmra.mxu0 %v6914
        %v8078 = vpop.f32.mrf.mxu0
        %v8079 = vadd.f32 %v7534, %v8078
        %v8080 = vpop.f32.mrf.mxu0
        %v8081 = vpop.f32.mrf.mxu0
        %v8082 = vadd.f32 %v7537, %v8081
        %v8083 = vpop.f32.mrf.mxu0
        %8084 = vmatprep.mubr.bf16.mxu0 %v6919
        %8085 = vmatmul.mubr.bf16.gmra.mxu0 %v6918
        %v8086 = vpop.f32.mrf.mxu0
        %v8087 = vadd.f32 %v7542, %v8086
        %v8088 = vpop.f32.mrf.mxu0
        %v8089 = vpop.f32.mrf.mxu0
        %v8090 = vadd.f32 %v7545, %v8089
        %v8091 = vpop.f32.mrf.mxu0
        %8092 = vmatprep.mubr.bf16.mxu0 %v6923
        %8093 = vmatmul.mubr.bf16.gmra.mxu0 %v6922
        %v8094 = vpop.f32.mrf.mxu0
        %v8095 = vadd.f32 %v7550, %v8094
        %v8096 = vpop.f32.mrf.mxu0
        %v8097 = vpop.f32.mrf.mxu0
        %v8098 = vadd.f32 %v7553, %v8097
        %v8099 = vpop.f32.mrf.mxu0
        %8100 = vmatprep.mubr.bf16.mxu0 %v6927
        %8101 = vmatmul.mubr.bf16.gmra.mxu0 %v6926
        %v8102 = vpop.f32.mrf.mxu0
        %v8103 = vadd.f32 %v7558, %v8102
        %v8104 = vpop.f32.mrf.mxu0
        %v8105 = vpop.f32.mrf.mxu0
        %v8106 = vadd.f32 %v7561, %v8105
        %v8107 = vpop.f32.mrf.mxu0
        %8108 = vmatprep.mubr.bf16.mxu0 %v6931
        %8109 = vmatmul.mubr.bf16.gmra.mxu0 %v6930
        %v8110 = vpop.f32.mrf.mxu0
        %v8111 = vadd.f32 %v7566, %v8110
        %v8112 = vpop.f32.mrf.mxu0
        %v8113 = vpop.f32.mrf.mxu0
        %v8114 = vadd.f32 %v7569, %v8113
        %v8115 = vpop.f32.mrf.mxu0
        %8116 = vmatprep.mubr.bf16.mxu0 %v6935
        %8117 = vmatmul.mubr.bf16.gmra.mxu0 %v6934
        %v8118 = vpop.f32.mrf.mxu0
        %v8119 = vadd.f32 %v7574, %v8118
        %v8120 = vpop.f32.mrf.mxu0
        %v8121 = vpop.f32.mrf.mxu0
        %v8122 = vadd.f32 %v7577, %v8121
        %v8123 = vpop.f32.mrf.mxu0
        %8124 = vmatprep.mubr.bf16.mxu0 %v6939
        %8125 = vmatmul.mubr.bf16.gmra.mxu0 %v6938
        %v8126 = vpop.f32.mrf.mxu0
        %v8127 = vadd.f32 %v7582, %v8126
        %v8128 = vpop.f32.mrf.mxu0
        %v8129 = vpop.f32.mrf.mxu0
        %v8130 = vadd.f32 %v7585, %v8129
        %v8131 = vpop.f32.mrf.mxu0
        %8132 = vmatprep.mubr.bf16.mxu0 %v6943
        %8133 = vmatmul.mubr.bf16.gmra.mxu0 %v6942
        %v8134 = vpop.f32.mrf.mxu0
        %v8135 = vadd.f32 %v7590, %v8134
        %v8136 = vpop.f32.mrf.mxu0
        %v8137 = vpop.f32.mrf.mxu0
        %v8138 = vadd.f32 %v7593, %v8137
        %v8139 = vpop.f32.mrf.mxu0
        %8140 = vmatprep.mubr.bf16.mxu0 %v6947
        %8141 = vmatmul.mubr.bf16.gmra.mxu0 %v6946
        %v8142 = vpop.f32.mrf.mxu0
        %v8143 = vadd.f32 %v7598, %v8142
        %v8144 = vpop.f32.mrf.mxu0
        %v8145 = vpop.f32.mrf.mxu0
        %v8146 = vadd.f32 %v7601, %v8145
        %v8147 = vpop.f32.mrf.mxu0
        %8148 = vmatprep.mubr.bf16.mxu0 %v6951
        %8149 = vmatmul.mubr.bf16.gmra.mxu0 %v6950
        %v8150 = vpop.f32.mrf.mxu0
        %v8151 = vadd.f32 %v7606, %v8150
        %v8152 = vpop.f32.mrf.mxu0
        %v8153 = vpop.f32.mrf.mxu0
        %v8154 = vadd.f32 %v7609, %v8153
        %v8155 = vpop.f32.mrf.mxu0
        %8156 = vmatprep.mubr.bf16.mxu0 %v6955
        %8157 = vmatmul.mubr.bf16.gmra.mxu0 %v6954
        %v8158 = vpop.f32.mrf.mxu0
        %v8159 = vadd.f32 %v7614, %v8158
        %v8160 = vpop.f32.mrf.mxu0
        %v8161 = vpop.f32.mrf.mxu0
        %v8162 = vadd.f32 %v7617, %v8161
        %v8163 = vpop.f32.mrf.mxu0
        %8164 = vmatprep.mubr.bf16.mxu0 %v6959
        %8165 = vmatmul.mubr.bf16.gmra.mxu0 %v6958
        %v8166 = vpop.f32.mrf.mxu0
        %v8167 = vadd.f32 %v7622, %v8166
        %v8168 = vpop.f32.mrf.mxu0
        %v8169 = vpop.f32.mrf.mxu0
        %v8170 = vadd.f32 %v7625, %v8169
        %v8171 = vpop.f32.mrf.mxu0
        %8172 = vmatprep.mubr.bf16.mxu0 %v6963
        %8173 = vmatmul.mubr.bf16.gmra.mxu0 %v6962
        %v8174 = vpop.f32.mrf.mxu0
        %v8175 = vadd.f32 %v7630, %v8174
        %v8176 = vpop.f32.mrf.mxu0
        %v8177 = vpop.f32.mrf.mxu0
        %v8178 = vadd.f32 %v7633, %v8177
        %v8179 = vpop.f32.mrf.mxu0
        %8180 = vmatprep.mubr.bf16.mxu0 %v6967
        %8181 = vmatmul.mubr.bf16.gmra.mxu0 %v6966
        %v8182 = vpop.f32.mrf.mxu0
        %v8183 = vadd.f32 %v7638, %v8182
        %v8184 = vpop.f32.mrf.mxu0
        %v8185 = vpop.f32.mrf.mxu0
        %v8186 = vadd.f32 %v7641, %v8185
        %v8187 = vpop.f32.mrf.mxu0
        %8188 = vmatprep.mubr.bf16.mxu0 %v6971
        %8189 = vmatmul.mubr.bf16.gmra.mxu0 %v6970
        %v8190 = vpop.f32.mrf.mxu0
        %v8191 = vadd.f32 %v7646, %v8190
        %v8192 = vpop.f32.mrf.mxu0
        %v8193 = vpop.f32.mrf.mxu0
        %v8194 = vadd.f32 %v7649, %v8193
        %v8195 = vpop.f32.mrf.mxu0
        %8196 = vmatprep.mubr.bf16.mxu0 %v6975
        %8197 = vmatmul.mubr.bf16.gmra.mxu0 %v6974
        %v8198 = vpop.f32.mrf.mxu0
        %v8199 = vadd.f32 %v7654, %v8198
        %v8200 = vpop.f32.mrf.mxu0
        %v8201 = vpop.f32.mrf.mxu0
        %v8202 = vadd.f32 %v7657, %v8201
        %v8203 = vpop.f32.mrf.mxu0
        %8204 = vmatprep.mubr.bf16.mxu0 %v6979
        %8205 = vmatmul.mubr.bf16.gmra.mxu0 %v6978
        %v8206 = vpop.f32.mrf.mxu0
        %v8207 = vadd.f32 %v7662, %v8206
        %v8208 = vpop.f32.mrf.mxu0
        %v8209 = vpop.f32.mrf.mxu0
        %v8210 = vadd.f32 %v7665, %v8209
        %v8211 = vpop.f32.mrf.mxu0
        %8212 = vmatprep.mubr.bf16.mxu0 %v6983
        %8213 = vmatmul.mubr.bf16.gmra.mxu0 %v6982
        %v8214 = vpop.f32.mrf.mxu0
        %v8215 = vadd.f32 %v7670, %v8214
        %v8216 = vpop.f32.mrf.mxu0
        %v8217 = vpop.f32.mrf.mxu0
        %v8218 = vadd.f32 %v7673, %v8217
        %v8219 = vpop.f32.mrf.mxu0
        %8220 = vmatprep.mubr.bf16.mxu0 %v6987
        %8221 = vmatmul.mubr.bf16.gmra.mxu0 %v6986
        %v8222 = vpop.f32.mrf.mxu0
        %v8223 = vadd.f32 %v7678, %v8222
        %v8224 = vpop.f32.mrf.mxu0
        %v8225 = vpop.f32.mrf.mxu0
        %v8226 = vadd.f32 %v7681, %v8225
        %v8227 = vpop.f32.mrf.mxu0
        %8228 = vmatprep.mubr.bf16.mxu0 %v6991
        %8229 = vmatmul.mubr.bf16.gmra.mxu0 %v6990
        %v8230 = vpop.f32.mrf.mxu0
        %v8231 = vadd.f32 %v7686, %v8230
        %v8232 = vpop.f32.mrf.mxu0
        %v8233 = vpop.f32.mrf.mxu0
        %v8234 = vadd.f32 %v7689, %v8233
        %v8235 = vpop.f32.mrf.mxu0
        %8236 = vmatprep.mubr.bf16.mxu0 %v6995
        %8237 = vmatmul.mubr.bf16.gmra.mxu0 %v6994
        %v8238 = vpop.f32.mrf.mxu0
        %v8239 = vadd.f32 %v7694, %v8238
        %v8240 = vpop.f32.mrf.mxu0
        %v8241 = vpop.f32.mrf.mxu0
        %v8242 = vadd.f32 %v7697, %v8241
        %v8243 = vpop.f32.mrf.mxu0
        %8244 = vmatprep.mubr.bf16.mxu0 %v6999
        %8245 = vmatmul.mubr.bf16.gmra.mxu0 %v6998
        %v8246 = vpop.f32.mrf.mxu0
        %v8247 = vadd.f32 %v7702, %v8246
        %v8248 = vpop.f32.mrf.mxu0
        %v8249 = vpop.f32.mrf.mxu0
        %v8250 = vadd.f32 %v7705, %v8249
        %v8251 = vpop.f32.mrf.mxu0
        %8252 = vmatprep.mubr.bf16.mxu0 %v7003
        %8253 = vmatmul.mubr.bf16.gmra.mxu0 %v7002
        %v8254 = vpop.f32.mrf.mxu0
        %v8255 = vadd.f32 %v7710, %v8254
        %v8256 = vpop.f32.mrf.mxu0
        %v8257 = vpop.f32.mrf.mxu0
        %v8258 = vadd.f32 %v7713, %v8257
        %v8259 = vpop.f32.mrf.mxu0
        %8260 = vmatprep.mubr.bf16.mxu0 %v7007
        %8261 = vmatmul.mubr.bf16.gmra.mxu0 %v7006
        %v8262 = vpop.f32.mrf.mxu0
        %v8263 = vadd.f32 %v7718, %v8262
        %v8264 = vpop.f32.mrf.mxu0
        %v8265 = vpop.f32.mrf.mxu0
        %v8266 = vadd.f32 %v7721, %v8265
        %v8267 = vpop.f32.mrf.mxu0
        %8268 = vmatprep.mubr.bf16.mxu0 %v7011
        %8269 = vmatmul.mubr.bf16.gmra.mxu0 %v7010
        %v8270 = vpop.f32.mrf.mxu0
        %v8271 = vadd.f32 %v7726, %v8270
        %v8272 = vpop.f32.mrf.mxu0
        %v8273 = vpop.f32.mrf.mxu0
        %v8274 = vadd.f32 %v7729, %v8273
        %v8275 = vpop.f32.mrf.mxu0
        %8276 = vmatprep.mubr.bf16.mxu0 %v7015
        %8277 = vmatmul.mubr.bf16.gmra.mxu0 %v7014
        %v8278 = vpop.f32.mrf.mxu0
        %v8279 = vadd.f32 %v7734, %v8278
        %v8280 = vpop.f32.mrf.mxu0
        %v8281 = vpop.f32.mrf.mxu0
        %v8282 = vadd.f32 %v7737, %v8281
        %v8283 = vpop.f32.mrf.mxu0
        %8284 = vmatprep.mubr.bf16.mxu0 %v7019
        %8285 = vmatmul.mubr.bf16.gmra.mxu0 %v7018
        %v8286 = vpop.f32.mrf.mxu0
        %v8287 = vadd.f32 %v7742, %v8286
        %v8288 = vpop.f32.mrf.mxu0
        %v8289 = vpop.f32.mrf.mxu0
        %v8290 = vadd.f32 %v7745, %v8289
        %v8291 = vpop.f32.mrf.mxu0
        %8292 = vmatprep.mubr.bf16.mxu0 %v7023
        %8293 = vmatmul.mubr.bf16.gmra.mxu0 %v7022
        %v8294 = vpop.f32.mrf.mxu0
        %v8295 = vadd.f32 %v7750, %v8294
        %v8296 = vpop.f32.mrf.mxu0
        %v8297 = vpop.f32.mrf.mxu0
        %v8298 = vadd.f32 %v7753, %v8297
        %v8299 = vpop.f32.mrf.mxu0
        %8300 = vmatprep.mubr.bf16.mxu0 %v7027
        %8301 = vmatmul.mubr.bf16.gmra.mxu0 %v7026
        %v8302 = vpop.f32.mrf.mxu0
        %v8303 = vadd.f32 %v7758, %v8302
        %v8304 = vpop.f32.mrf.mxu0
        %v8305 = vpop.f32.mrf.mxu0
        %v8306 = vadd.f32 %v7761, %v8305
        %v8307 = vpop.f32.mrf.mxu0
        %8308 = vmatprep.mubr.bf16.mxu0 %v7031
        %8309 = vmatmul.mubr.bf16.gmra.mxu0 %v7030
        %v8310 = vpop.f32.mrf.mxu0
        %v8311 = vadd.f32 %v7766, %v8310
        %v8312 = vpop.f32.mrf.mxu0
        %v8313 = vpop.f32.mrf.mxu0
        %v8314 = vadd.f32 %v7769, %v8313
        %v8315 = vpop.f32.mrf.mxu0
        %8316 = vmatprep.mubr.bf16.mxu0 %v7035
        %8317 = vmatmul.mubr.bf16.gmra.mxu0 %v7034
        %v8318 = vpop.f32.mrf.mxu0
        %v8319 = vadd.f32 %v7774, %v8318
        %v8320 = vpop.f32.mrf.mxu0
        %v8321 = vpop.f32.mrf.mxu0
        %v8322 = vadd.f32 %v7777, %v8321
        %v8323 = vpop.f32.mrf.mxu0
        %8324 = vmatprep.mubr.bf16.mxu0 %v7039
        %8325 = vmatmul.mubr.bf16.gmra.mxu0 %v7038
        %v8326 = vpop.f32.mrf.mxu0
        %v8327 = vadd.f32 %v7782, %v8326
        %v8328 = vpop.f32.mrf.mxu0
        %v8329 = vpop.f32.mrf.mxu0
        %v8330 = vadd.f32 %v7785, %v8329
        %v8331 = vpop.f32.mrf.mxu0
        %8332 = vmatprep.mubr.bf16.mxu0 %v7043
        %8333 = vmatmul.mubr.bf16.gmra.mxu0 %v7042
        %v8334 = vpop.f32.mrf.mxu0
        %v8335 = vadd.f32 %v7790, %v8334
        %v8336 = vpop.f32.mrf.mxu0
        %v8337 = vpop.f32.mrf.mxu0
        %v8338 = vadd.f32 %v7793, %v8337
        %v8339 = vpop.f32.mrf.mxu0
        %8340 = vmatprep.mubr.bf16.mxu0 %v7047
        %8341 = vmatmul.mubr.bf16.gmra.mxu0 %v7046
        %v8342 = vpop.f32.mrf.mxu0
        %v8343 = vadd.f32 %v7798, %v8342
        %v8344 = vpop.f32.mrf.mxu0
        %v8345 = vpop.f32.mrf.mxu0
        %v8346 = vadd.f32 %v7801, %v8345
        %v8347 = vpop.f32.mrf.mxu0
        %8348 = vmatprep.mubr.bf16.mxu0 %v7051
        %8349 = vmatmul.mubr.bf16.gmra.mxu0 %v7050
        %v8350 = vpop.f32.mrf.mxu0
        %v8351 = vadd.f32 %v7806, %v8350
        %v8352 = vpop.f32.mrf.mxu0
        %v8353 = vpop.f32.mrf.mxu0
        %v8354 = vadd.f32 %v7809, %v8353
        %v8355 = vpop.f32.mrf.mxu0
        %8356 = vmatprep.mubr.bf16.mxu0 %v7055
        %8357 = vmatmul.mubr.bf16.gmra.mxu0 %v7054
        %v8358 = vpop.f32.mrf.mxu0
        %v8359 = vadd.f32 %v7814, %v8358
        %v8360 = vpop.f32.mrf.mxu0
        %v8361 = vpop.f32.mrf.mxu0
        %v8362 = vadd.f32 %v7817, %v8361
        %v8363 = vpop.f32.mrf.mxu0
        %8364 = vmatprep.mubr.bf16.mxu0 %v7059
        %8365 = vmatmul.mubr.bf16.gmra.mxu0 %v7058
        %v8366 = vpop.f32.mrf.mxu0
        %v8367 = vadd.f32 %v7822, %v8366
        %v8368 = vpop.f32.mrf.mxu0
        %v8369 = vpop.f32.mrf.mxu0
        %v8370 = vadd.f32 %v7825, %v8369
        %v8371 = vpop.f32.mrf.mxu0
        %8372 = vmatprep.mubr.bf16.mxu0 %v7063
        %8373 = vmatmul.mubr.bf16.gmra.mxu0 %v7062
        %v8374 = vpop.f32.mrf.mxu0
        %v8375 = vadd.f32 %v7830, %v8374
        %v8376 = vpop.f32.mrf.mxu0
        %v8377 = vpop.f32.mrf.mxu0
        %v8378 = vadd.f32 %v7833, %v8377
        %v8379 = vpop.f32.mrf.mxu0
        %8380 = vmatprep.mubr.bf16.mxu0 %v7067
        %8381 = vmatmul.mubr.bf16.gmra.mxu0 %v7066
        %v8382 = vpop.f32.mrf.mxu0
        %v8383 = vadd.f32 %v7838, %v8382
        %v8384 = vpop.f32.mrf.mxu0
        %v8385 = vpop.f32.mrf.mxu0
        %v8386 = vadd.f32 %v7841, %v8385
        %v8387 = vpop.f32.mrf.mxu0
        %8388 = vmatprep.mubr.bf16.mxu0 %v7071
        %8389 = vmatmul.mubr.bf16.gmra.mxu0 %v7070
        %v8390 = vpop.f32.mrf.mxu0
        %v8391 = vadd.f32 %v7846, %v8390
        %v8392 = vpop.f32.mrf.mxu0
        %v8393 = vpop.f32.mrf.mxu0
        %v8394 = vadd.f32 %v7849, %v8393
        %v8395 = vpop.f32.mrf.mxu0
        %8396 = vmatprep.mubr.bf16.mxu0 %v7075
        %8397 = vmatmul.mubr.bf16.gmra.mxu0 %v7074
        %v8398 = vpop.f32.mrf.mxu0
        %v8399 = vadd.f32 %v7854, %v8398
        %v8400 = vpop.f32.mrf.mxu0
        %v8401 = vpop.f32.mrf.mxu0
        %v8402 = vadd.f32 %v7857, %v8401
        %v8403 = vpop.f32.mrf.mxu0
        %8404 = vmatprep.mubr.bf16.mxu0 %v7079
        %8405 = vmatmul.mubr.bf16.gmra.mxu0 %v7078
        %v8406 = vpop.f32.mrf.mxu0
        %v8407 = vadd.f32 %v7862, %v8406
        %v8408 = vpop.f32.mrf.mxu0
        %v8409 = vpop.f32.mrf.mxu0
        %v8410 = vadd.f32 %v7865, %v8409
        %v8411 = vpop.f32.mrf.mxu0
        %8412 = vmatprep.mubr.bf16.mxu0 %v7083
        %8413 = vmatmul.mubr.bf16.gmra.mxu0 %v7082
        %v8414 = vpop.f32.mrf.mxu0
        %v8415 = vadd.f32 %v7870, %v8414
        %v8416 = vpop.f32.mrf.mxu0
        %v8417 = vpop.f32.mrf.mxu0
        %v8418 = vadd.f32 %v7873, %v8417
        %v8419 = vpop.f32.mrf.mxu0
        %8420 = vmatprep.mubr.bf16.mxu0 %v7087
        %8421 = vmatmul.mubr.bf16.gmra.mxu0 %v7086
        %v8422 = vpop.f32.mrf.mxu0
        %v8423 = vadd.f32 %v7878, %v8422
        %v8424 = vpop.f32.mrf.mxu0
        %v8425 = vpop.f32.mrf.mxu0
        %v8426 = vadd.f32 %v7881, %v8425
        %v8427 = vpop.f32.mrf.mxu0
        %8428 = vmatprep.mubr.bf16.mxu0 %v7091
        %8429 = vmatmul.mubr.bf16.gmra.mxu0 %v7090
        %v8430 = vpop.f32.mrf.mxu0
        %v8431 = vadd.f32 %v7886, %v8430
        %v8432 = vpop.f32.mrf.mxu0
        %v8433 = vpop.f32.mrf.mxu0
        %v8434 = vadd.f32 %v7889, %v8433
        %v8435 = vpop.f32.mrf.mxu0
        %8436 = vmatprep.mubr.bf16.mxu0 %v7095
        %8437 = vmatmul.mubr.bf16.gmra.mxu0 %v7094
        %v8438 = vpop.f32.mrf.mxu0
        %v8439 = vadd.f32 %v7894, %v8438
        %v8440 = vpop.f32.mrf.mxu0
        %v8441 = vpop.f32.mrf.mxu0
        %v8442 = vadd.f32 %v7897, %v8441
        %v8443 = vpop.f32.mrf.mxu0
        %8444 = vmatprep.mubr.bf16.mxu0 %v7099
        %8445 = vmatmul.mubr.bf16.gmra.mxu0 %v7098
        %v8446 = vpop.f32.mrf.mxu0
        %v8447 = vadd.f32 %v7902, %v8446
        %v8448 = vpop.f32.mrf.mxu0
        %v8449 = vpop.f32.mrf.mxu0
        %v8450 = vadd.f32 %v7905, %v8449
        %v8451 = vpop.f32.mrf.mxu0
        %8452 = vdwg.mxu0
        %8453 = vst [vmem:[%s272] sm:$0xff] %v7943
        %8454 = vst [vmem:[%s272 + $0x8] sm:$0xff] %v7946
        %8455 = vst [vmem:[%s272 + $0x10] sm:$0xff] %v7951
        %8456 = vst [vmem:[%s272 + $0x18] sm:$0xff] %v7954
        %8457 = vst [vmem:[%s272 + $0x20] sm:$0xff] %v7959
        %8458 = vst [vmem:[%s272 + $0x28] sm:$0xff] %v7962
        %8459 = vst [vmem:[%s272 + $0x30] sm:$0xff] %v7967
        %8460 = vst [vmem:[%s272 + $0x38] sm:$0xff] %v7970
        %8461 = vst [vmem:[%s272 + $0x40] sm:$0xff] %v7975
        %8462 = vst [vmem:[%s272 + $0x48] sm:$0xff] %v7978
        %8463 = vst [vmem:[%s272 + $0x50] sm:$0xff] %v7983
        %8464 = vst [vmem:[%s272 + $0x58] sm:$0xff] %v7986
        %8465 = vst [vmem:[%s272 + $0x60] sm:$0xff] %v7991
        %8466 = vst [vmem:[%s272 + $0x68] sm:$0xff] %v7994
        %8467 = vst [vmem:[%s272 + $0x70] sm:$0xff] %v7999
        %8468 = vst [vmem:[%s272 + $0x78] sm:$0xff] %v8002
        %8469 = vst [vmem:[%s272 + $0x80] sm:$0xff] %v8007
        %8470 = vst [vmem:[%s272 + $0x88] sm:$0xff] %v8010
        %8471 = vst [vmem:[%s272 + $0x90] sm:$0xff] %v8015
        %8472 = vst [vmem:[%s272 + $0x98] sm:$0xff] %v8018
        %8473 = vst [vmem:[%s272 + $0xa0] sm:$0xff] %v8023
        %8474 = vst [vmem:[%s272 + $0xa8] sm:$0xff] %v8026
        %8475 = vst [vmem:[%s272 + $0xb0] sm:$0xff] %v8031
        %8476 = vst [vmem:[%s272 + $0xb8] sm:$0xff] %v8034
        %8477 = vst [vmem:[%s272 + $0xc0] sm:$0xff] %v8039
        %8478 = vst [vmem:[%s272 + $0xc8] sm:$0xff] %v8042
        %8479 = vst [vmem:[%s272 + $0xd0] sm:$0xff] %v8047
        %8480 = vst [vmem:[%s272 + $0xd8] sm:$0xff] %v8050
        %8481 = vst [vmem:[%s272 + $0xe0] sm:$0xff] %v8055
        %8482 = vst [vmem:[%s272 + $0xe8] sm:$0xff] %v8058
        %8483 = vst [vmem:[%s272 + $0xf0] sm:$0xff] %v8063
        %8484 = vst [vmem:[%s272 + $0xf8] sm:$0xff] %v8066
        %8485 = vst [vmem:[%s272 + $0x100] sm:$0xff] %v8071
        %8486 = vst [vmem:[%s272 + $0x108] sm:$0xff] %v8074
        %8487 = vst [vmem:[%s272 + $0x110] sm:$0xff] %v8079
        %8488 = vst [vmem:[%s272 + $0x118] sm:$0xff] %v8082
        %8489 = vst [vmem:[%s272 + $0x120] sm:$0xff] %v8087
        %8490 = vst [vmem:[%s272 + $0x128] sm:$0xff] %v8090
        %8491 = vst [vmem:[%s272 + $0x130] sm:$0xff] %v8095
        %8492 = vst [vmem:[%s272 + $0x138] sm:$0xff] %v8098
        %8493 = vst [vmem:[%s272 + $0x140] sm:$0xff] %v8103
        %8494 = vst [vmem:[%s272 + $0x148] sm:$0xff] %v8106
        %8495 = vst [vmem:[%s272 + $0x150] sm:$0xff] %v8111
        %8496 = vst [vmem:[%s272 + $0x158] sm:$0xff] %v8114
        %8497 = vst [vmem:[%s272 + $0x160] sm:$0xff] %v8119
        %8498 = vst [vmem:[%s272 + $0x168] sm:$0xff] %v8122
        %8499 = vst [vmem:[%s272 + $0x170] sm:$0xff] %v8127
        %8500 = vst [vmem:[%s272 + $0x178] sm:$0xff] %v8130
        %8501 = vst [vmem:[%s272 + $0x180] sm:$0xff] %v8135
        %8502 = vst [vmem:[%s272 + $0x188] sm:$0xff] %v8138
        %8503 = vst [vmem:[%s272 + $0x190] sm:$0xff] %v8143
        %8504 = vst [vmem:[%s272 + $0x198] sm:$0xff] %v8146
        %8505 = vst [vmem:[%s272 + $0x1a0] sm:$0xff] %v8151
        %8506 = vst [vmem:[%s272 + $0x1a8] sm:$0xff] %v8154
        %8507 = vst [vmem:[%s272 + $0x1b0] sm:$0xff] %v8159
        %8508 = vst [vmem:[%s272 + $0x1b8] sm:$0xff] %v8162
        %8509 = vst [vmem:[%s272 + $0x1c0] sm:$0xff] %v8167
        %8510 = vst [vmem:[%s272 + $0x1c8] sm:$0xff] %v8170
        %8511 = vst [vmem:[%s272 + $0x1d0] sm:$0xff] %v8175
        %8512 = vst [vmem:[%s272 + $0x1d8] sm:$0xff] %v8178
        %8513 = vst [vmem:[%s272 + $0x1e0] sm:$0xff] %v8183
        %8514 = vst [vmem:[%s272 + $0x1e8] sm:$0xff] %v8186
        %8515 = vst [vmem:[%s272 + $0x1f0] sm:$0xff] %v8191
        %8516 = vst [vmem:[%s272 + $0x1f8] sm:$0xff] %v8194
        %8517 = vst [vmem:[%s272 + $0x200] sm:$0xff] %v8199
        %8518 = vst [vmem:[%s272 + $0x208] sm:$0xff] %v8202
        %8519 = vst [vmem:[%s272 + $0x210] sm:$0xff] %v8207
        %8520 = vst [vmem:[%s272 + $0x218] sm:$0xff] %v8210
        %8521 = vst [vmem:[%s272 + $0x220] sm:$0xff] %v8215
        %8522 = vst [vmem:[%s272 + $0x228] sm:$0xff] %v8218
        %8523 = vst [vmem:[%s272 + $0x230] sm:$0xff] %v8223
        %8524 = vst [vmem:[%s272 + $0x238] sm:$0xff] %v8226
        %8525 = vst [vmem:[%s272 + $0x240] sm:$0xff] %v8231
        %8526 = vst [vmem:[%s272 + $0x248] sm:$0xff] %v8234
        %8527 = vst [vmem:[%s272 + $0x250] sm:$0xff] %v8239
        %8528 = vst [vmem:[%s272 + $0x258] sm:$0xff] %v8242
        %8529 = vst [vmem:[%s272 + $0x260] sm:$0xff] %v8247
        %8530 = vst [vmem:[%s272 + $0x268] sm:$0xff] %v8250
        %8531 = vst [vmem:[%s272 + $0x270] sm:$0xff] %v8255
        %8532 = vst [vmem:[%s272 + $0x278] sm:$0xff] %v8258
        %8533 = vst [vmem:[%s272 + $0x280] sm:$0xff] %v8263
        %8534 = vst [vmem:[%s272 + $0x288] sm:$0xff] %v8266
        %8535 = vst [vmem:[%s272 + $0x290] sm:$0xff] %v8271
        %8536 = vst [vmem:[%s272 + $0x298] sm:$0xff] %v8274
        %8537 = vst [vmem:[%s272 + $0x2a0] sm:$0xff] %v8279
        %8538 = vst [vmem:[%s272 + $0x2a8] sm:$0xff] %v8282
        %8539 = vst [vmem:[%s272 + $0x2b0] sm:$0xff] %v8287
        %8540 = vst [vmem:[%s272 + $0x2b8] sm:$0xff] %v8290
        %8541 = vst [vmem:[%s272 + $0x2c0] sm:$0xff] %v8295
        %8542 = vst [vmem:[%s272 + $0x2c8] sm:$0xff] %v8298
        %8543 = vst [vmem:[%s272 + $0x2d0] sm:$0xff] %v8303
        %8544 = vst [vmem:[%s272 + $0x2d8] sm:$0xff] %v8306
        %8545 = vst [vmem:[%s272 + $0x2e0] sm:$0xff] %v8311
        %8546 = vst [vmem:[%s272 + $0x2e8] sm:$0xff] %v8314
        %8547 = vst [vmem:[%s272 + $0x2f0] sm:$0xff] %v8319
        %8548 = vst [vmem:[%s272 + $0x2f8] sm:$0xff] %v8322
        %8549 = vst [vmem:[%s272 + $0x300] sm:$0xff] %v8327
        %8550 = vst [vmem:[%s272 + $0x308] sm:$0xff] %v8330
        %8551 = vst [vmem:[%s272 + $0x310] sm:$0xff] %v8335
        %8552 = vst [vmem:[%s272 + $0x318] sm:$0xff] %v8338
        %8553 = vst [vmem:[%s272 + $0x320] sm:$0xff] %v8343
        %8554 = vst [vmem:[%s272 + $0x328] sm:$0xff] %v8346
        %8555 = vst [vmem:[%s272 + $0x330] sm:$0xff] %v8351
        %8556 = vst [vmem:[%s272 + $0x338] sm:$0xff] %v8354
        %8557 = vst [vmem:[%s272 + $0x340] sm:$0xff] %v8359
        %8558 = vst [vmem:[%s272 + $0x348] sm:$0xff] %v8362
        %8559 = vst [vmem:[%s272 + $0x350] sm:$0xff] %v8367
        %8560 = vst [vmem:[%s272 + $0x358] sm:$0xff] %v8370
        %8561 = vst [vmem:[%s272 + $0x360] sm:$0xff] %v8375
        %8562 = vst [vmem:[%s272 + $0x368] sm:$0xff] %v8378
        %8563 = vst [vmem:[%s272 + $0x370] sm:$0xff] %v8383
        %8564 = vst [vmem:[%s272 + $0x378] sm:$0xff] %v8386
        %8565 = vst [vmem:[%s272 + $0x380] sm:$0xff] %v8391
        %8566 = vst [vmem:[%s272 + $0x388] sm:$0xff] %v8394
        %8567 = vst [vmem:[%s272 + $0x390] sm:$0xff] %v8399
        %8568 = vst [vmem:[%s272 + $0x398] sm:$0xff] %v8402
        %8569 = vst [vmem:[%s272 + $0x3a0] sm:$0xff] %v8407
        %8570 = vst [vmem:[%s272 + $0x3a8] sm:$0xff] %v8410
        %8571 = vst [vmem:[%s272 + $0x3b0] sm:$0xff] %v8415
        %8572 = vst [vmem:[%s272 + $0x3b8] sm:$0xff] %v8418
        %8573 = vst [vmem:[%s272 + $0x3c0] sm:$0xff] %v8423
        %8574 = vst [vmem:[%s272 + $0x3c8] sm:$0xff] %v8426
        %8575 = vst [vmem:[%s272 + $0x3d0] sm:$0xff] %v8431
        %8576 = vst [vmem:[%s272 + $0x3d8] sm:$0xff] %v8434
        %8577 = vst [vmem:[%s272 + $0x3e0] sm:$0xff] %v8439
        %8578 = vst [vmem:[%s272 + $0x3e8] sm:$0xff] %v8442
        %8579 = vst [vmem:[%s272 + $0x3f0] sm:$0xff] %v8447
        %8580 = vst [vmem:[%s272 + $0x3f8] sm:$0xff] %v8450
        %s8581 = sand.u32 %s181, 1
        %s8582 = scalar_lea.sflag [#allocation3], %s8581
        %s8583 = sand.u32 %s181, 1
        %s8584 = smul.addr %s8583, 1024
        %s8585 = scalar_lea.vmem [#allocation2], %s8584
        // Predicated region
        $region49: #{tpu_custom_call.1} parent=47 // pred_check
          %p8586 = pneg %p191
        $region50: #{tpu_custom_call.1} parent=47 // pred_check_branch
          %8588 = sbr.rel (%p8586) target = $region52
        $region51: #{tpu_custom_call.1} parent=47 // pred_region
          %s8589 = smul.u32 128, %s21
          %s8591 = ssub.s32 16384, 16384
          %8592 = vsyncadd %s8582, %s8591
          %s8593 = smul.addr %s8589, 128
          %s8594 = scalar_lea.hbm %s7, %s8593
          %s8595 = sshll.u32 %s8585, 4
          %s8596 = int_to_ptr.vmem [resolvable:$true] %s8595
          %8601 = dma.vmem_to_hbm [thread:$0]  %s8596, 16384, %s8594, %s8582, 128, 128, 8
        $region52: #{tpu_custom_call.1} parent=47 // pred_fallthru
          _
      $region48: #{tpu_custom_call.1} parent=5 // pred_fallthru
        _
      %p8602 = scmp.le.s32.totalorder 2, %s16
      // Predicated region
      $region53: #{tpu_custom_call.1} parent=5 // pred_check
        %p8603 = pneg %p8602
      $region54: #{tpu_custom_call.1} parent=5 // pred_check_branch
        %8605 = sbr.rel (%p8603) target = $region56
      $region55: #{tpu_custom_call.1} parent=5 // pred_region
        %s8606 = ssub.s32 %s16, 2
        // Predicated region
        $region57: #{tpu_custom_call.1} parent=55 // pred_check
          %p8607 = pneg %p197
        $region58: #{tpu_custom_call.1} parent=55 // pred_check_branch
          %8609 = sbr.rel (%p8607) target = $region60
        $region59: #{tpu_custom_call.1} parent=55 // pred_region
          %s8610 = sand.u32 %s182, 1
          %s8611 = scalar_lea.sflag [#allocation3], %s8610
          %s8612 = sand.u32 %s182, 1
          %s8613 = smul.addr %s8612, 1024
          %s8614 = scalar_lea.vmem [#allocation2], %s8613
          %8615 = dma.done %s8611, 16384
        $region60: #{tpu_custom_call.1} parent=55 // pred_fallthru
          _
      $region56: #{tpu_custom_call.1} parent=5 // pred_fallthru
        _
    $region6: #{tpu_custom_call.1} parent=1 // loop_footer
      %s20 = sadd.s32 1, %s16
    $region7: #{tpu_custom_call.1} parent=1 // loop_footer_branch
      %15 = sbr.rel target = $region3
    $region8: #{tpu_custom_call.1} parent=1 // loop_exit
      _
    %8616 = vsyncpa [#allocation3], 1
    %s8617 = scalar_lea.sflag [#allocation3], 1
    %8618 = vsyncpa %s8617, 1

</llo_original>
